<compile_context>
chip_gen: v7x
topology: tpu7x:2x2x1
jax: 0.10.0
libtpu: 0.0.40
codegen_flags: <defaults>
</compile_context>

<pallas_src>
import functools

import jax
import jax.numpy as jnp
from jax.experimental import pallas as pl
from jax.experimental.pallas import tpu as pltpu


# ----------------------------------------------------------------------------
# Block-size helper
# ----------------------------------------------------------------------------
def _pick_block(dim, target, quantum):
    """Largest multiple of `quantum` <= target dividing `dim`; `dim` if small."""
    if dim <= target:
        return dim
    b = (target // quantum) * quantum
    while b >= quantum:
        if dim % b == 0:
            return b
        b -= quantum
    return dim  # fallback: no tiling


# ----------------------------------------------------------------------------
# Kernel A: fused MLP1 / MLP2 + encoder weight multiply  ->  XW1, XW2
# ----------------------------------------------------------------------------
def _premix_kernel(o1_ref, o2_ref,
                   m1w1_ref, m1b1_ref, m1w2_ref, m1b2_ref,
                   m2w1_ref, m2b1_ref,
                   e1w_ref, e2w_ref,
                   xw1_ref, xw2_ref):
    # modality 1: two linears (MLP1) then encoder weight
    h1 = jnp.dot(o1_ref[...], m1w1_ref[...],
                 preferred_element_type=jnp.float32) + m1b1_ref[...]
    f1 = jnp.dot(h1, m1w2_ref[...],
                 preferred_element_type=jnp.float32) + m1b2_ref[...]
    xw1_ref[...] = jnp.dot(f1, e1w_ref[...],
                           preferred_element_type=jnp.float32).astype(xw1_ref.dtype)
    # modality 2 (RNA_ADT): single linear (MLP2) then encoder weight
    f2 = jnp.dot(o2_ref[...], m2w1_ref[...],
                 preferred_element_type=jnp.float32) + m2b1_ref[...]
    xw2_ref[...] = jnp.dot(f2, e2w_ref[...],
                           preferred_element_type=jnp.float32).astype(xw2_ref.dtype)


def premix(p, omic1, omic2, block_m=256):
    M = omic1.shape[0]
    bm = _pick_block(M, block_m, 8)
    n_i1, n_h1 = p['mlp1_w1'].shape
    n_o1 = p['mlp1_w2'].shape[1]
    n_i2, n_o2 = p['mlp2_w1'].shape
    D = p['enc1_w'].shape[1]

    def full(*s):
        return pl.BlockSpec(s, lambda i, _n=len(s): (0,) * _n)

    def row(n):
        return pl.BlockSpec((bm, n), lambda i: (i, 0))

    return pl.pallas_call(
        _premix_kernel,
        out_shape=(jax.ShapeDtypeStruct((M, D), jnp.float32),
                   jax.ShapeDtypeStruct((M, D), jnp.float32)),
        grid_spec=pltpu.PrefetchScalarGridSpec(
            num_scalar_prefetch=0,
            grid=(M // bm,),
            in_specs=[row(n_i1), row(n_i2),
                      full(n_i1, n_h1), full(1, n_h1),
                      full(n_h1, n_o1), full(1, n_o1),
                      full(n_i2, n_o2), full(1, n_o2),
                      full(n_o1, D), full(n_o2, D)],
            out_specs=[row(D), row(D)]),
        compiler_params=pltpu.CompilerParams(dimension_semantics=("parallel",)),
    )(omic1, omic2,
      p['mlp1_w1'], p['mlp1_b1'].reshape(1, -1),
      p['mlp1_w2'], p['mlp1_b2'].reshape(1, -1),
      p['mlp2_w1'], p['mlp2_b1'].reshape(1, -1),
      p['enc1_w'], p['enc2_w'])


# ----------------------------------------------------------------------------
# Kernel B: both encoder GCNs (tiled reduction over cells) + cross-modality
#           attention + decoder weight multiply (YW1 / YW2), all fused.
# ----------------------------------------------------------------------------
def _enc_att_kernel(a1_ref, a2_ref, xw1_ref, xw2_ref,
                    attw_ref, attut_ref, d1w_ref, d2w_ref,
                    emb1_ref, emb2_ref, comb_ref, alpha_ref, yw1_ref, yw2_ref,
                    acc1, acc2):
    k = pl.program_id(1)

    @pl.when(k == 0)
    def _():
        acc1[...] = jnp.zeros_like(acc1)
        acc2[...] = jnp.zeros_like(acc2)

    # GCN reduction step:  acc_m += adj_m[i, k-block] @ XW_m[k-block]
    acc1[...] += jnp.dot(a1_ref[...], xw1_ref[...],
                         preferred_element_type=jnp.float32)
    acc2[...] += jnp.dot(a2_ref[...], xw2_ref[...],
                         preferred_element_type=jnp.float32)

    @pl.when(k == pl.num_programs(1) - 1)
    def _():
        e1 = acc1[...]
        e2 = acc2[...]
        emb1_ref[...] = e1.astype(emb1_ref.dtype)
        emb2_ref[...] = e2.astype(emb2_ref.dtype)

        # AttentionLayer: v = tanh(emb @ w); vu = v @ u; alpha = softmax(vu+1e-6)
        w = attw_ref[...]
        ut = attut_ref[...]                       # (1, D) == u_omega^T
        v1 = jnp.tanh(jnp.dot(e1, w, preferred_element_type=jnp.float32))
        v2 = jnp.tanh(jnp.dot(e2, w, preferred_element_type=jnp.float32))
        s1 = jnp.sum(v1 * ut, axis=-1, keepdims=True) + 1e-6
        s2 = jnp.sum(v2 * ut, axis=-1, keepdims=True) + 1e-6
        m = jnp.maximum(s1, s2)
        a1e = jnp.exp(s1 - m)
        a2e = jnp.exp(s2 - m)
        inv = pl.reciprocal(a1e + a2e, approx=True)   # EUP slot, off the VALU path
        alpha1 = a1e * inv
        alpha2 = a2e * inv

        comb = alpha1 * e1 + alpha2 * e2
        comb_ref[...] = comb.astype(comb_ref.dtype)
        col = jax.lax.broadcasted_iota(jnp.int32, alpha_ref.shape, 1)
        alpha_ref[...] = jnp.where(col == 0, alpha1, alpha2).astype(alpha_ref.dtype)

        # Decoder weight multiply fused here (feeds kernel C's GCN reduction)
        yw1_ref[...] = jnp.dot(comb, d1w_ref[...],
                               preferred_element_type=jnp.float32).astype(yw1_ref.dtype)
        yw2_ref[...] = jnp.dot(comb, d2w_ref[...],
                               preferred_element_type=jnp.float32).astype(yw2_ref.dtype)


def enc_attention_dec(p, adj_1, adj_2, xw1, xw2, block_m=256, block_k=512):
    M = adj_1.shape[0]
    D = xw1.shape[1]
    n_o1 = p['dec1_w'].shape[1]
    n_o2 = p['dec2_w'].shape[1]
    bm = _pick_block(M, block_m, 8)
    bk = _pick_block(M, block_k, 128)

    adj_spec = pl.BlockSpec((bm, bk), lambda i, k: (i, k))
    xw_spec = pl.BlockSpec((bk, D), lambda i, k: (k, 0))

    def full(*s):
        return pl.BlockSpec(s, lambda i, k, _n=len(s): (0,) * _n)

    def out_row(n):
        return pl.BlockSpec((bm, n), lambda i, k: (i, 0))

    return pl.pallas_call(
        _enc_att_kernel,
        out_shape=(jax.ShapeDtypeStruct((M, D), jnp.float32),
                   jax.ShapeDtypeStruct((M, D), jnp.float32),
                   jax.ShapeDtypeStruct((M, D), jnp.float32),
                   jax.ShapeDtypeStruct((M, 2), jnp.float32),
                   jax.ShapeDtypeStruct((M, n_o1), jnp.float32),
                   jax.ShapeDtypeStruct((M, n_o2), jnp.float32)),
        grid_spec=pltpu.PrefetchScalarGridSpec(
            num_scalar_prefetch=0,
            grid=(M // bm, M // bk),
            in_specs=[adj_spec, adj_spec, xw_spec, xw_spec,
                      full(D, D), full(1, D), full(D, n_o1), full(D, n_o2)],
            out_specs=[out_row(D), out_row(D), out_row(D), out_row(2),
                       out_row(n_o1), out_row(n_o2)],
            scratch_shapes=[pltpu.VMEM((bm, D), jnp.float32),
                            pltpu.VMEM((bm, D), jnp.float32)]),
        compiler_params=pltpu.CompilerParams(
            dimension_semantics=("parallel", "arbitrary")),
    )(adj_1, adj_2, xw1, xw2,
      p['att_w'], p['att_u'].reshape(1, -1), p['dec1_w'], p['dec2_w'])


# ----------------------------------------------------------------------------
# Kernel C: decoder GCNs (tiled reduction) + MLP3 / MLP4 heads, fused.
# ----------------------------------------------------------------------------
def _dec_head_kernel(a1_ref, a2_ref, yw1_ref, yw2_ref,
                     m3w1_ref, m3b1_ref, m3w2_ref, m3b2_ref,
                     m4w1_ref, m4b1_ref,
                     f1_ref, f2_ref,
                     acc1, acc2):
    k = pl.program_id(1)

    @pl.when(k == 0)
    def _():
        acc1[...] = jnp.zeros_like(acc1)
        acc2[...] = jnp.zeros_like(acc2)

    acc1[...] += jnp.dot(a1_ref[...], yw1_ref[...],
                         preferred_element_type=jnp.float32)
    acc2[...] += jnp.dot(a2_ref[...], yw2_ref[...],
                         preferred_element_type=jnp.float32)

    @pl.when(k == pl.num_programs(1) - 1)
    def _():
        d1 = acc1[...]
        d2 = acc2[...]
        # MLP3: two linears (no activation in the reference forward)
        h = jnp.dot(d1, m3w1_ref[...],
                    preferred_element_type=jnp.float32) + m3b1_ref[...]
        f1_ref[...] = (jnp.dot(h, m3w2_ref[...],
                               preferred_element_type=jnp.float32)
                       + m3b2_ref[...]).astype(f1_ref.dtype)
        # MLP4 (RNA_ADT): single linear
        f2_ref[...] = (jnp.dot(d2, m4w1_ref[...],
                               preferred_element_type=jnp.float32)
                       + m4b1_ref[...]).astype(f2_ref.dtype)


def dec_gcn_heads(p, adj_1, adj_2, yw1, yw2, block_m=256, block_k=512):
    M = adj_1.shape[0]
    n_o1 = yw1.shape[1]
    n_o2 = yw2.shape[1]
    n_h1 = p['mlp3_w1'].shape[1]
    n_i1 = p['mlp3_w2'].shape[1]
    n_i2 = p['mlp4_w1'].shape[1]
    bm = _pick_block(M, block_m, 8)
    bk = _pick_block(M, block_k, 128)

    adj_spec = pl.BlockSpec((bm, bk), lambda i, k: (i, k))

    def col_spec(n):
        return pl.BlockSpec((bk, n), lambda i, k: (k, 0))

    def full(*s):
        return pl.BlockSpec(s, lambda i, k, _n=len(s): (0,) * _n)

    def out_row(n):
        return pl.BlockSpec((bm, n), lambda i, k: (i, 0))

    return pl.pallas_call(
        _dec_head_kernel,
        out_shape=(jax.ShapeDtypeStruct((M, n_i1), jnp.float32),
                   jax.ShapeDtypeStruct((M, n_i2), jnp.float32)),
        grid_spec=pltpu.PrefetchScalarGridSpec(
            num_scalar_prefetch=0,
            grid=(M // bm, M // bk),
            in_specs=[adj_spec, adj_spec, col_spec(n_o1), col_spec(n_o2),
                      full(n_o1, n_h1), full(1, n_h1),
                      full(n_h1, n_i1), full(1, n_i1),
                      full(n_o2, n_i2), full(1, n_i2)],
            out_specs=[out_row(n_i1), out_row(n_i2)],
            scratch_shapes=[pltpu.VMEM((bm, n_o1), jnp.float32),
                            pltpu.VMEM((bm, n_o2), jnp.float32)]),
        compiler_params=pltpu.CompilerParams(
            dimension_semantics=("parallel", "arbitrary")),
    )(adj_1, adj_2, yw1, yw2,
      p['mlp3_w1'], p['mlp3_b1'].reshape(1, -1),
      p['mlp3_w2'], p['mlp3_b2'].reshape(1, -1),
      p['mlp4_w1'], p['mlp4_b1'].reshape(1, -1))


# ----------------------------------------------------------------------------
# Encoder_omics forward: 3 fused pallas_calls
# ----------------------------------------------------------------------------
@functools.partial(jax.jit, static_argnames=("block_m", "block_k"))
def encoder_omics_forward(p, omic1, omic2, adj_1, adj_2,
                          block_m=256, block_k=512):
    xw1, xw2 = premix(p, omic1, omic2, block_m=block_m)
    (emb_1_within, emb_2_within, emb_combined, alpha_omics,
     yw1, yw2) = enc_attention_dec(p, adj_1, adj_2, xw1, xw2,
                                   block_m=block_m, block_k=block_k)
    feat1_after, feat2_after = dec_gcn_heads(p, adj_1, adj_2, yw1, yw2,
                                             block_m=block_m, block_k=block_k)
    return (emb_1_within, emb_2_within, emb_combined, alpha_omics,
            feat1_after, feat2_after, emb_1_within, emb_2_within)


# ----------------------------------------------------------------------------
# Pure-JAX reference (for correctness checking)
# ----------------------------------------------------------------------------
def encoder_omics_reference(p, omic1, omic2, adj_1, adj_2):
    feat1 = (omic1 @ p['mlp1_w1'] + p['mlp1_b1']) @ p['mlp1_w2'] + p['mlp1_b2']
    feat2 = omic2 @ p['mlp2_w1'] + p['mlp2_b1']
    emb1 = adj_1 @ (feat1 @ p['enc1_w'])
    emb2 = adj_2 @ (feat2 @ p['enc2_w'])
    v1 = jnp.tanh(emb1 @ p['att_w'])
    v2 = jnp.tanh(emb2 @ p['att_w'])
    s = jnp.stack([(v1 @ p['att_u'])[:, 0], (v2 @ p['att_u'])[:, 0]], axis=1) + 1e-6
    alpha = jax.nn.softmax(s, axis=1)
    comb = alpha[:, 0:1] * emb1 + alpha[:, 1:2] * emb2
    d1 = adj_1 @ (comb @ p['dec1_w'])
    d2 = adj_2 @ (comb @ p['dec2_w'])
    f1 = (d1 @ p['mlp3_w1'] + p['mlp3_b1']) @ p['mlp3_w2'] + p['mlp3_b2']
    f2 = d2 @ p['mlp4_w1'] + p['mlp4_b1']
    return emb1, emb2, comb, alpha, f1, f2, emb1, emb2


# ----------------------------------------------------------------------------
# Deterministic parameter init (xavier-uniform-like)
# ----------------------------------------------------------------------------
def _xavier(key, shape):
    fan_in, fan_out = shape[0], shape[1]
    bound = (6.0 / (fan_in + fan_out)) ** 0.5
    return jax.random.uniform(key, shape, jnp.float32, -bound, bound)


def init_params(key, n_i_RNA, n_h_RNA, n_o_RNA,
                n_i_PROT, n_h_PROT, n_o_PROT, dim_output):
    ks = iter(jax.random.split(key, 32))
    p = {}
    # MLP1 : n_i_RNA -> n_h_RNA -> n_o_RNA
    p['mlp1_w1'] = _xavier(next(ks), (n_i_RNA, n_h_RNA))
    p['mlp1_b1'] = jax.random.normal(next(ks), (n_h_RNA,)) * 0.01
    p['mlp1_w2'] = _xavier(next(ks), (n_h_RNA, n_o_RNA))
    p['mlp1_b2'] = jax.random.normal(next(ks), (n_o_RNA,)) * 0.01
    # MLP2 (RNA_ADT): n_i_PROT -> n_o_PROT
    p['mlp2_w1'] = _xavier(next(ks), (n_i_PROT, n_o_PROT))
    p['mlp2_b1'] = jax.random.normal(next(ks), (n_o_PROT,)) * 0.01
    # GCN encoders
    p['enc1_w'] = _xavier(next(ks), (n_o_RNA, dim_output))
    p['enc2_w'] = _xavier(next(ks), (n_o_PROT, dim_output))
    # attention
    p['att_w'] = _xavier(next(ks), (dim_output, dim_output))
    p['att_u'] = _xavier(next(ks), (dim_output, 1))
    # GCN decoders
    p['dec1_w'] = _xavier(next(ks), (dim_output, n_o_RNA))
    p['dec2_w'] = _xavier(next(ks), (dim_output, n_o_PROT))
    # MLP3 : n_o_RNA -> n_h_RNA -> n_i_RNA
    p['mlp3_w1'] = _xavier(next(ks), (n_o_RNA, n_h_RNA))
    p['mlp3_b1'] = jax.random.normal(next(ks), (n_h_RNA,)) * 0.01
    p['mlp3_w2'] = _xavier(next(ks), (n_h_RNA, n_i_RNA))
    p['mlp3_b2'] = jax.random.normal(next(ks), (n_i_RNA,)) * 0.01
    # MLP4 (RNA_ADT): n_o_PROT -> n_i_PROT
    p['mlp4_w1'] = _xavier(next(ks), (n_o_PROT, n_i_PROT))
    p['mlp4_b1'] = jax.random.normal(next(ks), (n_i_PROT,)) * 0.01
    return p


if __name__ == "__main__":
    # small config; M chosen to exercise both the parallel row axis and the
    # "arbitrary" GCN reduction axis (block_m=256, block_k=256 -> 2x2 grid)
    N_CELLS = 512
    n_i_RNA, n_h_RNA, n_o_RNA = 32, 16, 16
    n_i_PROT, n_h_PROT, n_o_PROT = 16, 8, 8
    dim_output = 16

    key = jax.random.PRNGKey(0)
    k_par, k_o1, k_o2, k_a1, k_a2 = jax.random.split(key, 5)

    params = init_params(k_par, n_i_RNA, n_h_RNA, n_o_RNA,
                         n_i_PROT, n_h_PROT, n_o_PROT, dim_output)

    omic1 = jax.random.normal(k_o1, (N_CELLS, n_i_RNA), jnp.float32)
    omic2 = jax.random.normal(k_o2, (N_CELLS, n_i_PROT), jnp.float32)

    # row-normalized random non-negative adjacency (dense stand-in for spmm)
    a1 = jnp.abs(jax.random.normal(k_a1, (N_CELLS, N_CELLS), jnp.float32))
    a2 = jnp.abs(jax.random.normal(k_a2, (N_CELLS, N_CELLS), jnp.float32))
    adj_1 = a1 / jnp.sum(a1, axis=1, keepdims=True)
    adj_2 = a2 / jnp.sum(a2, axis=1, keepdims=True)

    outs = encoder_omics_forward(params, omic1, omic2, adj_1, adj_2,
                                 block_m=256, block_k=256)
    outs = jax.block_until_ready(outs)

    (emb1, emb2, emb_comb, alpha, f1_after, f2_after, _, _) = outs
    assert emb1.shape == (N_CELLS, dim_output)
    assert emb2.shape == (N_CELLS, dim_output)
    assert emb_comb.shape == (N_CELLS, dim_output)
    assert alpha.shape == (N_CELLS, 2)
    assert f1_after.shape == (N_CELLS, n_i_RNA)
    assert f2_after.shape == (N_CELLS, n_i_PROT)

    # attention weights sum to 1 over the 2 modalities (approx reciprocal -> loose tol)
    assert bool(jnp.allclose(jnp.sum(alpha, axis=1), 1.0, atol=5e-3))

    # compare against pure-JAX reference
    refs = encoder_omics_reference(params, omic1, omic2, adj_1, adj_2)
    names = ["emb1", "emb2", "emb_comb", "alpha", "feat1_after", "feat2_after"]
    for name, got, want in zip(names, outs[:6], refs[:6]):
        assert bool(jnp.allclose(got, want, rtol=2e-2, atol=2e-2)), name

    print("KERNEL_OK")
</pallas_src>

<mosaic_0001>
module attributes {stable_mosaic.version = 11 : i64} {
  func.func @_premix_kernel(%arg0: i32, %arg1: memref<256x32xf32, #tpu.memory_space<vmem>>, %arg2: memref<256x16xf32, #tpu.memory_space<vmem>>, %arg3: memref<32x16xf32, #tpu.memory_space<vmem>>, %arg4: memref<1x16xf32, #tpu.memory_space<vmem>>, %arg5: memref<16x16xf32, #tpu.memory_space<vmem>>, %arg6: memref<1x16xf32, #tpu.memory_space<vmem>>, %arg7: memref<16x8xf32, #tpu.memory_space<vmem>>, %arg8: memref<1x8xf32, #tpu.memory_space<vmem>>, %arg9: memref<16x16xf32, #tpu.memory_space<vmem>>, %arg10: memref<8x16xf32, #tpu.memory_space<vmem>>, %arg11: memref<256x16xf32, #tpu.memory_space<vmem>>, %arg12: memref<256x16xf32, #tpu.memory_space<vmem>>) attributes {dimension_semantics = [#tpu.dimension_semantics<parallel>], iteration_bounds = array<i64: 2>, scalar_prefetch = 0 : i64, scratch_operands = 0 : i64, tpu.core_type = #tpu.core_type<tc>, window_params = [{transform_indices = @transform_0, window_bounds = array<i64: 256, 32>}, {transform_indices = @transform_1, window_bounds = array<i64: 256, 16>}, {pipeline_mode = #tpu.pipeline_mode<synchronous>, transform_indices = @transform_2, window_bounds = array<i64: 32, 16>}, {pipeline_mode = #tpu.pipeline_mode<synchronous>, transform_indices = @transform_3, window_bounds = array<i64: 1, 16>}, {pipeline_mode = #tpu.pipeline_mode<synchronous>, transform_indices = @transform_4, window_bounds = array<i64: 16, 16>}, {pipeline_mode = #tpu.pipeline_mode<synchronous>, transform_indices = @transform_5, window_bounds = array<i64: 1, 16>}, {pipeline_mode = #tpu.pipeline_mode<synchronous>, transform_indices = @transform_6, window_bounds = array<i64: 16, 8>}, {pipeline_mode = #tpu.pipeline_mode<synchronous>, transform_indices = @transform_7, window_bounds = array<i64: 1, 8>}, {pipeline_mode = #tpu.pipeline_mode<synchronous>, transform_indices = @transform_8, window_bounds = array<i64: 16, 16>}, {pipeline_mode = #tpu.pipeline_mode<synchronous>, transform_indices = @transform_9, window_bounds = array<i64: 8, 16>}, {transform_indices = @transform_10, window_bounds = array<i64: 256, 16>}, {transform_indices = @transform_11, window_bounds = array<i64: 256, 16>}]} {
    %c0 = arith.constant 0 : index
    %c0_0 = arith.constant 0 : index
    %0 = vector.load %arg1[%c0, %c0_0] : memref<256x32xf32, #tpu.memory_space<vmem>>, vector<256x32xf32>
    %c0_1 = arith.constant 0 : index
    %c0_2 = arith.constant 0 : index
    %1 = vector.load %arg3[%c0_1, %c0_2] : memref<32x16xf32, #tpu.memory_space<vmem>>, vector<32x16xf32>
    %cst = arith.constant dense<0.000000e+00> : vector<256x16xf32>
    %2 = tpu.matmul %0, %1, %cst {dimension_numbers = #tpu.dot_dimension_numbers<[1], [0], [0], [1], [0, 0, 1, 1], [], []>} : vector<256x32xf32>, vector<32x16xf32>, vector<256x16xf32> -> vector<256x16xf32>
    %c0_3 = arith.constant 0 : index
    %c0_4 = arith.constant 0 : index
    %3 = vector.load %arg4[%c0_3, %c0_4] : memref<1x16xf32, #tpu.memory_space<vmem>>, vector<1x16xf32>
    %4 = vector.broadcast %3 : vector<1x16xf32> to vector<256x16xf32>
    %5 = arith.addf %2, %4 : vector<256x16xf32>
    %c0_5 = arith.constant 0 : index
    %c0_6 = arith.constant 0 : index
    %6 = vector.load %arg5[%c0_5, %c0_6] : memref<16x16xf32, #tpu.memory_space<vmem>>, vector<16x16xf32>
    %cst_7 = arith.constant dense<0.000000e+00> : vector<256x16xf32>
    %7 = tpu.matmul %5, %6, %cst_7 {dimension_numbers = #tpu.dot_dimension_numbers<[1], [0], [0], [1], [0, 0, 1, 1], [], []>} : vector<256x16xf32>, vector<16x16xf32>, vector<256x16xf32> -> vector<256x16xf32>
    %c0_8 = arith.constant 0 : index
    %c0_9 = arith.constant 0 : index
    %8 = vector.load %arg6[%c0_8, %c0_9] : memref<1x16xf32, #tpu.memory_space<vmem>>, vector<1x16xf32>
    %9 = vector.broadcast %8 : vector<1x16xf32> to vector<256x16xf32>
    %10 = arith.addf %7, %9 : vector<256x16xf32>
    %c0_10 = arith.constant 0 : index
    %c0_11 = arith.constant 0 : index
    %11 = vector.load %arg9[%c0_10, %c0_11] : memref<16x16xf32, #tpu.memory_space<vmem>>, vector<16x16xf32>
    %cst_12 = arith.constant dense<0.000000e+00> : vector<256x16xf32>
    %12 = tpu.matmul %10, %11, %cst_12 {dimension_numbers = #tpu.dot_dimension_numbers<[1], [0], [0], [1], [0, 0, 1, 1], [], []>} : vector<256x16xf32>, vector<16x16xf32>, vector<256x16xf32> -> vector<256x16xf32>
    %c0_13 = arith.constant 0 : index
    %c0_14 = arith.constant 0 : index
    %13 = vector.load %arg11[%c0_13, %c0_14] : memref<256x16xf32, #tpu.memory_space<vmem>>, vector<256x16xf32>
    tpu.vector_store %arg11[%c0_13, %c0_14], %12 {strides = array<i32>} : memref<256x16xf32, #tpu.memory_space<vmem>>, vector<256x16xf32>,
    %c0_15 = arith.constant 0 : index
    %c0_16 = arith.constant 0 : index
    %14 = vector.load %arg2[%c0_15, %c0_16] : memref<256x16xf32, #tpu.memory_space<vmem>>, vector<256x16xf32>
    %c0_17 = arith.constant 0 : index
    %c0_18 = arith.constant 0 : index
    %15 = vector.load %arg7[%c0_17, %c0_18] : memref<16x8xf32, #tpu.memory_space<vmem>>, vector<16x8xf32>
    %cst_19 = arith.constant dense<0.000000e+00> : vector<256x8xf32>
    %16 = tpu.matmul %14, %15, %cst_19 {dimension_numbers = #tpu.dot_dimension_numbers<[1], [0], [0], [1], [0, 0, 1, 1], [], []>} : vector<256x16xf32>, vector<16x8xf32>, vector<256x8xf32> -> vector<256x8xf32>
    %c0_20 = arith.constant 0 : index
    %c0_21 = arith.constant 0 : index
    %17 = vector.load %arg8[%c0_20, %c0_21] : memref<1x8xf32, #tpu.memory_space<vmem>>, vector<1x8xf32>
    %18 = vector.broadcast %17 : vector<1x8xf32> to vector<256x8xf32>
    %19 = arith.addf %16, %18 : vector<256x8xf32>
    %c0_22 = arith.constant 0 : index
    %c0_23 = arith.constant 0 : index
    %20 = vector.load %arg10[%c0_22, %c0_23] : memref<8x16xf32, #tpu.memory_space<vmem>>, vector<8x16xf32>
    %cst_24 = arith.constant dense<0.000000e+00> : vector<256x16xf32>
    %21 = tpu.matmul %19, %20, %cst_24 {dimension_numbers = #tpu.dot_dimension_numbers<[1], [0], [0], [1], [0, 0, 1, 1], [], []>} : vector<256x8xf32>, vector<8x16xf32>, vector<256x16xf32> -> vector<256x16xf32>
    %c0_25 = arith.constant 0 : index
    %c0_26 = arith.constant 0 : index
    %22 = vector.load %arg12[%c0_25, %c0_26] : memref<256x16xf32, #tpu.memory_space<vmem>>, vector<256x16xf32>
    tpu.vector_store %arg12[%c0_25, %c0_26], %21 {strides = array<i32>} : memref<256x16xf32, #tpu.memory_space<vmem>>, vector<256x16xf32>,
    return
  }
  func.func @transform_0(%arg0: i32) -> (i32, i32) {
    %c0_i32 = arith.constant 0 : i32
    %c0_i32_0 = arith.constant 0 : i32
    return %arg0, %c0_i32 : i32, i32
  }
  func.func @transform_1(%arg0: i32) -> (i32, i32) {
    %c0_i32 = arith.constant 0 : i32
    %c0_i32_0 = arith.constant 0 : i32
    return %arg0, %c0_i32 : i32, i32
  }
  func.func @transform_2(%arg0: i32) -> (i32, i32) {
    %c0_i32 = arith.constant 0 : i32
    %c0_i32_0 = arith.constant 0 : i32
    %c0_i32_1 = arith.constant 0 : i32
    return %c0_i32, %c0_i32_0 : i32, i32
  }
  func.func @transform_3(%arg0: i32) -> (i32, i32) {
    %c0_i32 = arith.constant 0 : i32
    %c0_i32_0 = arith.constant 0 : i32
    %c0_i32_1 = arith.constant 0 : i32
    return %c0_i32, %c0_i32_0 : i32, i32
  }
  func.func @transform_4(%arg0: i32) -> (i32, i32) {
    %c0_i32 = arith.constant 0 : i32
    %c0_i32_0 = arith.constant 0 : i32
    %c0_i32_1 = arith.constant 0 : i32
    return %c0_i32, %c0_i32_0 : i32, i32
  }
  func.func @transform_5(%arg0: i32) -> (i32, i32) {
    %c0_i32 = arith.constant 0 : i32
    %c0_i32_0 = arith.constant 0 : i32
    %c0_i32_1 = arith.constant 0 : i32
    return %c0_i32, %c0_i32_0 : i32, i32
  }
  func.func @transform_6(%arg0: i32) -> (i32, i32) {
    %c0_i32 = arith.constant 0 : i32
    %c0_i32_0 = arith.constant 0 : i32
    %c0_i32_1 = arith.constant 0 : i32
    return %c0_i32, %c0_i32_0 : i32, i32
  }
  func.func @transform_7(%arg0: i32) -> (i32, i32) {
    %c0_i32 = arith.constant 0 : i32
    %c0_i32_0 = arith.constant 0 : i32
    %c0_i32_1 = arith.constant 0 : i32
    return %c0_i32, %c0_i32_0 : i32, i32
  }
  func.func @transform_8(%arg0: i32) -> (i32, i32) {
    %c0_i32 = arith.constant 0 : i32
    %c0_i32_0 = arith.constant 0 : i32
    %c0_i32_1 = arith.constant 0 : i32
    return %c0_i32, %c0_i32_0 : i32, i32
  }
  func.func @transform_9(%arg0: i32) -> (i32, i32) {
    %c0_i32 = arith.constant 0 : i32
    %c0_i32_0 = arith.constant 0 : i32
    %c0_i32_1 = arith.constant 0 : i32
    return %c0_i32, %c0_i32_0 : i32, i32
  }
  func.func @transform_10(%arg0: i32) -> (i32, i32) {
    %c0_i32 = arith.constant 0 : i32
    %c0_i32_0 = arith.constant 0 : i32
    return %arg0, %c0_i32 : i32, i32
  }
  func.func @transform_11(%arg0: i32) -> (i32, i32) {
    %c0_i32 = arith.constant 0 : i32
    %c0_i32_0 = arith.constant 0 : i32
    return %arg0, %c0_i32 : i32, i32
  }
}

module attributes {stable_mosaic.version = 11 : i64} {
  func.func @_enc_att_kernel(%arg0: i32, %arg1: i32, %arg2: memref<256x256xf32, #tpu.memory_space<vmem>>, %arg3: memref<256x256xf32, #tpu.memory_space<vmem>>, %arg4: memref<256x16xf32, #tpu.memory_space<vmem>>, %arg5: memref<256x16xf32, #tpu.memory_space<vmem>>, %arg6: memref<16x16xf32, #tpu.memory_space<vmem>>, %arg7: memref<1x16xf32, #tpu.memory_space<vmem>>, %arg8: memref<16x16xf32, #tpu.memory_space<vmem>>, %arg9: memref<16x8xf32, #tpu.memory_space<vmem>>, %arg10: memref<256x16xf32, #tpu.memory_space<vmem>>, %arg11: memref<256x16xf32, #tpu.memory_space<vmem>>, %arg12: memref<256x16xf32, #tpu.memory_space<vmem>>, %arg13: memref<256x2xf32, #tpu.memory_space<vmem>>, %arg14: memref<256x16xf32, #tpu.memory_space<vmem>>, %arg15: memref<256x8xf32, #tpu.memory_space<vmem>>, %arg16: memref<256x16xf32, #tpu.memory_space<vmem>>, %arg17: memref<256x16xf32, #tpu.memory_space<vmem>>) attributes {dimension_semantics = [#tpu.dimension_semantics<parallel>, #tpu.dimension_semantics<arbitrary>], iteration_bounds = array<i64: 2, 2>, scalar_prefetch = 0 : i64, scratch_operands = 2 : i64, tpu.core_type = #tpu.core_type<tc>, window_params = [{transform_indices = @transform_0, window_bounds = array<i64: 256, 256>}, {transform_indices = @transform_1, window_bounds = array<i64: 256, 256>}, {transform_indices = @transform_2, window_bounds = array<i64: 256, 16>}, {transform_indices = @transform_3, window_bounds = array<i64: 256, 16>}, {pipeline_mode = #tpu.pipeline_mode<synchronous>, transform_indices = @transform_4, window_bounds = array<i64: 16, 16>}, {pipeline_mode = #tpu.pipeline_mode<synchronous>, transform_indices = @transform_5, window_bounds = array<i64: 1, 16>}, {pipeline_mode = #tpu.pipeline_mode<synchronous>, transform_indices = @transform_6, window_bounds = array<i64: 16, 16>}, {pipeline_mode = #tpu.pipeline_mode<synchronous>, transform_indices = @transform_7, window_bounds = array<i64: 16, 8>}, {transform_indices = @transform_8, window_bounds = array<i64: 256, 16>}, {transform_indices = @transform_9, window_bounds = array<i64: 256, 16>}, {transform_indices = @transform_10, window_bounds = array<i64: 256, 16>}, {transform_indices = @transform_11, window_bounds = array<i64: 256, 2>}, {transform_indices = @transform_12, window_bounds = array<i64: 256, 16>}, {transform_indices = @transform_13, window_bounds = array<i64: 256, 8>}]} {
    %c0_i32 = arith.constant 0 : i32
    %0 = arith.cmpi eq, %arg1, %c0_i32 : i32
    %1 = arith.extui %0 : i1 to i32
    %c0_i32_0 = arith.constant 0 : i32
    %2 = arith.cmpi ne, %1, %c0_i32_0 : i32
    scf.if %2 {
      %cst_18 = arith.constant 0.000000e+00 : f32
      %18 = vector.broadcast %cst_18 : f32 to vector<256x16xf32>
      %c0_19 = arith.constant 0 : index
      %c0_20 = arith.constant 0 : index
      %19 = vector.load %arg16[%c0_19, %c0_20] : memref<256x16xf32, #tpu.memory_space<vmem>>, vector<256x16xf32>
      tpu.vector_store %arg16[%c0_19, %c0_20], %18 {strides = array<i32>} : memref<256x16xf32, #tpu.memory_space<vmem>>, vector<256x16xf32>,
      %cst_21 = arith.constant 0.000000e+00 : f32
      %20 = vector.broadcast %cst_21 : f32 to vector<256x16xf32>
      %c0_22 = arith.constant 0 : index
      %c0_23 = arith.constant 0 : index
      %21 = vector.load %arg17[%c0_22, %c0_23] : memref<256x16xf32, #tpu.memory_space<vmem>>, vector<256x16xf32>
      tpu.vector_store %arg17[%c0_22, %c0_23], %20 {strides = array<i32>} : memref<256x16xf32, #tpu.memory_space<vmem>>, vector<256x16xf32>,
    } else {
    }
    %c0 = arith.constant 0 : index
    %c0_1 = arith.constant 0 : index
    %3 = vector.load %arg16[%c0, %c0_1] : memref<256x16xf32, #tpu.memory_space<vmem>>, vector<256x16xf32>
    %c0_2 = arith.constant 0 : index
    %c0_3 = arith.constant 0 : index
    %4 = vector.load %arg2[%c0_2, %c0_3] : memref<256x256xf32, #tpu.memory_space<vmem>>, vector<256x256xf32>
    %c0_4 = arith.constant 0 : index
    %c0_5 = arith.constant 0 : index
    %5 = vector.load %arg4[%c0_4, %c0_5] : memref<256x16xf32, #tpu.memory_space<vmem>>, vector<256x16xf32>
    %cst = arith.constant dense<0.000000e+00> : vector<256x16xf32>
    %6 = tpu.matmul %4, %5, %cst {dimension_numbers = #tpu.dot_dimension_numbers<[1], [0], [0], [1], [0, 0, 1, 1], [], []>} : vector<256x256xf32>, vector<256x16xf32>, vector<256x16xf32> -> vector<256x16xf32>
    %7 = arith.addf %3, %6 : vector<256x16xf32>
    %c0_6 = arith.constant 0 : index
    %c0_7 = arith.constant 0 : index
    %8 = vector.load %arg16[%c0_6, %c0_7] : memref<256x16xf32, #tpu.memory_space<vmem>>, vector<256x16xf32>
    tpu.vector_store %arg16[%c0_6, %c0_7], %7 {strides = array<i32>} : memref<256x16xf32, #tpu.memory_space<vmem>>, vector<256x16xf32>,
    %c0_8 = arith.constant 0 : index
    %c0_9 = arith.constant 0 : index
    %9 = vector.load %arg17[%c0_8, %c0_9] : memref<256x16xf32, #tpu.memory_space<vmem>>, vector<256x16xf32>
    %c0_10 = arith.constant 0 : index
    %c0_11 = arith.constant 0 : index
    %10 = vector.load %arg3[%c0_10, %c0_11] : memref<256x256xf32, #tpu.memory_space<vmem>>, vector<256x256xf32>
    %c0_12 = arith.constant 0 : index
    %c0_13 = arith.constant 0 : index
    %11 = vector.load %arg5[%c0_12, %c0_13] : memref<256x16xf32, #tpu.memory_space<vmem>>, vector<256x16xf32>
    %cst_14 = arith.constant dense<0.000000e+00> : vector<256x16xf32>
    %12 = tpu.matmul %10, %11, %cst_14 {dimension_numbers = #tpu.dot_dimension_numbers<[1], [0], [0], [1], [0, 0, 1, 1], [], []>} : vector<256x256xf32>, vector<256x16xf32>, vector<256x16xf32> -> vector<256x16xf32>
    %13 = arith.addf %9, %12 : vector<256x16xf32>
    %c0_15 = arith.constant 0 : index
    %c0_16 = arith.constant 0 : index
    %14 = vector.load %arg17[%c0_15, %c0_16] : memref<256x16xf32, #tpu.memory_space<vmem>>, vector<256x16xf32>
    tpu.vector_store %arg17[%c0_15, %c0_16], %13 {strides = array<i32>} : memref<256x16xf32, #tpu.memory_space<vmem>>, vector<256x16xf32>,
    %c1_i32 = arith.constant 1 : i32
    %15 = arith.cmpi eq, %arg1, %c1_i32 : i32
    %16 = arith.extui %15 : i1 to i32
    %c0_i32_17 = arith.constant 0 : i32
    %17 = arith.cmpi ne, %16, %c0_i32_17 : i32
    scf.if %17 {
      %c0_18 = arith.constant 0 : index
      %c0_19 = arith.constant 0 : index
      %18 = vector.load %arg16[%c0_18, %c0_19] : memref<256x16xf32, #tpu.memory_space<vmem>>, vector<256x16xf32>
      %c0_20 = arith.constant 0 : index
      %c0_21 = arith.constant 0 : index
      %19 = vector.load %arg17[%c0_20, %c0_21] : memref<256x16xf32, #tpu.memory_space<vmem>>, vector<256x16xf32>
      %c0_22 = arith.constant 0 : index
      %c0_23 = arith.constant 0 : index
      %20 = vector.load %arg10[%c0_22, %c0_23] : memref<256x16xf32, #tpu.memory_space<vmem>>, vector<256x16xf32>
      tpu.vector_store %arg10[%c0_22, %c0_23], %18 {strides = array<i32>} : memref<256x16xf32, #tpu.memory_space<vmem>>, vector<256x16xf32>,
      %c0_24 = arith.constant 0 : index
      %c0_25 = arith.constant 0 : index
      %21 = vector.load %arg11[%c0_24, %c0_25] : memref<256x16xf32, #tpu.memory_space<vmem>>, vector<256x16xf32>
      tpu.vector_store %arg11[%c0_24, %c0_25], %19 {strides = array<i32>} : memref<256x16xf32, #tpu.memory_space<vmem>>, vector<256x16xf32>,
      %c0_26 = arith.constant 0 : index
      %c0_27 = arith.constant 0 : index
      %22 = vector.load %arg6[%c0_26, %c0_27] : memref<16x16xf32, #tpu.memory_space<vmem>>, vector<16x16xf32>
      %c0_28 = arith.constant 0 : index
      %c0_29 = arith.constant 0 : index
      %23 = vector.load %arg7[%c0_28, %c0_29] : memref<1x16xf32, #tpu.memory_space<vmem>>, vector<1x16xf32>
      %cst_30 = arith.constant dense<0.000000e+00> : vector<256x16xf32>
      %24 = tpu.matmul %18, %22, %cst_30 {dimension_numbers = #tpu.dot_dimension_numbers<[1], [0], [0], [1], [0, 0, 1, 1], [], []>} : vector<256x16xf32>, vector<16x16xf32>, vector<256x16xf32> -> vector<256x16xf32>
      %25 = math.tanh %24 : vector<256x16xf32>
      %cst_31 = arith.constant dense<0.000000e+00> : vector<256x16xf32>
      %26 = tpu.matmul %19, %22, %cst_31 {dimension_numbers = #tpu.dot_dimension_numbers<[1], [0], [0], [1], [0, 0, 1, 1], [], []>} : vector<256x16xf32>, vector<16x16xf32>, vector<256x16xf32> -> vector<256x16xf32>
      %27 = math.tanh %26 : vector<256x16xf32>
      %28 = vector.broadcast %23 : vector<1x16xf32> to vector<256x16xf32>
      %29 = arith.mulf %25, %28 : vector<256x16xf32>
      %cst_32 = arith.constant dense<0.000000e+00> : vector<256xf32>
      %30 = vector.multi_reduction <add>, %29, %cst_32 [1] : vector<256x16xf32> to vector<256xf32>
      %31 = vector.shape_cast %30 : vector<256xf32> to vector<256x1xf32>
      %cst_33 = arith.constant 9.99999997E-7 : f32
      %32 = vector.broadcast %cst_33 : f32 to vector<256x1xf32>
      %33 = arith.addf %31, %32 : vector<256x1xf32>
      %34 = vector.broadcast %23 : vector<1x16xf32> to vector<256x16xf32>
      %35 = arith.mulf %27, %34 : vector<256x16xf32>
      %cst_34 = arith.constant dense<0.000000e+00> : vector<256xf32>
      %36 = vector.multi_reduction <add>, %35, %cst_34 [1] : vector<256x16xf32> to vector<256xf32>
      %37 = vector.shape_cast %36 : vector<256xf32> to vector<256x1xf32>
      %cst_35 = arith.constant 9.99999997E-7 : f32
      %38 = vector.broadcast %cst_35 : f32 to vector<256x1xf32>
      %39 = arith.addf %37, %38 : vector<256x1xf32>
      %40 = arith.maximumf %33, %39 : vector<256x1xf32>
      %41 = arith.subf %33, %40 : vector<256x1xf32>
      %42 = math.exp %41 : vector<256x1xf32>
      %43 = arith.subf %39, %40 : vector<256x1xf32>
      %44 = math.exp %43 : vector<256x1xf32>
      %45 = arith.addf %42, %44 : vector<256x1xf32>
      %46 = tpu.reciprocal %45 {approx = true} : vector<256x1xf32> -> vector<256x1xf32>
      %47 = arith.mulf %42, %46 : vector<256x1xf32>
      %48 = arith.mulf %44, %46 : vector<256x1xf32>
      %49 = vector.broadcast %47 : vector<256x1xf32> to vector<256x16xf32>
      %50 = arith.mulf %49, %18 : vector<256x16xf32>
      %51 = vector.broadcast %48 : vector<256x1xf32> to vector<256x16xf32>
      %52 = arith.mulf %51, %19 : vector<256x16xf32>
      %53 = arith.addf %50, %52 : vector<256x16xf32>
      %c0_36 = arith.constant 0 : index
      %c0_37 = arith.constant 0 : index
      %54 = vector.load %arg12[%c0_36, %c0_37] : memref<256x16xf32, #tpu.memory_space<vmem>>, vector<256x16xf32>
      tpu.vector_store %arg12[%c0_36, %c0_37], %53 {strides = array<i32>} : memref<256x16xf32, #tpu.memory_space<vmem>>, vector<256x16xf32>,
      %55 = tpu.iota {dimensions = array<i32: 1>} : vector<256x2xi32>
      %c0_i32_38 = arith.constant 0 : i32
      %56 = vector.broadcast %c0_i32_38 : i32 to vector<256x2xi32>
      %57 = arith.cmpi eq, %55, %56 : vector<256x2xi32>
      %58 = vector.shape_cast %47 : vector<256x1xf32> to vector<256x1xf32>
      %59 = vector.broadcast %58 : vector<256x1xf32> to vector<256x2xf32>
      %60 = vector.shape_cast %48 : vector<256x1xf32> to vector<256x1xf32>
      %61 = vector.broadcast %60 : vector<256x1xf32> to vector<256x2xf32>
      %62 = arith.select %57, %59, %61 : vector<256x2xi1>, vector<256x2xf32>
      %c0_39 = arith.constant 0 : index
      %c0_40 = arith.constant 0 : index
      %63 = vector.load %arg13[%c0_39, %c0_40] : memref<256x2xf32, #tpu.memory_space<vmem>>, vector<256x2xf32>
      tpu.vector_store %arg13[%c0_39, %c0_40], %62 {strides = array<i32>} : memref<256x2xf32, #tpu.memory_space<vmem>>, vector<256x2xf32>,
      %c0_41 = arith.constant 0 : index
      %c0_42 = arith.constant 0 : index
      %64 = vector.load %arg8[%c0_41, %c0_42] : memref<16x16xf32, #tpu.memory_space<vmem>>, vector<16x16xf32>
      %cst_43 = arith.constant dense<0.000000e+00> : vector<256x16xf32>
      %65 = tpu.matmul %53, %64, %cst_43 {dimension_numbers = #tpu.dot_dimension_numbers<[1], [0], [0], [1], [0, 0, 1, 1], [], []>} : vector<256x16xf32>, vector<16x16xf32>, vector<256x16xf32> -> vector<256x16xf32>
      %c0_44 = arith.constant 0 : index
      %c0_45 = arith.constant 0 : index
      %66 = vector.load %arg14[%c0_44, %c0_45] : memref<256x16xf32, #tpu.memory_space<vmem>>, vector<256x16xf32>
      tpu.vector_store %arg14[%c0_44, %c0_45], %65 {strides = array<i32>} : memref<256x16xf32, #tpu.memory_space<vmem>>, vector<256x16xf32>,
      %c0_46 = arith.constant 0 : index
      %c0_47 = arith.constant 0 : index
      %67 = vector.load %arg9[%c0_46, %c0_47] : memref<16x8xf32, #tpu.memory_space<vmem>>, vector<16x8xf32>
      %cst_48 = arith.constant dense<0.000000e+00> : vector<256x8xf32>
      %68 = tpu.matmul %53, %67, %cst_48 {dimension_numbers = #tpu.dot_dimension_numbers<[1], [0], [0], [1], [0, 0, 1, 1], [], []>} : vector<256x16xf32>, vector<16x8xf32>, vector<256x8xf32> -> vector<256x8xf32>
      %c0_49 = arith.constant 0 : index
      %c0_50 = arith.constant 0 : index
      %69 = vector.load %arg15[%c0_49, %c0_50] : memref<256x8xf32, #tpu.memory_space<vmem>>, vector<256x8xf32>
      tpu.vector_store %arg15[%c0_49, %c0_50], %68 {strides = array<i32>} : memref<256x8xf32, #tpu.memory_space<vmem>>, vector<256x8xf32>,
    } else {
    }
    return
  }
  func.func @transform_0(%arg0: i32, %arg1: i32) -> (i32, i32) {
    %c0_i32 = arith.constant 0 : i32
    return %arg0, %arg1 : i32, i32
  }
  func.func @transform_1(%arg0: i32, %arg1: i32) -> (i32, i32) {
    %c0_i32 = arith.constant 0 : i32
    return %arg0, %arg1 : i32, i32
  }
  func.func @transform_2(%arg0: i32, %arg1: i32) -> (i32, i32) {
    %c0_i32 = arith.constant 0 : i32
    %c0_i32_0 = arith.constant 0 : i32
    return %arg1, %c0_i32 : i32, i32
  }
  func.func @transform_3(%arg0: i32, %arg1: i32) -> (i32, i32) {
    %c0_i32 = arith.constant 0 : i32
    %c0_i32_0 = arith.constant 0 : i32
    return %arg1, %c0_i32 : i32, i32
  }
  func.func @transform_4(%arg0: i32, %arg1: i32) -> (i32, i32) {
    %c0_i32 = arith.constant 0 : i32
    %c0_i32_0 = arith.constant 0 : i32
    %c0_i32_1 = arith.constant 0 : i32
    return %c0_i32, %c0_i32_0 : i32, i32
  }
  func.func @transform_5(%arg0: i32, %arg1: i32) -> (i32, i32) {
    %c0_i32 = arith.constant 0 : i32
    %c0_i32_0 = arith.constant 0 : i32
    %c0_i32_1 = arith.constant 0 : i32
    return %c0_i32, %c0_i32_0 : i32, i32
  }
  func.func @transform_6(%arg0: i32, %arg1: i32) -> (i32, i32) {
    %c0_i32 = arith.constant 0 : i32
    %c0_i32_0 = arith.constant 0 : i32
    %c0_i32_1 = arith.constant 0 : i32
    return %c0_i32, %c0_i32_0 : i32, i32
  }
  func.func @transform_7(%arg0: i32, %arg1: i32) -> (i32, i32) {
    %c0_i32 = arith.constant 0 : i32
    %c0_i32_0 = arith.constant 0 : i32
    %c0_i32_1 = arith.constant 0 : i32
    return %c0_i32, %c0_i32_0 : i32, i32
  }
  func.func @transform_8(%arg0: i32, %arg1: i32) -> (i32, i32) {
    %c0_i32 = arith.constant 0 : i32
    %c0_i32_0 = arith.constant 0 : i32
    return %arg0, %c0_i32 : i32, i32
  }
  func.func @transform_9(%arg0: i32, %arg1: i32) -> (i32, i32) {
    %c0_i32 = arith.constant 0 : i32
    %c0_i32_0 = arith.constant 0 : i32
    return %arg0, %c0_i32 : i32, i32
  }
  func.func @transform_10(%arg0: i32, %arg1: i32) -> (i32, i32) {
    %c0_i32 = arith.constant 0 : i32
    %c0_i32_0 = arith.constant 0 : i32
    return %arg0, %c0_i32 : i32, i32
  }
  func.func @transform_11(%arg0: i32, %arg1: i32) -> (i32, i32) {
    %c0_i32 = arith.constant 0 : i32
    %c0_i32_0 = arith.constant 0 : i32
    return %arg0, %c0_i32 : i32, i32
  }
  func.func @transform_12(%arg0: i32, %arg1: i32) -> (i32, i32) {
    %c0_i32 = arith.constant 0 : i32
    %c0_i32_0 = arith.constant 0 : i32
    return %arg0, %c0_i32 : i32, i32
  }
  func.func @transform_13(%arg0: i32, %arg1: i32) -> (i32, i32) {
    %c0_i32 = arith.constant 0 : i32
    %c0_i32_0 = arith.constant 0 : i32
    return %arg0, %c0_i32 : i32, i32
  }
}

module attributes {stable_mosaic.version = 11 : i64} {
  func.func @_dec_head_kernel(%arg0: i32, %arg1: i32, %arg2: memref<256x256xf32, #tpu.memory_space<vmem>>, %arg3: memref<256x256xf32, #tpu.memory_space<vmem>>, %arg4: memref<256x16xf32, #tpu.memory_space<vmem>>, %arg5: memref<256x8xf32, #tpu.memory_space<vmem>>, %arg6: memref<16x16xf32, #tpu.memory_space<vmem>>, %arg7: memref<1x16xf32, #tpu.memory_space<vmem>>, %arg8: memref<16x32xf32, #tpu.memory_space<vmem>>, %arg9: memref<1x32xf32, #tpu.memory_space<vmem>>, %arg10: memref<8x16xf32, #tpu.memory_space<vmem>>, %arg11: memref<1x16xf32, #tpu.memory_space<vmem>>, %arg12: memref<256x32xf32, #tpu.memory_space<vmem>>, %arg13: memref<256x16xf32, #tpu.memory_space<vmem>>, %arg14: memref<256x16xf32, #tpu.memory_space<vmem>>, %arg15: memref<256x8xf32, #tpu.memory_space<vmem>>) attributes {dimension_semantics = [#tpu.dimension_semantics<parallel>, #tpu.dimension_semantics<arbitrary>], iteration_bounds = array<i64: 2, 2>, scalar_prefetch = 0 : i64, scratch_operands = 2 : i64, tpu.core_type = #tpu.core_type<tc>, window_params = [{transform_indices = @transform_0, window_bounds = array<i64: 256, 256>}, {transform_indices = @transform_1, window_bounds = array<i64: 256, 256>}, {transform_indices = @transform_2, window_bounds = array<i64: 256, 16>}, {transform_indices = @transform_3, window_bounds = array<i64: 256, 8>}, {pipeline_mode = #tpu.pipeline_mode<synchronous>, transform_indices = @transform_4, window_bounds = array<i64: 16, 16>}, {pipeline_mode = #tpu.pipeline_mode<synchronous>, transform_indices = @transform_5, window_bounds = array<i64: 1, 16>}, {pipeline_mode = #tpu.pipeline_mode<synchronous>, transform_indices = @transform_6, window_bounds = array<i64: 16, 32>}, {pipeline_mode = #tpu.pipeline_mode<synchronous>, transform_indices = @transform_7, window_bounds = array<i64: 1, 32>}, {pipeline_mode = #tpu.pipeline_mode<synchronous>, transform_indices = @transform_8, window_bounds = array<i64: 8, 16>}, {pipeline_mode = #tpu.pipeline_mode<synchronous>, transform_indices = @transform_9, window_bounds = array<i64: 1, 16>}, {transform_indices = @transform_10, window_bounds = array<i64: 256, 32>}, {transform_indices = @transform_11, window_bounds = array<i64: 256, 16>}]} {
    %c0_i32 = arith.constant 0 : i32
    %0 = arith.cmpi eq, %arg1, %c0_i32 : i32
    %1 = arith.extui %0 : i1 to i32
    %c0_i32_0 = arith.constant 0 : i32
    %2 = arith.cmpi ne, %1, %c0_i32_0 : i32
    scf.if %2 {
      %cst_18 = arith.constant 0.000000e+00 : f32
      %18 = vector.broadcast %cst_18 : f32 to vector<256x16xf32>
      %c0_19 = arith.constant 0 : index
      %c0_20 = arith.constant 0 : index
      %19 = vector.load %arg14[%c0_19, %c0_20] : memref<256x16xf32, #tpu.memory_space<vmem>>, vector<256x16xf32>
      tpu.vector_store %arg14[%c0_19, %c0_20], %18 {strides = array<i32>} : memref<256x16xf32, #tpu.memory_space<vmem>>, vector<256x16xf32>,
      %cst_21 = arith.constant 0.000000e+00 : f32
      %20 = vector.broadcast %cst_21 : f32 to vector<256x8xf32>
      %c0_22 = arith.constant 0 : index
      %c0_23 = arith.constant 0 : index
      %21 = vector.load %arg15[%c0_22, %c0_23] : memref<256x8xf32, #tpu.memory_space<vmem>>, vector<256x8xf32>
      tpu.vector_store %arg15[%c0_22, %c0_23], %20 {strides = array<i32>} : memref<256x8xf32, #tpu.memory_space<vmem>>, vector<256x8xf32>,
    } else {
    }
    %c0 = arith.constant 0 : index
    %c0_1 = arith.constant 0 : index
    %3 = vector.load %arg14[%c0, %c0_1] : memref<256x16xf32, #tpu.memory_space<vmem>>, vector<256x16xf32>
    %c0_2 = arith.constant 0 : index
    %c0_3 = arith.constant 0 : index
    %4 = vector.load %arg2[%c0_2, %c0_3] : memref<256x256xf32, #tpu.memory_space<vmem>>, vector<256x256xf32>
    %c0_4 = arith.constant 0 : index
    %c0_5 = arith.constant 0 : index
    %5 = vector.load %arg4[%c0_4, %c0_5] : memref<256x16xf32, #tpu.memory_space<vmem>>, vector<256x16xf32>
    %cst = arith.constant dense<0.000000e+00> : vector<256x16xf32>
    %6 = tpu.matmul %4, %5, %cst {dimension_numbers = #tpu.dot_dimension_numbers<[1], [0], [0], [1], [0, 0, 1, 1], [], []>} : vector<256x256xf32>, vector<256x16xf32>, vector<256x16xf32> -> vector<256x16xf32>
    %7 = arith.addf %3, %6 : vector<256x16xf32>
    %c0_6 = arith.constant 0 : index
    %c0_7 = arith.constant 0 : index
    %8 = vector.load %arg14[%c0_6, %c0_7] : memref<256x16xf32, #tpu.memory_space<vmem>>, vector<256x16xf32>
    tpu.vector_store %arg14[%c0_6, %c0_7], %7 {strides = array<i32>} : memref<256x16xf32, #tpu.memory_space<vmem>>, vector<256x16xf32>,
    %c0_8 = arith.constant 0 : index
    %c0_9 = arith.constant 0 : index
    %9 = vector.load %arg15[%c0_8, %c0_9] : memref<256x8xf32, #tpu.memory_space<vmem>>, vector<256x8xf32>
    %c0_10 = arith.constant 0 : index
    %c0_11 = arith.constant 0 : index
    %10 = vector.load %arg3[%c0_10, %c0_11] : memref<256x256xf32, #tpu.memory_space<vmem>>, vector<256x256xf32>
    %c0_12 = arith.constant 0 : index
    %c0_13 = arith.constant 0 : index
    %11 = vector.load %arg5[%c0_12, %c0_13] : memref<256x8xf32, #tpu.memory_space<vmem>>, vector<256x8xf32>
    %cst_14 = arith.constant dense<0.000000e+00> : vector<256x8xf32>
    %12 = tpu.matmul %10, %11, %cst_14 {dimension_numbers = #tpu.dot_dimension_numbers<[1], [0], [0], [1], [0, 0, 1, 1], [], []>} : vector<256x256xf32>, vector<256x8xf32>, vector<256x8xf32> -> vector<256x8xf32>
    %13 = arith.addf %9, %12 : vector<256x8xf32>
    %c0_15 = arith.constant 0 : index
    %c0_16 = arith.constant 0 : index
    %14 = vector.load %arg15[%c0_15, %c0_16] : memref<256x8xf32, #tpu.memory_space<vmem>>, vector<256x8xf32>
    tpu.vector_store %arg15[%c0_15, %c0_16], %13 {strides = array<i32>} : memref<256x8xf32, #tpu.memory_space<vmem>>, vector<256x8xf32>,
    %c1_i32 = arith.constant 1 : i32
    %15 = arith.cmpi eq, %arg1, %c1_i32 : i32
    %16 = arith.extui %15 : i1 to i32
    %c0_i32_17 = arith.constant 0 : i32
    %17 = arith.cmpi ne, %16, %c0_i32_17 : i32
    scf.if %17 {
      %c0_18 = arith.constant 0 : index
      %c0_19 = arith.constant 0 : index
      %18 = vector.load %arg14[%c0_18, %c0_19] : memref<256x16xf32, #tpu.memory_space<vmem>>, vector<256x16xf32>
      %c0_20 = arith.constant 0 : index
      %c0_21 = arith.constant 0 : index
      %19 = vector.load %arg15[%c0_20, %c0_21] : memref<256x8xf32, #tpu.memory_space<vmem>>, vector<256x8xf32>
      %c0_22 = arith.constant 0 : index
      %c0_23 = arith.constant 0 : index
      %20 = vector.load %arg6[%c0_22, %c0_23] : memref<16x16xf32, #tpu.memory_space<vmem>>, vector<16x16xf32>
      %cst_24 = arith.constant dense<0.000000e+00> : vector<256x16xf32>
      %21 = tpu.matmul %18, %20, %cst_24 {dimension_numbers = #tpu.dot_dimension_numbers<[1], [0], [0], [1], [0, 0, 1, 1], [], []>} : vector<256x16xf32>, vector<16x16xf32>, vector<256x16xf32> -> vector<256x16xf32>
      %c0_25 = arith.constant 0 : index
      %c0_26 = arith.constant 0 : index
      %22 = vector.load %arg7[%c0_25, %c0_26] : memref<1x16xf32, #tpu.memory_space<vmem>>, vector<1x16xf32>
      %23 = vector.broadcast %22 : vector<1x16xf32> to vector<256x16xf32>
      %24 = arith.addf %21, %23 : vector<256x16xf32>
      %c0_27 = arith.constant 0 : index
      %c0_28 = arith.constant 0 : index
      %25 = vector.load %arg8[%c0_27, %c0_28] : memref<16x32xf32, #tpu.memory_space<vmem>>, vector<16x32xf32>
      %cst_29 = arith.constant dense<0.000000e+00> : vector<256x32xf32>
      %26 = tpu.matmul %24, %25, %cst_29 {dimension_numbers = #tpu.dot_dimension_numbers<[1], [0], [0], [1], [0, 0, 1, 1], [], []>} : vector<256x16xf32>, vector<16x32xf32>, vector<256x32xf32> -> vector<256x32xf32>
      %c0_30 = arith.constant 0 : index
      %c0_31 = arith.constant 0 : index
      %27 = vector.load %arg9[%c0_30, %c0_31] : memref<1x32xf32, #tpu.memory_space<vmem>>, vector<1x32xf32>
      %28 = vector.broadcast %27 : vector<1x32xf32> to vector<256x32xf32>
      %29 = arith.addf %26, %28 : vector<256x32xf32>
      %c0_32 = arith.constant 0 : index
      %c0_33 = arith.constant 0 : index
      %30 = vector.load %arg12[%c0_32, %c0_33] : memref<256x32xf32, #tpu.memory_space<vmem>>, vector<256x32xf32>
      tpu.vector_store %arg12[%c0_32, %c0_33], %29 {strides = array<i32>} : memref<256x32xf32, #tpu.memory_space<vmem>>, vector<256x32xf32>,
      %c0_34 = arith.constant 0 : index
      %c0_35 = arith.constant 0 : index
      %31 = vector.load %arg10[%c0_34, %c0_35] : memref<8x16xf32, #tpu.memory_space<vmem>>, vector<8x16xf32>
      %cst_36 = arith.constant dense<0.000000e+00> : vector<256x16xf32>
      %32 = tpu.matmul %19, %31, %cst_36 {dimension_numbers = #tpu.dot_dimension_numbers<[1], [0], [0], [1], [0, 0, 1, 1], [], []>} : vector<256x8xf32>, vector<8x16xf32>, vector<256x16xf32> -> vector<256x16xf32>
      %c0_37 = arith.constant 0 : index
      %c0_38 = arith.constant 0 : index
      %33 = vector.load %arg11[%c0_37, %c0_38] : memref<1x16xf32, #tpu.memory_space<vmem>>, vector<1x16xf32>
      %34 = vector.broadcast %33 : vector<1x16xf32> to vector<256x16xf32>
      %35 = arith.addf %32, %34 : vector<256x16xf32>
      %c0_39 = arith.constant 0 : index
      %c0_40 = arith.constant 0 : index
      %36 = vector.load %arg13[%c0_39, %c0_40] : memref<256x16xf32, #tpu.memory_space<vmem>>, vector<256x16xf32>
      tpu.vector_store %arg13[%c0_39, %c0_40], %35 {strides = array<i32>} : memref<256x16xf32, #tpu.memory_space<vmem>>, vector<256x16xf32>,
    } else {
    }
    return
  }
  func.func @transform_0(%arg0: i32, %arg1: i32) -> (i32, i32) {
    %c0_i32 = arith.constant 0 : i32
    return %arg0, %arg1 : i32, i32
  }
  func.func @transform_1(%arg0: i32, %arg1: i32) -> (i32, i32) {
    %c0_i32 = arith.constant 0 : i32
    return %arg0, %arg1 : i32, i32
  }
  func.func @transform_2(%arg0: i32, %arg1: i32) -> (i32, i32) {
    %c0_i32 = arith.constant 0 : i32
    %c0_i32_0 = arith.constant 0 : i32
    return %arg1, %c0_i32 : i32, i32
  }
  func.func @transform_3(%arg0: i32, %arg1: i32) -> (i32, i32) {
    %c0_i32 = arith.constant 0 : i32
    %c0_i32_0 = arith.constant 0 : i32
    return %arg1, %c0_i32 : i32, i32
  }
  func.func @transform_4(%arg0: i32, %arg1: i32) -> (i32, i32) {
    %c0_i32 = arith.constant 0 : i32
    %c0_i32_0 = arith.constant 0 : i32
    %c0_i32_1 = arith.constant 0 : i32
    return %c0_i32, %c0_i32_0 : i32, i32
  }
  func.func @transform_5(%arg0: i32, %arg1: i32) -> (i32, i32) {
    %c0_i32 = arith.constant 0 : i32
    %c0_i32_0 = arith.constant 0 : i32
    %c0_i32_1 = arith.constant 0 : i32
    return %c0_i32, %c0_i32_0 : i32, i32
  }
  func.func @transform_6(%arg0: i32, %arg1: i32) -> (i32, i32) {
    %c0_i32 = arith.constant 0 : i32
    %c0_i32_0 = arith.constant 0 : i32
    %c0_i32_1 = arith.constant 0 : i32
    return %c0_i32, %c0_i32_0 : i32, i32
  }
  func.func @transform_7(%arg0: i32, %arg1: i32) -> (i32, i32) {
    %c0_i32 = arith.constant 0 : i32
    %c0_i32_0 = arith.constant 0 : i32
    %c0_i32_1 = arith.constant 0 : i32
    return %c0_i32, %c0_i32_0 : i32, i32
  }
  func.func @transform_8(%arg0: i32, %arg1: i32) -> (i32, i32) {
    %c0_i32 = arith.constant 0 : i32
    %c0_i32_0 = arith.constant 0 : i32
    %c0_i32_1 = arith.constant 0 : i32
    return %c0_i32, %c0_i32_0 : i32, i32
  }
  func.func @transform_9(%arg0: i32, %arg1: i32) -> (i32, i32) {
    %c0_i32 = arith.constant 0 : i32
    %c0_i32_0 = arith.constant 0 : i32
    %c0_i32_1 = arith.constant 0 : i32
    return %c0_i32, %c0_i32_0 : i32, i32
  }
  func.func @transform_10(%arg0: i32, %arg1: i32) -> (i32, i32) {
    %c0_i32 = arith.constant 0 : i32
    %c0_i32_0 = arith.constant 0 : i32
    return %arg0, %c0_i32 : i32, i32
  }
  func.func @transform_11(%arg0: i32, %arg1: i32) -> (i32, i32) {
    %c0_i32 = arith.constant 0 : i32
    %c0_i32_0 = arith.constant 0 : i32
    return %arg0, %c0_i32 : i32, i32
  }
}

</mosaic_0001>

<llo_original>
// kernel: encoder_omics_forward.3
$region0: #{encoder_omics_forward.3}
  #allocation0 [shape = 'u32[]', space=smem, size = 0x4, offset = 0x4, fixed_abs, tag = 'smem constant byte address 0x4 - core index']
  #allocation1 [shape = 'u32[144,128]{1,0:T(1,128)}', space=vmem, size = 0x12000, scoped, tag = 'internal scratch']
  %s0 = inlined_call_operand.vmem [shape: f32[512,32], index: 0, kind: input, shape index: {}]
  %s1 = inlined_call_operand.vmem [shape: f32[512,16], index: 1, kind: input, shape index: {}]
  %s2 = inlined_call_operand.vmem [shape: f32[32,16], index: 2, kind: input, shape index: {}]
  %s3 = inlined_call_operand.hbm [shape: f32[1,16], index: 3, kind: input, shape index: {}]
  %s4 = inlined_call_operand.hbm [shape: f32[16,16], index: 4, kind: input, shape index: {}]
  %s5 = inlined_call_operand.hbm [shape: f32[1,16], index: 5, kind: input, shape index: {}]
  %s6 = inlined_call_operand.vmem [shape: f32[16,8], index: 6, kind: input, shape index: {}]
  %s7 = inlined_call_operand.hbm [shape: f32[1,8], index: 7, kind: input, shape index: {}]
  %s8 = inlined_call_operand.hbm [shape: f32[16,16], index: 8, kind: input, shape index: {}]
  %s9 = inlined_call_operand.hbm [shape: f32[8,16], index: 9, kind: input, shape index: {}]
  %s10 = inlined_call_operand.vmem [shape: f32[512,16], index: 10, kind: output, shape index: {0}]
  %s11 = inlined_call_operand.vmem [shape: f32[512,16], index: 11, kind: output, shape index: {1}]
  %12 = xla_tuple %s10, %s11
  %s13 = sld [smem:[#allocation0]]
  $region105: #{encoder_omics_forward.3} parent=0
    _
  %s15 = ssub.s32 1, %s13
  %s16 = scalar_select 0, %s15, %s13
  $region1: #{encoder_omics_forward.3} parent=0
    #allocation2 [shape = 'u8[512]{0}', space=vmem, size = 0x400, scoped, tag = 'input window, operand 3, single buffered']
    #allocation3 [shape = 's32[2]{0}', space=sflag, size = 0x8, scoped, tag = 'scoped memory for encoder_omics_forward.3']
    #allocation4 [shape = 'u8[8192]{0}', space=vmem, size = 0x2000, scoped, tag = 'input window, operand 4, single buffered']
    #allocation5 [shape = 's32[1]{0}', space=sflag, size = 0x4, scoped, tag = 'scoped memory for encoder_omics_forward.3']
    #allocation6 [shape = 'u8[512]{0}', space=vmem, size = 0x400, scoped, tag = 'input window, operand 5, single buffered']
    #allocation7 [shape = 'u8[512]{0}', space=vmem, size = 0x400, scoped, tag = 'input window, operand 7, single buffered']
    #allocation8 [shape = 's32[1]{0}', space=sflag, size = 0x4, scoped, tag = 'scoped memory for encoder_omics_forward.3']
    #allocation9 [shape = 'u8[8192]{0}', space=vmem, size = 0x2000, scoped, tag = 'input window, operand 8, single buffered']
    #allocation10 [shape = 'u8[4096]{0}', space=vmem, size = 0x1000, scoped, tag = 'input window, operand 9, single buffered']
    #allocation11 [shape = 's32[1]{0}', space=sflag, size = 0x4, scoped, tag = 'scoped memory for encoder_omics_forward.3']
    %17 = vsyncpa [#allocation3], 0
    %18 = vsyncpa [#allocation5], 0
    %19 = vsyncpa [#allocation8], 0
    %20 = vsyncpa [#allocation11], 0
    loop: start=0, step=1, limit=4
    $region2: #{encoder_omics_forward.3} parent=1 // loop_pre_header
      _
    $region3: #{encoder_omics_forward.3} parent=1 // loop_header
      %s22 = sphi 0, %s26
      %p23 = scmp.ge.s32.totalorder %s22, 4
      %s32 = sphi 0, %s34
      %s35 = sphi 0, %s32
      %s36 = sphi 0, %s35
      %s52 = sphi 0, %s36
      %s58 = sphi 0, %s60
      %s61 = sphi 0, %s58
      %s62 = sphi 0, %s61
      %s78 = sphi 0, %s62
      %s82 = sphi 0, %s82
      %s84 = sphi 0, %s82
      %s85 = sphi 0, %s84
      %s99 = sphi 0, %s85
      %s103 = sphi 0, %s103
      %s105 = sphi 0, %s103
      %s106 = sphi 0, %s105
      %s120 = sphi 0, %s106
      %s124 = sphi 0, %s124
      %s126 = sphi 0, %s124
      %s127 = sphi 0, %s126
      %s141 = sphi 0, %s127
      %s145 = sphi 0, %s145
      %s147 = sphi 0, %s145
      %s148 = sphi 0, %s147
      %s162 = sphi 0, %s148
      %s166 = sphi 0, %s166
      %s168 = sphi 0, %s166
      %s169 = sphi 0, %s168
      %s183 = sphi 0, %s169
      %s187 = sphi 0, %s187
      %s189 = sphi 0, %s187
      %s190 = sphi 0, %s189
      %s204 = sphi 0, %s190
      %s208 = sphi 0, %s208
      %s210 = sphi 0, %s208
      %s211 = sphi 0, %s210
      %s225 = sphi 0, %s211
      %s229 = sphi 0, %s229
      %s231 = sphi 0, %s229
      %s232 = sphi 0, %s231
      %s246 = sphi 0, %s232
      %s252 = sphi 0, %s254
      %s255 = sphi 0, %s252
      %s256 = sphi 0, %s255
      %s272 = sphi 0, %s256
      %s278 = sphi 0, %s280
      %s281 = sphi 0, %s278
      %s282 = sphi 0, %s281
      %s298 = sphi 0, %s282
    $region4: #{encoder_omics_forward.3} parent=1 // loop_header_branch
      %25 = sbr.rel (%p23) target = $region8
    $region5: #{encoder_omics_forward.3} parent=1 // loop_body
      %s27 = ssub.s32 %s22, 1
      %s28 = ssub.s32 %s22, 2
      %s29 = sadd.s32 %s22, 1
      %s30 = ssub.s32 %s22, %s29
      %p31 = scmp.eq.s32.totalorder %s30, 0
      %s33 = sadd.s32 %s32, 1
      %s34 = scalar_select %p31, %s32, %s33
      %p37 = pneg %p31
      %p38 = scmp.eq.s32.totalorder %s22, 1
      %p39 = por %p37, %p38
      %p40 = scmp.ne.s32.totalorder %s32, %s35
      %p41 = scmp.eq.s32.totalorder %s22, 0
      %p42 = por %p40, %p41
      %p43 = scmp.ne.s32.totalorder %s32, %s35
      %p44 = scmp.eq.s32.totalorder %s27, 1
      %p45 = por %p43, %p44
      %p46 = scmp.ne.s32.totalorder %s35, %s36
      %p47 = scmp.eq.s32.totalorder %s27, 0
      %p48 = por %p46, %p47
      %p49 = scmp.ne.s32.totalorder %s35, %s36
      %p50 = scmp.eq.s32.totalorder %s28, 1
      %p51 = por %p49, %p50
      %p53 = scmp.ne.s32.totalorder %s36, %s52
      %p54 = scmp.eq.s32.totalorder %s28, 0
      %p55 = por %p53, %p54
      %s56 = ssub.s32 %s22, %s29
      %p57 = scmp.eq.s32.totalorder %s56, 0
      %s59 = sadd.s32 %s58, 1
      %s60 = scalar_select %p57, %s58, %s59
      %p63 = pneg %p57
      %p64 = scmp.eq.s32.totalorder %s22, 1
      %p65 = por %p63, %p64
      %p66 = scmp.ne.s32.totalorder %s58, %s61
      %p67 = scmp.eq.s32.totalorder %s22, 0
      %p68 = por %p66, %p67
      %p69 = scmp.ne.s32.totalorder %s58, %s61
      %p70 = scmp.eq.s32.totalorder %s27, 1
      %p71 = por %p69, %p70
      %p72 = scmp.ne.s32.totalorder %s61, %s62
      %p73 = scmp.eq.s32.totalorder %s27, 0
      %p74 = por %p72, %p73
      %p75 = scmp.ne.s32.totalorder %s61, %s62
      %p76 = scmp.eq.s32.totalorder %s28, 1
      %p77 = por %p75, %p76
      %p79 = scmp.ne.s32.totalorder %s62, %s78
      %p80 = scmp.eq.s32.totalorder %s28, 0
      %p81 = por %p79, %p80
      %s83 = sadd.s32 %s82, 1
      %p86 = scmp.eq.s32.totalorder %s22, 1
      %p87 = scmp.ne.s32.totalorder %s82, %s84
      %p88 = scmp.eq.s32.totalorder %s22, 0
      %p89 = por %p87, %p88
      %p90 = scmp.ne.s32.totalorder %s82, %s84
      %p91 = scmp.eq.s32.totalorder %s27, 1
      %p92 = por %p90, %p91
      %p93 = scmp.ne.s32.totalorder %s84, %s85
      %p94 = scmp.eq.s32.totalorder %s27, 0
      %p95 = por %p93, %p94
      %p96 = scmp.ne.s32.totalorder %s84, %s85
      %p97 = scmp.eq.s32.totalorder %s28, 1
      %p98 = por %p96, %p97
      %p100 = scmp.ne.s32.totalorder %s85, %s99
      %p101 = scmp.eq.s32.totalorder %s28, 0
      %p102 = por %p100, %p101
      %s104 = sadd.s32 %s103, 1
      %p107 = scmp.eq.s32.totalorder %s22, 1
      %p108 = scmp.ne.s32.totalorder %s103, %s105
      %p109 = scmp.eq.s32.totalorder %s22, 0
      %p110 = por %p108, %p109
      %p111 = scmp.ne.s32.totalorder %s103, %s105
      %p112 = scmp.eq.s32.totalorder %s27, 1
      %p113 = por %p111, %p112
      %p114 = scmp.ne.s32.totalorder %s105, %s106
      %p115 = scmp.eq.s32.totalorder %s27, 0
      %p116 = por %p114, %p115
      %p117 = scmp.ne.s32.totalorder %s105, %s106
      %p118 = scmp.eq.s32.totalorder %s28, 1
      %p119 = por %p117, %p118
      %p121 = scmp.ne.s32.totalorder %s106, %s120
      %p122 = scmp.eq.s32.totalorder %s28, 0
      %p123 = por %p121, %p122
      %s125 = sadd.s32 %s124, 1
      %p128 = scmp.eq.s32.totalorder %s22, 1
      %p129 = scmp.ne.s32.totalorder %s124, %s126
      %p130 = scmp.eq.s32.totalorder %s22, 0
      %p131 = por %p129, %p130
      %p132 = scmp.ne.s32.totalorder %s124, %s126
      %p133 = scmp.eq.s32.totalorder %s27, 1
      %p134 = por %p132, %p133
      %p135 = scmp.ne.s32.totalorder %s126, %s127
      %p136 = scmp.eq.s32.totalorder %s27, 0
      %p137 = por %p135, %p136
      %p138 = scmp.ne.s32.totalorder %s126, %s127
      %p139 = scmp.eq.s32.totalorder %s28, 1
      %p140 = por %p138, %p139
      %p142 = scmp.ne.s32.totalorder %s127, %s141
      %p143 = scmp.eq.s32.totalorder %s28, 0
      %p144 = por %p142, %p143
      %s146 = sadd.s32 %s145, 1
      %p149 = scmp.eq.s32.totalorder %s22, 1
      %p150 = scmp.ne.s32.totalorder %s145, %s147
      %p151 = scmp.eq.s32.totalorder %s22, 0
      %p152 = por %p150, %p151
      %p153 = scmp.ne.s32.totalorder %s145, %s147
      %p154 = scmp.eq.s32.totalorder %s27, 1
      %p155 = por %p153, %p154
      %p156 = scmp.ne.s32.totalorder %s147, %s148
      %p157 = scmp.eq.s32.totalorder %s27, 0
      %p158 = por %p156, %p157
      %p159 = scmp.ne.s32.totalorder %s147, %s148
      %p160 = scmp.eq.s32.totalorder %s28, 1
      %p161 = por %p159, %p160
      %p163 = scmp.ne.s32.totalorder %s148, %s162
      %p164 = scmp.eq.s32.totalorder %s28, 0
      %p165 = por %p163, %p164
      %s167 = sadd.s32 %s166, 1
      %p170 = scmp.eq.s32.totalorder %s22, 1
      %p171 = scmp.ne.s32.totalorder %s166, %s168
      %p172 = scmp.eq.s32.totalorder %s22, 0
      %p173 = por %p171, %p172
      %p174 = scmp.ne.s32.totalorder %s166, %s168
      %p175 = scmp.eq.s32.totalorder %s27, 1
      %p176 = por %p174, %p175
      %p177 = scmp.ne.s32.totalorder %s168, %s169
      %p178 = scmp.eq.s32.totalorder %s27, 0
      %p179 = por %p177, %p178
      %p180 = scmp.ne.s32.totalorder %s168, %s169
      %p181 = scmp.eq.s32.totalorder %s28, 1
      %p182 = por %p180, %p181
      %p184 = scmp.ne.s32.totalorder %s169, %s183
      %p185 = scmp.eq.s32.totalorder %s28, 0
      %p186 = por %p184, %p185
      %s188 = sadd.s32 %s187, 1
      %p191 = scmp.eq.s32.totalorder %s22, 1
      %p192 = scmp.ne.s32.totalorder %s187, %s189
      %p193 = scmp.eq.s32.totalorder %s22, 0
      %p194 = por %p192, %p193
      %p195 = scmp.ne.s32.totalorder %s187, %s189
      %p196 = scmp.eq.s32.totalorder %s27, 1
      %p197 = por %p195, %p196
      %p198 = scmp.ne.s32.totalorder %s189, %s190
      %p199 = scmp.eq.s32.totalorder %s27, 0
      %p200 = por %p198, %p199
      %p201 = scmp.ne.s32.totalorder %s189, %s190
      %p202 = scmp.eq.s32.totalorder %s28, 1
      %p203 = por %p201, %p202
      %p205 = scmp.ne.s32.totalorder %s190, %s204
      %p206 = scmp.eq.s32.totalorder %s28, 0
      %p207 = por %p205, %p206
      %s209 = sadd.s32 %s208, 1
      %p212 = scmp.eq.s32.totalorder %s22, 1
      %p213 = scmp.ne.s32.totalorder %s208, %s210
      %p214 = scmp.eq.s32.totalorder %s22, 0
      %p215 = por %p213, %p214
      %p216 = scmp.ne.s32.totalorder %s208, %s210
      %p217 = scmp.eq.s32.totalorder %s27, 1
      %p218 = por %p216, %p217
      %p219 = scmp.ne.s32.totalorder %s210, %s211
      %p220 = scmp.eq.s32.totalorder %s27, 0
      %p221 = por %p219, %p220
      %p222 = scmp.ne.s32.totalorder %s210, %s211
      %p223 = scmp.eq.s32.totalorder %s28, 1
      %p224 = por %p222, %p223
      %p226 = scmp.ne.s32.totalorder %s211, %s225
      %p227 = scmp.eq.s32.totalorder %s28, 0
      %p228 = por %p226, %p227
      %s230 = sadd.s32 %s229, 1
      %p233 = scmp.eq.s32.totalorder %s22, 1
      %p234 = scmp.ne.s32.totalorder %s229, %s231
      %p235 = scmp.eq.s32.totalorder %s22, 0
      %p236 = por %p234, %p235
      %p237 = scmp.ne.s32.totalorder %s229, %s231
      %p238 = scmp.eq.s32.totalorder %s27, 1
      %p239 = por %p237, %p238
      %p240 = scmp.ne.s32.totalorder %s231, %s232
      %p241 = scmp.eq.s32.totalorder %s27, 0
      %p242 = por %p240, %p241
      %p243 = scmp.ne.s32.totalorder %s231, %s232
      %p244 = scmp.eq.s32.totalorder %s28, 1
      %p245 = por %p243, %p244
      %p247 = scmp.ne.s32.totalorder %s232, %s246
      %p248 = scmp.eq.s32.totalorder %s28, 0
      %p249 = por %p247, %p248
      %s250 = ssub.s32 %s22, %s29
      %p251 = scmp.eq.s32.totalorder %s250, 0
      %s253 = sadd.s32 %s252, 1
      %s254 = scalar_select %p251, %s252, %s253
      %p257 = pneg %p251
      %p258 = scmp.eq.s32.totalorder %s22, 1
      %p259 = por %p257, %p258
      %p260 = scmp.ne.s32.totalorder %s252, %s255
      %p261 = scmp.eq.s32.totalorder %s22, 0
      %p262 = por %p260, %p261
      %p263 = scmp.ne.s32.totalorder %s252, %s255
      %p264 = scmp.eq.s32.totalorder %s27, 1
      %p265 = por %p263, %p264
      %p266 = scmp.ne.s32.totalorder %s255, %s256
      %p267 = scmp.eq.s32.totalorder %s27, 0
      %p268 = por %p266, %p267
      %p269 = scmp.ne.s32.totalorder %s255, %s256
      %p270 = scmp.eq.s32.totalorder %s28, 1
      %p271 = por %p269, %p270
      %p273 = scmp.ne.s32.totalorder %s256, %s272
      %p274 = scmp.eq.s32.totalorder %s28, 0
      %p275 = por %p273, %p274
      %s276 = ssub.s32 %s22, %s29
      %p277 = scmp.eq.s32.totalorder %s276, 0
      %s279 = sadd.s32 %s278, 1
      %s280 = scalar_select %p277, %s278, %s279
      %p283 = pneg %p277
      %p284 = scmp.eq.s32.totalorder %s22, 1
      %p285 = por %p283, %p284
      %p286 = scmp.ne.s32.totalorder %s278, %s281
      %p287 = scmp.eq.s32.totalorder %s22, 0
      %p288 = por %p286, %p287
      %p289 = scmp.ne.s32.totalorder %s278, %s281
      %p290 = scmp.eq.s32.totalorder %s27, 1
      %p291 = por %p289, %p290
      %p292 = scmp.ne.s32.totalorder %s281, %s282
      %p293 = scmp.eq.s32.totalorder %s27, 0
      %p294 = por %p292, %p293
      %p295 = scmp.ne.s32.totalorder %s281, %s282
      %p296 = scmp.eq.s32.totalorder %s28, 1
      %p297 = por %p295, %p296
      %p299 = scmp.ne.s32.totalorder %s282, %s298
      %p300 = scmp.eq.s32.totalorder %s28, 0
      %p301 = por %p299, %p300
      %p302 = scmp.le.s32.totalorder 1, %s22
      %p303 = scmp.lt.s32.totalorder %s22, 3
      %p304 = pnand %p302, %p303
      %p305 = pneg %p304
      // Predicated region
      $region9: #{encoder_omics_forward.3} parent=5 // pred_check
        _
      $region10: #{encoder_omics_forward.3} parent=5 // pred_check_branch
        %307 = sbr.rel (%p304) target = $region12
      $region11: #{encoder_omics_forward.3} parent=5 // pred_region
        %s308 = ssub.s32 %s22, 1
        // Predicated region
        $region13: #{encoder_omics_forward.3} parent=11 // pred_check
          %p309 = pneg %p95
        $region14: #{encoder_omics_forward.3} parent=11 // pred_check_branch
          %311 = sbr.rel (%p309) target = $region16
        $region15: #{encoder_omics_forward.3} parent=11 // pred_region
          _
        $region16: #{encoder_omics_forward.3} parent=11 // pred_fallthru
          _
        // Predicated region
        $region17: #{encoder_omics_forward.3} parent=11 // pred_check
          %p312 = pneg %p116
        $region18: #{encoder_omics_forward.3} parent=11 // pred_check_branch
          %314 = sbr.rel (%p312) target = $region20
        $region19: #{encoder_omics_forward.3} parent=11 // pred_region
          %s316 = ssub.s32 16, 16
          %317 = vsyncadd [#allocation3], %s316
          %s319 = sshll.u32 [#allocation2], 4
          %s320 = int_to_ptr.vmem [resolvable:$true] %s319
          %322 = dma.hbm_to_vmem [thread:$0]  %s3, 16, %s320, [#allocation3]
        $region20: #{encoder_omics_forward.3} parent=11 // pred_fallthru
          _
        // Predicated region
        $region21: #{encoder_omics_forward.3} parent=11 // pred_check
          %p323 = pneg %p137
        $region22: #{encoder_omics_forward.3} parent=11 // pred_check_branch
          %325 = sbr.rel (%p323) target = $region24
        $region23: #{encoder_omics_forward.3} parent=11 // pred_region
          %s327 = ssub.s32 256, 256
          %328 = vsyncadd [#allocation5], %s327
          %s329 = sshll.u32 [#allocation4], 4
          %s330 = int_to_ptr.vmem [resolvable:$true] %s329
          %335 = dma.hbm_to_vmem [thread:$0]  %s4, 256, %s330, [#allocation5], 128, 128, 8
        $region24: #{encoder_omics_forward.3} parent=11 // pred_fallthru
          _
        // Predicated region
        $region25: #{encoder_omics_forward.3} parent=11 // pred_check
          %p336 = pneg %p158
        $region26: #{encoder_omics_forward.3} parent=11 // pred_check_branch
          %338 = sbr.rel (%p336) target = $region28
        $region27: #{encoder_omics_forward.3} parent=11 // pred_region
          %s340 = ssub.s32 16, 16
          %341 = vsyncadd [#allocation5], %s340
          %s343 = sshll.u32 [#allocation6], 4
          %s344 = int_to_ptr.vmem [resolvable:$true] %s343
          %346 = dma.hbm_to_vmem [thread:$0]  %s5, 16, %s344, [#allocation5]
        $region28: #{encoder_omics_forward.3} parent=11 // pred_fallthru
          _
        // Predicated region
        $region29: #{encoder_omics_forward.3} parent=11 // pred_check
          %p347 = pneg %p179
        $region30: #{encoder_omics_forward.3} parent=11 // pred_check_branch
          %349 = sbr.rel (%p347) target = $region32
        $region31: #{encoder_omics_forward.3} parent=11 // pred_region
          _
        $region32: #{encoder_omics_forward.3} parent=11 // pred_fallthru
          _
        // Predicated region
        $region33: #{encoder_omics_forward.3} parent=11 // pred_check
          %p350 = pneg %p200
        $region34: #{encoder_omics_forward.3} parent=11 // pred_check_branch
          %352 = sbr.rel (%p350) target = $region36
        $region35: #{encoder_omics_forward.3} parent=11 // pred_region
          %s354 = ssub.s32 16, 16
          %355 = vsyncadd [#allocation8], %s354
          %s357 = sshll.u32 [#allocation7], 4
          %s358 = int_to_ptr.vmem [resolvable:$true] %s357
          %360 = dma.hbm_to_vmem [thread:$0]  %s7, 16, %s358, [#allocation8]
        $region36: #{encoder_omics_forward.3} parent=11 // pred_fallthru
          _
        // Predicated region
        $region37: #{encoder_omics_forward.3} parent=11 // pred_check
          %p361 = pneg %p221
        $region38: #{encoder_omics_forward.3} parent=11 // pred_check_branch
          %363 = sbr.rel (%p361) target = $region40
        $region39: #{encoder_omics_forward.3} parent=11 // pred_region
          %s365 = ssub.s32 256, 256
          %366 = vsyncadd [#allocation8], %s365
          %s367 = sshll.u32 [#allocation9], 4
          %s368 = int_to_ptr.vmem [resolvable:$true] %s367
          %373 = dma.hbm_to_vmem [thread:$0]  %s8, 256, %s368, [#allocation8], 128, 128, 8
        $region40: #{encoder_omics_forward.3} parent=11 // pred_fallthru
          _
        // Predicated region
        $region41: #{encoder_omics_forward.3} parent=11 // pred_check
          %p374 = pneg %p242
        $region42: #{encoder_omics_forward.3} parent=11 // pred_check_branch
          %376 = sbr.rel (%p374) target = $region44
        $region43: #{encoder_omics_forward.3} parent=11 // pred_region
          %s378 = ssub.s32 128, 128
          %379 = vsyncadd [#allocation11], %s378
          %s381 = sshll.u32 [#allocation10], 4
          %s382 = int_to_ptr.vmem [resolvable:$true] %s381
          %384 = dma.hbm_to_vmem [thread:$0]  %s9, 128, %s382, [#allocation11]
        $region44: #{encoder_omics_forward.3} parent=11 // pred_fallthru
          _
      $region12: #{encoder_omics_forward.3} parent=5 // pred_fallthru
        _
      %p385 = scmp.lt.s32.totalorder %s22, 2
      // Predicated region
      $region45: #{encoder_omics_forward.3} parent=5 // pred_check
        %p386 = pneg %p385
      $region46: #{encoder_omics_forward.3} parent=5 // pred_check_branch
        %388 = sbr.rel (%p386) target = $region48
      $region47: #{encoder_omics_forward.3} parent=5 // pred_region
        // Predicated region
        $region49: #{encoder_omics_forward.3} parent=47 // pred_check
          %p389 = pneg %p42
        $region50: #{encoder_omics_forward.3} parent=47 // pred_check_branch
          %391 = sbr.rel (%p389) target = $region52
        $region51: #{encoder_omics_forward.3} parent=47 // pred_region
          %s392 = smul.u32 32, %s22
          %p393 = scmp.lt.s32.totalorder %s392, 63
          %s394 = scalar_select %p393, %s392, 63
          %s395 = smul.addr %s394, 8
          %s396 = scalar_lea.vmem %s0, %s395
          %s397 = smul.u32 32, %s22
        $region52: #{encoder_omics_forward.3} parent=47 // pred_fallthru
          _
        // Predicated region
        $region53: #{encoder_omics_forward.3} parent=47 // pred_check
          %p398 = pneg %p68
        $region54: #{encoder_omics_forward.3} parent=47 // pred_check_branch
          %400 = sbr.rel (%p398) target = $region56
        $region55: #{encoder_omics_forward.3} parent=47 // pred_region
          %s401 = smul.u32 32, %s22
          %p402 = scmp.lt.s32.totalorder %s401, 63
          %s403 = scalar_select %p402, %s401, 63
          %s404 = smul.addr %s403, 8
          %s405 = scalar_lea.vmem %s1, %s404
          %s406 = smul.u32 32, %s22
        $region56: #{encoder_omics_forward.3} parent=47 // pred_fallthru
          _
      $region48: #{encoder_omics_forward.3} parent=5 // pred_fallthru
        _
      %p407 = scmp.le.s32.totalorder 1, %s22
      %p408 = scmp.lt.s32.totalorder %s22, 3
      %p409 = pnand %p407, %p408
      %p410 = pneg %p409
      // Predicated region
      $region57: #{encoder_omics_forward.3} parent=5 // pred_check
        _
      $region58: #{encoder_omics_forward.3} parent=5 // pred_check_branch
        %412 = sbr.rel (%p409) target = $region60
      $region59: #{encoder_omics_forward.3} parent=5 // pred_region
        %s413 = ssub.s32 %s22, 1
        // Predicated region
        $region61: #{encoder_omics_forward.3} parent=59 // pred_check
          %p414 = pneg %p116
        $region62: #{encoder_omics_forward.3} parent=59 // pred_check_branch
          %416 = sbr.rel (%p414) target = $region64
        $region63: #{encoder_omics_forward.3} parent=59 // pred_region
          %417 = dma.done [#allocation3], 16
        $region64: #{encoder_omics_forward.3} parent=59 // pred_fallthru
          _
        // Predicated region
        $region65: #{encoder_omics_forward.3} parent=59 // pred_check
          %p418 = pneg %p137
        $region66: #{encoder_omics_forward.3} parent=59 // pred_check_branch
          %420 = sbr.rel (%p418) target = $region68
        $region67: #{encoder_omics_forward.3} parent=59 // pred_region
          %421 = dma.done [#allocation5], 256
        $region68: #{encoder_omics_forward.3} parent=59 // pred_fallthru
          _
        // Predicated region
        $region69: #{encoder_omics_forward.3} parent=59 // pred_check
          %p422 = pneg %p158
        $region70: #{encoder_omics_forward.3} parent=59 // pred_check_branch
          %424 = sbr.rel (%p422) target = $region72
        $region71: #{encoder_omics_forward.3} parent=59 // pred_region
          %425 = dma.done [#allocation5], 16
        $region72: #{encoder_omics_forward.3} parent=59 // pred_fallthru
          _
        // Predicated region
        $region73: #{encoder_omics_forward.3} parent=59 // pred_check
          %p426 = pneg %p200
        $region74: #{encoder_omics_forward.3} parent=59 // pred_check_branch
          %428 = sbr.rel (%p426) target = $region76
        $region75: #{encoder_omics_forward.3} parent=59 // pred_region
          %429 = dma.done [#allocation8], 16
        $region76: #{encoder_omics_forward.3} parent=59 // pred_fallthru
          _
        // Predicated region
        $region77: #{encoder_omics_forward.3} parent=59 // pred_check
          %p430 = pneg %p221
        $region78: #{encoder_omics_forward.3} parent=59 // pred_check_branch
          %432 = sbr.rel (%p430) target = $region80
        $region79: #{encoder_omics_forward.3} parent=59 // pred_region
          %433 = dma.done [#allocation8], 256
        $region80: #{encoder_omics_forward.3} parent=59 // pred_fallthru
          _
        // Predicated region
        $region81: #{encoder_omics_forward.3} parent=59 // pred_check
          %p434 = pneg %p242
        $region82: #{encoder_omics_forward.3} parent=59 // pred_check_branch
          %436 = sbr.rel (%p434) target = $region84
        $region83: #{encoder_omics_forward.3} parent=59 // pred_region
          %437 = dma.done [#allocation11], 128
        $region84: #{encoder_omics_forward.3} parent=59 // pred_fallthru
          _
        %s438 = smul.u32 32, %s27
        %p439 = scmp.lt.s32.totalorder %s438, 63
        %s440 = scalar_select %p439, %s438, 63
        %s441 = smul.addr %s440, 8
        %s442 = scalar_lea.vmem %s0, %s441
        %p443 = pneg %p48
        %p444 = pneg %p45
        %s445 = smul.u32 32, %s27
        %p446 = scmp.lt.s32.totalorder %s445, 63
        %s447 = scalar_select %p446, %s445, 63
        %s448 = smul.addr %s447, 8
        %s449 = scalar_lea.vmem %s1, %s448
        %p450 = pneg %p74
        %p451 = pneg %p71
        %p452 = pneg %p95
        %p453 = pneg %p92
        %p454 = pneg %p116
        %p455 = pneg %p113
        %p456 = pneg %p137
        %p457 = pneg %p134
        %p458 = pneg %p158
        %p459 = pneg %p155
        %p460 = pneg %p179
        %p461 = pneg %p176
        %p462 = pneg %p200
        %p463 = pneg %p197
        %p464 = pneg %p221
        %p465 = pneg %p218
        %p466 = pneg %p242
        %p467 = pneg %p239
        %p468 = pneg %p268
        %p469 = pneg %p265
        %s470 = smul.u32 32, %s27
        %p471 = scmp.lt.s32.totalorder %s470, 63
        %s472 = scalar_select %p471, %s470, 63
        %s473 = smul.addr %s472, 8
        %s474 = scalar_lea.vmem %s10, %s473
        %p475 = pneg %p294
        %p476 = pneg %p291
        %s477 = smul.u32 32, %s27
        %p478 = scmp.lt.s32.totalorder %s477, 63
        %s479 = scalar_select %p478, %s477, 63
        %s480 = smul.addr %s479, 8
        %s481 = scalar_lea.vmem %s11, %s480
        %s482 = smul.u32 32, %s27
        %p483 = scmp.lt.s32.totalorder %s482, 63
        %s484 = scalar_select %p483, %s482, 63
        %s485 = smul.addr %s484, 8
        %s486 = scalar_lea.vmem %s0, %s485
        %s487 = smul.u32 32, %s27
        %s488 = smul.u32 32, %s27
        %p489 = scmp.lt.s32.totalorder %s488, 63
        %s490 = scalar_select %p489, %s488, 63
        %s491 = smul.addr %s490, 8
        %s492 = scalar_lea.vmem %s1, %s491
        %s493 = smul.u32 32, %s27
        %s494 = smul.u32 32, %s27
        %p495 = scmp.lt.s32.totalorder %s494, 63
        %s496 = scalar_select %p495, %s494, 63
        %s497 = smul.addr %s496, 8
        %s498 = scalar_lea.vmem %s10, %s497
        %s499 = smul.u32 32, %s27
        %s500 = smul.u32 32, %s27
        %p501 = scmp.lt.s32.totalorder %s500, 63
        %s502 = scalar_select %p501, %s500, 63
        %s503 = smul.addr %s502, 8
        %s504 = scalar_lea.vmem %s11, %s503
        %s505 = smul.u32 32, %s27
        %v506 = vld [vmem:[%s486] sm:$0xff]
        %v507 = vld [vmem:[%s486 + $0x8] sm:$0xff]
        %v508 = vld [vmem:[%s486 + $0x10] sm:$0xff]
        %v509 = vld [vmem:[%s486 + $0x18] sm:$0xff]
        %v510 = vld [vmem:[%s486 + $0x20] sm:$0xff]
        %v511 = vld [vmem:[%s486 + $0x28] sm:$0xff]
        %v512 = vld [vmem:[%s486 + $0x30] sm:$0xff]
        %v513 = vld [vmem:[%s486 + $0x38] sm:$0xff]
        %v514 = vld [vmem:[%s486 + $0x40] sm:$0xff]
        %v515 = vld [vmem:[%s486 + $0x48] sm:$0xff]
        %v516 = vld [vmem:[%s486 + $0x50] sm:$0xff]
        %v517 = vld [vmem:[%s486 + $0x58] sm:$0xff]
        %v518 = vld [vmem:[%s486 + $0x60] sm:$0xff]
        %v519 = vld [vmem:[%s486 + $0x68] sm:$0xff]
        %v520 = vld [vmem:[%s486 + $0x70] sm:$0xff]
        %v521 = vld [vmem:[%s486 + $0x78] sm:$0xff]
        %v522 = vld [vmem:[%s486 + $0x80] sm:$0xff]
        %v523 = vld [vmem:[%s486 + $0x88] sm:$0xff]
        %v524 = vld [vmem:[%s486 + $0x90] sm:$0xff]
        %v525 = vld [vmem:[%s486 + $0x98] sm:$0xff]
        %v526 = vld [vmem:[%s486 + $0xa0] sm:$0xff]
        %v527 = vld [vmem:[%s486 + $0xa8] sm:$0xff]
        %v528 = vld [vmem:[%s486 + $0xb0] sm:$0xff]
        %v529 = vld [vmem:[%s486 + $0xb8] sm:$0xff]
        %v530 = vld [vmem:[%s486 + $0xc0] sm:$0xff]
        %v531 = vld [vmem:[%s486 + $0xc8] sm:$0xff]
        %v532 = vld [vmem:[%s486 + $0xd0] sm:$0xff]
        %v533 = vld [vmem:[%s486 + $0xd8] sm:$0xff]
        %v534 = vld [vmem:[%s486 + $0xe0] sm:$0xff]
        %v535 = vld [vmem:[%s486 + $0xe8] sm:$0xff]
        %v536 = vld [vmem:[%s486 + $0xf0] sm:$0xff]
        %v537 = vld [vmem:[%s486 + $0xf8] sm:$0xff]
        %v538 = vld [vmem:[%s2] sm:$0xff]
        %v539 = vld [vmem:[%s2 + $0x8] sm:$0xff]
        %v540 = vld [vmem:[%s2 + $0x10] sm:$0xff]
        %v541 = vld [vmem:[%s2 + $0x18] sm:$0xff]
        %v542 = vld [vmem:[#allocation2] sm:$0x1]
        %v544 = vlaneseq
        %v545 = vshrl.u32 %v544, 7
        %v546 = vsub.s32 0, %v545
        %v547 = vrot.slane %v542, %v546
        %vm549 = vcmask 261120
        %v551 = vsel %vm549, %v506, 0
        %v554 = vsel %vm549, %v507, 0
        %v557 = vsel %vm549, %v508, 0
        %v560 = vsel %vm549, %v509, 0
        %v563 = vsel %vm549, %v510, 0
        %v566 = vsel %vm549, %v511, 0
        %v569 = vsel %vm549, %v512, 0
        %v572 = vsel %vm549, %v513, 0
        %v575 = vsel %vm549, %v514, 0
        %v578 = vsel %vm549, %v515, 0
        %v581 = vsel %vm549, %v516, 0
        %v584 = vsel %vm549, %v517, 0
        %v587 = vsel %vm549, %v518, 0
        %v590 = vsel %vm549, %v519, 0
        %v593 = vsel %vm549, %v520, 0
        %v596 = vsel %vm549, %v521, 0
        %v599 = vsel %vm549, %v522, 0
        %v602 = vsel %vm549, %v523, 0
        %v605 = vsel %vm549, %v524, 0
        %v608 = vsel %vm549, %v525, 0
        %v611 = vsel %vm549, %v526, 0
        %v614 = vsel %vm549, %v527, 0
        %v617 = vsel %vm549, %v528, 0
        %v620 = vsel %vm549, %v529, 0
        %v623 = vsel %vm549, %v530, 0
        %v626 = vsel %vm549, %v531, 0
        %v629 = vsel %vm549, %v532, 0
        %v632 = vsel %vm549, %v533, 0
        %v635 = vsel %vm549, %v534, 0
        %v638 = vsel %vm549, %v535, 0
        %v641 = vsel %vm549, %v536, 0
        %v644 = vsel %vm549, %v537, 0
        %646 = vmatprep.subr.mxu0 0.0
        %647 = vmatpush1.msra.mxu0 %v538
        %648 = vmatprep.subr.mxu0 0.0
        %649 = vmatpush1.msra.mxu0 %v539
        %650 = vmatprep.subr.mxu0 0.0
        %651 = vmatpush1.msra.mxu0 %v540
        %652 = vmatprep.subr.mxu0 0.0
        %653 = vmatpush1.msra.mxu0 %v541
        %654 = vmatprep.subr.mxu0 0.0
        %655 = vmatpush1.msra.mxu0 0.0
        %656 = vmatprep.subr.mxu0 0.0
        %657 = vmatpush1.msra.mxu0 0.0
        %658 = vmatprep.subr.mxu0 0.0
        %659 = vmatpush1.msra.mxu0 0.0
        %660 = vmatprep.subr.mxu0 0.0
        %661 = vmatpush1.msra.mxu0 0.0
        %662 = vmatprep.subr.mxu0 0.0
        %663 = vmatpush1.msra.mxu0 0.0
        %664 = vmatprep.subr.mxu0 0.0
        %665 = vmatpush1.msra.mxu0 0.0
        %666 = vmatprep.subr.mxu0 0.0
        %667 = vmatpush1.msra.mxu0 0.0
        %668 = vmatprep.subr.mxu0 0.0
        %669 = vmatpush1.msra.mxu0 0.0
        %670 = vmatprep.subr.mxu0 0.0
        %671 = vmatpush1.msra.mxu0 0.0
        %672 = vmatprep.subr.mxu0 0.0
        %673 = vmatpush1.msra.mxu0 0.0
        %674 = vmatprep.subr.mxu0 0.0
        %675 = vmatpush1.msra.mxu0 0.0
        %676 = vmatprep.subr.mxu0 0.0
        %677 = vmatpush1.msra.mxu0 0.0
        %678 = vmatprep.subr.mxu0 0.0
        %679 = vmatpush1.msra.mxu0 0.0
        %680 = vmatprep.subr.mxu0 0.0
        %681 = vmatpush1.msra.mxu0 0.0
        %682 = vmatprep.subr.mxu0 0.0
        %683 = vmatpush1.msra.mxu0 0.0
        %684 = vmatprep.subr.mxu0 0.0
        %685 = vmatpush1.msra.mxu0 0.0
        %686 = vmatprep.subr.mxu0 0.0
        %687 = vmatpush1.msra.mxu0 0.0
        %688 = vmatprep.subr.mxu0 0.0
        %689 = vmatpush1.msra.mxu0 0.0
        %690 = vmatprep.subr.mxu0 0.0
        %691 = vmatpush1.msra.mxu0 0.0
        %692 = vmatprep.subr.mxu0 0.0
        %693 = vmatpush1.msra.mxu0 0.0
        %694 = vmatprep.subr.mxu0 0.0
        %695 = vmatpush1.msra.mxu0 0.0
        %696 = vmatprep.subr.mxu0 0.0
        %697 = vmatpush1.msra.mxu0 0.0
        %698 = vmatprep.subr.mxu0 0.0
        %699 = vmatpush1.msra.mxu0 0.0
        %700 = vmatprep.subr.mxu0 0.0
        %701 = vmatpush1.msra.mxu0 0.0
        %702 = vmatprep.subr.mxu0 0.0
        %703 = vmatpush1.msra.mxu0 0.0
        %704 = vmatprep.subr.mxu0 0.0
        %705 = vmatpush1.msra.mxu0 0.0
        %706 = vmatprep.subr.mxu0 0.0
        %707 = vmatpush1.msra.mxu0 0.0
        %708 = vmatprep.subr.mxu0 0.0
        %709 = vmatpush1.msra.mxu0 0.0
        %710 = vmatprep.mubr.f32.mxu0 0.0
        %711 = vmatmul.mubr.f32.gmra.mrb[0].mxu0 %v551
        %v712 = vpop.f32.mrb[0].mxu0
        %v713 = vadd.f32 %v547, %v712
        %v714 = vpop.f32.mrb[0].mxu0
        %715 = vmatprep.mubr.f32.mxu0 0.0
        %716 = vmatmul.mubr.f32.gmra.mrb[0].mxu0 %v554
        %v717 = vpop.f32.mrb[0].mxu0
        %v718 = vadd.f32 %v547, %v717
        %v719 = vpop.f32.mrb[0].mxu0
        %720 = vmatprep.mubr.f32.mxu0 0.0
        %721 = vmatmul.mubr.f32.gmra.mrb[0].mxu0 %v557
        %v722 = vpop.f32.mrb[0].mxu0
        %v723 = vadd.f32 %v547, %v722
        %v724 = vpop.f32.mrb[0].mxu0
        %725 = vmatprep.mubr.f32.mxu0 0.0
        %726 = vmatmul.mubr.f32.gmra.mrb[0].mxu0 %v560
        %v727 = vpop.f32.mrb[0].mxu0
        %v728 = vadd.f32 %v547, %v727
        %v729 = vpop.f32.mrb[0].mxu0
        %730 = vmatprep.mubr.f32.mxu0 0.0
        %731 = vmatmul.mubr.f32.gmra.mrb[0].mxu0 %v563
        %v732 = vpop.f32.mrb[0].mxu0
        %v733 = vadd.f32 %v547, %v732
        %v734 = vpop.f32.mrb[0].mxu0
        %735 = vmatprep.mubr.f32.mxu0 0.0
        %736 = vmatmul.mubr.f32.gmra.mrb[0].mxu0 %v566
        %v737 = vpop.f32.mrb[0].mxu0
        %v738 = vadd.f32 %v547, %v737
        %v739 = vpop.f32.mrb[0].mxu0
        %740 = vmatprep.mubr.f32.mxu0 0.0
        %741 = vmatmul.mubr.f32.gmra.mrb[0].mxu0 %v569
        %v742 = vpop.f32.mrb[0].mxu0
        %v743 = vadd.f32 %v547, %v742
        %v744 = vpop.f32.mrb[0].mxu0
        %745 = vmatprep.mubr.f32.mxu0 0.0
        %746 = vmatmul.mubr.f32.gmra.mrb[0].mxu0 %v572
        %v747 = vpop.f32.mrb[0].mxu0
        %v748 = vadd.f32 %v547, %v747
        %v749 = vpop.f32.mrb[0].mxu0
        %750 = vmatprep.mubr.f32.mxu0 0.0
        %751 = vmatmul.mubr.f32.gmra.mrb[0].mxu0 %v575
        %v752 = vpop.f32.mrb[0].mxu0
        %v753 = vadd.f32 %v547, %v752
        %v754 = vpop.f32.mrb[0].mxu0
        %755 = vmatprep.mubr.f32.mxu0 0.0
        %756 = vmatmul.mubr.f32.gmra.mrb[0].mxu0 %v578
        %v757 = vpop.f32.mrb[0].mxu0
        %v758 = vadd.f32 %v547, %v757
        %v759 = vpop.f32.mrb[0].mxu0
        %760 = vmatprep.mubr.f32.mxu0 0.0
        %761 = vmatmul.mubr.f32.gmra.mrb[0].mxu0 %v581
        %v762 = vpop.f32.mrb[0].mxu0
        %v763 = vadd.f32 %v547, %v762
        %v764 = vpop.f32.mrb[0].mxu0
        %765 = vmatprep.mubr.f32.mxu0 0.0
        %766 = vmatmul.mubr.f32.gmra.mrb[0].mxu0 %v584
        %v767 = vpop.f32.mrb[0].mxu0
        %v768 = vadd.f32 %v547, %v767
        %v769 = vpop.f32.mrb[0].mxu0
        %770 = vmatprep.mubr.f32.mxu0 0.0
        %771 = vmatmul.mubr.f32.gmra.mrb[0].mxu0 %v587
        %v772 = vpop.f32.mrb[0].mxu0
        %v773 = vadd.f32 %v547, %v772
        %v774 = vpop.f32.mrb[0].mxu0
        %775 = vmatprep.mubr.f32.mxu0 0.0
        %776 = vmatmul.mubr.f32.gmra.mrb[0].mxu0 %v590
        %v777 = vpop.f32.mrb[0].mxu0
        %v778 = vadd.f32 %v547, %v777
        %v779 = vpop.f32.mrb[0].mxu0
        %780 = vmatprep.mubr.f32.mxu0 0.0
        %781 = vmatmul.mubr.f32.gmra.mrb[0].mxu0 %v593
        %v782 = vpop.f32.mrb[0].mxu0
        %v783 = vadd.f32 %v547, %v782
        %v784 = vpop.f32.mrb[0].mxu0
        %785 = vmatprep.mubr.f32.mxu0 0.0
        %786 = vmatmul.mubr.f32.gmra.mrb[0].mxu0 %v596
        %v787 = vpop.f32.mrb[0].mxu0
        %v788 = vadd.f32 %v547, %v787
        %v789 = vpop.f32.mrb[0].mxu0
        %790 = vmatprep.mubr.f32.mxu0 0.0
        %791 = vmatmul.mubr.f32.gmra.mrb[0].mxu0 %v599
        %v792 = vpop.f32.mrb[0].mxu0
        %v793 = vadd.f32 %v547, %v792
        %v794 = vpop.f32.mrb[0].mxu0
        %795 = vmatprep.mubr.f32.mxu0 0.0
        %796 = vmatmul.mubr.f32.gmra.mrb[0].mxu0 %v602
        %v797 = vpop.f32.mrb[0].mxu0
        %v798 = vadd.f32 %v547, %v797
        %v799 = vpop.f32.mrb[0].mxu0
        %800 = vmatprep.mubr.f32.mxu0 0.0
        %801 = vmatmul.mubr.f32.gmra.mrb[0].mxu0 %v605
        %v802 = vpop.f32.mrb[0].mxu0
        %v803 = vadd.f32 %v547, %v802
        %v804 = vpop.f32.mrb[0].mxu0
        %805 = vmatprep.mubr.f32.mxu0 0.0
        %806 = vmatmul.mubr.f32.gmra.mrb[0].mxu0 %v608
        %v807 = vpop.f32.mrb[0].mxu0
        %v808 = vadd.f32 %v547, %v807
        %v809 = vpop.f32.mrb[0].mxu0
        %810 = vmatprep.mubr.f32.mxu0 0.0
        %811 = vmatmul.mubr.f32.gmra.mrb[0].mxu0 %v611
        %v812 = vpop.f32.mrb[0].mxu0
        %v813 = vadd.f32 %v547, %v812
        %v814 = vpop.f32.mrb[0].mxu0
        %815 = vmatprep.mubr.f32.mxu0 0.0
        %816 = vmatmul.mubr.f32.gmra.mrb[0].mxu0 %v614
        %v817 = vpop.f32.mrb[0].mxu0
        %v818 = vadd.f32 %v547, %v817
        %v819 = vpop.f32.mrb[0].mxu0
        %820 = vmatprep.mubr.f32.mxu0 0.0
        %821 = vmatmul.mubr.f32.gmra.mrb[0].mxu0 %v617
        %v822 = vpop.f32.mrb[0].mxu0
        %v823 = vadd.f32 %v547, %v822
        %v824 = vpop.f32.mrb[0].mxu0
        %825 = vmatprep.mubr.f32.mxu0 0.0
        %826 = vmatmul.mubr.f32.gmra.mrb[0].mxu0 %v620
        %v827 = vpop.f32.mrb[0].mxu0
        %v828 = vadd.f32 %v547, %v827
        %v829 = vpop.f32.mrb[0].mxu0
        %830 = vmatprep.mubr.f32.mxu0 0.0
        %831 = vmatmul.mubr.f32.gmra.mrb[0].mxu0 %v623
        %v832 = vpop.f32.mrb[0].mxu0
        %v833 = vadd.f32 %v547, %v832
        %v834 = vpop.f32.mrb[0].mxu0
        %835 = vmatprep.mubr.f32.mxu0 0.0
        %836 = vmatmul.mubr.f32.gmra.mrb[0].mxu0 %v626
        %v837 = vpop.f32.mrb[0].mxu0
        %v838 = vadd.f32 %v547, %v837
        %v839 = vpop.f32.mrb[0].mxu0
        %840 = vmatprep.mubr.f32.mxu0 0.0
        %841 = vmatmul.mubr.f32.gmra.mrb[0].mxu0 %v629
        %v842 = vpop.f32.mrb[0].mxu0
        %v843 = vadd.f32 %v547, %v842
        %v844 = vpop.f32.mrb[0].mxu0
        %845 = vmatprep.mubr.f32.mxu0 0.0
        %846 = vmatmul.mubr.f32.gmra.mrb[0].mxu0 %v632
        %v847 = vpop.f32.mrb[0].mxu0
        %v848 = vadd.f32 %v547, %v847
        %v849 = vpop.f32.mrb[0].mxu0
        %850 = vmatprep.mubr.f32.mxu0 0.0
        %851 = vmatmul.mubr.f32.gmra.mrb[0].mxu0 %v635
        %v852 = vpop.f32.mrb[0].mxu0
        %v853 = vadd.f32 %v547, %v852
        %v854 = vpop.f32.mrb[0].mxu0
        %855 = vmatprep.mubr.f32.mxu0 0.0
        %856 = vmatmul.mubr.f32.gmra.mrb[0].mxu0 %v638
        %v857 = vpop.f32.mrb[0].mxu0
        %v858 = vadd.f32 %v547, %v857
        %v859 = vpop.f32.mrb[0].mxu0
        %860 = vmatprep.mubr.f32.mxu0 0.0
        %861 = vmatmul.mubr.f32.gmra.mrb[0].mxu0 %v641
        %v862 = vpop.f32.mrb[0].mxu0
        %v863 = vadd.f32 %v547, %v862
        %v864 = vpop.f32.mrb[0].mxu0
        %865 = vmatprep.mubr.f32.mxu0 0.0
        %866 = vmatmul.mubr.f32.gmra.mrb[0].mxu0 %v644
        %v867 = vpop.f32.mrb[0].mxu0
        %v868 = vadd.f32 %v547, %v867
        %v869 = vpop.f32.mrb[0].mxu0
        %870 = vdwg.mxu0
        %v871 = vld [vmem:[#allocation4] sm:$0xff]
        %v872 = vld [vmem:[#allocation4 + $0x8] sm:$0xff]
        %v873 = vld [vmem:[#allocation6] sm:$0x1]
        %v875 = vlaneseq
        %v876 = vshrl.u32 %v875, 7
        %v877 = vsub.s32 0, %v876
        %v878 = vrot.slane %v873, %v877
        %vm880 = vcmask 130048
        %v882 = vsel %vm880, %v713, 0
        %v885 = vsel %vm880, %v718, 0
        %v888 = vsel %vm880, %v723, 0
        %v891 = vsel %vm880, %v728, 0
        %v894 = vsel %vm880, %v733, 0
        %v897 = vsel %vm880, %v738, 0
        %v900 = vsel %vm880, %v743, 0
        %v903 = vsel %vm880, %v748, 0
        %v906 = vsel %vm880, %v753, 0
        %v909 = vsel %vm880, %v758, 0
        %v912 = vsel %vm880, %v763, 0
        %v915 = vsel %vm880, %v768, 0
        %v918 = vsel %vm880, %v773, 0
        %v921 = vsel %vm880, %v778, 0
        %v924 = vsel %vm880, %v783, 0
        %v927 = vsel %vm880, %v788, 0
        %v930 = vsel %vm880, %v793, 0
        %v933 = vsel %vm880, %v798, 0
        %v936 = vsel %vm880, %v803, 0
        %v939 = vsel %vm880, %v808, 0
        %v942 = vsel %vm880, %v813, 0
        %v945 = vsel %vm880, %v818, 0
        %v948 = vsel %vm880, %v823, 0
        %v951 = vsel %vm880, %v828, 0
        %v954 = vsel %vm880, %v833, 0
        %v957 = vsel %vm880, %v838, 0
        %v960 = vsel %vm880, %v843, 0
        %v963 = vsel %vm880, %v848, 0
        %v966 = vsel %vm880, %v853, 0
        %v969 = vsel %vm880, %v858, 0
        %v972 = vsel %vm880, %v863, 0
        %v975 = vsel %vm880, %v868, 0
        %977 = vmatprep.subr.mxu0 0.0
        %978 = vmatpush1.msra.mxu0 %v871
        %979 = vmatprep.subr.mxu0 0.0
        %980 = vmatpush1.msra.mxu0 %v872
        %981 = vmatprep.subr.mxu0 0.0
        %982 = vmatpush1.msra.mxu0 0.0
        %983 = vmatprep.subr.mxu0 0.0
        %984 = vmatpush1.msra.mxu0 0.0
        %985 = vmatprep.subr.mxu0 0.0
        %986 = vmatpush1.msra.mxu0 0.0
        %987 = vmatprep.subr.mxu0 0.0
        %988 = vmatpush1.msra.mxu0 0.0
        %989 = vmatprep.subr.mxu0 0.0
        %990 = vmatpush1.msra.mxu0 0.0
        %991 = vmatprep.subr.mxu0 0.0
        %992 = vmatpush1.msra.mxu0 0.0
        %993 = vmatprep.subr.mxu0 0.0
        %994 = vmatpush1.msra.mxu0 0.0
        %995 = vmatprep.subr.mxu0 0.0
        %996 = vmatpush1.msra.mxu0 0.0
        %997 = vmatprep.subr.mxu0 0.0
        %998 = vmatpush1.msra.mxu0 0.0
        %999 = vmatprep.subr.mxu0 0.0
        %1000 = vmatpush1.msra.mxu0 0.0
        %1001 = vmatprep.subr.mxu0 0.0
        %1002 = vmatpush1.msra.mxu0 0.0
        %1003 = vmatprep.subr.mxu0 0.0
        %1004 = vmatpush1.msra.mxu0 0.0
        %1005 = vmatprep.subr.mxu0 0.0
        %1006 = vmatpush1.msra.mxu0 0.0
        %1007 = vmatprep.subr.mxu0 0.0
        %1008 = vmatpush1.msra.mxu0 0.0
        %1009 = vmatprep.subr.mxu0 0.0
        %1010 = vmatpush1.msra.mxu0 0.0
        %1011 = vmatprep.subr.mxu0 0.0
        %1012 = vmatpush1.msra.mxu0 0.0
        %1013 = vmatprep.subr.mxu0 0.0
        %1014 = vmatpush1.msra.mxu0 0.0
        %1015 = vmatprep.subr.mxu0 0.0
        %1016 = vmatpush1.msra.mxu0 0.0
        %1017 = vmatprep.subr.mxu0 0.0
        %1018 = vmatpush1.msra.mxu0 0.0
        %1019 = vmatprep.subr.mxu0 0.0
        %1020 = vmatpush1.msra.mxu0 0.0
        %1021 = vmatprep.subr.mxu0 0.0
        %1022 = vmatpush1.msra.mxu0 0.0
        %1023 = vmatprep.subr.mxu0 0.0
        %1024 = vmatpush1.msra.mxu0 0.0
        %1025 = vmatprep.subr.mxu0 0.0
        %1026 = vmatpush1.msra.mxu0 0.0
        %1027 = vmatprep.subr.mxu0 0.0
        %1028 = vmatpush1.msra.mxu0 0.0
        %1029 = vmatprep.subr.mxu0 0.0
        %1030 = vmatpush1.msra.mxu0 0.0
        %1031 = vmatprep.subr.mxu0 0.0
        %1032 = vmatpush1.msra.mxu0 0.0
        %1033 = vmatprep.subr.mxu0 0.0
        %1034 = vmatpush1.msra.mxu0 0.0
        %1035 = vmatprep.subr.mxu0 0.0
        %1036 = vmatpush1.msra.mxu0 0.0
        %1037 = vmatprep.subr.mxu0 0.0
        %1038 = vmatpush1.msra.mxu0 0.0
        %1039 = vmatprep.subr.mxu0 0.0
        %1040 = vmatpush1.msra.mxu0 0.0
        %1041 = vmatprep.mubr.f32.mxu0 0.0
        %1042 = vmatmul.mubr.f32.gmra.mrb[0].mxu0 %v882
        %v1043 = vpop.f32.mrb[0].mxu0
        %v1044 = vadd.f32 %v878, %v1043
        %v1045 = vpop.f32.mrb[0].mxu0
        %1046 = vmatprep.mubr.f32.mxu0 0.0
        %1047 = vmatmul.mubr.f32.gmra.mrb[0].mxu0 %v885
        %v1048 = vpop.f32.mrb[0].mxu0
        %v1049 = vadd.f32 %v878, %v1048
        %v1050 = vpop.f32.mrb[0].mxu0
        %1051 = vmatprep.mubr.f32.mxu0 0.0
        %1052 = vmatmul.mubr.f32.gmra.mrb[0].mxu0 %v888
        %v1053 = vpop.f32.mrb[0].mxu0
        %v1054 = vadd.f32 %v878, %v1053
        %v1055 = vpop.f32.mrb[0].mxu0
        %1056 = vmatprep.mubr.f32.mxu0 0.0
        %1057 = vmatmul.mubr.f32.gmra.mrb[0].mxu0 %v891
        %v1058 = vpop.f32.mrb[0].mxu0
        %v1059 = vadd.f32 %v878, %v1058
        %v1060 = vpop.f32.mrb[0].mxu0
        %1061 = vmatprep.mubr.f32.mxu0 0.0
        %1062 = vmatmul.mubr.f32.gmra.mrb[0].mxu0 %v894
        %v1063 = vpop.f32.mrb[0].mxu0
        %v1064 = vadd.f32 %v878, %v1063
        %v1065 = vpop.f32.mrb[0].mxu0
        %1066 = vmatprep.mubr.f32.mxu0 0.0
        %1067 = vmatmul.mubr.f32.gmra.mrb[0].mxu0 %v897
        %v1068 = vpop.f32.mrb[0].mxu0
        %v1069 = vadd.f32 %v878, %v1068
        %v1070 = vpop.f32.mrb[0].mxu0
        %1071 = vmatprep.mubr.f32.mxu0 0.0
        %1072 = vmatmul.mubr.f32.gmra.mrb[0].mxu0 %v900
        %v1073 = vpop.f32.mrb[0].mxu0
        %v1074 = vadd.f32 %v878, %v1073
        %v1075 = vpop.f32.mrb[0].mxu0
        %1076 = vmatprep.mubr.f32.mxu0 0.0
        %1077 = vmatmul.mubr.f32.gmra.mrb[0].mxu0 %v903
        %v1078 = vpop.f32.mrb[0].mxu0
        %v1079 = vadd.f32 %v878, %v1078
        %v1080 = vpop.f32.mrb[0].mxu0
        %1081 = vmatprep.mubr.f32.mxu0 0.0
        %1082 = vmatmul.mubr.f32.gmra.mrb[0].mxu0 %v906
        %v1083 = vpop.f32.mrb[0].mxu0
        %v1084 = vadd.f32 %v878, %v1083
        %v1085 = vpop.f32.mrb[0].mxu0
        %1086 = vmatprep.mubr.f32.mxu0 0.0
        %1087 = vmatmul.mubr.f32.gmra.mrb[0].mxu0 %v909
        %v1088 = vpop.f32.mrb[0].mxu0
        %v1089 = vadd.f32 %v878, %v1088
        %v1090 = vpop.f32.mrb[0].mxu0
        %1091 = vmatprep.mubr.f32.mxu0 0.0
        %1092 = vmatmul.mubr.f32.gmra.mrb[0].mxu0 %v912
        %v1093 = vpop.f32.mrb[0].mxu0
        %v1094 = vadd.f32 %v878, %v1093
        %v1095 = vpop.f32.mrb[0].mxu0
        %1096 = vmatprep.mubr.f32.mxu0 0.0
        %1097 = vmatmul.mubr.f32.gmra.mrb[0].mxu0 %v915
        %v1098 = vpop.f32.mrb[0].mxu0
        %v1099 = vadd.f32 %v878, %v1098
        %v1100 = vpop.f32.mrb[0].mxu0
        %1101 = vmatprep.mubr.f32.mxu0 0.0
        %1102 = vmatmul.mubr.f32.gmra.mrb[0].mxu0 %v918
        %v1103 = vpop.f32.mrb[0].mxu0
        %v1104 = vadd.f32 %v878, %v1103
        %v1105 = vpop.f32.mrb[0].mxu0
        %1106 = vmatprep.mubr.f32.mxu0 0.0
        %1107 = vmatmul.mubr.f32.gmra.mrb[0].mxu0 %v921
        %v1108 = vpop.f32.mrb[0].mxu0
        %v1109 = vadd.f32 %v878, %v1108
        %v1110 = vpop.f32.mrb[0].mxu0
        %1111 = vmatprep.mubr.f32.mxu0 0.0
        %1112 = vmatmul.mubr.f32.gmra.mrb[0].mxu0 %v924
        %v1113 = vpop.f32.mrb[0].mxu0
        %v1114 = vadd.f32 %v878, %v1113
        %v1115 = vpop.f32.mrb[0].mxu0
        %1116 = vmatprep.mubr.f32.mxu0 0.0
        %1117 = vmatmul.mubr.f32.gmra.mrb[0].mxu0 %v927
        %v1118 = vpop.f32.mrb[0].mxu0
        %v1119 = vadd.f32 %v878, %v1118
        %v1120 = vpop.f32.mrb[0].mxu0
        %1121 = vmatprep.mubr.f32.mxu0 0.0
        %1122 = vmatmul.mubr.f32.gmra.mrb[0].mxu0 %v930
        %v1123 = vpop.f32.mrb[0].mxu0
        %v1124 = vadd.f32 %v878, %v1123
        %v1125 = vpop.f32.mrb[0].mxu0
        %1126 = vmatprep.mubr.f32.mxu0 0.0
        %1127 = vmatmul.mubr.f32.gmra.mrb[0].mxu0 %v933
        %v1128 = vpop.f32.mrb[0].mxu0
        %v1129 = vadd.f32 %v878, %v1128
        %v1130 = vpop.f32.mrb[0].mxu0
        %1131 = vmatprep.mubr.f32.mxu0 0.0
        %1132 = vmatmul.mubr.f32.gmra.mrb[0].mxu0 %v936
        %v1133 = vpop.f32.mrb[0].mxu0
        %v1134 = vadd.f32 %v878, %v1133
        %v1135 = vpop.f32.mrb[0].mxu0
        %1136 = vmatprep.mubr.f32.mxu0 0.0
        %1137 = vmatmul.mubr.f32.gmra.mrb[0].mxu0 %v939
        %v1138 = vpop.f32.mrb[0].mxu0
        %v1139 = vadd.f32 %v878, %v1138
        %v1140 = vpop.f32.mrb[0].mxu0
        %1141 = vmatprep.mubr.f32.mxu0 0.0
        %1142 = vmatmul.mubr.f32.gmra.mrb[0].mxu0 %v942
        %v1143 = vpop.f32.mrb[0].mxu0
        %v1144 = vadd.f32 %v878, %v1143
        %v1145 = vpop.f32.mrb[0].mxu0
        %1146 = vmatprep.mubr.f32.mxu0 0.0
        %1147 = vmatmul.mubr.f32.gmra.mrb[0].mxu0 %v945
        %v1148 = vpop.f32.mrb[0].mxu0
        %v1149 = vadd.f32 %v878, %v1148
        %v1150 = vpop.f32.mrb[0].mxu0
        %1151 = vmatprep.mubr.f32.mxu0 0.0
        %1152 = vmatmul.mubr.f32.gmra.mrb[0].mxu0 %v948
        %v1153 = vpop.f32.mrb[0].mxu0
        %v1154 = vadd.f32 %v878, %v1153
        %v1155 = vpop.f32.mrb[0].mxu0
        %1156 = vmatprep.mubr.f32.mxu0 0.0
        %1157 = vmatmul.mubr.f32.gmra.mrb[0].mxu0 %v951
        %v1158 = vpop.f32.mrb[0].mxu0
        %v1159 = vadd.f32 %v878, %v1158
        %v1160 = vpop.f32.mrb[0].mxu0
        %1161 = vmatprep.mubr.f32.mxu0 0.0
        %1162 = vmatmul.mubr.f32.gmra.mrb[0].mxu0 %v954
        %v1163 = vpop.f32.mrb[0].mxu0
        %v1164 = vadd.f32 %v878, %v1163
        %v1165 = vpop.f32.mrb[0].mxu0
        %1166 = vmatprep.mubr.f32.mxu0 0.0
        %1167 = vmatmul.mubr.f32.gmra.mrb[0].mxu0 %v957
        %v1168 = vpop.f32.mrb[0].mxu0
        %v1169 = vadd.f32 %v878, %v1168
        %v1170 = vpop.f32.mrb[0].mxu0
        %1171 = vmatprep.mubr.f32.mxu0 0.0
        %1172 = vmatmul.mubr.f32.gmra.mrb[0].mxu0 %v960
        %v1173 = vpop.f32.mrb[0].mxu0
        %v1174 = vadd.f32 %v878, %v1173
        %v1175 = vpop.f32.mrb[0].mxu0
        %1176 = vmatprep.mubr.f32.mxu0 0.0
        %1177 = vmatmul.mubr.f32.gmra.mrb[0].mxu0 %v963
        %v1178 = vpop.f32.mrb[0].mxu0
        %v1179 = vadd.f32 %v878, %v1178
        %v1180 = vpop.f32.mrb[0].mxu0
        %1181 = vmatprep.mubr.f32.mxu0 0.0
        %1182 = vmatmul.mubr.f32.gmra.mrb[0].mxu0 %v966
        %v1183 = vpop.f32.mrb[0].mxu0
        %v1184 = vadd.f32 %v878, %v1183
        %v1185 = vpop.f32.mrb[0].mxu0
        %1186 = vmatprep.mubr.f32.mxu0 0.0
        %1187 = vmatmul.mubr.f32.gmra.mrb[0].mxu0 %v969
        %v1188 = vpop.f32.mrb[0].mxu0
        %v1189 = vadd.f32 %v878, %v1188
        %v1190 = vpop.f32.mrb[0].mxu0
        %1191 = vmatprep.mubr.f32.mxu0 0.0
        %1192 = vmatmul.mubr.f32.gmra.mrb[0].mxu0 %v972
        %v1193 = vpop.f32.mrb[0].mxu0
        %v1194 = vadd.f32 %v878, %v1193
        %v1195 = vpop.f32.mrb[0].mxu0
        %1196 = vmatprep.mubr.f32.mxu0 0.0
        %1197 = vmatmul.mubr.f32.gmra.mrb[0].mxu0 %v975
        %v1198 = vpop.f32.mrb[0].mxu0
        %v1199 = vadd.f32 %v878, %v1198
        %v1200 = vpop.f32.mrb[0].mxu0
        %1201 = vdwg.mxu0
        %v1202 = vld [vmem:[#allocation9] sm:$0xff]
        %v1203 = vld [vmem:[#allocation9 + $0x8] sm:$0xff]
        %v1205 = vsel %vm880, %v1044, 0
        %v1208 = vsel %vm880, %v1049, 0
        %v1211 = vsel %vm880, %v1054, 0
        %v1214 = vsel %vm880, %v1059, 0
        %v1217 = vsel %vm880, %v1064, 0
        %v1220 = vsel %vm880, %v1069, 0
        %v1223 = vsel %vm880, %v1074, 0
        %v1226 = vsel %vm880, %v1079, 0
        %v1229 = vsel %vm880, %v1084, 0
        %v1232 = vsel %vm880, %v1089, 0
        %v1235 = vsel %vm880, %v1094, 0
        %v1238 = vsel %vm880, %v1099, 0
        %v1241 = vsel %vm880, %v1104, 0
        %v1244 = vsel %vm880, %v1109, 0
        %v1247 = vsel %vm880, %v1114, 0
        %v1250 = vsel %vm880, %v1119, 0
        %v1253 = vsel %vm880, %v1124, 0
        %v1256 = vsel %vm880, %v1129, 0
        %v1259 = vsel %vm880, %v1134, 0
        %v1262 = vsel %vm880, %v1139, 0
        %v1265 = vsel %vm880, %v1144, 0
        %v1268 = vsel %vm880, %v1149, 0
        %v1271 = vsel %vm880, %v1154, 0
        %v1274 = vsel %vm880, %v1159, 0
        %v1277 = vsel %vm880, %v1164, 0
        %v1280 = vsel %vm880, %v1169, 0
        %v1283 = vsel %vm880, %v1174, 0
        %v1286 = vsel %vm880, %v1179, 0
        %v1289 = vsel %vm880, %v1184, 0
        %v1292 = vsel %vm880, %v1189, 0
        %v1295 = vsel %vm880, %v1194, 0
        %v1298 = vsel %vm880, %v1199, 0
        %1300 = vmatprep.subr.mxu0 0.0
        %1301 = vmatpush1.msra.mxu0 %v1202
        %1302 = vmatprep.subr.mxu0 0.0
        %1303 = vmatpush1.msra.mxu0 %v1203
        %1304 = vmatprep.subr.mxu0 0.0
        %1305 = vmatpush1.msra.mxu0 0.0
        %1306 = vmatprep.subr.mxu0 0.0
        %1307 = vmatpush1.msra.mxu0 0.0
        %1308 = vmatprep.subr.mxu0 0.0
        %1309 = vmatpush1.msra.mxu0 0.0
        %1310 = vmatprep.subr.mxu0 0.0
        %1311 = vmatpush1.msra.mxu0 0.0
        %1312 = vmatprep.subr.mxu0 0.0
        %1313 = vmatpush1.msra.mxu0 0.0
        %1314 = vmatprep.subr.mxu0 0.0
        %1315 = vmatpush1.msra.mxu0 0.0
        %1316 = vmatprep.subr.mxu0 0.0
        %1317 = vmatpush1.msra.mxu0 0.0
        %1318 = vmatprep.subr.mxu0 0.0
        %1319 = vmatpush1.msra.mxu0 0.0
        %1320 = vmatprep.subr.mxu0 0.0
        %1321 = vmatpush1.msra.mxu0 0.0
        %1322 = vmatprep.subr.mxu0 0.0
        %1323 = vmatpush1.msra.mxu0 0.0
        %1324 = vmatprep.subr.mxu0 0.0
        %1325 = vmatpush1.msra.mxu0 0.0
        %1326 = vmatprep.subr.mxu0 0.0
        %1327 = vmatpush1.msra.mxu0 0.0
        %1328 = vmatprep.subr.mxu0 0.0
        %1329 = vmatpush1.msra.mxu0 0.0
        %1330 = vmatprep.subr.mxu0 0.0
        %1331 = vmatpush1.msra.mxu0 0.0
        %1332 = vmatprep.subr.mxu0 0.0
        %1333 = vmatpush1.msra.mxu0 0.0
        %1334 = vmatprep.subr.mxu0 0.0
        %1335 = vmatpush1.msra.mxu0 0.0
        %1336 = vmatprep.subr.mxu0 0.0
        %1337 = vmatpush1.msra.mxu0 0.0
        %1338 = vmatprep.subr.mxu0 0.0
        %1339 = vmatpush1.msra.mxu0 0.0
        %1340 = vmatprep.subr.mxu0 0.0
        %1341 = vmatpush1.msra.mxu0 0.0
        %1342 = vmatprep.subr.mxu0 0.0
        %1343 = vmatpush1.msra.mxu0 0.0
        %1344 = vmatprep.subr.mxu0 0.0
        %1345 = vmatpush1.msra.mxu0 0.0
        %1346 = vmatprep.subr.mxu0 0.0
        %1347 = vmatpush1.msra.mxu0 0.0
        %1348 = vmatprep.subr.mxu0 0.0
        %1349 = vmatpush1.msra.mxu0 0.0
        %1350 = vmatprep.subr.mxu0 0.0
        %1351 = vmatpush1.msra.mxu0 0.0
        %1352 = vmatprep.subr.mxu0 0.0
        %1353 = vmatpush1.msra.mxu0 0.0
        %1354 = vmatprep.subr.mxu0 0.0
        %1355 = vmatpush1.msra.mxu0 0.0
        %1356 = vmatprep.subr.mxu0 0.0
        %1357 = vmatpush1.msra.mxu0 0.0
        %1358 = vmatprep.subr.mxu0 0.0
        %1359 = vmatpush1.msra.mxu0 0.0
        %1360 = vmatprep.subr.mxu0 0.0
        %1361 = vmatpush1.msra.mxu0 0.0
        %1362 = vmatprep.subr.mxu0 0.0
        %1363 = vmatpush1.msra.mxu0 0.0
        %1364 = vmatprep.mubr.f32.mxu0 0.0
        %1365 = vmatmul.mubr.f32.gmra.mrb[0].mxu0 %v1205
        %v1366 = vpop.f32.mrb[0].mxu0
        %v1367 = vadd.f32 0.0, %v1366
        %v1368 = vpop.f32.mrb[0].mxu0
        %1369 = vmatprep.mubr.f32.mxu0 0.0
        %1370 = vmatmul.mubr.f32.gmra.mrb[0].mxu0 %v1208
        %v1371 = vpop.f32.mrb[0].mxu0
        %v1372 = vadd.f32 0.0, %v1371
        %v1373 = vpop.f32.mrb[0].mxu0
        %1374 = vmatprep.mubr.f32.mxu0 0.0
        %1375 = vmatmul.mubr.f32.gmra.mrb[0].mxu0 %v1211
        %v1376 = vpop.f32.mrb[0].mxu0
        %v1377 = vadd.f32 0.0, %v1376
        %v1378 = vpop.f32.mrb[0].mxu0
        %1379 = vmatprep.mubr.f32.mxu0 0.0
        %1380 = vmatmul.mubr.f32.gmra.mrb[0].mxu0 %v1214
        %v1381 = vpop.f32.mrb[0].mxu0
        %v1382 = vadd.f32 0.0, %v1381
        %v1383 = vpop.f32.mrb[0].mxu0
        %1384 = vmatprep.mubr.f32.mxu0 0.0
        %1385 = vmatmul.mubr.f32.gmra.mrb[0].mxu0 %v1217
        %v1386 = vpop.f32.mrb[0].mxu0
        %v1387 = vadd.f32 0.0, %v1386
        %v1388 = vpop.f32.mrb[0].mxu0
        %1389 = vmatprep.mubr.f32.mxu0 0.0
        %1390 = vmatmul.mubr.f32.gmra.mrb[0].mxu0 %v1220
        %v1391 = vpop.f32.mrb[0].mxu0
        %v1392 = vadd.f32 0.0, %v1391
        %v1393 = vpop.f32.mrb[0].mxu0
        %1394 = vmatprep.mubr.f32.mxu0 0.0
        %1395 = vmatmul.mubr.f32.gmra.mrb[0].mxu0 %v1223
        %v1396 = vpop.f32.mrb[0].mxu0
        %v1397 = vadd.f32 0.0, %v1396
        %v1398 = vpop.f32.mrb[0].mxu0
        %1399 = vmatprep.mubr.f32.mxu0 0.0
        %1400 = vmatmul.mubr.f32.gmra.mrb[0].mxu0 %v1226
        %v1401 = vpop.f32.mrb[0].mxu0
        %v1402 = vadd.f32 0.0, %v1401
        %v1403 = vpop.f32.mrb[0].mxu0
        %1404 = vmatprep.mubr.f32.mxu0 0.0
        %1405 = vmatmul.mubr.f32.gmra.mrb[0].mxu0 %v1229
        %v1406 = vpop.f32.mrb[0].mxu0
        %v1407 = vadd.f32 0.0, %v1406
        %v1408 = vpop.f32.mrb[0].mxu0
        %1409 = vmatprep.mubr.f32.mxu0 0.0
        %1410 = vmatmul.mubr.f32.gmra.mrb[0].mxu0 %v1232
        %v1411 = vpop.f32.mrb[0].mxu0
        %v1412 = vadd.f32 0.0, %v1411
        %v1413 = vpop.f32.mrb[0].mxu0
        %1414 = vmatprep.mubr.f32.mxu0 0.0
        %1415 = vmatmul.mubr.f32.gmra.mrb[0].mxu0 %v1235
        %v1416 = vpop.f32.mrb[0].mxu0
        %v1417 = vadd.f32 0.0, %v1416
        %v1418 = vpop.f32.mrb[0].mxu0
        %1419 = vmatprep.mubr.f32.mxu0 0.0
        %1420 = vmatmul.mubr.f32.gmra.mrb[0].mxu0 %v1238
        %v1421 = vpop.f32.mrb[0].mxu0
        %v1422 = vadd.f32 0.0, %v1421
        %v1423 = vpop.f32.mrb[0].mxu0
        %1424 = vmatprep.mubr.f32.mxu0 0.0
        %1425 = vmatmul.mubr.f32.gmra.mrb[0].mxu0 %v1241
        %v1426 = vpop.f32.mrb[0].mxu0
        %v1427 = vadd.f32 0.0, %v1426
        %v1428 = vpop.f32.mrb[0].mxu0
        %1429 = vmatprep.mubr.f32.mxu0 0.0
        %1430 = vmatmul.mubr.f32.gmra.mrb[0].mxu0 %v1244
        %v1431 = vpop.f32.mrb[0].mxu0
        %v1432 = vadd.f32 0.0, %v1431
        %v1433 = vpop.f32.mrb[0].mxu0
        %1434 = vmatprep.mubr.f32.mxu0 0.0
        %1435 = vmatmul.mubr.f32.gmra.mrb[0].mxu0 %v1247
        %v1436 = vpop.f32.mrb[0].mxu0
        %v1437 = vadd.f32 0.0, %v1436
        %v1438 = vpop.f32.mrb[0].mxu0
        %1439 = vmatprep.mubr.f32.mxu0 0.0
        %1440 = vmatmul.mubr.f32.gmra.mrb[0].mxu0 %v1250
        %v1441 = vpop.f32.mrb[0].mxu0
        %v1442 = vadd.f32 0.0, %v1441
        %v1443 = vpop.f32.mrb[0].mxu0
        %1444 = vmatprep.mubr.f32.mxu0 0.0
        %1445 = vmatmul.mubr.f32.gmra.mrb[0].mxu0 %v1253
        %v1446 = vpop.f32.mrb[0].mxu0
        %v1447 = vadd.f32 0.0, %v1446
        %v1448 = vpop.f32.mrb[0].mxu0
        %1449 = vmatprep.mubr.f32.mxu0 0.0
        %1450 = vmatmul.mubr.f32.gmra.mrb[0].mxu0 %v1256
        %v1451 = vpop.f32.mrb[0].mxu0
        %v1452 = vadd.f32 0.0, %v1451
        %v1453 = vpop.f32.mrb[0].mxu0
        %1454 = vmatprep.mubr.f32.mxu0 0.0
        %1455 = vmatmul.mubr.f32.gmra.mrb[0].mxu0 %v1259
        %v1456 = vpop.f32.mrb[0].mxu0
        %v1457 = vadd.f32 0.0, %v1456
        %v1458 = vpop.f32.mrb[0].mxu0
        %1459 = vmatprep.mubr.f32.mxu0 0.0
        %1460 = vmatmul.mubr.f32.gmra.mrb[0].mxu0 %v1262
        %v1461 = vpop.f32.mrb[0].mxu0
        %v1462 = vadd.f32 0.0, %v1461
        %v1463 = vpop.f32.mrb[0].mxu0
        %1464 = vmatprep.mubr.f32.mxu0 0.0
        %1465 = vmatmul.mubr.f32.gmra.mrb[0].mxu0 %v1265
        %v1466 = vpop.f32.mrb[0].mxu0
        %v1467 = vadd.f32 0.0, %v1466
        %v1468 = vpop.f32.mrb[0].mxu0
        %1469 = vmatprep.mubr.f32.mxu0 0.0
        %1470 = vmatmul.mubr.f32.gmra.mrb[0].mxu0 %v1268
        %v1471 = vpop.f32.mrb[0].mxu0
        %v1472 = vadd.f32 0.0, %v1471
        %v1473 = vpop.f32.mrb[0].mxu0
        %1474 = vmatprep.mubr.f32.mxu0 0.0
        %1475 = vmatmul.mubr.f32.gmra.mrb[0].mxu0 %v1271
        %v1476 = vpop.f32.mrb[0].mxu0
        %v1477 = vadd.f32 0.0, %v1476
        %v1478 = vpop.f32.mrb[0].mxu0
        %1479 = vmatprep.mubr.f32.mxu0 0.0
        %1480 = vmatmul.mubr.f32.gmra.mrb[0].mxu0 %v1274
        %v1481 = vpop.f32.mrb[0].mxu0
        %v1482 = vadd.f32 0.0, %v1481
        %v1483 = vpop.f32.mrb[0].mxu0
        %1484 = vmatprep.mubr.f32.mxu0 0.0
        %1485 = vmatmul.mubr.f32.gmra.mrb[0].mxu0 %v1277
        %v1486 = vpop.f32.mrb[0].mxu0
        %v1487 = vadd.f32 0.0, %v1486
        %v1488 = vpop.f32.mrb[0].mxu0
        %1489 = vmatprep.mubr.f32.mxu0 0.0
        %1490 = vmatmul.mubr.f32.gmra.mrb[0].mxu0 %v1280
        %v1491 = vpop.f32.mrb[0].mxu0
        %v1492 = vadd.f32 0.0, %v1491
        %v1493 = vpop.f32.mrb[0].mxu0
        %1494 = vmatprep.mubr.f32.mxu0 0.0
        %1495 = vmatmul.mubr.f32.gmra.mrb[0].mxu0 %v1283
        %v1496 = vpop.f32.mrb[0].mxu0
        %v1497 = vadd.f32 0.0, %v1496
        %v1498 = vpop.f32.mrb[0].mxu0
        %1499 = vmatprep.mubr.f32.mxu0 0.0
        %1500 = vmatmul.mubr.f32.gmra.mrb[0].mxu0 %v1286
        %v1501 = vpop.f32.mrb[0].mxu0
        %v1502 = vadd.f32 0.0, %v1501
        %v1503 = vpop.f32.mrb[0].mxu0
        %1504 = vmatprep.mubr.f32.mxu0 0.0
        %1505 = vmatmul.mubr.f32.gmra.mrb[0].mxu0 %v1289
        %v1506 = vpop.f32.mrb[0].mxu0
        %v1507 = vadd.f32 0.0, %v1506
        %v1508 = vpop.f32.mrb[0].mxu0
        %1509 = vmatprep.mubr.f32.mxu0 0.0
        %1510 = vmatmul.mubr.f32.gmra.mrb[0].mxu0 %v1292
        %v1511 = vpop.f32.mrb[0].mxu0
        %v1512 = vadd.f32 0.0, %v1511
        %v1513 = vpop.f32.mrb[0].mxu0
        %1514 = vmatprep.mubr.f32.mxu0 0.0
        %1515 = vmatmul.mubr.f32.gmra.mrb[0].mxu0 %v1295
        %v1516 = vpop.f32.mrb[0].mxu0
        %v1517 = vadd.f32 0.0, %v1516
        %v1518 = vpop.f32.mrb[0].mxu0
        %1519 = vmatprep.mubr.f32.mxu0 0.0
        %1520 = vmatmul.mubr.f32.gmra.mrb[0].mxu0 %v1298
        %v1521 = vpop.f32.mrb[0].mxu0
        %v1522 = vadd.f32 0.0, %v1521
        %v1523 = vpop.f32.mrb[0].mxu0
        %1524 = vdwg.mxu0
        %1525 = vst.msk [vmem:[%s498] sm:$0xff] %vm880, %v1367
        %1526 = vst.msk [vmem:[%s498 + $0x8] sm:$0xff] %vm880, %v1372
        %1527 = vst.msk [vmem:[%s498 + $0x10] sm:$0xff] %vm880, %v1377
        %1528 = vst.msk [vmem:[%s498 + $0x18] sm:$0xff] %vm880, %v1382
        %1529 = vst.msk [vmem:[%s498 + $0x20] sm:$0xff] %vm880, %v1387
        %1530 = vst.msk [vmem:[%s498 + $0x28] sm:$0xff] %vm880, %v1392
        %1531 = vst.msk [vmem:[%s498 + $0x30] sm:$0xff] %vm880, %v1397
        %1532 = vst.msk [vmem:[%s498 + $0x38] sm:$0xff] %vm880, %v1402
        %1533 = vst.msk [vmem:[%s498 + $0x40] sm:$0xff] %vm880, %v1407
        %1534 = vst.msk [vmem:[%s498 + $0x48] sm:$0xff] %vm880, %v1412
        %1535 = vst.msk [vmem:[%s498 + $0x50] sm:$0xff] %vm880, %v1417
        %1536 = vst.msk [vmem:[%s498 + $0x58] sm:$0xff] %vm880, %v1422
        %1537 = vst.msk [vmem:[%s498 + $0x60] sm:$0xff] %vm880, %v1427
        %1538 = vst.msk [vmem:[%s498 + $0x68] sm:$0xff] %vm880, %v1432
        %1539 = vst.msk [vmem:[%s498 + $0x70] sm:$0xff] %vm880, %v1437
        %1540 = vst.msk [vmem:[%s498 + $0x78] sm:$0xff] %vm880, %v1442
        %1541 = vst.msk [vmem:[%s498 + $0x80] sm:$0xff] %vm880, %v1447
        %1542 = vst.msk [vmem:[%s498 + $0x88] sm:$0xff] %vm880, %v1452
        %1543 = vst.msk [vmem:[%s498 + $0x90] sm:$0xff] %vm880, %v1457
        %1544 = vst.msk [vmem:[%s498 + $0x98] sm:$0xff] %vm880, %v1462
        %1545 = vst.msk [vmem:[%s498 + $0xa0] sm:$0xff] %vm880, %v1467
        %1546 = vst.msk [vmem:[%s498 + $0xa8] sm:$0xff] %vm880, %v1472
        %1547 = vst.msk [vmem:[%s498 + $0xb0] sm:$0xff] %vm880, %v1477
        %1548 = vst.msk [vmem:[%s498 + $0xb8] sm:$0xff] %vm880, %v1482
        %1549 = vst.msk [vmem:[%s498 + $0xc0] sm:$0xff] %vm880, %v1487
        %1550 = vst.msk [vmem:[%s498 + $0xc8] sm:$0xff] %vm880, %v1492
        %1551 = vst.msk [vmem:[%s498 + $0xd0] sm:$0xff] %vm880, %v1497
        %1552 = vst.msk [vmem:[%s498 + $0xd8] sm:$0xff] %vm880, %v1502
        %1553 = vst.msk [vmem:[%s498 + $0xe0] sm:$0xff] %vm880, %v1507
        %1554 = vst.msk [vmem:[%s498 + $0xe8] sm:$0xff] %vm880, %v1512
        %1555 = vst.msk [vmem:[%s498 + $0xf0] sm:$0xff] %vm880, %v1517
        %1556 = vst.msk [vmem:[%s498 + $0xf8] sm:$0xff] %vm880, %v1522
        %v1557 = vld [vmem:[%s492] sm:$0xff]
        %v1558 = vld [vmem:[%s492 + $0x8] sm:$0xff]
        %v1559 = vld [vmem:[%s492 + $0x10] sm:$0xff]
        %v1560 = vld [vmem:[%s492 + $0x18] sm:$0xff]
        %v1561 = vld [vmem:[%s492 + $0x20] sm:$0xff]
        %v1562 = vld [vmem:[%s492 + $0x28] sm:$0xff]
        %v1563 = vld [vmem:[%s492 + $0x30] sm:$0xff]
        %v1564 = vld [vmem:[%s492 + $0x38] sm:$0xff]
        %v1565 = vld [vmem:[%s492 + $0x40] sm:$0xff]
        %v1566 = vld [vmem:[%s492 + $0x48] sm:$0xff]
        %v1567 = vld [vmem:[%s492 + $0x50] sm:$0xff]
        %v1568 = vld [vmem:[%s492 + $0x58] sm:$0xff]
        %v1569 = vld [vmem:[%s492 + $0x60] sm:$0xff]
        %v1570 = vld [vmem:[%s492 + $0x68] sm:$0xff]
        %v1571 = vld [vmem:[%s492 + $0x70] sm:$0xff]
        %v1572 = vld [vmem:[%s492 + $0x78] sm:$0xff]
        %v1573 = vld [vmem:[%s492 + $0x80] sm:$0xff]
        %v1574 = vld [vmem:[%s492 + $0x88] sm:$0xff]
        %v1575 = vld [vmem:[%s492 + $0x90] sm:$0xff]
        %v1576 = vld [vmem:[%s492 + $0x98] sm:$0xff]
        %v1577 = vld [vmem:[%s492 + $0xa0] sm:$0xff]
        %v1578 = vld [vmem:[%s492 + $0xa8] sm:$0xff]
        %v1579 = vld [vmem:[%s492 + $0xb0] sm:$0xff]
        %v1580 = vld [vmem:[%s492 + $0xb8] sm:$0xff]
        %v1581 = vld [vmem:[%s492 + $0xc0] sm:$0xff]
        %v1582 = vld [vmem:[%s492 + $0xc8] sm:$0xff]
        %v1583 = vld [vmem:[%s492 + $0xd0] sm:$0xff]
        %v1584 = vld [vmem:[%s492 + $0xd8] sm:$0xff]
        %v1585 = vld [vmem:[%s492 + $0xe0] sm:$0xff]
        %v1586 = vld [vmem:[%s492 + $0xe8] sm:$0xff]
        %v1587 = vld [vmem:[%s492 + $0xf0] sm:$0xff]
        %v1588 = vld [vmem:[%s492 + $0xf8] sm:$0xff]
        %v1589 = vld [vmem:[%s6] sm:$0xff]
        %v1590 = vld [vmem:[%s6 + $0x8] sm:$0xff]
        %v1591 = vld [vmem:[#allocation7] sm:$0x1]
        %v1593 = vlaneseq
        %v1594 = vshrl.u32 %v1593, 7
        %v1595 = vsub.s32 0, %v1594
        %v1596 = vrot.slane %v1591, %v1595
        %v1599 = vsel %vm880, %v1557, 0
        %v1602 = vsel %vm880, %v1558, 0
        %v1605 = vsel %vm880, %v1559, 0
        %v1608 = vsel %vm880, %v1560, 0
        %v1611 = vsel %vm880, %v1561, 0
        %v1614 = vsel %vm880, %v1562, 0
        %v1617 = vsel %vm880, %v1563, 0
        %v1620 = vsel %vm880, %v1564, 0
        %v1623 = vsel %vm880, %v1565, 0
        %v1626 = vsel %vm880, %v1566, 0
        %v1629 = vsel %vm880, %v1567, 0
        %v1632 = vsel %vm880, %v1568, 0
        %v1635 = vsel %vm880, %v1569, 0
        %v1638 = vsel %vm880, %v1570, 0
        %v1641 = vsel %vm880, %v1571, 0
        %v1644 = vsel %vm880, %v1572, 0
        %v1647 = vsel %vm880, %v1573, 0
        %v1650 = vsel %vm880, %v1574, 0
        %v1653 = vsel %vm880, %v1575, 0
        %v1656 = vsel %vm880, %v1576, 0
        %v1659 = vsel %vm880, %v1577, 0
        %v1662 = vsel %vm880, %v1578, 0
        %v1665 = vsel %vm880, %v1579, 0
        %v1668 = vsel %vm880, %v1580, 0
        %v1671 = vsel %vm880, %v1581, 0
        %v1674 = vsel %vm880, %v1582, 0
        %v1677 = vsel %vm880, %v1583, 0
        %v1680 = vsel %vm880, %v1584, 0
        %v1683 = vsel %vm880, %v1585, 0
        %v1686 = vsel %vm880, %v1586, 0
        %v1689 = vsel %vm880, %v1587, 0
        %v1692 = vsel %vm880, %v1588, 0
        %1694 = vmatprep.subr.mxu0 0.0
        %1695 = vmatpush1.msra.mxu0 %v1589
        %1696 = vmatprep.subr.mxu0 0.0
        %1697 = vmatpush1.msra.mxu0 %v1590
        %1698 = vmatprep.subr.mxu0 0.0
        %1699 = vmatpush1.msra.mxu0 0.0
        %1700 = vmatprep.subr.mxu0 0.0
        %1701 = vmatpush1.msra.mxu0 0.0
        %1702 = vmatprep.subr.mxu0 0.0
        %1703 = vmatpush1.msra.mxu0 0.0
        %1704 = vmatprep.subr.mxu0 0.0
        %1705 = vmatpush1.msra.mxu0 0.0
        %1706 = vmatprep.subr.mxu0 0.0
        %1707 = vmatpush1.msra.mxu0 0.0
        %1708 = vmatprep.subr.mxu0 0.0
        %1709 = vmatpush1.msra.mxu0 0.0
        %1710 = vmatprep.subr.mxu0 0.0
        %1711 = vmatpush1.msra.mxu0 0.0
        %1712 = vmatprep.subr.mxu0 0.0
        %1713 = vmatpush1.msra.mxu0 0.0
        %1714 = vmatprep.subr.mxu0 0.0
        %1715 = vmatpush1.msra.mxu0 0.0
        %1716 = vmatprep.subr.mxu0 0.0
        %1717 = vmatpush1.msra.mxu0 0.0
        %1718 = vmatprep.subr.mxu0 0.0
        %1719 = vmatpush1.msra.mxu0 0.0
        %1720 = vmatprep.subr.mxu0 0.0
        %1721 = vmatpush1.msra.mxu0 0.0
        %1722 = vmatprep.subr.mxu0 0.0
        %1723 = vmatpush1.msra.mxu0 0.0
        %1724 = vmatprep.subr.mxu0 0.0
        %1725 = vmatpush1.msra.mxu0 0.0
        %1726 = vmatprep.subr.mxu0 0.0
        %1727 = vmatpush1.msra.mxu0 0.0
        %1728 = vmatprep.subr.mxu0 0.0
        %1729 = vmatpush1.msra.mxu0 0.0
        %1730 = vmatprep.subr.mxu0 0.0
        %1731 = vmatpush1.msra.mxu0 0.0
        %1732 = vmatprep.subr.mxu0 0.0
        %1733 = vmatpush1.msra.mxu0 0.0
        %1734 = vmatprep.subr.mxu0 0.0
        %1735 = vmatpush1.msra.mxu0 0.0
        %1736 = vmatprep.subr.mxu0 0.0
        %1737 = vmatpush1.msra.mxu0 0.0
        %1738 = vmatprep.subr.mxu0 0.0
        %1739 = vmatpush1.msra.mxu0 0.0
        %1740 = vmatprep.subr.mxu0 0.0
        %1741 = vmatpush1.msra.mxu0 0.0
        %1742 = vmatprep.subr.mxu0 0.0
        %1743 = vmatpush1.msra.mxu0 0.0
        %1744 = vmatprep.subr.mxu0 0.0
        %1745 = vmatpush1.msra.mxu0 0.0
        %1746 = vmatprep.subr.mxu0 0.0
        %1747 = vmatpush1.msra.mxu0 0.0
        %1748 = vmatprep.subr.mxu0 0.0
        %1749 = vmatpush1.msra.mxu0 0.0
        %1750 = vmatprep.subr.mxu0 0.0
        %1751 = vmatpush1.msra.mxu0 0.0
        %1752 = vmatprep.subr.mxu0 0.0
        %1753 = vmatpush1.msra.mxu0 0.0
        %1754 = vmatprep.subr.mxu0 0.0
        %1755 = vmatpush1.msra.mxu0 0.0
        %1756 = vmatprep.subr.mxu0 0.0
        %1757 = vmatpush1.msra.mxu0 0.0
        %1758 = vmatprep.mubr.f32.mxu0 0.0
        %1759 = vmatmul.mubr.f32.gmra.mrb[0].mxu0 %v1599
        %v1760 = vpop.f32.mrb[0].mxu0
        %v1761 = vadd.f32 %v1596, %v1760
        %v1762 = vpop.f32.mrb[0].mxu0
        %1763 = vmatprep.mubr.f32.mxu0 0.0
        %1764 = vmatmul.mubr.f32.gmra.mrb[0].mxu0 %v1602
        %v1765 = vpop.f32.mrb[0].mxu0
        %v1766 = vadd.f32 %v1596, %v1765
        %v1767 = vpop.f32.mrb[0].mxu0
        %1768 = vmatprep.mubr.f32.mxu0 0.0
        %1769 = vmatmul.mubr.f32.gmra.mrb[0].mxu0 %v1605
        %v1770 = vpop.f32.mrb[0].mxu0
        %v1771 = vadd.f32 %v1596, %v1770
        %v1772 = vpop.f32.mrb[0].mxu0
        %1773 = vmatprep.mubr.f32.mxu0 0.0
        %1774 = vmatmul.mubr.f32.gmra.mrb[0].mxu0 %v1608
        %v1775 = vpop.f32.mrb[0].mxu0
        %v1776 = vadd.f32 %v1596, %v1775
        %v1777 = vpop.f32.mrb[0].mxu0
        %1778 = vmatprep.mubr.f32.mxu0 0.0
        %1779 = vmatmul.mubr.f32.gmra.mrb[0].mxu0 %v1611
        %v1780 = vpop.f32.mrb[0].mxu0
        %v1781 = vadd.f32 %v1596, %v1780
        %v1782 = vpop.f32.mrb[0].mxu0
        %1783 = vmatprep.mubr.f32.mxu0 0.0
        %1784 = vmatmul.mubr.f32.gmra.mrb[0].mxu0 %v1614
        %v1785 = vpop.f32.mrb[0].mxu0
        %v1786 = vadd.f32 %v1596, %v1785
        %v1787 = vpop.f32.mrb[0].mxu0
        %1788 = vmatprep.mubr.f32.mxu0 0.0
        %1789 = vmatmul.mubr.f32.gmra.mrb[0].mxu0 %v1617
        %v1790 = vpop.f32.mrb[0].mxu0
        %v1791 = vadd.f32 %v1596, %v1790
        %v1792 = vpop.f32.mrb[0].mxu0
        %1793 = vmatprep.mubr.f32.mxu0 0.0
        %1794 = vmatmul.mubr.f32.gmra.mrb[0].mxu0 %v1620
        %v1795 = vpop.f32.mrb[0].mxu0
        %v1796 = vadd.f32 %v1596, %v1795
        %v1797 = vpop.f32.mrb[0].mxu0
        %1798 = vmatprep.mubr.f32.mxu0 0.0
        %1799 = vmatmul.mubr.f32.gmra.mrb[0].mxu0 %v1623
        %v1800 = vpop.f32.mrb[0].mxu0
        %v1801 = vadd.f32 %v1596, %v1800
        %v1802 = vpop.f32.mrb[0].mxu0
        %1803 = vmatprep.mubr.f32.mxu0 0.0
        %1804 = vmatmul.mubr.f32.gmra.mrb[0].mxu0 %v1626
        %v1805 = vpop.f32.mrb[0].mxu0
        %v1806 = vadd.f32 %v1596, %v1805
        %v1807 = vpop.f32.mrb[0].mxu0
        %1808 = vmatprep.mubr.f32.mxu0 0.0
        %1809 = vmatmul.mubr.f32.gmra.mrb[0].mxu0 %v1629
        %v1810 = vpop.f32.mrb[0].mxu0
        %v1811 = vadd.f32 %v1596, %v1810
        %v1812 = vpop.f32.mrb[0].mxu0
        %1813 = vmatprep.mubr.f32.mxu0 0.0
        %1814 = vmatmul.mubr.f32.gmra.mrb[0].mxu0 %v1632
        %v1815 = vpop.f32.mrb[0].mxu0
        %v1816 = vadd.f32 %v1596, %v1815
        %v1817 = vpop.f32.mrb[0].mxu0
        %1818 = vmatprep.mubr.f32.mxu0 0.0
        %1819 = vmatmul.mubr.f32.gmra.mrb[0].mxu0 %v1635
        %v1820 = vpop.f32.mrb[0].mxu0
        %v1821 = vadd.f32 %v1596, %v1820
        %v1822 = vpop.f32.mrb[0].mxu0
        %1823 = vmatprep.mubr.f32.mxu0 0.0
        %1824 = vmatmul.mubr.f32.gmra.mrb[0].mxu0 %v1638
        %v1825 = vpop.f32.mrb[0].mxu0
        %v1826 = vadd.f32 %v1596, %v1825
        %v1827 = vpop.f32.mrb[0].mxu0
        %1828 = vmatprep.mubr.f32.mxu0 0.0
        %1829 = vmatmul.mubr.f32.gmra.mrb[0].mxu0 %v1641
        %v1830 = vpop.f32.mrb[0].mxu0
        %v1831 = vadd.f32 %v1596, %v1830
        %v1832 = vpop.f32.mrb[0].mxu0
        %1833 = vmatprep.mubr.f32.mxu0 0.0
        %1834 = vmatmul.mubr.f32.gmra.mrb[0].mxu0 %v1644
        %v1835 = vpop.f32.mrb[0].mxu0
        %v1836 = vadd.f32 %v1596, %v1835
        %v1837 = vpop.f32.mrb[0].mxu0
        %1838 = vmatprep.mubr.f32.mxu0 0.0
        %1839 = vmatmul.mubr.f32.gmra.mrb[0].mxu0 %v1647
        %v1840 = vpop.f32.mrb[0].mxu0
        %v1841 = vadd.f32 %v1596, %v1840
        %v1842 = vpop.f32.mrb[0].mxu0
        %1843 = vmatprep.mubr.f32.mxu0 0.0
        %1844 = vmatmul.mubr.f32.gmra.mrb[0].mxu0 %v1650
        %v1845 = vpop.f32.mrb[0].mxu0
        %v1846 = vadd.f32 %v1596, %v1845
        %v1847 = vpop.f32.mrb[0].mxu0
        %1848 = vmatprep.mubr.f32.mxu0 0.0
        %1849 = vmatmul.mubr.f32.gmra.mrb[0].mxu0 %v1653
        %v1850 = vpop.f32.mrb[0].mxu0
        %v1851 = vadd.f32 %v1596, %v1850
        %v1852 = vpop.f32.mrb[0].mxu0
        %1853 = vmatprep.mubr.f32.mxu0 0.0
        %1854 = vmatmul.mubr.f32.gmra.mrb[0].mxu0 %v1656
        %v1855 = vpop.f32.mrb[0].mxu0
        %v1856 = vadd.f32 %v1596, %v1855
        %v1857 = vpop.f32.mrb[0].mxu0
        %1858 = vmatprep.mubr.f32.mxu0 0.0
        %1859 = vmatmul.mubr.f32.gmra.mrb[0].mxu0 %v1659
        %v1860 = vpop.f32.mrb[0].mxu0
        %v1861 = vadd.f32 %v1596, %v1860
        %v1862 = vpop.f32.mrb[0].mxu0
        %1863 = vmatprep.mubr.f32.mxu0 0.0
        %1864 = vmatmul.mubr.f32.gmra.mrb[0].mxu0 %v1662
        %v1865 = vpop.f32.mrb[0].mxu0
        %v1866 = vadd.f32 %v1596, %v1865
        %v1867 = vpop.f32.mrb[0].mxu0
        %1868 = vmatprep.mubr.f32.mxu0 0.0
        %1869 = vmatmul.mubr.f32.gmra.mrb[0].mxu0 %v1665
        %v1870 = vpop.f32.mrb[0].mxu0
        %v1871 = vadd.f32 %v1596, %v1870
        %v1872 = vpop.f32.mrb[0].mxu0
        %1873 = vmatprep.mubr.f32.mxu0 0.0
        %1874 = vmatmul.mubr.f32.gmra.mrb[0].mxu0 %v1668
        %v1875 = vpop.f32.mrb[0].mxu0
        %v1876 = vadd.f32 %v1596, %v1875
        %v1877 = vpop.f32.mrb[0].mxu0
        %1878 = vmatprep.mubr.f32.mxu0 0.0
        %1879 = vmatmul.mubr.f32.gmra.mrb[0].mxu0 %v1671
        %v1880 = vpop.f32.mrb[0].mxu0
        %v1881 = vadd.f32 %v1596, %v1880
        %v1882 = vpop.f32.mrb[0].mxu0
        %1883 = vmatprep.mubr.f32.mxu0 0.0
        %1884 = vmatmul.mubr.f32.gmra.mrb[0].mxu0 %v1674
        %v1885 = vpop.f32.mrb[0].mxu0
        %v1886 = vadd.f32 %v1596, %v1885
        %v1887 = vpop.f32.mrb[0].mxu0
        %1888 = vmatprep.mubr.f32.mxu0 0.0
        %1889 = vmatmul.mubr.f32.gmra.mrb[0].mxu0 %v1677
        %v1890 = vpop.f32.mrb[0].mxu0
        %v1891 = vadd.f32 %v1596, %v1890
        %v1892 = vpop.f32.mrb[0].mxu0
        %1893 = vmatprep.mubr.f32.mxu0 0.0
        %1894 = vmatmul.mubr.f32.gmra.mrb[0].mxu0 %v1680
        %v1895 = vpop.f32.mrb[0].mxu0
        %v1896 = vadd.f32 %v1596, %v1895
        %v1897 = vpop.f32.mrb[0].mxu0
        %1898 = vmatprep.mubr.f32.mxu0 0.0
        %1899 = vmatmul.mubr.f32.gmra.mrb[0].mxu0 %v1683
        %v1900 = vpop.f32.mrb[0].mxu0
        %v1901 = vadd.f32 %v1596, %v1900
        %v1902 = vpop.f32.mrb[0].mxu0
        %1903 = vmatprep.mubr.f32.mxu0 0.0
        %1904 = vmatmul.mubr.f32.gmra.mrb[0].mxu0 %v1686
        %v1905 = vpop.f32.mrb[0].mxu0
        %v1906 = vadd.f32 %v1596, %v1905
        %v1907 = vpop.f32.mrb[0].mxu0
        %1908 = vmatprep.mubr.f32.mxu0 0.0
        %1909 = vmatmul.mubr.f32.gmra.mrb[0].mxu0 %v1689
        %v1910 = vpop.f32.mrb[0].mxu0
        %v1911 = vadd.f32 %v1596, %v1910
        %v1912 = vpop.f32.mrb[0].mxu0
        %1913 = vmatprep.mubr.f32.mxu0 0.0
        %1914 = vmatmul.mubr.f32.gmra.mrb[0].mxu0 %v1692
        %v1915 = vpop.f32.mrb[0].mxu0
        %v1916 = vadd.f32 %v1596, %v1915
        %v1917 = vpop.f32.mrb[0].mxu0
        %1918 = vdwg.mxu0
        %v1919 = vld [vmem:[#allocation10] sm:$0xff]
        %vm1920 = vcmask 64512
        %v1922 = vsel %vm1920, %v1761, 0
        %v1925 = vsel %vm1920, %v1766, 0
        %v1928 = vsel %vm1920, %v1771, 0
        %v1931 = vsel %vm1920, %v1776, 0
        %v1934 = vsel %vm1920, %v1781, 0
        %v1937 = vsel %vm1920, %v1786, 0
        %v1940 = vsel %vm1920, %v1791, 0
        %v1943 = vsel %vm1920, %v1796, 0
        %v1946 = vsel %vm1920, %v1801, 0
        %v1949 = vsel %vm1920, %v1806, 0
        %v1952 = vsel %vm1920, %v1811, 0
        %v1955 = vsel %vm1920, %v1816, 0
        %v1958 = vsel %vm1920, %v1821, 0
        %v1961 = vsel %vm1920, %v1826, 0
        %v1964 = vsel %vm1920, %v1831, 0
        %v1967 = vsel %vm1920, %v1836, 0
        %v1970 = vsel %vm1920, %v1841, 0
        %v1973 = vsel %vm1920, %v1846, 0
        %v1976 = vsel %vm1920, %v1851, 0
        %v1979 = vsel %vm1920, %v1856, 0
        %v1982 = vsel %vm1920, %v1861, 0
        %v1985 = vsel %vm1920, %v1866, 0
        %v1988 = vsel %vm1920, %v1871, 0
        %v1991 = vsel %vm1920, %v1876, 0
        %v1994 = vsel %vm1920, %v1881, 0
        %v1997 = vsel %vm1920, %v1886, 0
        %v2000 = vsel %vm1920, %v1891, 0
        %v2003 = vsel %vm1920, %v1896, 0
        %v2006 = vsel %vm1920, %v1901, 0
        %v2009 = vsel %vm1920, %v1906, 0
        %v2012 = vsel %vm1920, %v1911, 0
        %v2015 = vsel %vm1920, %v1916, 0
        %2017 = vmatprep.subr.mxu0 0.0
        %2018 = vmatpush1.msra.mxu0 %v1919
        %2019 = vmatprep.subr.mxu0 0.0
        %2020 = vmatpush1.msra.mxu0 0.0
        %2021 = vmatprep.subr.mxu0 0.0
        %2022 = vmatpush1.msra.mxu0 0.0
        %2023 = vmatprep.subr.mxu0 0.0
        %2024 = vmatpush1.msra.mxu0 0.0
        %2025 = vmatprep.subr.mxu0 0.0
        %2026 = vmatpush1.msra.mxu0 0.0
        %2027 = vmatprep.subr.mxu0 0.0
        %2028 = vmatpush1.msra.mxu0 0.0
        %2029 = vmatprep.subr.mxu0 0.0
        %2030 = vmatpush1.msra.mxu0 0.0
        %2031 = vmatprep.subr.mxu0 0.0
        %2032 = vmatpush1.msra.mxu0 0.0
        %2033 = vmatprep.subr.mxu0 0.0
        %2034 = vmatpush1.msra.mxu0 0.0
        %2035 = vmatprep.subr.mxu0 0.0
        %2036 = vmatpush1.msra.mxu0 0.0
        %2037 = vmatprep.subr.mxu0 0.0
        %2038 = vmatpush1.msra.mxu0 0.0
        %2039 = vmatprep.subr.mxu0 0.0
        %2040 = vmatpush1.msra.mxu0 0.0
        %2041 = vmatprep.subr.mxu0 0.0
        %2042 = vmatpush1.msra.mxu0 0.0
        %2043 = vmatprep.subr.mxu0 0.0
        %2044 = vmatpush1.msra.mxu0 0.0
        %2045 = vmatprep.subr.mxu0 0.0
        %2046 = vmatpush1.msra.mxu0 0.0
        %2047 = vmatprep.subr.mxu0 0.0
        %2048 = vmatpush1.msra.mxu0 0.0
        %2049 = vmatprep.subr.mxu0 0.0
        %2050 = vmatpush1.msra.mxu0 0.0
        %2051 = vmatprep.subr.mxu0 0.0
        %2052 = vmatpush1.msra.mxu0 0.0
        %2053 = vmatprep.subr.mxu0 0.0
        %2054 = vmatpush1.msra.mxu0 0.0
        %2055 = vmatprep.subr.mxu0 0.0
        %2056 = vmatpush1.msra.mxu0 0.0
        %2057 = vmatprep.subr.mxu0 0.0
        %2058 = vmatpush1.msra.mxu0 0.0
        %2059 = vmatprep.subr.mxu0 0.0
        %2060 = vmatpush1.msra.mxu0 0.0
        %2061 = vmatprep.subr.mxu0 0.0
        %2062 = vmatpush1.msra.mxu0 0.0
        %2063 = vmatprep.subr.mxu0 0.0
        %2064 = vmatpush1.msra.mxu0 0.0
        %2065 = vmatprep.subr.mxu0 0.0
        %2066 = vmatpush1.msra.mxu0 0.0
        %2067 = vmatprep.subr.mxu0 0.0
        %2068 = vmatpush1.msra.mxu0 0.0
        %2069 = vmatprep.subr.mxu0 0.0
        %2070 = vmatpush1.msra.mxu0 0.0
        %2071 = vmatprep.subr.mxu0 0.0
        %2072 = vmatpush1.msra.mxu0 0.0
        %2073 = vmatprep.subr.mxu0 0.0
        %2074 = vmatpush1.msra.mxu0 0.0
        %2075 = vmatprep.subr.mxu0 0.0
        %2076 = vmatpush1.msra.mxu0 0.0
        %2077 = vmatprep.subr.mxu0 0.0
        %2078 = vmatpush1.msra.mxu0 0.0
        %2079 = vmatprep.subr.mxu0 0.0
        %2080 = vmatpush1.msra.mxu0 0.0
        %2081 = vmatprep.mubr.f32.mxu0 0.0
        %2082 = vmatmul.mubr.f32.gmra.mrb[0].mxu0 %v1922
        %v2083 = vpop.f32.mrb[0].mxu0
        %v2084 = vadd.f32 0.0, %v2083
        %v2085 = vpop.f32.mrb[0].mxu0
        %2086 = vmatprep.mubr.f32.mxu0 0.0
        %2087 = vmatmul.mubr.f32.gmra.mrb[0].mxu0 %v1925
        %v2088 = vpop.f32.mrb[0].mxu0
        %v2089 = vadd.f32 0.0, %v2088
        %v2090 = vpop.f32.mrb[0].mxu0
        %2091 = vmatprep.mubr.f32.mxu0 0.0
        %2092 = vmatmul.mubr.f32.gmra.mrb[0].mxu0 %v1928
        %v2093 = vpop.f32.mrb[0].mxu0
        %v2094 = vadd.f32 0.0, %v2093
        %v2095 = vpop.f32.mrb[0].mxu0
        %2096 = vmatprep.mubr.f32.mxu0 0.0
        %2097 = vmatmul.mubr.f32.gmra.mrb[0].mxu0 %v1931
        %v2098 = vpop.f32.mrb[0].mxu0
        %v2099 = vadd.f32 0.0, %v2098
        %v2100 = vpop.f32.mrb[0].mxu0
        %2101 = vmatprep.mubr.f32.mxu0 0.0
        %2102 = vmatmul.mubr.f32.gmra.mrb[0].mxu0 %v1934
        %v2103 = vpop.f32.mrb[0].mxu0
        %v2104 = vadd.f32 0.0, %v2103
        %v2105 = vpop.f32.mrb[0].mxu0
        %2106 = vmatprep.mubr.f32.mxu0 0.0
        %2107 = vmatmul.mubr.f32.gmra.mrb[0].mxu0 %v1937
        %v2108 = vpop.f32.mrb[0].mxu0
        %v2109 = vadd.f32 0.0, %v2108
        %v2110 = vpop.f32.mrb[0].mxu0
        %2111 = vmatprep.mubr.f32.mxu0 0.0
        %2112 = vmatmul.mubr.f32.gmra.mrb[0].mxu0 %v1940
        %v2113 = vpop.f32.mrb[0].mxu0
        %v2114 = vadd.f32 0.0, %v2113
        %v2115 = vpop.f32.mrb[0].mxu0
        %2116 = vmatprep.mubr.f32.mxu0 0.0
        %2117 = vmatmul.mubr.f32.gmra.mrb[0].mxu0 %v1943
        %v2118 = vpop.f32.mrb[0].mxu0
        %v2119 = vadd.f32 0.0, %v2118
        %v2120 = vpop.f32.mrb[0].mxu0
        %2121 = vmatprep.mubr.f32.mxu0 0.0
        %2122 = vmatmul.mubr.f32.gmra.mrb[0].mxu0 %v1946
        %v2123 = vpop.f32.mrb[0].mxu0
        %v2124 = vadd.f32 0.0, %v2123
        %v2125 = vpop.f32.mrb[0].mxu0
        %2126 = vmatprep.mubr.f32.mxu0 0.0
        %2127 = vmatmul.mubr.f32.gmra.mrb[0].mxu0 %v1949
        %v2128 = vpop.f32.mrb[0].mxu0
        %v2129 = vadd.f32 0.0, %v2128
        %v2130 = vpop.f32.mrb[0].mxu0
        %2131 = vmatprep.mubr.f32.mxu0 0.0
        %2132 = vmatmul.mubr.f32.gmra.mrb[0].mxu0 %v1952
        %v2133 = vpop.f32.mrb[0].mxu0
        %v2134 = vadd.f32 0.0, %v2133
        %v2135 = vpop.f32.mrb[0].mxu0
        %2136 = vmatprep.mubr.f32.mxu0 0.0
        %2137 = vmatmul.mubr.f32.gmra.mrb[0].mxu0 %v1955
        %v2138 = vpop.f32.mrb[0].mxu0
        %v2139 = vadd.f32 0.0, %v2138
        %v2140 = vpop.f32.mrb[0].mxu0
        %2141 = vmatprep.mubr.f32.mxu0 0.0
        %2142 = vmatmul.mubr.f32.gmra.mrb[0].mxu0 %v1958
        %v2143 = vpop.f32.mrb[0].mxu0
        %v2144 = vadd.f32 0.0, %v2143
        %v2145 = vpop.f32.mrb[0].mxu0
        %2146 = vmatprep.mubr.f32.mxu0 0.0
        %2147 = vmatmul.mubr.f32.gmra.mrb[0].mxu0 %v1961
        %v2148 = vpop.f32.mrb[0].mxu0
        %v2149 = vadd.f32 0.0, %v2148
        %v2150 = vpop.f32.mrb[0].mxu0
        %2151 = vmatprep.mubr.f32.mxu0 0.0
        %2152 = vmatmul.mubr.f32.gmra.mrb[0].mxu0 %v1964
        %v2153 = vpop.f32.mrb[0].mxu0
        %v2154 = vadd.f32 0.0, %v2153
        %v2155 = vpop.f32.mrb[0].mxu0
        %2156 = vmatprep.mubr.f32.mxu0 0.0
        %2157 = vmatmul.mubr.f32.gmra.mrb[0].mxu0 %v1967
        %v2158 = vpop.f32.mrb[0].mxu0
        %v2159 = vadd.f32 0.0, %v2158
        %v2160 = vpop.f32.mrb[0].mxu0
        %2161 = vmatprep.mubr.f32.mxu0 0.0
        %2162 = vmatmul.mubr.f32.gmra.mrb[0].mxu0 %v1970
        %v2163 = vpop.f32.mrb[0].mxu0
        %v2164 = vadd.f32 0.0, %v2163
        %v2165 = vpop.f32.mrb[0].mxu0
        %2166 = vmatprep.mubr.f32.mxu0 0.0
        %2167 = vmatmul.mubr.f32.gmra.mrb[0].mxu0 %v1973
        %v2168 = vpop.f32.mrb[0].mxu0
        %v2169 = vadd.f32 0.0, %v2168
        %v2170 = vpop.f32.mrb[0].mxu0
        %2171 = vmatprep.mubr.f32.mxu0 0.0
        %2172 = vmatmul.mubr.f32.gmra.mrb[0].mxu0 %v1976
        %v2173 = vpop.f32.mrb[0].mxu0
        %v2174 = vadd.f32 0.0, %v2173
        %v2175 = vpop.f32.mrb[0].mxu0
        %2176 = vmatprep.mubr.f32.mxu0 0.0
        %2177 = vmatmul.mubr.f32.gmra.mrb[0].mxu0 %v1979
        %v2178 = vpop.f32.mrb[0].mxu0
        %v2179 = vadd.f32 0.0, %v2178
        %v2180 = vpop.f32.mrb[0].mxu0
        %2181 = vmatprep.mubr.f32.mxu0 0.0
        %2182 = vmatmul.mubr.f32.gmra.mrb[0].mxu0 %v1982
        %v2183 = vpop.f32.mrb[0].mxu0
        %v2184 = vadd.f32 0.0, %v2183
        %v2185 = vpop.f32.mrb[0].mxu0
        %2186 = vmatprep.mubr.f32.mxu0 0.0
        %2187 = vmatmul.mubr.f32.gmra.mrb[0].mxu0 %v1985
        %v2188 = vpop.f32.mrb[0].mxu0
        %v2189 = vadd.f32 0.0, %v2188
        %v2190 = vpop.f32.mrb[0].mxu0
        %2191 = vmatprep.mubr.f32.mxu0 0.0
        %2192 = vmatmul.mubr.f32.gmra.mrb[0].mxu0 %v1988
        %v2193 = vpop.f32.mrb[0].mxu0
        %v2194 = vadd.f32 0.0, %v2193
        %v2195 = vpop.f32.mrb[0].mxu0
        %2196 = vmatprep.mubr.f32.mxu0 0.0
        %2197 = vmatmul.mubr.f32.gmra.mrb[0].mxu0 %v1991
        %v2198 = vpop.f32.mrb[0].mxu0
        %v2199 = vadd.f32 0.0, %v2198
        %v2200 = vpop.f32.mrb[0].mxu0
        %2201 = vmatprep.mubr.f32.mxu0 0.0
        %2202 = vmatmul.mubr.f32.gmra.mrb[0].mxu0 %v1994
        %v2203 = vpop.f32.mrb[0].mxu0
        %v2204 = vadd.f32 0.0, %v2203
        %v2205 = vpop.f32.mrb[0].mxu0
        %2206 = vmatprep.mubr.f32.mxu0 0.0
        %2207 = vmatmul.mubr.f32.gmra.mrb[0].mxu0 %v1997
        %v2208 = vpop.f32.mrb[0].mxu0
        %v2209 = vadd.f32 0.0, %v2208
        %v2210 = vpop.f32.mrb[0].mxu0
        %2211 = vmatprep.mubr.f32.mxu0 0.0
        %2212 = vmatmul.mubr.f32.gmra.mrb[0].mxu0 %v2000
        %v2213 = vpop.f32.mrb[0].mxu0
        %v2214 = vadd.f32 0.0, %v2213
        %v2215 = vpop.f32.mrb[0].mxu0
        %2216 = vmatprep.mubr.f32.mxu0 0.0
        %2217 = vmatmul.mubr.f32.gmra.mrb[0].mxu0 %v2003
        %v2218 = vpop.f32.mrb[0].mxu0
        %v2219 = vadd.f32 0.0, %v2218
        %v2220 = vpop.f32.mrb[0].mxu0
        %2221 = vmatprep.mubr.f32.mxu0 0.0
        %2222 = vmatmul.mubr.f32.gmra.mrb[0].mxu0 %v2006
        %v2223 = vpop.f32.mrb[0].mxu0
        %v2224 = vadd.f32 0.0, %v2223
        %v2225 = vpop.f32.mrb[0].mxu0
        %2226 = vmatprep.mubr.f32.mxu0 0.0
        %2227 = vmatmul.mubr.f32.gmra.mrb[0].mxu0 %v2009
        %v2228 = vpop.f32.mrb[0].mxu0
        %v2229 = vadd.f32 0.0, %v2228
        %v2230 = vpop.f32.mrb[0].mxu0
        %2231 = vmatprep.mubr.f32.mxu0 0.0
        %2232 = vmatmul.mubr.f32.gmra.mrb[0].mxu0 %v2012
        %v2233 = vpop.f32.mrb[0].mxu0
        %v2234 = vadd.f32 0.0, %v2233
        %v2235 = vpop.f32.mrb[0].mxu0
        %2236 = vmatprep.mubr.f32.mxu0 0.0
        %2237 = vmatmul.mubr.f32.gmra.mrb[0].mxu0 %v2015
        %v2238 = vpop.f32.mrb[0].mxu0
        %v2239 = vadd.f32 0.0, %v2238
        %v2240 = vpop.f32.mrb[0].mxu0
        %2241 = vdwg.mxu0
        %2242 = vst.msk [vmem:[%s504] sm:$0xff] %vm880, %v2084
        %2243 = vst.msk [vmem:[%s504 + $0x8] sm:$0xff] %vm880, %v2089
        %2244 = vst.msk [vmem:[%s504 + $0x10] sm:$0xff] %vm880, %v2094
        %2245 = vst.msk [vmem:[%s504 + $0x18] sm:$0xff] %vm880, %v2099
        %2246 = vst.msk [vmem:[%s504 + $0x20] sm:$0xff] %vm880, %v2104
        %2247 = vst.msk [vmem:[%s504 + $0x28] sm:$0xff] %vm880, %v2109
        %2248 = vst.msk [vmem:[%s504 + $0x30] sm:$0xff] %vm880, %v2114
        %2249 = vst.msk [vmem:[%s504 + $0x38] sm:$0xff] %vm880, %v2119
        %2250 = vst.msk [vmem:[%s504 + $0x40] sm:$0xff] %vm880, %v2124
        %2251 = vst.msk [vmem:[%s504 + $0x48] sm:$0xff] %vm880, %v2129
        %2252 = vst.msk [vmem:[%s504 + $0x50] sm:$0xff] %vm880, %v2134
        %2253 = vst.msk [vmem:[%s504 + $0x58] sm:$0xff] %vm880, %v2139
        %2254 = vst.msk [vmem:[%s504 + $0x60] sm:$0xff] %vm880, %v2144
        %2255 = vst.msk [vmem:[%s504 + $0x68] sm:$0xff] %vm880, %v2149
        %2256 = vst.msk [vmem:[%s504 + $0x70] sm:$0xff] %vm880, %v2154
        %2257 = vst.msk [vmem:[%s504 + $0x78] sm:$0xff] %vm880, %v2159
        %2258 = vst.msk [vmem:[%s504 + $0x80] sm:$0xff] %vm880, %v2164
        %2259 = vst.msk [vmem:[%s504 + $0x88] sm:$0xff] %vm880, %v2169
        %2260 = vst.msk [vmem:[%s504 + $0x90] sm:$0xff] %vm880, %v2174
        %2261 = vst.msk [vmem:[%s504 + $0x98] sm:$0xff] %vm880, %v2179
        %2262 = vst.msk [vmem:[%s504 + $0xa0] sm:$0xff] %vm880, %v2184
        %2263 = vst.msk [vmem:[%s504 + $0xa8] sm:$0xff] %vm880, %v2189
        %2264 = vst.msk [vmem:[%s504 + $0xb0] sm:$0xff] %vm880, %v2194
        %2265 = vst.msk [vmem:[%s504 + $0xb8] sm:$0xff] %vm880, %v2199
        %2266 = vst.msk [vmem:[%s504 + $0xc0] sm:$0xff] %vm880, %v2204
        %2267 = vst.msk [vmem:[%s504 + $0xc8] sm:$0xff] %vm880, %v2209
        %2268 = vst.msk [vmem:[%s504 + $0xd0] sm:$0xff] %vm880, %v2214
        %2269 = vst.msk [vmem:[%s504 + $0xd8] sm:$0xff] %vm880, %v2219
        %2270 = vst.msk [vmem:[%s504 + $0xe0] sm:$0xff] %vm880, %v2224
        %2271 = vst.msk [vmem:[%s504 + $0xe8] sm:$0xff] %vm880, %v2229
        %2272 = vst.msk [vmem:[%s504 + $0xf0] sm:$0xff] %vm880, %v2234
        %2273 = vst.msk [vmem:[%s504 + $0xf8] sm:$0xff] %vm880, %v2239
        %s2274 = smul.u32 32, %s27
        %p2275 = scmp.lt.s32.totalorder %s2274, 63
        %s2276 = scalar_select %p2275, %s2274, 63
        %s2277 = smul.addr %s2276, 8
        %s2278 = scalar_lea.vmem %s10, %s2277
        %s2279 = smul.u32 32, %s27
        %p2280 = scmp.lt.s32.totalorder %s2279, 63
        %s2281 = scalar_select %p2280, %s2279, 63
        %s2282 = smul.addr %s2281, 8
        %s2283 = scalar_lea.vmem %s11, %s2282
        // Predicated region
        $region85: #{encoder_omics_forward.3} parent=59 // pred_check
          %p2284 = pneg %p265
        $region86: #{encoder_omics_forward.3} parent=59 // pred_check_branch
          %2286 = sbr.rel (%p2284) target = $region88
        $region87: #{encoder_omics_forward.3} parent=59 // pred_region
          %s2287 = smul.u32 32, %s27
        $region88: #{encoder_omics_forward.3} parent=59 // pred_fallthru
          _
        // Predicated region
        $region89: #{encoder_omics_forward.3} parent=59 // pred_check
          %p2288 = pneg %p291
        $region90: #{encoder_omics_forward.3} parent=59 // pred_check_branch
          %2290 = sbr.rel (%p2288) target = $region92
        $region91: #{encoder_omics_forward.3} parent=59 // pred_region
          %s2291 = smul.u32 32, %s27
        $region92: #{encoder_omics_forward.3} parent=59 // pred_fallthru
          _
      $region60: #{encoder_omics_forward.3} parent=5 // pred_fallthru
        _
      %p2292 = scmp.le.s32.totalorder 2, %s22
      // Predicated region
      $region93: #{encoder_omics_forward.3} parent=5 // pred_check
        %p2293 = pneg %p2292
      $region94: #{encoder_omics_forward.3} parent=5 // pred_check_branch
        %2295 = sbr.rel (%p2293) target = $region96
      $region95: #{encoder_omics_forward.3} parent=5 // pred_region
        %s2296 = ssub.s32 %s22, 2
        // Predicated region
        $region97: #{encoder_omics_forward.3} parent=95 // pred_check
          %p2297 = pneg %p271
        $region98: #{encoder_omics_forward.3} parent=95 // pred_check_branch
          %2299 = sbr.rel (%p2297) target = $region100
        $region99: #{encoder_omics_forward.3} parent=95 // pred_region
          %s2300 = smul.u32 32, %s28
          %p2301 = scmp.lt.s32.totalorder %s2300, 63
          %s2302 = scalar_select %p2301, %s2300, 63
          %s2303 = smul.addr %s2302, 8
          %s2304 = scalar_lea.vmem %s10, %s2303
        $region100: #{encoder_omics_forward.3} parent=95 // pred_fallthru
          _
        // Predicated region
        $region101: #{encoder_omics_forward.3} parent=95 // pred_check
          %p2305 = pneg %p297
        $region102: #{encoder_omics_forward.3} parent=95 // pred_check_branch
          %2307 = sbr.rel (%p2305) target = $region104
        $region103: #{encoder_omics_forward.3} parent=95 // pred_region
          %s2308 = smul.u32 32, %s28
          %p2309 = scmp.lt.s32.totalorder %s2308, 63
          %s2310 = scalar_select %p2309, %s2308, 63
          %s2311 = smul.addr %s2310, 8
          %s2312 = scalar_lea.vmem %s11, %s2311
        $region104: #{encoder_omics_forward.3} parent=95 // pred_fallthru
          _
      $region96: #{encoder_omics_forward.3} parent=5 // pred_fallthru
        _
    $region6: #{encoder_omics_forward.3} parent=1 // loop_footer
      %s26 = sadd.s32 1, %s22
    $region7: #{encoder_omics_forward.3} parent=1 // loop_footer_branch
      %21 = sbr.rel target = $region3
    $region8: #{encoder_omics_forward.3} parent=1 // loop_exit
      _
    %2313 = vsyncpa [#allocation3], 1
    %s2314 = scalar_lea.sflag [#allocation3], 1
    %2315 = vsyncpa %s2314, 1
    %2316 = vsyncpa [#allocation5], 1
    %2317 = vsyncpa [#allocation8], 1
    %2318 = vsyncpa [#allocation11], 1

// kernel: encoder_omics_forward.5
$region0: #{encoder_omics_forward.5}
  #allocation0 [shape = 'u32[]', space=smem, size = 0x4, offset = 0x4, fixed_abs, tag = 'smem constant byte address 0x4 - core index']
  #allocation1 [shape = 'u32[144,128]{1,0:T(1,128)}', space=vmem, size = 0x12000, scoped, tag = 'internal scratch']
  #allocation2 [shape = 'f32[256,16]{1,0:T(8,128)}', space=vmem, size = 0x20000, scoped, tag = 'scratch operand']
  #allocation3 [shape = 'f32[256,8]{1,0:T(8,128)}', space=vmem, size = 0x20000, scoped, tag = 'scratch operand']
  %s0 = inlined_call_operand.vmem [shape: f32[512,512], index: 0, kind: input, shape index: {}]
  %s1 = inlined_call_operand.vmem [shape: f32[512,512], index: 1, kind: input, shape index: {}]
  %s2 = inlined_call_operand.vmem [shape: f32[512,16], index: 2, kind: input, shape index: {}]
  %s3 = inlined_call_operand.vmem [shape: f32[512,8], index: 3, kind: input, shape index: {}]
  %s4 = inlined_call_operand.vmem [shape: f32[16,16], index: 4, kind: input, shape index: {}]
  %s5 = inlined_call_operand.vmem [shape: f32[1,16], index: 5, kind: input, shape index: {}]
  %s6 = inlined_call_operand.vmem [shape: f32[16,32], index: 6, kind: input, shape index: {}]
  %s7 = inlined_call_operand.vmem [shape: f32[1,32], index: 7, kind: input, shape index: {}]
  %s8 = inlined_call_operand.vmem [shape: f32[8,16], index: 8, kind: input, shape index: {}]
  %s9 = inlined_call_operand.vmem [shape: f32[1,16], index: 9, kind: input, shape index: {}]
  %s10 = inlined_call_operand.vmem [shape: f32[512,32], index: 10, kind: output, shape index: {0}]
  %s11 = inlined_call_operand.vmem [shape: f32[512,16], index: 11, kind: output, shape index: {1}]
  %12 = xla_tuple %s10, %s11
  %s13 = sld [smem:[#allocation0]]
  $region135: #{encoder_omics_forward.5} parent=0
    _
  %s15 = ssub.s32 1, %s13
  %s16 = scalar_select 0, %s15, %s13
  $region1: #{encoder_omics_forward.5} parent=0
    #allocation4 [shape = 'u8[524288]{0}', space=vmem, size = 0x80000, scoped, tag = 'input window, operand 0']
    #allocation5 [shape = 'u8[524288]{0}', space=vmem, size = 0x80000, scoped, tag = 'input window, operand 1']
    loop: start=0, step=1, limit=6
    $region2: #{encoder_omics_forward.5} parent=1 // loop_pre_header
      _
    $region3: #{encoder_omics_forward.5} parent=1 // loop_header
      %s18 = sphi 0, %s22
      %p19 = scmp.ge.s32.totalorder %s18, 6
      %s25 = sphi 0, %s37
      %s26 = sphi 0, %s33
      %s27 = sphi 0, %s25
      %s28 = sphi 0, %s26
      %s29 = sphi 0, %s27
      %s30 = sphi 0, %s28
      %s42 = sphi 0, %s44
      %s45 = sphi 0, %s42
      %s46 = sphi 0, %s45
      %s62 = sphi 0, %s46
      %s70 = sphi 0, %s72
      %s73 = sphi 0, %s70
      %s74 = sphi 0, %s73
      %s90 = sphi 0, %s74
      %s96 = sphi 0, %s98
      %s99 = sphi 0, %s96
      %s100 = sphi 0, %s99
      %s116 = sphi 0, %s100
      %s122 = sphi 0, %s124
      %s125 = sphi 0, %s122
      %s126 = sphi 0, %s125
      %s142 = sphi 0, %s126
      %s146 = sphi 0, %s146
      %s148 = sphi 0, %s146
      %s149 = sphi 0, %s148
      %s163 = sphi 0, %s149
      %s167 = sphi 0, %s167
      %s169 = sphi 0, %s167
      %s170 = sphi 0, %s169
      %s184 = sphi 0, %s170
      %s188 = sphi 0, %s188
      %s190 = sphi 0, %s188
      %s191 = sphi 0, %s190
      %s205 = sphi 0, %s191
      %s209 = sphi 0, %s209
      %s211 = sphi 0, %s209
      %s212 = sphi 0, %s211
      %s226 = sphi 0, %s212
      %s230 = sphi 0, %s230
      %s232 = sphi 0, %s230
      %s233 = sphi 0, %s232
      %s247 = sphi 0, %s233
      %s251 = sphi 0, %s251
      %s253 = sphi 0, %s251
      %s254 = sphi 0, %s253
      %s268 = sphi 0, %s254
      %s274 = sphi 0, %s276
      %s277 = sphi 0, %s274
      %s278 = sphi 0, %s277
      %s294 = sphi 0, %s278
      %s300 = sphi 0, %s302
      %s303 = sphi 0, %s300
      %s304 = sphi 0, %s303
      %s320 = sphi 0, %s304
    $region4: #{encoder_omics_forward.5} parent=1 // loop_header_branch
      %21 = sbr.rel (%p19) target = $region8
    $region5: #{encoder_omics_forward.5} parent=1 // loop_body
      %s23 = ssub.s32 %s18, 1
      %s24 = ssub.s32 %s18, 2
      %s31 = sadd.s32 1, %s26
      %p32 = scmp.ge.s32.totalorder %s31, 2
      %s33 = scalar_select %p32, 0, %s31
      %s34 = sadd.s32 1, %s25
      %s35 = scalar_select %p32, %s34, %s25
      %p36 = scmp.ge.s32.totalorder %s35, 2
      %s37 = scalar_select %p36, 0, %s35
      %s38 = ssub.s32 %s25, %s37
      %s39 = ssub.s32 %s26, %s33
      %s40 = sor.u32 %s38, %s39
      %p41 = scmp.eq.s32.totalorder %s40, 0
      %s43 = sadd.s32 %s42, 1
      %s44 = scalar_select %p41, %s42, %s43
      %p47 = pneg %p41
      %p48 = scmp.eq.s32.totalorder %s18, 3
      %p49 = por %p47, %p48
      %p50 = scmp.ne.s32.totalorder %s42, %s45
      %p51 = scmp.eq.s32.totalorder %s18, 0
      %p52 = por %p50, %p51
      %p53 = scmp.ne.s32.totalorder %s42, %s45
      %p54 = scmp.eq.s32.totalorder %s23, 3
      %p55 = por %p53, %p54
      %p56 = scmp.ne.s32.totalorder %s45, %s46
      %p57 = scmp.eq.s32.totalorder %s23, 0
      %p58 = por %p56, %p57
      %p59 = scmp.ne.s32.totalorder %s45, %s46
      %p60 = scmp.eq.s32.totalorder %s24, 3
      %p61 = por %p59, %p60
      %p63 = scmp.ne.s32.totalorder %s46, %s62
      %p64 = scmp.eq.s32.totalorder %s24, 0
      %p65 = por %p63, %p64
      %s66 = ssub.s32 %s25, %s37
      %s67 = ssub.s32 %s26, %s33
      %s68 = sor.u32 %s66, %s67
      %p69 = scmp.eq.s32.totalorder %s68, 0
      %s71 = sadd.s32 %s70, 1
      %s72 = scalar_select %p69, %s70, %s71
      %p75 = pneg %p69
      %p76 = scmp.eq.s32.totalorder %s18, 3
      %p77 = por %p75, %p76
      %p78 = scmp.ne.s32.totalorder %s70, %s73
      %p79 = scmp.eq.s32.totalorder %s18, 0
      %p80 = por %p78, %p79
      %p81 = scmp.ne.s32.totalorder %s70, %s73
      %p82 = scmp.eq.s32.totalorder %s23, 3
      %p83 = por %p81, %p82
      %p84 = scmp.ne.s32.totalorder %s73, %s74
      %p85 = scmp.eq.s32.totalorder %s23, 0
      %p86 = por %p84, %p85
      %p87 = scmp.ne.s32.totalorder %s73, %s74
      %p88 = scmp.eq.s32.totalorder %s24, 3
      %p89 = por %p87, %p88
      %p91 = scmp.ne.s32.totalorder %s74, %s90
      %p92 = scmp.eq.s32.totalorder %s24, 0
      %p93 = por %p91, %p92
      %s94 = ssub.s32 %s26, %s33
      %p95 = scmp.eq.s32.totalorder %s94, 0
      %s97 = sadd.s32 %s96, 1
      %s98 = scalar_select %p95, %s96, %s97
      %p101 = pneg %p95
      %p102 = scmp.eq.s32.totalorder %s18, 3
      %p103 = por %p101, %p102
      %p104 = scmp.ne.s32.totalorder %s96, %s99
      %p105 = scmp.eq.s32.totalorder %s18, 0
      %p106 = por %p104, %p105
      %p107 = scmp.ne.s32.totalorder %s96, %s99
      %p108 = scmp.eq.s32.totalorder %s23, 3
      %p109 = por %p107, %p108
      %p110 = scmp.ne.s32.totalorder %s99, %s100
      %p111 = scmp.eq.s32.totalorder %s23, 0
      %p112 = por %p110, %p111
      %p113 = scmp.ne.s32.totalorder %s99, %s100
      %p114 = scmp.eq.s32.totalorder %s24, 3
      %p115 = por %p113, %p114
      %p117 = scmp.ne.s32.totalorder %s100, %s116
      %p118 = scmp.eq.s32.totalorder %s24, 0
      %p119 = por %p117, %p118
      %s120 = ssub.s32 %s26, %s33
      %p121 = scmp.eq.s32.totalorder %s120, 0
      %s123 = sadd.s32 %s122, 1
      %s124 = scalar_select %p121, %s122, %s123
      %p127 = pneg %p121
      %p128 = scmp.eq.s32.totalorder %s18, 3
      %p129 = por %p127, %p128
      %p130 = scmp.ne.s32.totalorder %s122, %s125
      %p131 = scmp.eq.s32.totalorder %s18, 0
      %p132 = por %p130, %p131
      %p133 = scmp.ne.s32.totalorder %s122, %s125
      %p134 = scmp.eq.s32.totalorder %s23, 3
      %p135 = por %p133, %p134
      %p136 = scmp.ne.s32.totalorder %s125, %s126
      %p137 = scmp.eq.s32.totalorder %s23, 0
      %p138 = por %p136, %p137
      %p139 = scmp.ne.s32.totalorder %s125, %s126
      %p140 = scmp.eq.s32.totalorder %s24, 3
      %p141 = por %p139, %p140
      %p143 = scmp.ne.s32.totalorder %s126, %s142
      %p144 = scmp.eq.s32.totalorder %s24, 0
      %p145 = por %p143, %p144
      %s147 = sadd.s32 %s146, 1
      %p150 = scmp.eq.s32.totalorder %s18, 3
      %p151 = scmp.ne.s32.totalorder %s146, %s148
      %p152 = scmp.eq.s32.totalorder %s18, 0
      %p153 = por %p151, %p152
      %p154 = scmp.ne.s32.totalorder %s146, %s148
      %p155 = scmp.eq.s32.totalorder %s23, 3
      %p156 = por %p154, %p155
      %p157 = scmp.ne.s32.totalorder %s148, %s149
      %p158 = scmp.eq.s32.totalorder %s23, 0
      %p159 = por %p157, %p158
      %p160 = scmp.ne.s32.totalorder %s148, %s149
      %p161 = scmp.eq.s32.totalorder %s24, 3
      %p162 = por %p160, %p161
      %p164 = scmp.ne.s32.totalorder %s149, %s163
      %p165 = scmp.eq.s32.totalorder %s24, 0
      %p166 = por %p164, %p165
      %s168 = sadd.s32 %s167, 1
      %p171 = scmp.eq.s32.totalorder %s18, 3
      %p172 = scmp.ne.s32.totalorder %s167, %s169
      %p173 = scmp.eq.s32.totalorder %s18, 0
      %p174 = por %p172, %p173
      %p175 = scmp.ne.s32.totalorder %s167, %s169
      %p176 = scmp.eq.s32.totalorder %s23, 3
      %p177 = por %p175, %p176
      %p178 = scmp.ne.s32.totalorder %s169, %s170
      %p179 = scmp.eq.s32.totalorder %s23, 0
      %p180 = por %p178, %p179
      %p181 = scmp.ne.s32.totalorder %s169, %s170
      %p182 = scmp.eq.s32.totalorder %s24, 3
      %p183 = por %p181, %p182
      %p185 = scmp.ne.s32.totalorder %s170, %s184
      %p186 = scmp.eq.s32.totalorder %s24, 0
      %p187 = por %p185, %p186
      %s189 = sadd.s32 %s188, 1
      %p192 = scmp.eq.s32.totalorder %s18, 3
      %p193 = scmp.ne.s32.totalorder %s188, %s190
      %p194 = scmp.eq.s32.totalorder %s18, 0
      %p195 = por %p193, %p194
      %p196 = scmp.ne.s32.totalorder %s188, %s190
      %p197 = scmp.eq.s32.totalorder %s23, 3
      %p198 = por %p196, %p197
      %p199 = scmp.ne.s32.totalorder %s190, %s191
      %p200 = scmp.eq.s32.totalorder %s23, 0
      %p201 = por %p199, %p200
      %p202 = scmp.ne.s32.totalorder %s190, %s191
      %p203 = scmp.eq.s32.totalorder %s24, 3
      %p204 = por %p202, %p203
      %p206 = scmp.ne.s32.totalorder %s191, %s205
      %p207 = scmp.eq.s32.totalorder %s24, 0
      %p208 = por %p206, %p207
      %s210 = sadd.s32 %s209, 1
      %p213 = scmp.eq.s32.totalorder %s18, 3
      %p214 = scmp.ne.s32.totalorder %s209, %s211
      %p215 = scmp.eq.s32.totalorder %s18, 0
      %p216 = por %p214, %p215
      %p217 = scmp.ne.s32.totalorder %s209, %s211
      %p218 = scmp.eq.s32.totalorder %s23, 3
      %p219 = por %p217, %p218
      %p220 = scmp.ne.s32.totalorder %s211, %s212
      %p221 = scmp.eq.s32.totalorder %s23, 0
      %p222 = por %p220, %p221
      %p223 = scmp.ne.s32.totalorder %s211, %s212
      %p224 = scmp.eq.s32.totalorder %s24, 3
      %p225 = por %p223, %p224
      %p227 = scmp.ne.s32.totalorder %s212, %s226
      %p228 = scmp.eq.s32.totalorder %s24, 0
      %p229 = por %p227, %p228
      %s231 = sadd.s32 %s230, 1
      %p234 = scmp.eq.s32.totalorder %s18, 3
      %p235 = scmp.ne.s32.totalorder %s230, %s232
      %p236 = scmp.eq.s32.totalorder %s18, 0
      %p237 = por %p235, %p236
      %p238 = scmp.ne.s32.totalorder %s230, %s232
      %p239 = scmp.eq.s32.totalorder %s23, 3
      %p240 = por %p238, %p239
      %p241 = scmp.ne.s32.totalorder %s232, %s233
      %p242 = scmp.eq.s32.totalorder %s23, 0
      %p243 = por %p241, %p242
      %p244 = scmp.ne.s32.totalorder %s232, %s233
      %p245 = scmp.eq.s32.totalorder %s24, 3
      %p246 = por %p244, %p245
      %p248 = scmp.ne.s32.totalorder %s233, %s247
      %p249 = scmp.eq.s32.totalorder %s24, 0
      %p250 = por %p248, %p249
      %s252 = sadd.s32 %s251, 1
      %p255 = scmp.eq.s32.totalorder %s18, 3
      %p256 = scmp.ne.s32.totalorder %s251, %s253
      %p257 = scmp.eq.s32.totalorder %s18, 0
      %p258 = por %p256, %p257
      %p259 = scmp.ne.s32.totalorder %s251, %s253
      %p260 = scmp.eq.s32.totalorder %s23, 3
      %p261 = por %p259, %p260
      %p262 = scmp.ne.s32.totalorder %s253, %s254
      %p263 = scmp.eq.s32.totalorder %s23, 0
      %p264 = por %p262, %p263
      %p265 = scmp.ne.s32.totalorder %s253, %s254
      %p266 = scmp.eq.s32.totalorder %s24, 3
      %p267 = por %p265, %p266
      %p269 = scmp.ne.s32.totalorder %s254, %s268
      %p270 = scmp.eq.s32.totalorder %s24, 0
      %p271 = por %p269, %p270
      %s272 = ssub.s32 %s25, %s37
      %p273 = scmp.eq.s32.totalorder %s272, 0
      %s275 = sadd.s32 %s274, 1
      %s276 = scalar_select %p273, %s274, %s275
      %p279 = pneg %p273
      %p280 = scmp.eq.s32.totalorder %s18, 3
      %p281 = por %p279, %p280
      %p282 = scmp.ne.s32.totalorder %s274, %s277
      %p283 = scmp.eq.s32.totalorder %s18, 0
      %p284 = por %p282, %p283
      %p285 = scmp.ne.s32.totalorder %s274, %s277
      %p286 = scmp.eq.s32.totalorder %s23, 3
      %p287 = por %p285, %p286
      %p288 = scmp.ne.s32.totalorder %s277, %s278
      %p289 = scmp.eq.s32.totalorder %s23, 0
      %p290 = por %p288, %p289
      %p291 = scmp.ne.s32.totalorder %s277, %s278
      %p292 = scmp.eq.s32.totalorder %s24, 3
      %p293 = por %p291, %p292
      %p295 = scmp.ne.s32.totalorder %s278, %s294
      %p296 = scmp.eq.s32.totalorder %s24, 0
      %p297 = por %p295, %p296
      %s298 = ssub.s32 %s25, %s37
      %p299 = scmp.eq.s32.totalorder %s298, 0
      %s301 = sadd.s32 %s300, 1
      %s302 = scalar_select %p299, %s300, %s301
      %p305 = pneg %p299
      %p306 = scmp.eq.s32.totalorder %s18, 3
      %p307 = por %p305, %p306
      %p308 = scmp.ne.s32.totalorder %s300, %s303
      %p309 = scmp.eq.s32.totalorder %s18, 0
      %p310 = por %p308, %p309
      %p311 = scmp.ne.s32.totalorder %s300, %s303
      %p312 = scmp.eq.s32.totalorder %s23, 3
      %p313 = por %p311, %p312
      %p314 = scmp.ne.s32.totalorder %s303, %s304
      %p315 = scmp.eq.s32.totalorder %s23, 0
      %p316 = por %p314, %p315
      %p317 = scmp.ne.s32.totalorder %s303, %s304
      %p318 = scmp.eq.s32.totalorder %s24, 3
      %p319 = por %p317, %p318
      %p321 = scmp.ne.s32.totalorder %s304, %s320
      %p322 = scmp.eq.s32.totalorder %s24, 0
      %p323 = por %p321, %p322
      %p324 = scmp.le.s32.totalorder 1, %s18
      %p325 = scmp.lt.s32.totalorder %s18, 5
      %p326 = pnand %p324, %p325
      %p327 = pneg %p326
      // Predicated region
      $region9: #{encoder_omics_forward.5} parent=5 // pred_check
        _
      $region10: #{encoder_omics_forward.5} parent=5 // pred_check_branch
        %329 = sbr.rel (%p326) target = $region12
      $region11: #{encoder_omics_forward.5} parent=5 // pred_region
        %s330 = ssub.s32 %s18, 1
        // Predicated region
        $region13: #{encoder_omics_forward.5} parent=11 // pred_check
          %p331 = pneg %p159
        $region14: #{encoder_omics_forward.5} parent=11 // pred_check_branch
          %333 = sbr.rel (%p331) target = $region16
        $region15: #{encoder_omics_forward.5} parent=11 // pred_region
          _
        $region16: #{encoder_omics_forward.5} parent=11 // pred_fallthru
          _
        // Predicated region
        $region17: #{encoder_omics_forward.5} parent=11 // pred_check
          %p334 = pneg %p180
        $region18: #{encoder_omics_forward.5} parent=11 // pred_check_branch
          %336 = sbr.rel (%p334) target = $region20
        $region19: #{encoder_omics_forward.5} parent=11 // pred_region
          _
        $region20: #{encoder_omics_forward.5} parent=11 // pred_fallthru
          _
        // Predicated region
        $region21: #{encoder_omics_forward.5} parent=11 // pred_check
          %p337 = pneg %p201
        $region22: #{encoder_omics_forward.5} parent=11 // pred_check_branch
          %339 = sbr.rel (%p337) target = $region24
        $region23: #{encoder_omics_forward.5} parent=11 // pred_region
          _
        $region24: #{encoder_omics_forward.5} parent=11 // pred_fallthru
          _
        // Predicated region
        $region25: #{encoder_omics_forward.5} parent=11 // pred_check
          %p340 = pneg %p222
        $region26: #{encoder_omics_forward.5} parent=11 // pred_check_branch
          %342 = sbr.rel (%p340) target = $region28
        $region27: #{encoder_omics_forward.5} parent=11 // pred_region
          _
        $region28: #{encoder_omics_forward.5} parent=11 // pred_fallthru
          _
        // Predicated region
        $region29: #{encoder_omics_forward.5} parent=11 // pred_check
          %p343 = pneg %p243
        $region30: #{encoder_omics_forward.5} parent=11 // pred_check_branch
          %345 = sbr.rel (%p343) target = $region32
        $region31: #{encoder_omics_forward.5} parent=11 // pred_region
          _
        $region32: #{encoder_omics_forward.5} parent=11 // pred_fallthru
          _
        // Predicated region
        $region33: #{encoder_omics_forward.5} parent=11 // pred_check
          %p346 = pneg %p264
        $region34: #{encoder_omics_forward.5} parent=11 // pred_check_branch
          %348 = sbr.rel (%p346) target = $region36
        $region35: #{encoder_omics_forward.5} parent=11 // pred_region
          _
        $region36: #{encoder_omics_forward.5} parent=11 // pred_fallthru
          _
      $region12: #{encoder_omics_forward.5} parent=5 // pred_fallthru
        _
      %p349 = scmp.lt.s32.totalorder %s18, 4
      // Predicated region
      $region37: #{encoder_omics_forward.5} parent=5 // pred_check
        %p350 = pneg %p349
      $region38: #{encoder_omics_forward.5} parent=5 // pred_check_branch
        %352 = sbr.rel (%p350) target = $region40
      $region39: #{encoder_omics_forward.5} parent=5 // pred_region
        // Predicated region
        $region41: #{encoder_omics_forward.5} parent=39 // pred_check
          %p353 = pneg %p52
        $region42: #{encoder_omics_forward.5} parent=39 // pred_check_branch
          %355 = sbr.rel (%p353) target = $region44
        $region43: #{encoder_omics_forward.5} parent=39 // pred_region
          %s356 = sand.u32 %s42, 1
          %s357 = sand.u32 %s42, 1
          %s358 = smul.addr %s357, 512
          %s359 = scalar_lea.vmem [#allocation4], %s358
          %s360 = smul.u32 32, %s25
          %s361 = smul.u32 2, %s26
          %s362 = smul.addr %s360, 4
          %s363 = sadd.s32 %s361, %s362
          %s364 = smul.addr %s363, 8
          %s365 = scalar_lea.vmem %s0, %s364
          // Predicated region
          $region45: #{encoder_omics_forward.5} parent=43 // pred_check
            _
          $region46: #{encoder_omics_forward.5} parent=43 // pred_check_branch
            %367 = sbr.rel (0) target = $region48
          $region47: #{encoder_omics_forward.5} parent=43 // pred_region
            // Predicated region
            $region49: #{encoder_omics_forward.5} parent=47 // pred_check
              _
            $region50: #{encoder_omics_forward.5} parent=47 // pred_check_branch
              %369 = sbr.rel (0) target = $region52
            $region51: #{encoder_omics_forward.5} parent=47 // pred_region
              loop: start=0, step=1, limit=1
              $region53: #{encoder_omics_forward.5} parent=51 // loop_pre_header
                _
              $region54: #{encoder_omics_forward.5} parent=51 // loop_header
                %s371 = sphi 0, %s375
                %p372 = scmp.ge.s32.totalorder %s371, 1
                %s376 = sphi %s365, %s365
                %s377 = sphi %s359, %s359
              $region55: #{encoder_omics_forward.5} parent=51 // loop_header_branch
                %374 = sbr.rel (%p372) target = $region59
              $region56: #{encoder_omics_forward.5} parent=51 // loop_body
                %v378 = vld [vmem:[%s376] sm:$0xff]
                %379 = vst [vmem:[%s377] sm:$0xff] %v378
                %v380 = vld [vmem:[%s376 + $0x8] sm:$0xff]
                %381 = vst [vmem:[%s377 + $0x8] sm:$0xff] %v380
                %v382 = vld [vmem:[%s376 + $0x20] sm:$0xff]
                %383 = vst [vmem:[%s377 + $0x10] sm:$0xff] %v382
                %v384 = vld [vmem:[%s376 + $0x28] sm:$0xff]
                %385 = vst [vmem:[%s377 + $0x18] sm:$0xff] %v384
                %v386 = vld [vmem:[%s376 + $0x40] sm:$0xff]
                %387 = vst [vmem:[%s377 + $0x20] sm:$0xff] %v386
                %v388 = vld [vmem:[%s376 + $0x48] sm:$0xff]
                %389 = vst [vmem:[%s377 + $0x28] sm:$0xff] %v388
                %v390 = vld [vmem:[%s376 + $0x60] sm:$0xff]
                %391 = vst [vmem:[%s377 + $0x30] sm:$0xff] %v390
                %v392 = vld [vmem:[%s376 + $0x68] sm:$0xff]
                %393 = vst [vmem:[%s377 + $0x38] sm:$0xff] %v392
                %v394 = vld [vmem:[%s376 + $0x80] sm:$0xff]
                %395 = vst [vmem:[%s377 + $0x40] sm:$0xff] %v394
                %v396 = vld [vmem:[%s376 + $0x88] sm:$0xff]
                %397 = vst [vmem:[%s377 + $0x48] sm:$0xff] %v396
                %v398 = vld [vmem:[%s376 + $0xa0] sm:$0xff]
                %399 = vst [vmem:[%s377 + $0x50] sm:$0xff] %v398
                %v400 = vld [vmem:[%s376 + $0xa8] sm:$0xff]
                %401 = vst [vmem:[%s377 + $0x58] sm:$0xff] %v400
                %v402 = vld [vmem:[%s376 + $0xc0] sm:$0xff]
                %403 = vst [vmem:[%s377 + $0x60] sm:$0xff] %v402
                %v404 = vld [vmem:[%s376 + $0xc8] sm:$0xff]
                %405 = vst [vmem:[%s377 + $0x68] sm:$0xff] %v404
                %v406 = vld [vmem:[%s376 + $0xe0] sm:$0xff]
                %407 = vst [vmem:[%s377 + $0x70] sm:$0xff] %v406
                %v408 = vld [vmem:[%s376 + $0xe8] sm:$0xff]
                %409 = vst [vmem:[%s377 + $0x78] sm:$0xff] %v408
                %v410 = vld [vmem:[%s376 + $0x100] sm:$0xff]
                %411 = vst [vmem:[%s377 + $0x80] sm:$0xff] %v410
                %v412 = vld [vmem:[%s376 + $0x108] sm:$0xff]
                %413 = vst [vmem:[%s377 + $0x88] sm:$0xff] %v412
                %v414 = vld [vmem:[%s376 + $0x120] sm:$0xff]
                %415 = vst [vmem:[%s377 + $0x90] sm:$0xff] %v414
                %v416 = vld [vmem:[%s376 + $0x128] sm:$0xff]
                %417 = vst [vmem:[%s377 + $0x98] sm:$0xff] %v416
                %v418 = vld [vmem:[%s376 + $0x140] sm:$0xff]
                %419 = vst [vmem:[%s377 + $0xa0] sm:$0xff] %v418
                %v420 = vld [vmem:[%s376 + $0x148] sm:$0xff]
                %421 = vst [vmem:[%s377 + $0xa8] sm:$0xff] %v420
                %v422 = vld [vmem:[%s376 + $0x160] sm:$0xff]
                %423 = vst [vmem:[%s377 + $0xb0] sm:$0xff] %v422
                %v424 = vld [vmem:[%s376 + $0x168] sm:$0xff]
                %425 = vst [vmem:[%s377 + $0xb8] sm:$0xff] %v424
                %v426 = vld [vmem:[%s376 + $0x180] sm:$0xff]
                %427 = vst [vmem:[%s377 + $0xc0] sm:$0xff] %v426
                %v428 = vld [vmem:[%s376 + $0x188] sm:$0xff]
                %429 = vst [vmem:[%s377 + $0xc8] sm:$0xff] %v428
                %v430 = vld [vmem:[%s376 + $0x1a0] sm:$0xff]
                %431 = vst [vmem:[%s377 + $0xd0] sm:$0xff] %v430
                %v432 = vld [vmem:[%s376 + $0x1a8] sm:$0xff]
                %433 = vst [vmem:[%s377 + $0xd8] sm:$0xff] %v432
                %v434 = vld [vmem:[%s376 + $0x1c0] sm:$0xff]
                %435 = vst [vmem:[%s377 + $0xe0] sm:$0xff] %v434
                %v436 = vld [vmem:[%s376 + $0x1c8] sm:$0xff]
                %437 = vst [vmem:[%s377 + $0xe8] sm:$0xff] %v436
                %v438 = vld [vmem:[%s376 + $0x1e0] sm:$0xff]
                %439 = vst [vmem:[%s377 + $0xf0] sm:$0xff] %v438
                %v440 = vld [vmem:[%s376 + $0x1e8] sm:$0xff]
                %441 = vst [vmem:[%s377 + $0xf8] sm:$0xff] %v440
                %v442 = vld [vmem:[%s376 + $0x200] sm:$0xff]
                %443 = vst [vmem:[%s377 + $0x100] sm:$0xff] %v442
                %v444 = vld [vmem:[%s376 + $0x208] sm:$0xff]
                %445 = vst [vmem:[%s377 + $0x108] sm:$0xff] %v444
                %v446 = vld [vmem:[%s376 + $0x220] sm:$0xff]
                %447 = vst [vmem:[%s377 + $0x110] sm:$0xff] %v446
                %v448 = vld [vmem:[%s376 + $0x228] sm:$0xff]
                %449 = vst [vmem:[%s377 + $0x118] sm:$0xff] %v448
                %v450 = vld [vmem:[%s376 + $0x240] sm:$0xff]
                %451 = vst [vmem:[%s377 + $0x120] sm:$0xff] %v450
                %v452 = vld [vmem:[%s376 + $0x248] sm:$0xff]
                %453 = vst [vmem:[%s377 + $0x128] sm:$0xff] %v452
                %v454 = vld [vmem:[%s376 + $0x260] sm:$0xff]
                %455 = vst [vmem:[%s377 + $0x130] sm:$0xff] %v454
                %v456 = vld [vmem:[%s376 + $0x268] sm:$0xff]
                %457 = vst [vmem:[%s377 + $0x138] sm:$0xff] %v456
                %v458 = vld [vmem:[%s376 + $0x280] sm:$0xff]
                %459 = vst [vmem:[%s377 + $0x140] sm:$0xff] %v458
                %v460 = vld [vmem:[%s376 + $0x288] sm:$0xff]
                %461 = vst [vmem:[%s377 + $0x148] sm:$0xff] %v460
                %v462 = vld [vmem:[%s376 + $0x2a0] sm:$0xff]
                %463 = vst [vmem:[%s377 + $0x150] sm:$0xff] %v462
                %v464 = vld [vmem:[%s376 + $0x2a8] sm:$0xff]
                %465 = vst [vmem:[%s377 + $0x158] sm:$0xff] %v464
                %v466 = vld [vmem:[%s376 + $0x2c0] sm:$0xff]
                %467 = vst [vmem:[%s377 + $0x160] sm:$0xff] %v466
                %v468 = vld [vmem:[%s376 + $0x2c8] sm:$0xff]
                %469 = vst [vmem:[%s377 + $0x168] sm:$0xff] %v468
                %v470 = vld [vmem:[%s376 + $0x2e0] sm:$0xff]
                %471 = vst [vmem:[%s377 + $0x170] sm:$0xff] %v470
                %v472 = vld [vmem:[%s376 + $0x2e8] sm:$0xff]
                %473 = vst [vmem:[%s377 + $0x178] sm:$0xff] %v472
                %v474 = vld [vmem:[%s376 + $0x300] sm:$0xff]
                %475 = vst [vmem:[%s377 + $0x180] sm:$0xff] %v474
                %v476 = vld [vmem:[%s376 + $0x308] sm:$0xff]
                %477 = vst [vmem:[%s377 + $0x188] sm:$0xff] %v476
                %v478 = vld [vmem:[%s376 + $0x320] sm:$0xff]
                %479 = vst [vmem:[%s377 + $0x190] sm:$0xff] %v478
                %v480 = vld [vmem:[%s376 + $0x328] sm:$0xff]
                %481 = vst [vmem:[%s377 + $0x198] sm:$0xff] %v480
                %v482 = vld [vmem:[%s376 + $0x340] sm:$0xff]
                %483 = vst [vmem:[%s377 + $0x1a0] sm:$0xff] %v482
                %v484 = vld [vmem:[%s376 + $0x348] sm:$0xff]
                %485 = vst [vmem:[%s377 + $0x1a8] sm:$0xff] %v484
                %v486 = vld [vmem:[%s376 + $0x360] sm:$0xff]
                %487 = vst [vmem:[%s377 + $0x1b0] sm:$0xff] %v486
                %v488 = vld [vmem:[%s376 + $0x368] sm:$0xff]
                %489 = vst [vmem:[%s377 + $0x1b8] sm:$0xff] %v488
                %v490 = vld [vmem:[%s376 + $0x380] sm:$0xff]
                %491 = vst [vmem:[%s377 + $0x1c0] sm:$0xff] %v490
                %v492 = vld [vmem:[%s376 + $0x388] sm:$0xff]
                %493 = vst [vmem:[%s377 + $0x1c8] sm:$0xff] %v492
                %v494 = vld [vmem:[%s376 + $0x3a0] sm:$0xff]
                %495 = vst [vmem:[%s377 + $0x1d0] sm:$0xff] %v494
                %v496 = vld [vmem:[%s376 + $0x3a8] sm:$0xff]
                %497 = vst [vmem:[%s377 + $0x1d8] sm:$0xff] %v496
                %v498 = vld [vmem:[%s376 + $0x3c0] sm:$0xff]
                %499 = vst [vmem:[%s377 + $0x1e0] sm:$0xff] %v498
                %v500 = vld [vmem:[%s376 + $0x3c8] sm:$0xff]
                %501 = vst [vmem:[%s377 + $0x1e8] sm:$0xff] %v500
                %v502 = vld [vmem:[%s376 + $0x3e0] sm:$0xff]
                %503 = vst [vmem:[%s377 + $0x1f0] sm:$0xff] %v502
                %v504 = vld [vmem:[%s376 + $0x3e8] sm:$0xff]
                %505 = vst [vmem:[%s377 + $0x1f8] sm:$0xff] %v504
              $region57: #{encoder_omics_forward.5} parent=51 // loop_footer
                %s375 = sadd.s32 1, %s371
              $region58: #{encoder_omics_forward.5} parent=51 // loop_footer_branch
                %370 = sbr.rel target = $region54
              $region59: #{encoder_omics_forward.5} parent=51 // loop_exit
                _
            $region52: #{encoder_omics_forward.5} parent=47 // pred_fallthru
              _
            // Predicated region
            $region60: #{encoder_omics_forward.5} parent=47 // pred_check
              _
            $region61: #{encoder_omics_forward.5} parent=47 // pred_check_branch
              %507 = sbr.rel target = $region63
            $region62: #{encoder_omics_forward.5} parent=47 // pred_region
              _
            $region63: #{encoder_omics_forward.5} parent=47 // pred_fallthru
              _
          $region48: #{encoder_omics_forward.5} parent=43 // pred_fallthru
            _
          %508 = vnop
        $region44: #{encoder_omics_forward.5} parent=39 // pred_fallthru
          _
        // Predicated region
        $region64: #{encoder_omics_forward.5} parent=39 // pred_check
          %p509 = pneg %p80
        $region65: #{encoder_omics_forward.5} parent=39 // pred_check_branch
          %511 = sbr.rel (%p509) target = $region67
        $region66: #{encoder_omics_forward.5} parent=39 // pred_region
          %s512 = sand.u32 %s70, 1
          %s513 = sand.u32 %s70, 1
          %s514 = smul.addr %s513, 512
          %s515 = scalar_lea.vmem [#allocation5], %s514
          %s516 = smul.u32 32, %s25
          %s517 = smul.u32 2, %s26
          %s518 = smul.addr %s516, 4
          %s519 = sadd.s32 %s517, %s518
          %s520 = smul.addr %s519, 8
          %s521 = scalar_lea.vmem %s1, %s520
          // Predicated region
          $region68: #{encoder_omics_forward.5} parent=66 // pred_check
            _
          $region69: #{encoder_omics_forward.5} parent=66 // pred_check_branch
            %523 = sbr.rel (0) target = $region71
          $region70: #{encoder_omics_forward.5} parent=66 // pred_region
            // Predicated region
            $region72: #{encoder_omics_forward.5} parent=70 // pred_check
              _
            $region73: #{encoder_omics_forward.5} parent=70 // pred_check_branch
              %525 = sbr.rel (0) target = $region75
            $region74: #{encoder_omics_forward.5} parent=70 // pred_region
              loop: start=0, step=1, limit=1
              $region76: #{encoder_omics_forward.5} parent=74 // loop_pre_header
                _
              $region77: #{encoder_omics_forward.5} parent=74 // loop_header
                %s527 = sphi 0, %s531
                %p528 = scmp.ge.s32.totalorder %s527, 1
                %s532 = sphi %s521, %s521
                %s533 = sphi %s515, %s515
              $region78: #{encoder_omics_forward.5} parent=74 // loop_header_branch
                %530 = sbr.rel (%p528) target = $region82
              $region79: #{encoder_omics_forward.5} parent=74 // loop_body
                %v534 = vld [vmem:[%s532] sm:$0xff]
                %535 = vst [vmem:[%s533] sm:$0xff] %v534
                %v536 = vld [vmem:[%s532 + $0x8] sm:$0xff]
                %537 = vst [vmem:[%s533 + $0x8] sm:$0xff] %v536
                %v538 = vld [vmem:[%s532 + $0x20] sm:$0xff]
                %539 = vst [vmem:[%s533 + $0x10] sm:$0xff] %v538
                %v540 = vld [vmem:[%s532 + $0x28] sm:$0xff]
                %541 = vst [vmem:[%s533 + $0x18] sm:$0xff] %v540
                %v542 = vld [vmem:[%s532 + $0x40] sm:$0xff]
                %543 = vst [vmem:[%s533 + $0x20] sm:$0xff] %v542
                %v544 = vld [vmem:[%s532 + $0x48] sm:$0xff]
                %545 = vst [vmem:[%s533 + $0x28] sm:$0xff] %v544
                %v546 = vld [vmem:[%s532 + $0x60] sm:$0xff]
                %547 = vst [vmem:[%s533 + $0x30] sm:$0xff] %v546
                %v548 = vld [vmem:[%s532 + $0x68] sm:$0xff]
                %549 = vst [vmem:[%s533 + $0x38] sm:$0xff] %v548
                %v550 = vld [vmem:[%s532 + $0x80] sm:$0xff]
                %551 = vst [vmem:[%s533 + $0x40] sm:$0xff] %v550
                %v552 = vld [vmem:[%s532 + $0x88] sm:$0xff]
                %553 = vst [vmem:[%s533 + $0x48] sm:$0xff] %v552
                %v554 = vld [vmem:[%s532 + $0xa0] sm:$0xff]
                %555 = vst [vmem:[%s533 + $0x50] sm:$0xff] %v554
                %v556 = vld [vmem:[%s532 + $0xa8] sm:$0xff]
                %557 = vst [vmem:[%s533 + $0x58] sm:$0xff] %v556
                %v558 = vld [vmem:[%s532 + $0xc0] sm:$0xff]
                %559 = vst [vmem:[%s533 + $0x60] sm:$0xff] %v558
                %v560 = vld [vmem:[%s532 + $0xc8] sm:$0xff]
                %561 = vst [vmem:[%s533 + $0x68] sm:$0xff] %v560
                %v562 = vld [vmem:[%s532 + $0xe0] sm:$0xff]
                %563 = vst [vmem:[%s533 + $0x70] sm:$0xff] %v562
                %v564 = vld [vmem:[%s532 + $0xe8] sm:$0xff]
                %565 = vst [vmem:[%s533 + $0x78] sm:$0xff] %v564
                %v566 = vld [vmem:[%s532 + $0x100] sm:$0xff]
                %567 = vst [vmem:[%s533 + $0x80] sm:$0xff] %v566
                %v568 = vld [vmem:[%s532 + $0x108] sm:$0xff]
                %569 = vst [vmem:[%s533 + $0x88] sm:$0xff] %v568
                %v570 = vld [vmem:[%s532 + $0x120] sm:$0xff]
                %571 = vst [vmem:[%s533 + $0x90] sm:$0xff] %v570
                %v572 = vld [vmem:[%s532 + $0x128] sm:$0xff]
                %573 = vst [vmem:[%s533 + $0x98] sm:$0xff] %v572
                %v574 = vld [vmem:[%s532 + $0x140] sm:$0xff]
                %575 = vst [vmem:[%s533 + $0xa0] sm:$0xff] %v574
                %v576 = vld [vmem:[%s532 + $0x148] sm:$0xff]
                %577 = vst [vmem:[%s533 + $0xa8] sm:$0xff] %v576
                %v578 = vld [vmem:[%s532 + $0x160] sm:$0xff]
                %579 = vst [vmem:[%s533 + $0xb0] sm:$0xff] %v578
                %v580 = vld [vmem:[%s532 + $0x168] sm:$0xff]
                %581 = vst [vmem:[%s533 + $0xb8] sm:$0xff] %v580
                %v582 = vld [vmem:[%s532 + $0x180] sm:$0xff]
                %583 = vst [vmem:[%s533 + $0xc0] sm:$0xff] %v582
                %v584 = vld [vmem:[%s532 + $0x188] sm:$0xff]
                %585 = vst [vmem:[%s533 + $0xc8] sm:$0xff] %v584
                %v586 = vld [vmem:[%s532 + $0x1a0] sm:$0xff]
                %587 = vst [vmem:[%s533 + $0xd0] sm:$0xff] %v586
                %v588 = vld [vmem:[%s532 + $0x1a8] sm:$0xff]
                %589 = vst [vmem:[%s533 + $0xd8] sm:$0xff] %v588
                %v590 = vld [vmem:[%s532 + $0x1c0] sm:$0xff]
                %591 = vst [vmem:[%s533 + $0xe0] sm:$0xff] %v590
                %v592 = vld [vmem:[%s532 + $0x1c8] sm:$0xff]
                %593 = vst [vmem:[%s533 + $0xe8] sm:$0xff] %v592
                %v594 = vld [vmem:[%s532 + $0x1e0] sm:$0xff]
                %595 = vst [vmem:[%s533 + $0xf0] sm:$0xff] %v594
                %v596 = vld [vmem:[%s532 + $0x1e8] sm:$0xff]
                %597 = vst [vmem:[%s533 + $0xf8] sm:$0xff] %v596
                %v598 = vld [vmem:[%s532 + $0x200] sm:$0xff]
                %599 = vst [vmem:[%s533 + $0x100] sm:$0xff] %v598
                %v600 = vld [vmem:[%s532 + $0x208] sm:$0xff]
                %601 = vst [vmem:[%s533 + $0x108] sm:$0xff] %v600
                %v602 = vld [vmem:[%s532 + $0x220] sm:$0xff]
                %603 = vst [vmem:[%s533 + $0x110] sm:$0xff] %v602
                %v604 = vld [vmem:[%s532 + $0x228] sm:$0xff]
                %605 = vst [vmem:[%s533 + $0x118] sm:$0xff] %v604
                %v606 = vld [vmem:[%s532 + $0x240] sm:$0xff]
                %607 = vst [vmem:[%s533 + $0x120] sm:$0xff] %v606
                %v608 = vld [vmem:[%s532 + $0x248] sm:$0xff]
                %609 = vst [vmem:[%s533 + $0x128] sm:$0xff] %v608
                %v610 = vld [vmem:[%s532 + $0x260] sm:$0xff]
                %611 = vst [vmem:[%s533 + $0x130] sm:$0xff] %v610
                %v612 = vld [vmem:[%s532 + $0x268] sm:$0xff]
                %613 = vst [vmem:[%s533 + $0x138] sm:$0xff] %v612
                %v614 = vld [vmem:[%s532 + $0x280] sm:$0xff]
                %615 = vst [vmem:[%s533 + $0x140] sm:$0xff] %v614
                %v616 = vld [vmem:[%s532 + $0x288] sm:$0xff]
                %617 = vst [vmem:[%s533 + $0x148] sm:$0xff] %v616
                %v618 = vld [vmem:[%s532 + $0x2a0] sm:$0xff]
                %619 = vst [vmem:[%s533 + $0x150] sm:$0xff] %v618
                %v620 = vld [vmem:[%s532 + $0x2a8] sm:$0xff]
                %621 = vst [vmem:[%s533 + $0x158] sm:$0xff] %v620
                %v622 = vld [vmem:[%s532 + $0x2c0] sm:$0xff]
                %623 = vst [vmem:[%s533 + $0x160] sm:$0xff] %v622
                %v624 = vld [vmem:[%s532 + $0x2c8] sm:$0xff]
                %625 = vst [vmem:[%s533 + $0x168] sm:$0xff] %v624
                %v626 = vld [vmem:[%s532 + $0x2e0] sm:$0xff]
                %627 = vst [vmem:[%s533 + $0x170] sm:$0xff] %v626
                %v628 = vld [vmem:[%s532 + $0x2e8] sm:$0xff]
                %629 = vst [vmem:[%s533 + $0x178] sm:$0xff] %v628
                %v630 = vld [vmem:[%s532 + $0x300] sm:$0xff]
                %631 = vst [vmem:[%s533 + $0x180] sm:$0xff] %v630
                %v632 = vld [vmem:[%s532 + $0x308] sm:$0xff]
                %633 = vst [vmem:[%s533 + $0x188] sm:$0xff] %v632
                %v634 = vld [vmem:[%s532 + $0x320] sm:$0xff]
                %635 = vst [vmem:[%s533 + $0x190] sm:$0xff] %v634
                %v636 = vld [vmem:[%s532 + $0x328] sm:$0xff]
                %637 = vst [vmem:[%s533 + $0x198] sm:$0xff] %v636
                %v638 = vld [vmem:[%s532 + $0x340] sm:$0xff]
                %639 = vst [vmem:[%s533 + $0x1a0] sm:$0xff] %v638
                %v640 = vld [vmem:[%s532 + $0x348] sm:$0xff]
                %641 = vst [vmem:[%s533 + $0x1a8] sm:$0xff] %v640
                %v642 = vld [vmem:[%s532 + $0x360] sm:$0xff]
                %643 = vst [vmem:[%s533 + $0x1b0] sm:$0xff] %v642
                %v644 = vld [vmem:[%s532 + $0x368] sm:$0xff]
                %645 = vst [vmem:[%s533 + $0x1b8] sm:$0xff] %v644
                %v646 = vld [vmem:[%s532 + $0x380] sm:$0xff]
                %647 = vst [vmem:[%s533 + $0x1c0] sm:$0xff] %v646
                %v648 = vld [vmem:[%s532 + $0x388] sm:$0xff]
                %649 = vst [vmem:[%s533 + $0x1c8] sm:$0xff] %v648
                %v650 = vld [vmem:[%s532 + $0x3a0] sm:$0xff]
                %651 = vst [vmem:[%s533 + $0x1d0] sm:$0xff] %v650
                %v652 = vld [vmem:[%s532 + $0x3a8] sm:$0xff]
                %653 = vst [vmem:[%s533 + $0x1d8] sm:$0xff] %v652
                %v654 = vld [vmem:[%s532 + $0x3c0] sm:$0xff]
                %655 = vst [vmem:[%s533 + $0x1e0] sm:$0xff] %v654
                %v656 = vld [vmem:[%s532 + $0x3c8] sm:$0xff]
                %657 = vst [vmem:[%s533 + $0x1e8] sm:$0xff] %v656
                %v658 = vld [vmem:[%s532 + $0x3e0] sm:$0xff]
                %659 = vst [vmem:[%s533 + $0x1f0] sm:$0xff] %v658
                %v660 = vld [vmem:[%s532 + $0x3e8] sm:$0xff]
                %661 = vst [vmem:[%s533 + $0x1f8] sm:$0xff] %v660
              $region80: #{encoder_omics_forward.5} parent=74 // loop_footer
                %s531 = sadd.s32 1, %s527
              $region81: #{encoder_omics_forward.5} parent=74 // loop_footer_branch
                %526 = sbr.rel target = $region77
              $region82: #{encoder_omics_forward.5} parent=74 // loop_exit
                _
            $region75: #{encoder_omics_forward.5} parent=70 // pred_fallthru
              _
            // Predicated region
            $region83: #{encoder_omics_forward.5} parent=70 // pred_check
              _
            $region84: #{encoder_omics_forward.5} parent=70 // pred_check_branch
              %663 = sbr.rel target = $region86
            $region85: #{encoder_omics_forward.5} parent=70 // pred_region
              _
            $region86: #{encoder_omics_forward.5} parent=70 // pred_fallthru
              _
          $region71: #{encoder_omics_forward.5} parent=66 // pred_fallthru
            _
          %664 = vnop
        $region67: #{encoder_omics_forward.5} parent=39 // pred_fallthru
          _
        // Predicated region
        $region87: #{encoder_omics_forward.5} parent=39 // pred_check
          %p665 = pneg %p106
        $region88: #{encoder_omics_forward.5} parent=39 // pred_check_branch
          %667 = sbr.rel (%p665) target = $region90
        $region89: #{encoder_omics_forward.5} parent=39 // pred_region
          %s668 = smul.u32 32, %s26
          %p669 = scmp.lt.s32.totalorder %s668, 63
          %s670 = scalar_select %p669, %s668, 63
          %s671 = smul.addr %s670, 8
          %s672 = scalar_lea.vmem %s2, %s671
          %s673 = smul.u32 32, %s26
        $region90: #{encoder_omics_forward.5} parent=39 // pred_fallthru
          _
        // Predicated region
        $region91: #{encoder_omics_forward.5} parent=39 // pred_check
          %p674 = pneg %p132
        $region92: #{encoder_omics_forward.5} parent=39 // pred_check_branch
          %676 = sbr.rel (%p674) target = $region94
        $region93: #{encoder_omics_forward.5} parent=39 // pred_region
          %s677 = smul.u32 32, %s26
          %p678 = scmp.lt.s32.totalorder %s677, 63
          %s679 = scalar_select %p678, %s677, 63
          %s680 = smul.addr %s679, 8
          %s681 = scalar_lea.vmem %s3, %s680
          %s682 = smul.u32 32, %s26
        $region94: #{encoder_omics_forward.5} parent=39 // pred_fallthru
          _
      $region40: #{encoder_omics_forward.5} parent=5 // pred_fallthru
        _
      %p683 = scmp.le.s32.totalorder 1, %s18
      %p684 = scmp.lt.s32.totalorder %s18, 5
      %p685 = pnand %p683, %p684
      %p686 = pneg %p685
      // Predicated region
      $region95: #{encoder_omics_forward.5} parent=5 // pred_check
        _
      $region96: #{encoder_omics_forward.5} parent=5 // pred_check_branch
        %688 = sbr.rel (%p685) target = $region98
      $region97: #{encoder_omics_forward.5} parent=5 // pred_region
        %s689 = ssub.s32 %s18, 1
        %s690 = sand.u32 %s45, 1
        %s691 = sand.u32 %s45, 1
        %s692 = smul.addr %s691, 512
        %s693 = scalar_lea.vmem [#allocation4], %s692
        // Predicated region
        $region99: #{encoder_omics_forward.5} parent=97 // pred_check
          %p694 = pneg %p58
        $region100: #{encoder_omics_forward.5} parent=97 // pred_check_branch
          %696 = sbr.rel (%p694) target = $region102
        $region101: #{encoder_omics_forward.5} parent=97 // pred_region
          _
        $region102: #{encoder_omics_forward.5} parent=97 // pred_fallthru
          _
        %s697 = sand.u32 %s73, 1
        %s698 = sand.u32 %s73, 1
        %s699 = smul.addr %s698, 512
        %s700 = scalar_lea.vmem [#allocation5], %s699
        // Predicated region
        $region103: #{encoder_omics_forward.5} parent=97 // pred_check
          %p701 = pneg %p86
        $region104: #{encoder_omics_forward.5} parent=97 // pred_check_branch
          %703 = sbr.rel (%p701) target = $region106
        $region105: #{encoder_omics_forward.5} parent=97 // pred_region
          _
        $region106: #{encoder_omics_forward.5} parent=97 // pred_fallthru
          _
        %s704 = sand.u32 %s45, 1
        %s705 = sand.u32 %s45, 1
        %s706 = smul.addr %s705, 512
        %s707 = scalar_lea.vmem [#allocation4], %s706
        %p708 = pneg %p58
        %p709 = pneg %p55
        %s710 = sand.u32 %s73, 1
        %s711 = sand.u32 %s73, 1
        %s712 = smul.addr %s711, 512
        %s713 = scalar_lea.vmem [#allocation5], %s712
        %p714 = pneg %p86
        %p715 = pneg %p83
        %s716 = smul.u32 32, %s28
        %p717 = scmp.lt.s32.totalorder %s716, 63
        %s718 = scalar_select %p717, %s716, 63
        %s719 = smul.addr %s718, 8
        %s720 = scalar_lea.vmem %s2, %s719
        %p721 = pneg %p112
        %p722 = pneg %p109
        %s723 = smul.u32 32, %s28
        %p724 = scmp.lt.s32.totalorder %s723, 63
        %s725 = scalar_select %p724, %s723, 63
        %s726 = smul.addr %s725, 8
        %s727 = scalar_lea.vmem %s3, %s726
        %p728 = pneg %p138
        %p729 = pneg %p135
        %p730 = pneg %p159
        %p731 = pneg %p156
        %p732 = pneg %p180
        %p733 = pneg %p177
        %p734 = pneg %p201
        %p735 = pneg %p198
        %p736 = pneg %p222
        %p737 = pneg %p219
        %p738 = pneg %p243
        %p739 = pneg %p240
        %p740 = pneg %p264
        %p741 = pneg %p261
        %p742 = pneg %p290
        %p743 = pneg %p287
        %s744 = smul.u32 32, %s27
        %p745 = scmp.lt.s32.totalorder %s744, 63
        %s746 = scalar_select %p745, %s744, 63
        %s747 = smul.addr %s746, 8
        %s748 = scalar_lea.vmem %s10, %s747
        %p749 = pneg %p316
        %p750 = pneg %p313
        %s751 = smul.u32 32, %s27
        %p752 = scmp.lt.s32.totalorder %s751, 63
        %s753 = scalar_select %p752, %s751, 63
        %s754 = smul.addr %s753, 8
        %s755 = scalar_lea.vmem %s11, %s754
        %s756 = smul.u32 32, %s27
        %s757 = smul.u32 2, %s28
        %s758 = smul.u32 32, %s27
        %s759 = smul.u32 2, %s28
        %s760 = smul.u32 32, %s28
        %p761 = scmp.lt.s32.totalorder %s760, 63
        %s762 = scalar_select %p761, %s760, 63
        %s763 = smul.addr %s762, 8
        %s764 = scalar_lea.vmem %s2, %s763
        %s765 = smul.u32 32, %s28
        %s766 = smul.u32 32, %s28
        %p767 = scmp.lt.s32.totalorder %s766, 63
        %s768 = scalar_select %p767, %s766, 63
        %s769 = smul.addr %s768, 8
        %s770 = scalar_lea.vmem %s3, %s769
        %s771 = smul.u32 32, %s28
        %s772 = smul.u32 32, %s27
        %p773 = scmp.lt.s32.totalorder %s772, 63
        %s774 = scalar_select %p773, %s772, 63
        %s775 = smul.addr %s774, 8
        %s776 = scalar_lea.vmem %s10, %s775
        %s777 = smul.u32 32, %s27
        %s778 = smul.u32 32, %s27
        %p779 = scmp.lt.s32.totalorder %s778, 63
        %s780 = scalar_select %p779, %s778, 63
        %s781 = smul.addr %s780, 8
        %s782 = scalar_lea.vmem %s11, %s781
        %s783 = smul.u32 32, %s27
        %p784 = scmp.eq.s32.totalorder %s28, 0
        // Predicated region
        $region107: #{encoder_omics_forward.5} parent=97 // pred_check
          %p785 = pneg %p784
        $region108: #{encoder_omics_forward.5} parent=97 // pred_check_branch
          %787 = sbr.rel (%p785) target = $region110
        $region109: #{encoder_omics_forward.5} parent=97 // pred_region
          %vm788 = vcmask 130048
          %789 = vst.msk [vmem:[#allocation2] sm:$0xff] %vm788, 0.0
          %790 = vst.msk [vmem:[#allocation2 + $0x8] sm:$0xff] %vm788, 0.0
          %791 = vst.msk [vmem:[#allocation2 + $0x10] sm:$0xff] %vm788, 0.0
          %792 = vst.msk [vmem:[#allocation2 + $0x18] sm:$0xff] %vm788, 0.0
          %793 = vst.msk [vmem:[#allocation2 + $0x20] sm:$0xff] %vm788, 0.0
          %794 = vst.msk [vmem:[#allocation2 + $0x28] sm:$0xff] %vm788, 0.0
          %795 = vst.msk [vmem:[#allocation2 + $0x30] sm:$0xff] %vm788, 0.0
          %796 = vst.msk [vmem:[#allocation2 + $0x38] sm:$0xff] %vm788, 0.0
          %797 = vst.msk [vmem:[#allocation2 + $0x40] sm:$0xff] %vm788, 0.0
          %798 = vst.msk [vmem:[#allocation2 + $0x48] sm:$0xff] %vm788, 0.0
          %799 = vst.msk [vmem:[#allocation2 + $0x50] sm:$0xff] %vm788, 0.0
          %800 = vst.msk [vmem:[#allocation2 + $0x58] sm:$0xff] %vm788, 0.0
          %801 = vst.msk [vmem:[#allocation2 + $0x60] sm:$0xff] %vm788, 0.0
          %802 = vst.msk [vmem:[#allocation2 + $0x68] sm:$0xff] %vm788, 0.0
          %803 = vst.msk [vmem:[#allocation2 + $0x70] sm:$0xff] %vm788, 0.0
          %804 = vst.msk [vmem:[#allocation2 + $0x78] sm:$0xff] %vm788, 0.0
          %805 = vst.msk [vmem:[#allocation2 + $0x80] sm:$0xff] %vm788, 0.0
          %806 = vst.msk [vmem:[#allocation2 + $0x88] sm:$0xff] %vm788, 0.0
          %807 = vst.msk [vmem:[#allocation2 + $0x90] sm:$0xff] %vm788, 0.0
          %808 = vst.msk [vmem:[#allocation2 + $0x98] sm:$0xff] %vm788, 0.0
          %809 = vst.msk [vmem:[#allocation2 + $0xa0] sm:$0xff] %vm788, 0.0
          %810 = vst.msk [vmem:[#allocation2 + $0xa8] sm:$0xff] %vm788, 0.0
          %811 = vst.msk [vmem:[#allocation2 + $0xb0] sm:$0xff] %vm788, 0.0
          %812 = vst.msk [vmem:[#allocation2 + $0xb8] sm:$0xff] %vm788, 0.0
          %813 = vst.msk [vmem:[#allocation2 + $0xc0] sm:$0xff] %vm788, 0.0
          %814 = vst.msk [vmem:[#allocation2 + $0xc8] sm:$0xff] %vm788, 0.0
          %815 = vst.msk [vmem:[#allocation2 + $0xd0] sm:$0xff] %vm788, 0.0
          %816 = vst.msk [vmem:[#allocation2 + $0xd8] sm:$0xff] %vm788, 0.0
          %817 = vst.msk [vmem:[#allocation2 + $0xe0] sm:$0xff] %vm788, 0.0
          %818 = vst.msk [vmem:[#allocation2 + $0xe8] sm:$0xff] %vm788, 0.0
          %819 = vst.msk [vmem:[#allocation2 + $0xf0] sm:$0xff] %vm788, 0.0
          %820 = vst.msk [vmem:[#allocation2 + $0xf8] sm:$0xff] %vm788, 0.0
          %vm821 = vcmask 64512
          %822 = vst.msk [vmem:[#allocation3] sm:$0xff] %vm821, 0.0
          %823 = vst.msk [vmem:[#allocation3 + $0x8] sm:$0xff] %vm821, 0.0
          %824 = vst.msk [vmem:[#allocation3 + $0x10] sm:$0xff] %vm821, 0.0
          %825 = vst.msk [vmem:[#allocation3 + $0x18] sm:$0xff] %vm821, 0.0
          %826 = vst.msk [vmem:[#allocation3 + $0x20] sm:$0xff] %vm821, 0.0
          %827 = vst.msk [vmem:[#allocation3 + $0x28] sm:$0xff] %vm821, 0.0
          %828 = vst.msk [vmem:[#allocation3 + $0x30] sm:$0xff] %vm821, 0.0
          %829 = vst.msk [vmem:[#allocation3 + $0x38] sm:$0xff] %vm821, 0.0
          %830 = vst.msk [vmem:[#allocation3 + $0x40] sm:$0xff] %vm821, 0.0
          %831 = vst.msk [vmem:[#allocation3 + $0x48] sm:$0xff] %vm821, 0.0
          %832 = vst.msk [vmem:[#allocation3 + $0x50] sm:$0xff] %vm821, 0.0
          %833 = vst.msk [vmem:[#allocation3 + $0x58] sm:$0xff] %vm821, 0.0
          %834 = vst.msk [vmem:[#allocation3 + $0x60] sm:$0xff] %vm821, 0.0
          %835 = vst.msk [vmem:[#allocation3 + $0x68] sm:$0xff] %vm821, 0.0
          %836 = vst.msk [vmem:[#allocation3 + $0x70] sm:$0xff] %vm821, 0.0
          %837 = vst.msk [vmem:[#allocation3 + $0x78] sm:$0xff] %vm821, 0.0
          %838 = vst.msk [vmem:[#allocation3 + $0x80] sm:$0xff] %vm821, 0.0
          %839 = vst.msk [vmem:[#allocation3 + $0x88] sm:$0xff] %vm821, 0.0
          %840 = vst.msk [vmem:[#allocation3 + $0x90] sm:$0xff] %vm821, 0.0
          %841 = vst.msk [vmem:[#allocation3 + $0x98] sm:$0xff] %vm821, 0.0
          %842 = vst.msk [vmem:[#allocation3 + $0xa0] sm:$0xff] %vm821, 0.0
          %843 = vst.msk [vmem:[#allocation3 + $0xa8] sm:$0xff] %vm821, 0.0
          %844 = vst.msk [vmem:[#allocation3 + $0xb0] sm:$0xff] %vm821, 0.0
          %845 = vst.msk [vmem:[#allocation3 + $0xb8] sm:$0xff] %vm821, 0.0
          %846 = vst.msk [vmem:[#allocation3 + $0xc0] sm:$0xff] %vm821, 0.0
          %847 = vst.msk [vmem:[#allocation3 + $0xc8] sm:$0xff] %vm821, 0.0
          %848 = vst.msk [vmem:[#allocation3 + $0xd0] sm:$0xff] %vm821, 0.0
          %849 = vst.msk [vmem:[#allocation3 + $0xd8] sm:$0xff] %vm821, 0.0
          %850 = vst.msk [vmem:[#allocation3 + $0xe0] sm:$0xff] %vm821, 0.0
          %851 = vst.msk [vmem:[#allocation3 + $0xe8] sm:$0xff] %vm821, 0.0
          %852 = vst.msk [vmem:[#allocation3 + $0xf0] sm:$0xff] %vm821, 0.0
          %853 = vst.msk [vmem:[#allocation3 + $0xf8] sm:$0xff] %vm821, 0.0
        $region110: #{encoder_omics_forward.5} parent=97 // pred_fallthru
          _
        %v854 = vld [vmem:[#allocation2] sm:$0xff]
        %v855 = vld [vmem:[#allocation2 + $0x8] sm:$0xff]
        %v856 = vld [vmem:[#allocation2 + $0x10] sm:$0xff]
        %v857 = vld [vmem:[#allocation2 + $0x18] sm:$0xff]
        %v858 = vld [vmem:[#allocation2 + $0x20] sm:$0xff]
        %v859 = vld [vmem:[#allocation2 + $0x28] sm:$0xff]
        %v860 = vld [vmem:[#allocation2 + $0x30] sm:$0xff]
        %v861 = vld [vmem:[#allocation2 + $0x38] sm:$0xff]
        %v862 = vld [vmem:[#allocation2 + $0x40] sm:$0xff]
        %v863 = vld [vmem:[#allocation2 + $0x48] sm:$0xff]
        %v864 = vld [vmem:[#allocation2 + $0x50] sm:$0xff]
        %v865 = vld [vmem:[#allocation2 + $0x58] sm:$0xff]
        %v866 = vld [vmem:[#allocation2 + $0x60] sm:$0xff]
        %v867 = vld [vmem:[#allocation2 + $0x68] sm:$0xff]
        %v868 = vld [vmem:[#allocation2 + $0x70] sm:$0xff]
        %v869 = vld [vmem:[#allocation2 + $0x78] sm:$0xff]
        %v870 = vld [vmem:[#allocation2 + $0x80] sm:$0xff]
        %v871 = vld [vmem:[#allocation2 + $0x88] sm:$0xff]
        %v872 = vld [vmem:[#allocation2 + $0x90] sm:$0xff]
        %v873 = vld [vmem:[#allocation2 + $0x98] sm:$0xff]
        %v874 = vld [vmem:[#allocation2 + $0xa0] sm:$0xff]
        %v875 = vld [vmem:[#allocation2 + $0xa8] sm:$0xff]
        %v876 = vld [vmem:[#allocation2 + $0xb0] sm:$0xff]
        %v877 = vld [vmem:[#allocation2 + $0xb8] sm:$0xff]
        %v878 = vld [vmem:[#allocation2 + $0xc0] sm:$0xff]
        %v879 = vld [vmem:[#allocation2 + $0xc8] sm:$0xff]
        %v880 = vld [vmem:[#allocation2 + $0xd0] sm:$0xff]
        %v881 = vld [vmem:[#allocation2 + $0xd8] sm:$0xff]
        %v882 = vld [vmem:[#allocation2 + $0xe0] sm:$0xff]
        %v883 = vld [vmem:[#allocation2 + $0xe8] sm:$0xff]
        %v884 = vld [vmem:[#allocation2 + $0xf0] sm:$0xff]
        %v885 = vld [vmem:[#allocation2 + $0xf8] sm:$0xff]
        %v886 = vld [vmem:[%s693] sm:$0xff]
        %v887 = vld [vmem:[%s693 + $0x8] sm:$0xff]
        %v888 = vld [vmem:[%s693 + $0x10] sm:$0xff]
        %v889 = vld [vmem:[%s693 + $0x18] sm:$0xff]
        %v890 = vld [vmem:[%s693 + $0x20] sm:$0xff]
        %v891 = vld [vmem:[%s693 + $0x28] sm:$0xff]
        %v892 = vld [vmem:[%s693 + $0x30] sm:$0xff]
        %v893 = vld [vmem:[%s693 + $0x38] sm:$0xff]
        %v894 = vld [vmem:[%s693 + $0x40] sm:$0xff]
        %v895 = vld [vmem:[%s693 + $0x48] sm:$0xff]
        %v896 = vld [vmem:[%s693 + $0x50] sm:$0xff]
        %v897 = vld [vmem:[%s693 + $0x58] sm:$0xff]
        %v898 = vld [vmem:[%s693 + $0x60] sm:$0xff]
        %v899 = vld [vmem:[%s693 + $0x68] sm:$0xff]
        %v900 = vld [vmem:[%s693 + $0x70] sm:$0xff]
        %v901 = vld [vmem:[%s693 + $0x78] sm:$0xff]
        %v902 = vld [vmem:[%s693 + $0x80] sm:$0xff]
        %v903 = vld [vmem:[%s693 + $0x88] sm:$0xff]
        %v904 = vld [vmem:[%s693 + $0x90] sm:$0xff]
        %v905 = vld [vmem:[%s693 + $0x98] sm:$0xff]
        %v906 = vld [vmem:[%s693 + $0xa0] sm:$0xff]
        %v907 = vld [vmem:[%s693 + $0xa8] sm:$0xff]
        %v908 = vld [vmem:[%s693 + $0xb0] sm:$0xff]
        %v909 = vld [vmem:[%s693 + $0xb8] sm:$0xff]
        %v910 = vld [vmem:[%s693 + $0xc0] sm:$0xff]
        %v911 = vld [vmem:[%s693 + $0xc8] sm:$0xff]
        %v912 = vld [vmem:[%s693 + $0xd0] sm:$0xff]
        %v913 = vld [vmem:[%s693 + $0xd8] sm:$0xff]
        %v914 = vld [vmem:[%s693 + $0xe0] sm:$0xff]
        %v915 = vld [vmem:[%s693 + $0xe8] sm:$0xff]
        %v916 = vld [vmem:[%s693 + $0xf0] sm:$0xff]
        %v917 = vld [vmem:[%s693 + $0xf8] sm:$0xff]
        %v918 = vld [vmem:[%s693 + $0x100] sm:$0xff]
        %v919 = vld [vmem:[%s693 + $0x108] sm:$0xff]
        %v920 = vld [vmem:[%s693 + $0x110] sm:$0xff]
        %v921 = vld [vmem:[%s693 + $0x118] sm:$0xff]
        %v922 = vld [vmem:[%s693 + $0x120] sm:$0xff]
        %v923 = vld [vmem:[%s693 + $0x128] sm:$0xff]
        %v924 = vld [vmem:[%s693 + $0x130] sm:$0xff]
        %v925 = vld [vmem:[%s693 + $0x138] sm:$0xff]
        %v926 = vld [vmem:[%s693 + $0x140] sm:$0xff]
        %v927 = vld [vmem:[%s693 + $0x148] sm:$0xff]
        %v928 = vld [vmem:[%s693 + $0x150] sm:$0xff]
        %v929 = vld [vmem:[%s693 + $0x158] sm:$0xff]
        %v930 = vld [vmem:[%s693 + $0x160] sm:$0xff]
        %v931 = vld [vmem:[%s693 + $0x168] sm:$0xff]
        %v932 = vld [vmem:[%s693 + $0x170] sm:$0xff]
        %v933 = vld [vmem:[%s693 + $0x178] sm:$0xff]
        %v934 = vld [vmem:[%s693 + $0x180] sm:$0xff]
        %v935 = vld [vmem:[%s693 + $0x188] sm:$0xff]
        %v936 = vld [vmem:[%s693 + $0x190] sm:$0xff]
        %v937 = vld [vmem:[%s693 + $0x198] sm:$0xff]
        %v938 = vld [vmem:[%s693 + $0x1a0] sm:$0xff]
        %v939 = vld [vmem:[%s693 + $0x1a8] sm:$0xff]
        %v940 = vld [vmem:[%s693 + $0x1b0] sm:$0xff]
        %v941 = vld [vmem:[%s693 + $0x1b8] sm:$0xff]
        %v942 = vld [vmem:[%s693 + $0x1c0] sm:$0xff]
        %v943 = vld [vmem:[%s693 + $0x1c8] sm:$0xff]
        %v944 = vld [vmem:[%s693 + $0x1d0] sm:$0xff]
        %v945 = vld [vmem:[%s693 + $0x1d8] sm:$0xff]
        %v946 = vld [vmem:[%s693 + $0x1e0] sm:$0xff]
        %v947 = vld [vmem:[%s693 + $0x1e8] sm:$0xff]
        %v948 = vld [vmem:[%s693 + $0x1f0] sm:$0xff]
        %v949 = vld [vmem:[%s693 + $0x1f8] sm:$0xff]
        %v950 = vld [vmem:[%s764] sm:$0xff]
        %v951 = vld [vmem:[%s764 + $0x8] sm:$0xff]
        %v952 = vld [vmem:[%s764 + $0x10] sm:$0xff]
        %v953 = vld [vmem:[%s764 + $0x18] sm:$0xff]
        %v954 = vld [vmem:[%s764 + $0x20] sm:$0xff]
        %v955 = vld [vmem:[%s764 + $0x28] sm:$0xff]
        %v956 = vld [vmem:[%s764 + $0x30] sm:$0xff]
        %v957 = vld [vmem:[%s764 + $0x38] sm:$0xff]
        %v958 = vld [vmem:[%s764 + $0x40] sm:$0xff]
        %v959 = vld [vmem:[%s764 + $0x48] sm:$0xff]
        %v960 = vld [vmem:[%s764 + $0x50] sm:$0xff]
        %v961 = vld [vmem:[%s764 + $0x58] sm:$0xff]
        %v962 = vld [vmem:[%s764 + $0x60] sm:$0xff]
        %v963 = vld [vmem:[%s764 + $0x68] sm:$0xff]
        %v964 = vld [vmem:[%s764 + $0x70] sm:$0xff]
        %v965 = vld [vmem:[%s764 + $0x78] sm:$0xff]
        %v966 = vld [vmem:[%s764 + $0x80] sm:$0xff]
        %v967 = vld [vmem:[%s764 + $0x88] sm:$0xff]
        %v968 = vld [vmem:[%s764 + $0x90] sm:$0xff]
        %v969 = vld [vmem:[%s764 + $0x98] sm:$0xff]
        %v970 = vld [vmem:[%s764 + $0xa0] sm:$0xff]
        %v971 = vld [vmem:[%s764 + $0xa8] sm:$0xff]
        %v972 = vld [vmem:[%s764 + $0xb0] sm:$0xff]
        %v973 = vld [vmem:[%s764 + $0xb8] sm:$0xff]
        %v974 = vld [vmem:[%s764 + $0xc0] sm:$0xff]
        %v975 = vld [vmem:[%s764 + $0xc8] sm:$0xff]
        %v976 = vld [vmem:[%s764 + $0xd0] sm:$0xff]
        %v977 = vld [vmem:[%s764 + $0xd8] sm:$0xff]
        %v978 = vld [vmem:[%s764 + $0xe0] sm:$0xff]
        %v979 = vld [vmem:[%s764 + $0xe8] sm:$0xff]
        %v980 = vld [vmem:[%s764 + $0xf0] sm:$0xff]
        %v981 = vld [vmem:[%s764 + $0xf8] sm:$0xff]
        %982 = vmatprep.subr.mxu0 0.0
        %983 = vmatpush1.msra.mxu0 %v950
        %984 = vmatprep.subr.mxu0 0.0
        %985 = vmatpush1.msra.mxu0 %v951
        %986 = vmatprep.subr.mxu0 0.0
        %987 = vmatpush1.msra.mxu0 %v952
        %988 = vmatprep.subr.mxu0 0.0
        %989 = vmatpush1.msra.mxu0 %v953
        %990 = vmatprep.subr.mxu0 0.0
        %991 = vmatpush1.msra.mxu0 %v954
        %992 = vmatprep.subr.mxu0 0.0
        %993 = vmatpush1.msra.mxu0 %v955
        %994 = vmatprep.subr.mxu0 0.0
        %995 = vmatpush1.msra.mxu0 %v956
        %996 = vmatprep.subr.mxu0 0.0
        %997 = vmatpush1.msra.mxu0 %v957
        %998 = vmatprep.subr.mxu0 0.0
        %999 = vmatpush1.msra.mxu0 %v958
        %1000 = vmatprep.subr.mxu0 0.0
        %1001 = vmatpush1.msra.mxu0 %v959
        %1002 = vmatprep.subr.mxu0 0.0
        %1003 = vmatpush1.msra.mxu0 %v960
        %1004 = vmatprep.subr.mxu0 0.0
        %1005 = vmatpush1.msra.mxu0 %v961
        %1006 = vmatprep.subr.mxu0 0.0
        %1007 = vmatpush1.msra.mxu0 %v962
        %1008 = vmatprep.subr.mxu0 0.0
        %1009 = vmatpush1.msra.mxu0 %v963
        %1010 = vmatprep.subr.mxu0 0.0
        %1011 = vmatpush1.msra.mxu0 %v964
        %1012 = vmatprep.subr.mxu0 0.0
        %1013 = vmatpush1.msra.mxu0 %v965
        %1014 = vmatprep.subr.mxu0 0.0
        %1015 = vmatpush1.msra.mxu0 %v966
        %1016 = vmatprep.subr.mxu0 0.0
        %1017 = vmatpush1.msra.mxu0 %v967
        %1018 = vmatprep.subr.mxu0 0.0
        %1019 = vmatpush1.msra.mxu0 %v968
        %1020 = vmatprep.subr.mxu0 0.0
        %1021 = vmatpush1.msra.mxu0 %v969
        %1022 = vmatprep.subr.mxu0 0.0
        %1023 = vmatpush1.msra.mxu0 %v970
        %1024 = vmatprep.subr.mxu0 0.0
        %1025 = vmatpush1.msra.mxu0 %v971
        %1026 = vmatprep.subr.mxu0 0.0
        %1027 = vmatpush1.msra.mxu0 %v972
        %1028 = vmatprep.subr.mxu0 0.0
        %1029 = vmatpush1.msra.mxu0 %v973
        %1030 = vmatprep.subr.mxu0 0.0
        %1031 = vmatpush1.msra.mxu0 %v974
        %1032 = vmatprep.subr.mxu0 0.0
        %1033 = vmatpush1.msra.mxu0 %v975
        %1034 = vmatprep.subr.mxu0 0.0
        %1035 = vmatpush1.msra.mxu0 %v976
        %1036 = vmatprep.subr.mxu0 0.0
        %1037 = vmatpush1.msra.mxu0 %v977
        %1038 = vmatprep.subr.mxu0 0.0
        %1039 = vmatpush1.msra.mxu0 %v978
        %1040 = vmatprep.subr.mxu0 0.0
        %1041 = vmatpush1.msra.mxu0 %v979
        %1042 = vmatprep.subr.mxu0 0.0
        %1043 = vmatpush1.msra.mxu0 %v980
        %1044 = vmatprep.subr.mxu0 0.0
        %1045 = vmatpush1.msra.mxu0 %v981
        %1046 = vmatprep.mubr.f32.mxu0 %v887
        %1047 = vmatmul.mubr.f32.gmra.mrb[0].mxu0 %v886
        %v1048 = vpop.f32.mrb[0].mxu0
        %v1049 = vadd.f32 0.0, %v1048
        %v1050 = vpop.f32.mrb[0].mxu0
        %1051 = vmatprep.mubr.f32.mxu0 %v889
        %1052 = vmatmul.mubr.f32.gmra.mrb[0].mxu0 %v888
        %v1053 = vpop.f32.mrb[0].mxu0
        %v1054 = vadd.f32 0.0, %v1053
        %v1055 = vpop.f32.mrb[0].mxu0
        %1056 = vmatprep.mubr.f32.mxu0 %v891
        %1057 = vmatmul.mubr.f32.gmra.mrb[0].mxu0 %v890
        %v1058 = vpop.f32.mrb[0].mxu0
        %v1059 = vadd.f32 0.0, %v1058
        %v1060 = vpop.f32.mrb[0].mxu0
        %1061 = vmatprep.mubr.f32.mxu0 %v893
        %1062 = vmatmul.mubr.f32.gmra.mrb[0].mxu0 %v892
        %v1063 = vpop.f32.mrb[0].mxu0
        %v1064 = vadd.f32 0.0, %v1063
        %v1065 = vpop.f32.mrb[0].mxu0
        %1066 = vmatprep.mubr.f32.mxu0 %v895
        %1067 = vmatmul.mubr.f32.gmra.mrb[0].mxu0 %v894
        %v1068 = vpop.f32.mrb[0].mxu0
        %v1069 = vadd.f32 0.0, %v1068
        %v1070 = vpop.f32.mrb[0].mxu0
        %1071 = vmatprep.mubr.f32.mxu0 %v897
        %1072 = vmatmul.mubr.f32.gmra.mrb[0].mxu0 %v896
        %v1073 = vpop.f32.mrb[0].mxu0
        %v1074 = vadd.f32 0.0, %v1073
        %v1075 = vpop.f32.mrb[0].mxu0
        %1076 = vmatprep.mubr.f32.mxu0 %v899
        %1077 = vmatmul.mubr.f32.gmra.mrb[0].mxu0 %v898
        %v1078 = vpop.f32.mrb[0].mxu0
        %v1079 = vadd.f32 0.0, %v1078
        %v1080 = vpop.f32.mrb[0].mxu0
        %1081 = vmatprep.mubr.f32.mxu0 %v901
        %1082 = vmatmul.mubr.f32.gmra.mrb[0].mxu0 %v900
        %v1083 = vpop.f32.mrb[0].mxu0
        %v1084 = vadd.f32 0.0, %v1083
        %v1085 = vpop.f32.mrb[0].mxu0
        %1086 = vmatprep.mubr.f32.mxu0 %v903
        %1087 = vmatmul.mubr.f32.gmra.mrb[0].mxu0 %v902
        %v1088 = vpop.f32.mrb[0].mxu0
        %v1089 = vadd.f32 0.0, %v1088
        %v1090 = vpop.f32.mrb[0].mxu0
        %1091 = vmatprep.mubr.f32.mxu0 %v905
        %1092 = vmatmul.mubr.f32.gmra.mrb[0].mxu0 %v904
        %v1093 = vpop.f32.mrb[0].mxu0
        %v1094 = vadd.f32 0.0, %v1093
        %v1095 = vpop.f32.mrb[0].mxu0
        %1096 = vmatprep.mubr.f32.mxu0 %v907
        %1097 = vmatmul.mubr.f32.gmra.mrb[0].mxu0 %v906
        %v1098 = vpop.f32.mrb[0].mxu0
        %v1099 = vadd.f32 0.0, %v1098
        %v1100 = vpop.f32.mrb[0].mxu0
        %1101 = vmatprep.mubr.f32.mxu0 %v909
        %1102 = vmatmul.mubr.f32.gmra.mrb[0].mxu0 %v908
        %v1103 = vpop.f32.mrb[0].mxu0
        %v1104 = vadd.f32 0.0, %v1103
        %v1105 = vpop.f32.mrb[0].mxu0
        %1106 = vmatprep.mubr.f32.mxu0 %v911
        %1107 = vmatmul.mubr.f32.gmra.mrb[0].mxu0 %v910
        %v1108 = vpop.f32.mrb[0].mxu0
        %v1109 = vadd.f32 0.0, %v1108
        %v1110 = vpop.f32.mrb[0].mxu0
        %1111 = vmatprep.mubr.f32.mxu0 %v913
        %1112 = vmatmul.mubr.f32.gmra.mrb[0].mxu0 %v912
        %v1113 = vpop.f32.mrb[0].mxu0
        %v1114 = vadd.f32 0.0, %v1113
        %v1115 = vpop.f32.mrb[0].mxu0
        %1116 = vmatprep.mubr.f32.mxu0 %v915
        %1117 = vmatmul.mubr.f32.gmra.mrb[0].mxu0 %v914
        %v1118 = vpop.f32.mrb[0].mxu0
        %v1119 = vadd.f32 0.0, %v1118
        %v1120 = vpop.f32.mrb[0].mxu0
        %1121 = vmatprep.mubr.f32.mxu0 %v917
        %1122 = vmatmul.mubr.f32.gmra.mrb[0].mxu0 %v916
        %v1123 = vpop.f32.mrb[0].mxu0
        %v1124 = vadd.f32 0.0, %v1123
        %v1125 = vpop.f32.mrb[0].mxu0
        %1126 = vmatprep.mubr.f32.mxu0 %v919
        %1127 = vmatmul.mubr.f32.gmra.mrb[0].mxu0 %v918
        %v1128 = vpop.f32.mrb[0].mxu0
        %v1129 = vadd.f32 0.0, %v1128
        %v1130 = vpop.f32.mrb[0].mxu0
        %1131 = vmatprep.mubr.f32.mxu0 %v921
        %1132 = vmatmul.mubr.f32.gmra.mrb[0].mxu0 %v920
        %v1133 = vpop.f32.mrb[0].mxu0
        %v1134 = vadd.f32 0.0, %v1133
        %v1135 = vpop.f32.mrb[0].mxu0
        %1136 = vmatprep.mubr.f32.mxu0 %v923
        %1137 = vmatmul.mubr.f32.gmra.mrb[0].mxu0 %v922
        %v1138 = vpop.f32.mrb[0].mxu0
        %v1139 = vadd.f32 0.0, %v1138
        %v1140 = vpop.f32.mrb[0].mxu0
        %1141 = vmatprep.mubr.f32.mxu0 %v925
        %1142 = vmatmul.mubr.f32.gmra.mrb[0].mxu0 %v924
        %v1143 = vpop.f32.mrb[0].mxu0
        %v1144 = vadd.f32 0.0, %v1143
        %v1145 = vpop.f32.mrb[0].mxu0
        %1146 = vmatprep.mubr.f32.mxu0 %v927
        %1147 = vmatmul.mubr.f32.gmra.mrb[0].mxu0 %v926
        %v1148 = vpop.f32.mrb[0].mxu0
        %v1149 = vadd.f32 0.0, %v1148
        %v1150 = vpop.f32.mrb[0].mxu0
        %1151 = vmatprep.mubr.f32.mxu0 %v929
        %1152 = vmatmul.mubr.f32.gmra.mrb[0].mxu0 %v928
        %v1153 = vpop.f32.mrb[0].mxu0
        %v1154 = vadd.f32 0.0, %v1153
        %v1155 = vpop.f32.mrb[0].mxu0
        %1156 = vmatprep.mubr.f32.mxu0 %v931
        %1157 = vmatmul.mubr.f32.gmra.mrb[0].mxu0 %v930
        %v1158 = vpop.f32.mrb[0].mxu0
        %v1159 = vadd.f32 0.0, %v1158
        %v1160 = vpop.f32.mrb[0].mxu0
        %1161 = vmatprep.mubr.f32.mxu0 %v933
        %1162 = vmatmul.mubr.f32.gmra.mrb[0].mxu0 %v932
        %v1163 = vpop.f32.mrb[0].mxu0
        %v1164 = vadd.f32 0.0, %v1163
        %v1165 = vpop.f32.mrb[0].mxu0
        %1166 = vmatprep.mubr.f32.mxu0 %v935
        %1167 = vmatmul.mubr.f32.gmra.mrb[0].mxu0 %v934
        %v1168 = vpop.f32.mrb[0].mxu0
        %v1169 = vadd.f32 0.0, %v1168
        %v1170 = vpop.f32.mrb[0].mxu0
        %1171 = vmatprep.mubr.f32.mxu0 %v937
        %1172 = vmatmul.mubr.f32.gmra.mrb[0].mxu0 %v936
        %v1173 = vpop.f32.mrb[0].mxu0
        %v1174 = vadd.f32 0.0, %v1173
        %v1175 = vpop.f32.mrb[0].mxu0
        %1176 = vmatprep.mubr.f32.mxu0 %v939
        %1177 = vmatmul.mubr.f32.gmra.mrb[0].mxu0 %v938
        %v1178 = vpop.f32.mrb[0].mxu0
        %v1179 = vadd.f32 0.0, %v1178
        %v1180 = vpop.f32.mrb[0].mxu0
        %1181 = vmatprep.mubr.f32.mxu0 %v941
        %1182 = vmatmul.mubr.f32.gmra.mrb[0].mxu0 %v940
        %v1183 = vpop.f32.mrb[0].mxu0
        %v1184 = vadd.f32 0.0, %v1183
        %v1185 = vpop.f32.mrb[0].mxu0
        %1186 = vmatprep.mubr.f32.mxu0 %v943
        %1187 = vmatmul.mubr.f32.gmra.mrb[0].mxu0 %v942
        %v1188 = vpop.f32.mrb[0].mxu0
        %v1189 = vadd.f32 0.0, %v1188
        %v1190 = vpop.f32.mrb[0].mxu0
        %1191 = vmatprep.mubr.f32.mxu0 %v945
        %1192 = vmatmul.mubr.f32.gmra.mrb[0].mxu0 %v944
        %v1193 = vpop.f32.mrb[0].mxu0
        %v1194 = vadd.f32 0.0, %v1193
        %v1195 = vpop.f32.mrb[0].mxu0
        %1196 = vmatprep.mubr.f32.mxu0 %v947
        %1197 = vmatmul.mubr.f32.gmra.mrb[0].mxu0 %v946
        %v1198 = vpop.f32.mrb[0].mxu0
        %v1199 = vadd.f32 0.0, %v1198
        %v1200 = vpop.f32.mrb[0].mxu0
        %1201 = vmatprep.mubr.f32.mxu0 %v949
        %1202 = vmatmul.mubr.f32.gmra.mrb[0].mxu0 %v948
        %v1203 = vpop.f32.mrb[0].mxu0
        %v1204 = vadd.f32 0.0, %v1203
        %v1205 = vpop.f32.mrb[0].mxu0
        %1206 = vdwg.mxu0
        %v1207 = vadd.f32 %v854, %v1049
        %v1208 = vadd.f32 %v855, %v1054
        %v1209 = vadd.f32 %v856, %v1059
        %v1210 = vadd.f32 %v857, %v1064
        %v1211 = vadd.f32 %v858, %v1069
        %v1212 = vadd.f32 %v859, %v1074
        %v1213 = vadd.f32 %v860, %v1079
        %v1214 = vadd.f32 %v861, %v1084
        %v1215 = vadd.f32 %v862, %v1089
        %v1216 = vadd.f32 %v863, %v1094
        %v1217 = vadd.f32 %v864, %v1099
        %v1218 = vadd.f32 %v865, %v1104
        %v1219 = vadd.f32 %v866, %v1109
        %v1220 = vadd.f32 %v867, %v1114
        %v1221 = vadd.f32 %v868, %v1119
        %v1222 = vadd.f32 %v869, %v1124
        %v1223 = vadd.f32 %v870, %v1129
        %v1224 = vadd.f32 %v871, %v1134
        %v1225 = vadd.f32 %v872, %v1139
        %v1226 = vadd.f32 %v873, %v1144
        %v1227 = vadd.f32 %v874, %v1149
        %v1228 = vadd.f32 %v875, %v1154
        %v1229 = vadd.f32 %v876, %v1159
        %v1230 = vadd.f32 %v877, %v1164
        %v1231 = vadd.f32 %v878, %v1169
        %v1232 = vadd.f32 %v879, %v1174
        %v1233 = vadd.f32 %v880, %v1179
        %v1234 = vadd.f32 %v881, %v1184
        %v1235 = vadd.f32 %v882, %v1189
        %v1236 = vadd.f32 %v883, %v1194
        %v1237 = vadd.f32 %v884, %v1199
        %v1238 = vadd.f32 %v885, %v1204
        %vm1239 = vcmask 130048
        %1240 = vst.msk [vmem:[#allocation2] sm:$0xff] %vm1239, %v1207
        %1241 = vst.msk [vmem:[#allocation2 + $0x8] sm:$0xff] %vm1239, %v1208
        %1242 = vst.msk [vmem:[#allocation2 + $0x10] sm:$0xff] %vm1239, %v1209
        %1243 = vst.msk [vmem:[#allocation2 + $0x18] sm:$0xff] %vm1239, %v1210
        %1244 = vst.msk [vmem:[#allocation2 + $0x20] sm:$0xff] %vm1239, %v1211
        %1245 = vst.msk [vmem:[#allocation2 + $0x28] sm:$0xff] %vm1239, %v1212
        %1246 = vst.msk [vmem:[#allocation2 + $0x30] sm:$0xff] %vm1239, %v1213
        %1247 = vst.msk [vmem:[#allocation2 + $0x38] sm:$0xff] %vm1239, %v1214
        %1248 = vst.msk [vmem:[#allocation2 + $0x40] sm:$0xff] %vm1239, %v1215
        %1249 = vst.msk [vmem:[#allocation2 + $0x48] sm:$0xff] %vm1239, %v1216
        %1250 = vst.msk [vmem:[#allocation2 + $0x50] sm:$0xff] %vm1239, %v1217
        %1251 = vst.msk [vmem:[#allocation2 + $0x58] sm:$0xff] %vm1239, %v1218
        %1252 = vst.msk [vmem:[#allocation2 + $0x60] sm:$0xff] %vm1239, %v1219
        %1253 = vst.msk [vmem:[#allocation2 + $0x68] sm:$0xff] %vm1239, %v1220
        %1254 = vst.msk [vmem:[#allocation2 + $0x70] sm:$0xff] %vm1239, %v1221
        %1255 = vst.msk [vmem:[#allocation2 + $0x78] sm:$0xff] %vm1239, %v1222
        %1256 = vst.msk [vmem:[#allocation2 + $0x80] sm:$0xff] %vm1239, %v1223
        %1257 = vst.msk [vmem:[#allocation2 + $0x88] sm:$0xff] %vm1239, %v1224
        %1258 = vst.msk [vmem:[#allocation2 + $0x90] sm:$0xff] %vm1239, %v1225
        %1259 = vst.msk [vmem:[#allocation2 + $0x98] sm:$0xff] %vm1239, %v1226
        %1260 = vst.msk [vmem:[#allocation2 + $0xa0] sm:$0xff] %vm1239, %v1227
        %1261 = vst.msk [vmem:[#allocation2 + $0xa8] sm:$0xff] %vm1239, %v1228
        %1262 = vst.msk [vmem:[#allocation2 + $0xb0] sm:$0xff] %vm1239, %v1229
        %1263 = vst.msk [vmem:[#allocation2 + $0xb8] sm:$0xff] %vm1239, %v1230
        %1264 = vst.msk [vmem:[#allocation2 + $0xc0] sm:$0xff] %vm1239, %v1231
        %1265 = vst.msk [vmem:[#allocation2 + $0xc8] sm:$0xff] %vm1239, %v1232
        %1266 = vst.msk [vmem:[#allocation2 + $0xd0] sm:$0xff] %vm1239, %v1233
        %1267 = vst.msk [vmem:[#allocation2 + $0xd8] sm:$0xff] %vm1239, %v1234
        %1268 = vst.msk [vmem:[#allocation2 + $0xe0] sm:$0xff] %vm1239, %v1235
        %1269 = vst.msk [vmem:[#allocation2 + $0xe8] sm:$0xff] %vm1239, %v1236
        %1270 = vst.msk [vmem:[#allocation2 + $0xf0] sm:$0xff] %vm1239, %v1237
        %1271 = vst.msk [vmem:[#allocation2 + $0xf8] sm:$0xff] %vm1239, %v1238
        %v1272 = vld [vmem:[#allocation3] sm:$0xff]
        %v1273 = vld [vmem:[#allocation3 + $0x8] sm:$0xff]
        %v1274 = vld [vmem:[#allocation3 + $0x10] sm:$0xff]
        %v1275 = vld [vmem:[#allocation3 + $0x18] sm:$0xff]
        %v1276 = vld [vmem:[#allocation3 + $0x20] sm:$0xff]
        %v1277 = vld [vmem:[#allocation3 + $0x28] sm:$0xff]
        %v1278 = vld [vmem:[#allocation3 + $0x30] sm:$0xff]
        %v1279 = vld [vmem:[#allocation3 + $0x38] sm:$0xff]
        %v1280 = vld [vmem:[#allocation3 + $0x40] sm:$0xff]
        %v1281 = vld [vmem:[#allocation3 + $0x48] sm:$0xff]
        %v1282 = vld [vmem:[#allocation3 + $0x50] sm:$0xff]
        %v1283 = vld [vmem:[#allocation3 + $0x58] sm:$0xff]
        %v1284 = vld [vmem:[#allocation3 + $0x60] sm:$0xff]
        %v1285 = vld [vmem:[#allocation3 + $0x68] sm:$0xff]
        %v1286 = vld [vmem:[#allocation3 + $0x70] sm:$0xff]
        %v1287 = vld [vmem:[#allocation3 + $0x78] sm:$0xff]
        %v1288 = vld [vmem:[#allocation3 + $0x80] sm:$0xff]
        %v1289 = vld [vmem:[#allocation3 + $0x88] sm:$0xff]
        %v1290 = vld [vmem:[#allocation3 + $0x90] sm:$0xff]
        %v1291 = vld [vmem:[#allocation3 + $0x98] sm:$0xff]
        %v1292 = vld [vmem:[#allocation3 + $0xa0] sm:$0xff]
        %v1293 = vld [vmem:[#allocation3 + $0xa8] sm:$0xff]
        %v1294 = vld [vmem:[#allocation3 + $0xb0] sm:$0xff]
        %v1295 = vld [vmem:[#allocation3 + $0xb8] sm:$0xff]
        %v1296 = vld [vmem:[#allocation3 + $0xc0] sm:$0xff]
        %v1297 = vld [vmem:[#allocation3 + $0xc8] sm:$0xff]
        %v1298 = vld [vmem:[#allocation3 + $0xd0] sm:$0xff]
        %v1299 = vld [vmem:[#allocation3 + $0xd8] sm:$0xff]
        %v1300 = vld [vmem:[#allocation3 + $0xe0] sm:$0xff]
        %v1301 = vld [vmem:[#allocation3 + $0xe8] sm:$0xff]
        %v1302 = vld [vmem:[#allocation3 + $0xf0] sm:$0xff]
        %v1303 = vld [vmem:[#allocation3 + $0xf8] sm:$0xff]
        %v1304 = vld [vmem:[%s700] sm:$0xff]
        %v1305 = vld [vmem:[%s700 + $0x8] sm:$0xff]
        %v1306 = vld [vmem:[%s700 + $0x10] sm:$0xff]
        %v1307 = vld [vmem:[%s700 + $0x18] sm:$0xff]
        %v1308 = vld [vmem:[%s700 + $0x20] sm:$0xff]
        %v1309 = vld [vmem:[%s700 + $0x28] sm:$0xff]
        %v1310 = vld [vmem:[%s700 + $0x30] sm:$0xff]
        %v1311 = vld [vmem:[%s700 + $0x38] sm:$0xff]
        %v1312 = vld [vmem:[%s700 + $0x40] sm:$0xff]
        %v1313 = vld [vmem:[%s700 + $0x48] sm:$0xff]
        %v1314 = vld [vmem:[%s700 + $0x50] sm:$0xff]
        %v1315 = vld [vmem:[%s700 + $0x58] sm:$0xff]
        %v1316 = vld [vmem:[%s700 + $0x60] sm:$0xff]
        %v1317 = vld [vmem:[%s700 + $0x68] sm:$0xff]
        %v1318 = vld [vmem:[%s700 + $0x70] sm:$0xff]
        %v1319 = vld [vmem:[%s700 + $0x78] sm:$0xff]
        %v1320 = vld [vmem:[%s700 + $0x80] sm:$0xff]
        %v1321 = vld [vmem:[%s700 + $0x88] sm:$0xff]
        %v1322 = vld [vmem:[%s700 + $0x90] sm:$0xff]
        %v1323 = vld [vmem:[%s700 + $0x98] sm:$0xff]
        %v1324 = vld [vmem:[%s700 + $0xa0] sm:$0xff]
        %v1325 = vld [vmem:[%s700 + $0xa8] sm:$0xff]
        %v1326 = vld [vmem:[%s700 + $0xb0] sm:$0xff]
        %v1327 = vld [vmem:[%s700 + $0xb8] sm:$0xff]
        %v1328 = vld [vmem:[%s700 + $0xc0] sm:$0xff]
        %v1329 = vld [vmem:[%s700 + $0xc8] sm:$0xff]
        %v1330 = vld [vmem:[%s700 + $0xd0] sm:$0xff]
        %v1331 = vld [vmem:[%s700 + $0xd8] sm:$0xff]
        %v1332 = vld [vmem:[%s700 + $0xe0] sm:$0xff]
        %v1333 = vld [vmem:[%s700 + $0xe8] sm:$0xff]
        %v1334 = vld [vmem:[%s700 + $0xf0] sm:$0xff]
        %v1335 = vld [vmem:[%s700 + $0xf8] sm:$0xff]
        %v1336 = vld [vmem:[%s700 + $0x100] sm:$0xff]
        %v1337 = vld [vmem:[%s700 + $0x108] sm:$0xff]
        %v1338 = vld [vmem:[%s700 + $0x110] sm:$0xff]
        %v1339 = vld [vmem:[%s700 + $0x118] sm:$0xff]
        %v1340 = vld [vmem:[%s700 + $0x120] sm:$0xff]
        %v1341 = vld [vmem:[%s700 + $0x128] sm:$0xff]
        %v1342 = vld [vmem:[%s700 + $0x130] sm:$0xff]
        %v1343 = vld [vmem:[%s700 + $0x138] sm:$0xff]
        %v1344 = vld [vmem:[%s700 + $0x140] sm:$0xff]
        %v1345 = vld [vmem:[%s700 + $0x148] sm:$0xff]
        %v1346 = vld [vmem:[%s700 + $0x150] sm:$0xff]
        %v1347 = vld [vmem:[%s700 + $0x158] sm:$0xff]
        %v1348 = vld [vmem:[%s700 + $0x160] sm:$0xff]
        %v1349 = vld [vmem:[%s700 + $0x168] sm:$0xff]
        %v1350 = vld [vmem:[%s700 + $0x170] sm:$0xff]
        %v1351 = vld [vmem:[%s700 + $0x178] sm:$0xff]
        %v1352 = vld [vmem:[%s700 + $0x180] sm:$0xff]
        %v1353 = vld [vmem:[%s700 + $0x188] sm:$0xff]
        %v1354 = vld [vmem:[%s700 + $0x190] sm:$0xff]
        %v1355 = vld [vmem:[%s700 + $0x198] sm:$0xff]
        %v1356 = vld [vmem:[%s700 + $0x1a0] sm:$0xff]
        %v1357 = vld [vmem:[%s700 + $0x1a8] sm:$0xff]
        %v1358 = vld [vmem:[%s700 + $0x1b0] sm:$0xff]
        %v1359 = vld [vmem:[%s700 + $0x1b8] sm:$0xff]
        %v1360 = vld [vmem:[%s700 + $0x1c0] sm:$0xff]
        %v1361 = vld [vmem:[%s700 + $0x1c8] sm:$0xff]
        %v1362 = vld [vmem:[%s700 + $0x1d0] sm:$0xff]
        %v1363 = vld [vmem:[%s700 + $0x1d8] sm:$0xff]
        %v1364 = vld [vmem:[%s700 + $0x1e0] sm:$0xff]
        %v1365 = vld [vmem:[%s700 + $0x1e8] sm:$0xff]
        %v1366 = vld [vmem:[%s700 + $0x1f0] sm:$0xff]
        %v1367 = vld [vmem:[%s700 + $0x1f8] sm:$0xff]
        %v1368 = vld [vmem:[%s770] sm:$0xff]
        %v1369 = vld [vmem:[%s770 + $0x8] sm:$0xff]
        %v1370 = vld [vmem:[%s770 + $0x10] sm:$0xff]
        %v1371 = vld [vmem:[%s770 + $0x18] sm:$0xff]
        %v1372 = vld [vmem:[%s770 + $0x20] sm:$0xff]
        %v1373 = vld [vmem:[%s770 + $0x28] sm:$0xff]
        %v1374 = vld [vmem:[%s770 + $0x30] sm:$0xff]
        %v1375 = vld [vmem:[%s770 + $0x38] sm:$0xff]
        %v1376 = vld [vmem:[%s770 + $0x40] sm:$0xff]
        %v1377 = vld [vmem:[%s770 + $0x48] sm:$0xff]
        %v1378 = vld [vmem:[%s770 + $0x50] sm:$0xff]
        %v1379 = vld [vmem:[%s770 + $0x58] sm:$0xff]
        %v1380 = vld [vmem:[%s770 + $0x60] sm:$0xff]
        %v1381 = vld [vmem:[%s770 + $0x68] sm:$0xff]
        %v1382 = vld [vmem:[%s770 + $0x70] sm:$0xff]
        %v1383 = vld [vmem:[%s770 + $0x78] sm:$0xff]
        %v1384 = vld [vmem:[%s770 + $0x80] sm:$0xff]
        %v1385 = vld [vmem:[%s770 + $0x88] sm:$0xff]
        %v1386 = vld [vmem:[%s770 + $0x90] sm:$0xff]
        %v1387 = vld [vmem:[%s770 + $0x98] sm:$0xff]
        %v1388 = vld [vmem:[%s770 + $0xa0] sm:$0xff]
        %v1389 = vld [vmem:[%s770 + $0xa8] sm:$0xff]
        %v1390 = vld [vmem:[%s770 + $0xb0] sm:$0xff]
        %v1391 = vld [vmem:[%s770 + $0xb8] sm:$0xff]
        %v1392 = vld [vmem:[%s770 + $0xc0] sm:$0xff]
        %v1393 = vld [vmem:[%s770 + $0xc8] sm:$0xff]
        %v1394 = vld [vmem:[%s770 + $0xd0] sm:$0xff]
        %v1395 = vld [vmem:[%s770 + $0xd8] sm:$0xff]
        %v1396 = vld [vmem:[%s770 + $0xe0] sm:$0xff]
        %v1397 = vld [vmem:[%s770 + $0xe8] sm:$0xff]
        %v1398 = vld [vmem:[%s770 + $0xf0] sm:$0xff]
        %v1399 = vld [vmem:[%s770 + $0xf8] sm:$0xff]
        %1400 = vmatprep.subr.mxu0 0.0
        %1401 = vmatpush1.msra.mxu0 %v1368
        %1402 = vmatprep.subr.mxu0 0.0
        %1403 = vmatpush1.msra.mxu0 %v1369
        %1404 = vmatprep.subr.mxu0 0.0
        %1405 = vmatpush1.msra.mxu0 %v1370
        %1406 = vmatprep.subr.mxu0 0.0
        %1407 = vmatpush1.msra.mxu0 %v1371
        %1408 = vmatprep.subr.mxu0 0.0
        %1409 = vmatpush1.msra.mxu0 %v1372
        %1410 = vmatprep.subr.mxu0 0.0
        %1411 = vmatpush1.msra.mxu0 %v1373
        %1412 = vmatprep.subr.mxu0 0.0
        %1413 = vmatpush1.msra.mxu0 %v1374
        %1414 = vmatprep.subr.mxu0 0.0
        %1415 = vmatpush1.msra.mxu0 %v1375
        %1416 = vmatprep.subr.mxu0 0.0
        %1417 = vmatpush1.msra.mxu0 %v1376
        %1418 = vmatprep.subr.mxu0 0.0
        %1419 = vmatpush1.msra.mxu0 %v1377
        %1420 = vmatprep.subr.mxu0 0.0
        %1421 = vmatpush1.msra.mxu0 %v1378
        %1422 = vmatprep.subr.mxu0 0.0
        %1423 = vmatpush1.msra.mxu0 %v1379
        %1424 = vmatprep.subr.mxu0 0.0
        %1425 = vmatpush1.msra.mxu0 %v1380
        %1426 = vmatprep.subr.mxu0 0.0
        %1427 = vmatpush1.msra.mxu0 %v1381
        %1428 = vmatprep.subr.mxu0 0.0
        %1429 = vmatpush1.msra.mxu0 %v1382
        %1430 = vmatprep.subr.mxu0 0.0
        %1431 = vmatpush1.msra.mxu0 %v1383
        %1432 = vmatprep.subr.mxu0 0.0
        %1433 = vmatpush1.msra.mxu0 %v1384
        %1434 = vmatprep.subr.mxu0 0.0
        %1435 = vmatpush1.msra.mxu0 %v1385
        %1436 = vmatprep.subr.mxu0 0.0
        %1437 = vmatpush1.msra.mxu0 %v1386
        %1438 = vmatprep.subr.mxu0 0.0
        %1439 = vmatpush1.msra.mxu0 %v1387
        %1440 = vmatprep.subr.mxu0 0.0
        %1441 = vmatpush1.msra.mxu0 %v1388
        %1442 = vmatprep.subr.mxu0 0.0
        %1443 = vmatpush1.msra.mxu0 %v1389
        %1444 = vmatprep.subr.mxu0 0.0
        %1445 = vmatpush1.msra.mxu0 %v1390
        %1446 = vmatprep.subr.mxu0 0.0
        %1447 = vmatpush1.msra.mxu0 %v1391
        %1448 = vmatprep.subr.mxu0 0.0
        %1449 = vmatpush1.msra.mxu0 %v1392
        %1450 = vmatprep.subr.mxu0 0.0
        %1451 = vmatpush1.msra.mxu0 %v1393
        %1452 = vmatprep.subr.mxu0 0.0
        %1453 = vmatpush1.msra.mxu0 %v1394
        %1454 = vmatprep.subr.mxu0 0.0
        %1455 = vmatpush1.msra.mxu0 %v1395
        %1456 = vmatprep.subr.mxu0 0.0
        %1457 = vmatpush1.msra.mxu0 %v1396
        %1458 = vmatprep.subr.mxu0 0.0
        %1459 = vmatpush1.msra.mxu0 %v1397
        %1460 = vmatprep.subr.mxu0 0.0
        %1461 = vmatpush1.msra.mxu0 %v1398
        %1462 = vmatprep.subr.mxu0 0.0
        %1463 = vmatpush1.msra.mxu0 %v1399
        %1464 = vmatprep.mubr.f32.mxu0 %v1305
        %1465 = vmatmul.mubr.f32.gmra.mrb[0].mxu0 %v1304
        %v1466 = vpop.f32.mrb[0].mxu0
        %v1467 = vadd.f32 0.0, %v1466
        %v1468 = vpop.f32.mrb[0].mxu0
        %1469 = vmatprep.mubr.f32.mxu0 %v1307
        %1470 = vmatmul.mubr.f32.gmra.mrb[0].mxu0 %v1306
        %v1471 = vpop.f32.mrb[0].mxu0
        %v1472 = vadd.f32 0.0, %v1471
        %v1473 = vpop.f32.mrb[0].mxu0
        %1474 = vmatprep.mubr.f32.mxu0 %v1309
        %1475 = vmatmul.mubr.f32.gmra.mrb[0].mxu0 %v1308
        %v1476 = vpop.f32.mrb[0].mxu0
        %v1477 = vadd.f32 0.0, %v1476
        %v1478 = vpop.f32.mrb[0].mxu0
        %1479 = vmatprep.mubr.f32.mxu0 %v1311
        %1480 = vmatmul.mubr.f32.gmra.mrb[0].mxu0 %v1310
        %v1481 = vpop.f32.mrb[0].mxu0
        %v1482 = vadd.f32 0.0, %v1481
        %v1483 = vpop.f32.mrb[0].mxu0
        %1484 = vmatprep.mubr.f32.mxu0 %v1313
        %1485 = vmatmul.mubr.f32.gmra.mrb[0].mxu0 %v1312
        %v1486 = vpop.f32.mrb[0].mxu0
        %v1487 = vadd.f32 0.0, %v1486
        %v1488 = vpop.f32.mrb[0].mxu0
        %1489 = vmatprep.mubr.f32.mxu0 %v1315
        %1490 = vmatmul.mubr.f32.gmra.mrb[0].mxu0 %v1314
        %v1491 = vpop.f32.mrb[0].mxu0
        %v1492 = vadd.f32 0.0, %v1491
        %v1493 = vpop.f32.mrb[0].mxu0
        %1494 = vmatprep.mubr.f32.mxu0 %v1317
        %1495 = vmatmul.mubr.f32.gmra.mrb[0].mxu0 %v1316
        %v1496 = vpop.f32.mrb[0].mxu0
        %v1497 = vadd.f32 0.0, %v1496
        %v1498 = vpop.f32.mrb[0].mxu0
        %1499 = vmatprep.mubr.f32.mxu0 %v1319
        %1500 = vmatmul.mubr.f32.gmra.mrb[0].mxu0 %v1318
        %v1501 = vpop.f32.mrb[0].mxu0
        %v1502 = vadd.f32 0.0, %v1501
        %v1503 = vpop.f32.mrb[0].mxu0
        %1504 = vmatprep.mubr.f32.mxu0 %v1321
        %1505 = vmatmul.mubr.f32.gmra.mrb[0].mxu0 %v1320
        %v1506 = vpop.f32.mrb[0].mxu0
        %v1507 = vadd.f32 0.0, %v1506
        %v1508 = vpop.f32.mrb[0].mxu0
        %1509 = vmatprep.mubr.f32.mxu0 %v1323
        %1510 = vmatmul.mubr.f32.gmra.mrb[0].mxu0 %v1322
        %v1511 = vpop.f32.mrb[0].mxu0
        %v1512 = vadd.f32 0.0, %v1511
        %v1513 = vpop.f32.mrb[0].mxu0
        %1514 = vmatprep.mubr.f32.mxu0 %v1325
        %1515 = vmatmul.mubr.f32.gmra.mrb[0].mxu0 %v1324
        %v1516 = vpop.f32.mrb[0].mxu0
        %v1517 = vadd.f32 0.0, %v1516
        %v1518 = vpop.f32.mrb[0].mxu0
        %1519 = vmatprep.mubr.f32.mxu0 %v1327
        %1520 = vmatmul.mubr.f32.gmra.mrb[0].mxu0 %v1326
        %v1521 = vpop.f32.mrb[0].mxu0
        %v1522 = vadd.f32 0.0, %v1521
        %v1523 = vpop.f32.mrb[0].mxu0
        %1524 = vmatprep.mubr.f32.mxu0 %v1329
        %1525 = vmatmul.mubr.f32.gmra.mrb[0].mxu0 %v1328
        %v1526 = vpop.f32.mrb[0].mxu0
        %v1527 = vadd.f32 0.0, %v1526
        %v1528 = vpop.f32.mrb[0].mxu0
        %1529 = vmatprep.mubr.f32.mxu0 %v1331
        %1530 = vmatmul.mubr.f32.gmra.mrb[0].mxu0 %v1330
        %v1531 = vpop.f32.mrb[0].mxu0
        %v1532 = vadd.f32 0.0, %v1531
        %v1533 = vpop.f32.mrb[0].mxu0
        %1534 = vmatprep.mubr.f32.mxu0 %v1333
        %1535 = vmatmul.mubr.f32.gmra.mrb[0].mxu0 %v1332
        %v1536 = vpop.f32.mrb[0].mxu0
        %v1537 = vadd.f32 0.0, %v1536
        %v1538 = vpop.f32.mrb[0].mxu0
        %1539 = vmatprep.mubr.f32.mxu0 %v1335
        %1540 = vmatmul.mubr.f32.gmra.mrb[0].mxu0 %v1334
        %v1541 = vpop.f32.mrb[0].mxu0
        %v1542 = vadd.f32 0.0, %v1541
        %v1543 = vpop.f32.mrb[0].mxu0
        %1544 = vmatprep.mubr.f32.mxu0 %v1337
        %1545 = vmatmul.mubr.f32.gmra.mrb[0].mxu0 %v1336
        %v1546 = vpop.f32.mrb[0].mxu0
        %v1547 = vadd.f32 0.0, %v1546
        %v1548 = vpop.f32.mrb[0].mxu0
        %1549 = vmatprep.mubr.f32.mxu0 %v1339
        %1550 = vmatmul.mubr.f32.gmra.mrb[0].mxu0 %v1338
        %v1551 = vpop.f32.mrb[0].mxu0
        %v1552 = vadd.f32 0.0, %v1551
        %v1553 = vpop.f32.mrb[0].mxu0
        %1554 = vmatprep.mubr.f32.mxu0 %v1341
        %1555 = vmatmul.mubr.f32.gmra.mrb[0].mxu0 %v1340
        %v1556 = vpop.f32.mrb[0].mxu0
        %v1557 = vadd.f32 0.0, %v1556
        %v1558 = vpop.f32.mrb[0].mxu0
        %1559 = vmatprep.mubr.f32.mxu0 %v1343
        %1560 = vmatmul.mubr.f32.gmra.mrb[0].mxu0 %v1342
        %v1561 = vpop.f32.mrb[0].mxu0
        %v1562 = vadd.f32 0.0, %v1561
        %v1563 = vpop.f32.mrb[0].mxu0
        %1564 = vmatprep.mubr.f32.mxu0 %v1345
        %1565 = vmatmul.mubr.f32.gmra.mrb[0].mxu0 %v1344
        %v1566 = vpop.f32.mrb[0].mxu0
        %v1567 = vadd.f32 0.0, %v1566
        %v1568 = vpop.f32.mrb[0].mxu0
        %1569 = vmatprep.mubr.f32.mxu0 %v1347
        %1570 = vmatmul.mubr.f32.gmra.mrb[0].mxu0 %v1346
        %v1571 = vpop.f32.mrb[0].mxu0
        %v1572 = vadd.f32 0.0, %v1571
        %v1573 = vpop.f32.mrb[0].mxu0
        %1574 = vmatprep.mubr.f32.mxu0 %v1349
        %1575 = vmatmul.mubr.f32.gmra.mrb[0].mxu0 %v1348
        %v1576 = vpop.f32.mrb[0].mxu0
        %v1577 = vadd.f32 0.0, %v1576
        %v1578 = vpop.f32.mrb[0].mxu0
        %1579 = vmatprep.mubr.f32.mxu0 %v1351
        %1580 = vmatmul.mubr.f32.gmra.mrb[0].mxu0 %v1350
        %v1581 = vpop.f32.mrb[0].mxu0
        %v1582 = vadd.f32 0.0, %v1581
        %v1583 = vpop.f32.mrb[0].mxu0
        %1584 = vmatprep.mubr.f32.mxu0 %v1353
        %1585 = vmatmul.mubr.f32.gmra.mrb[0].mxu0 %v1352
        %v1586 = vpop.f32.mrb[0].mxu0
        %v1587 = vadd.f32 0.0, %v1586
        %v1588 = vpop.f32.mrb[0].mxu0
        %1589 = vmatprep.mubr.f32.mxu0 %v1355
        %1590 = vmatmul.mubr.f32.gmra.mrb[0].mxu0 %v1354
        %v1591 = vpop.f32.mrb[0].mxu0
        %v1592 = vadd.f32 0.0, %v1591
        %v1593 = vpop.f32.mrb[0].mxu0
        %1594 = vmatprep.mubr.f32.mxu0 %v1357
        %1595 = vmatmul.mubr.f32.gmra.mrb[0].mxu0 %v1356
        %v1596 = vpop.f32.mrb[0].mxu0
        %v1597 = vadd.f32 0.0, %v1596
        %v1598 = vpop.f32.mrb[0].mxu0
        %1599 = vmatprep.mubr.f32.mxu0 %v1359
        %1600 = vmatmul.mubr.f32.gmra.mrb[0].mxu0 %v1358
        %v1601 = vpop.f32.mrb[0].mxu0
        %v1602 = vadd.f32 0.0, %v1601
        %v1603 = vpop.f32.mrb[0].mxu0
        %1604 = vmatprep.mubr.f32.mxu0 %v1361
        %1605 = vmatmul.mubr.f32.gmra.mrb[0].mxu0 %v1360
        %v1606 = vpop.f32.mrb[0].mxu0
        %v1607 = vadd.f32 0.0, %v1606
        %v1608 = vpop.f32.mrb[0].mxu0
        %1609 = vmatprep.mubr.f32.mxu0 %v1363
        %1610 = vmatmul.mubr.f32.gmra.mrb[0].mxu0 %v1362
        %v1611 = vpop.f32.mrb[0].mxu0
        %v1612 = vadd.f32 0.0, %v1611
        %v1613 = vpop.f32.mrb[0].mxu0
        %1614 = vmatprep.mubr.f32.mxu0 %v1365
        %1615 = vmatmul.mubr.f32.gmra.mrb[0].mxu0 %v1364
        %v1616 = vpop.f32.mrb[0].mxu0
        %v1617 = vadd.f32 0.0, %v1616
        %v1618 = vpop.f32.mrb[0].mxu0
        %1619 = vmatprep.mubr.f32.mxu0 %v1367
        %1620 = vmatmul.mubr.f32.gmra.mrb[0].mxu0 %v1366
        %v1621 = vpop.f32.mrb[0].mxu0
        %v1622 = vadd.f32 0.0, %v1621
        %v1623 = vpop.f32.mrb[0].mxu0
        %1624 = vdwg.mxu0
        %v1625 = vadd.f32 %v1272, %v1467
        %v1626 = vadd.f32 %v1273, %v1472
        %v1627 = vadd.f32 %v1274, %v1477
        %v1628 = vadd.f32 %v1275, %v1482
        %v1629 = vadd.f32 %v1276, %v1487
        %v1630 = vadd.f32 %v1277, %v1492
        %v1631 = vadd.f32 %v1278, %v1497
        %v1632 = vadd.f32 %v1279, %v1502
        %v1633 = vadd.f32 %v1280, %v1507
        %v1634 = vadd.f32 %v1281, %v1512
        %v1635 = vadd.f32 %v1282, %v1517
        %v1636 = vadd.f32 %v1283, %v1522
        %v1637 = vadd.f32 %v1284, %v1527
        %v1638 = vadd.f32 %v1285, %v1532
        %v1639 = vadd.f32 %v1286, %v1537
        %v1640 = vadd.f32 %v1287, %v1542
        %v1641 = vadd.f32 %v1288, %v1547
        %v1642 = vadd.f32 %v1289, %v1552
        %v1643 = vadd.f32 %v1290, %v1557
        %v1644 = vadd.f32 %v1291, %v1562
        %v1645 = vadd.f32 %v1292, %v1567
        %v1646 = vadd.f32 %v1293, %v1572
        %v1647 = vadd.f32 %v1294, %v1577
        %v1648 = vadd.f32 %v1295, %v1582
        %v1649 = vadd.f32 %v1296, %v1587
        %v1650 = vadd.f32 %v1297, %v1592
        %v1651 = vadd.f32 %v1298, %v1597
        %v1652 = vadd.f32 %v1299, %v1602
        %v1653 = vadd.f32 %v1300, %v1607
        %v1654 = vadd.f32 %v1301, %v1612
        %v1655 = vadd.f32 %v1302, %v1617
        %v1656 = vadd.f32 %v1303, %v1622
        %vm1657 = vcmask 64512
        %1658 = vst.msk [vmem:[#allocation3] sm:$0xff] %vm1657, %v1625
        %1659 = vst.msk [vmem:[#allocation3 + $0x8] sm:$0xff] %vm1657, %v1626
        %1660 = vst.msk [vmem:[#allocation3 + $0x10] sm:$0xff] %vm1657, %v1627
        %1661 = vst.msk [vmem:[#allocation3 + $0x18] sm:$0xff] %vm1657, %v1628
        %1662 = vst.msk [vmem:[#allocation3 + $0x20] sm:$0xff] %vm1657, %v1629
        %1663 = vst.msk [vmem:[#allocation3 + $0x28] sm:$0xff] %vm1657, %v1630
        %1664 = vst.msk [vmem:[#allocation3 + $0x30] sm:$0xff] %vm1657, %v1631
        %1665 = vst.msk [vmem:[#allocation3 + $0x38] sm:$0xff] %vm1657, %v1632
        %1666 = vst.msk [vmem:[#allocation3 + $0x40] sm:$0xff] %vm1657, %v1633
        %1667 = vst.msk [vmem:[#allocation3 + $0x48] sm:$0xff] %vm1657, %v1634
        %1668 = vst.msk [vmem:[#allocation3 + $0x50] sm:$0xff] %vm1657, %v1635
        %1669 = vst.msk [vmem:[#allocation3 + $0x58] sm:$0xff] %vm1657, %v1636
        %1670 = vst.msk [vmem:[#allocation3 + $0x60] sm:$0xff] %vm1657, %v1637
        %1671 = vst.msk [vmem:[#allocation3 + $0x68] sm:$0xff] %vm1657, %v1638
        %1672 = vst.msk [vmem:[#allocation3 + $0x70] sm:$0xff] %vm1657, %v1639
        %1673 = vst.msk [vmem:[#allocation3 + $0x78] sm:$0xff] %vm1657, %v1640
        %1674 = vst.msk [vmem:[#allocation3 + $0x80] sm:$0xff] %vm1657, %v1641
        %1675 = vst.msk [vmem:[#allocation3 + $0x88] sm:$0xff] %vm1657, %v1642
        %1676 = vst.msk [vmem:[#allocation3 + $0x90] sm:$0xff] %vm1657, %v1643
        %1677 = vst.msk [vmem:[#allocation3 + $0x98] sm:$0xff] %vm1657, %v1644
        %1678 = vst.msk [vmem:[#allocation3 + $0xa0] sm:$0xff] %vm1657, %v1645
        %1679 = vst.msk [vmem:[#allocation3 + $0xa8] sm:$0xff] %vm1657, %v1646
        %1680 = vst.msk [vmem:[#allocation3 + $0xb0] sm:$0xff] %vm1657, %v1647
        %1681 = vst.msk [vmem:[#allocation3 + $0xb8] sm:$0xff] %vm1657, %v1648
        %1682 = vst.msk [vmem:[#allocation3 + $0xc0] sm:$0xff] %vm1657, %v1649
        %1683 = vst.msk [vmem:[#allocation3 + $0xc8] sm:$0xff] %vm1657, %v1650
        %1684 = vst.msk [vmem:[#allocation3 + $0xd0] sm:$0xff] %vm1657, %v1651
        %1685 = vst.msk [vmem:[#allocation3 + $0xd8] sm:$0xff] %vm1657, %v1652
        %1686 = vst.msk [vmem:[#allocation3 + $0xe0] sm:$0xff] %vm1657, %v1653
        %1687 = vst.msk [vmem:[#allocation3 + $0xe8] sm:$0xff] %vm1657, %v1654
        %1688 = vst.msk [vmem:[#allocation3 + $0xf0] sm:$0xff] %vm1657, %v1655
        %1689 = vst.msk [vmem:[#allocation3 + $0xf8] sm:$0xff] %vm1657, %v1656
        %p1690 = scmp.eq.s32.totalorder %s28, 1
        // Predicated region
        $region111: #{encoder_omics_forward.5} parent=97 // pred_check
          %p1691 = pneg %p1690
        $region112: #{encoder_omics_forward.5} parent=97 // pred_check_branch
          %1693 = sbr.rel (%p1691) target = $region114
        $region113: #{encoder_omics_forward.5} parent=97 // pred_region
          %v1694 = vld [vmem:[#allocation2] sm:$0xff]
          %v1695 = vld [vmem:[#allocation2 + $0x8] sm:$0xff]
          %v1696 = vld [vmem:[#allocation2 + $0x10] sm:$0xff]
          %v1697 = vld [vmem:[#allocation2 + $0x18] sm:$0xff]
          %v1698 = vld [vmem:[#allocation2 + $0x20] sm:$0xff]
          %v1699 = vld [vmem:[#allocation2 + $0x28] sm:$0xff]
          %v1700 = vld [vmem:[#allocation2 + $0x30] sm:$0xff]
          %v1701 = vld [vmem:[#allocation2 + $0x38] sm:$0xff]
          %v1702 = vld [vmem:[#allocation2 + $0x40] sm:$0xff]
          %v1703 = vld [vmem:[#allocation2 + $0x48] sm:$0xff]
          %v1704 = vld [vmem:[#allocation2 + $0x50] sm:$0xff]
          %v1705 = vld [vmem:[#allocation2 + $0x58] sm:$0xff]
          %v1706 = vld [vmem:[#allocation2 + $0x60] sm:$0xff]
          %v1707 = vld [vmem:[#allocation2 + $0x68] sm:$0xff]
          %v1708 = vld [vmem:[#allocation2 + $0x70] sm:$0xff]
          %v1709 = vld [vmem:[#allocation2 + $0x78] sm:$0xff]
          %v1710 = vld [vmem:[#allocation2 + $0x80] sm:$0xff]
          %v1711 = vld [vmem:[#allocation2 + $0x88] sm:$0xff]
          %v1712 = vld [vmem:[#allocation2 + $0x90] sm:$0xff]
          %v1713 = vld [vmem:[#allocation2 + $0x98] sm:$0xff]
          %v1714 = vld [vmem:[#allocation2 + $0xa0] sm:$0xff]
          %v1715 = vld [vmem:[#allocation2 + $0xa8] sm:$0xff]
          %v1716 = vld [vmem:[#allocation2 + $0xb0] sm:$0xff]
          %v1717 = vld [vmem:[#allocation2 + $0xb8] sm:$0xff]
          %v1718 = vld [vmem:[#allocation2 + $0xc0] sm:$0xff]
          %v1719 = vld [vmem:[#allocation2 + $0xc8] sm:$0xff]
          %v1720 = vld [vmem:[#allocation2 + $0xd0] sm:$0xff]
          %v1721 = vld [vmem:[#allocation2 + $0xd8] sm:$0xff]
          %v1722 = vld [vmem:[#allocation2 + $0xe0] sm:$0xff]
          %v1723 = vld [vmem:[#allocation2 + $0xe8] sm:$0xff]
          %v1724 = vld [vmem:[#allocation2 + $0xf0] sm:$0xff]
          %v1725 = vld [vmem:[#allocation2 + $0xf8] sm:$0xff]
          %v1726 = vld [vmem:[#allocation3] sm:$0xff]
          %v1727 = vld [vmem:[#allocation3 + $0x8] sm:$0xff]
          %v1728 = vld [vmem:[#allocation3 + $0x10] sm:$0xff]
          %v1729 = vld [vmem:[#allocation3 + $0x18] sm:$0xff]
          %v1730 = vld [vmem:[#allocation3 + $0x20] sm:$0xff]
          %v1731 = vld [vmem:[#allocation3 + $0x28] sm:$0xff]
          %v1732 = vld [vmem:[#allocation3 + $0x30] sm:$0xff]
          %v1733 = vld [vmem:[#allocation3 + $0x38] sm:$0xff]
          %v1734 = vld [vmem:[#allocation3 + $0x40] sm:$0xff]
          %v1735 = vld [vmem:[#allocation3 + $0x48] sm:$0xff]
          %v1736 = vld [vmem:[#allocation3 + $0x50] sm:$0xff]
          %v1737 = vld [vmem:[#allocation3 + $0x58] sm:$0xff]
          %v1738 = vld [vmem:[#allocation3 + $0x60] sm:$0xff]
          %v1739 = vld [vmem:[#allocation3 + $0x68] sm:$0xff]
          %v1740 = vld [vmem:[#allocation3 + $0x70] sm:$0xff]
          %v1741 = vld [vmem:[#allocation3 + $0x78] sm:$0xff]
          %v1742 = vld [vmem:[#allocation3 + $0x80] sm:$0xff]
          %v1743 = vld [vmem:[#allocation3 + $0x88] sm:$0xff]
          %v1744 = vld [vmem:[#allocation3 + $0x90] sm:$0xff]
          %v1745 = vld [vmem:[#allocation3 + $0x98] sm:$0xff]
          %v1746 = vld [vmem:[#allocation3 + $0xa0] sm:$0xff]
          %v1747 = vld [vmem:[#allocation3 + $0xa8] sm:$0xff]
          %v1748 = vld [vmem:[#allocation3 + $0xb0] sm:$0xff]
          %v1749 = vld [vmem:[#allocation3 + $0xb8] sm:$0xff]
          %v1750 = vld [vmem:[#allocation3 + $0xc0] sm:$0xff]
          %v1751 = vld [vmem:[#allocation3 + $0xc8] sm:$0xff]
          %v1752 = vld [vmem:[#allocation3 + $0xd0] sm:$0xff]
          %v1753 = vld [vmem:[#allocation3 + $0xd8] sm:$0xff]
          %v1754 = vld [vmem:[#allocation3 + $0xe0] sm:$0xff]
          %v1755 = vld [vmem:[#allocation3 + $0xe8] sm:$0xff]
          %v1756 = vld [vmem:[#allocation3 + $0xf0] sm:$0xff]
          %v1757 = vld [vmem:[#allocation3 + $0xf8] sm:$0xff]
          %v1758 = vld [vmem:[%s4] sm:$0xff]
          %v1759 = vld [vmem:[%s4 + $0x8] sm:$0xff]
          %v1760 = vld [vmem:[%s5] sm:$0x1]
          %v1762 = vlaneseq
          %v1763 = vshrl.u32 %v1762, 7
          %v1764 = vsub.s32 0, %v1763
          %v1765 = vrot.slane %v1760, %v1764
          %v1768 = vsel %vm1239, %v1694, 0
          %v1771 = vsel %vm1239, %v1695, 0
          %v1774 = vsel %vm1239, %v1696, 0
          %v1777 = vsel %vm1239, %v1697, 0
          %v1780 = vsel %vm1239, %v1698, 0
          %v1783 = vsel %vm1239, %v1699, 0
          %v1786 = vsel %vm1239, %v1700, 0
          %v1789 = vsel %vm1239, %v1701, 0
          %v1792 = vsel %vm1239, %v1702, 0
          %v1795 = vsel %vm1239, %v1703, 0
          %v1798 = vsel %vm1239, %v1704, 0
          %v1801 = vsel %vm1239, %v1705, 0
          %v1804 = vsel %vm1239, %v1706, 0
          %v1807 = vsel %vm1239, %v1707, 0
          %v1810 = vsel %vm1239, %v1708, 0
          %v1813 = vsel %vm1239, %v1709, 0
          %v1816 = vsel %vm1239, %v1710, 0
          %v1819 = vsel %vm1239, %v1711, 0
          %v1822 = vsel %vm1239, %v1712, 0
          %v1825 = vsel %vm1239, %v1713, 0
          %v1828 = vsel %vm1239, %v1714, 0
          %v1831 = vsel %vm1239, %v1715, 0
          %v1834 = vsel %vm1239, %v1716, 0
          %v1837 = vsel %vm1239, %v1717, 0
          %v1840 = vsel %vm1239, %v1718, 0
          %v1843 = vsel %vm1239, %v1719, 0
          %v1846 = vsel %vm1239, %v1720, 0
          %v1849 = vsel %vm1239, %v1721, 0
          %v1852 = vsel %vm1239, %v1722, 0
          %v1855 = vsel %vm1239, %v1723, 0
          %v1858 = vsel %vm1239, %v1724, 0
          %v1861 = vsel %vm1239, %v1725, 0
          %1863 = vmatprep.subr.mxu0 0.0
          %1864 = vmatpush1.msra.mxu0 %v1758
          %1865 = vmatprep.subr.mxu0 0.0
          %1866 = vmatpush1.msra.mxu0 %v1759
          %1867 = vmatprep.subr.mxu0 0.0
          %1868 = vmatpush1.msra.mxu0 0.0
          %1869 = vmatprep.subr.mxu0 0.0
          %1870 = vmatpush1.msra.mxu0 0.0
          %1871 = vmatprep.subr.mxu0 0.0
          %1872 = vmatpush1.msra.mxu0 0.0
          %1873 = vmatprep.subr.mxu0 0.0
          %1874 = vmatpush1.msra.mxu0 0.0
          %1875 = vmatprep.subr.mxu0 0.0
          %1876 = vmatpush1.msra.mxu0 0.0
          %1877 = vmatprep.subr.mxu0 0.0
          %1878 = vmatpush1.msra.mxu0 0.0
          %1879 = vmatprep.subr.mxu0 0.0
          %1880 = vmatpush1.msra.mxu0 0.0
          %1881 = vmatprep.subr.mxu0 0.0
          %1882 = vmatpush1.msra.mxu0 0.0
          %1883 = vmatprep.subr.mxu0 0.0
          %1884 = vmatpush1.msra.mxu0 0.0
          %1885 = vmatprep.subr.mxu0 0.0
          %1886 = vmatpush1.msra.mxu0 0.0
          %1887 = vmatprep.subr.mxu0 0.0
          %1888 = vmatpush1.msra.mxu0 0.0
          %1889 = vmatprep.subr.mxu0 0.0
          %1890 = vmatpush1.msra.mxu0 0.0
          %1891 = vmatprep.subr.mxu0 0.0
          %1892 = vmatpush1.msra.mxu0 0.0
          %1893 = vmatprep.subr.mxu0 0.0
          %1894 = vmatpush1.msra.mxu0 0.0
          %1895 = vmatprep.subr.mxu0 0.0
          %1896 = vmatpush1.msra.mxu0 0.0
          %1897 = vmatprep.subr.mxu0 0.0
          %1898 = vmatpush1.msra.mxu0 0.0
          %1899 = vmatprep.subr.mxu0 0.0
          %1900 = vmatpush1.msra.mxu0 0.0
          %1901 = vmatprep.subr.mxu0 0.0
          %1902 = vmatpush1.msra.mxu0 0.0
          %1903 = vmatprep.subr.mxu0 0.0
          %1904 = vmatpush1.msra.mxu0 0.0
          %1905 = vmatprep.subr.mxu0 0.0
          %1906 = vmatpush1.msra.mxu0 0.0
          %1907 = vmatprep.subr.mxu0 0.0
          %1908 = vmatpush1.msra.mxu0 0.0
          %1909 = vmatprep.subr.mxu0 0.0
          %1910 = vmatpush1.msra.mxu0 0.0
          %1911 = vmatprep.subr.mxu0 0.0
          %1912 = vmatpush1.msra.mxu0 0.0
          %1913 = vmatprep.subr.mxu0 0.0
          %1914 = vmatpush1.msra.mxu0 0.0
          %1915 = vmatprep.subr.mxu0 0.0
          %1916 = vmatpush1.msra.mxu0 0.0
          %1917 = vmatprep.subr.mxu0 0.0
          %1918 = vmatpush1.msra.mxu0 0.0
          %1919 = vmatprep.subr.mxu0 0.0
          %1920 = vmatpush1.msra.mxu0 0.0
          %1921 = vmatprep.subr.mxu0 0.0
          %1922 = vmatpush1.msra.mxu0 0.0
          %1923 = vmatprep.subr.mxu0 0.0
          %1924 = vmatpush1.msra.mxu0 0.0
          %1925 = vmatprep.subr.mxu0 0.0
          %1926 = vmatpush1.msra.mxu0 0.0
          %1927 = vmatprep.mubr.f32.mxu0 0.0
          %1928 = vmatmul.mubr.f32.gmra.mrb[0].mxu0 %v1768
          %v1929 = vpop.f32.mrb[0].mxu0
          %v1930 = vadd.f32 %v1765, %v1929
          %v1931 = vpop.f32.mrb[0].mxu0
          %1932 = vmatprep.mubr.f32.mxu0 0.0
          %1933 = vmatmul.mubr.f32.gmra.mrb[0].mxu0 %v1771
          %v1934 = vpop.f32.mrb[0].mxu0
          %v1935 = vadd.f32 %v1765, %v1934
          %v1936 = vpop.f32.mrb[0].mxu0
          %1937 = vmatprep.mubr.f32.mxu0 0.0
          %1938 = vmatmul.mubr.f32.gmra.mrb[0].mxu0 %v1774
          %v1939 = vpop.f32.mrb[0].mxu0
          %v1940 = vadd.f32 %v1765, %v1939
          %v1941 = vpop.f32.mrb[0].mxu0
          %1942 = vmatprep.mubr.f32.mxu0 0.0
          %1943 = vmatmul.mubr.f32.gmra.mrb[0].mxu0 %v1777
          %v1944 = vpop.f32.mrb[0].mxu0
          %v1945 = vadd.f32 %v1765, %v1944
          %v1946 = vpop.f32.mrb[0].mxu0
          %1947 = vmatprep.mubr.f32.mxu0 0.0
          %1948 = vmatmul.mubr.f32.gmra.mrb[0].mxu0 %v1780
          %v1949 = vpop.f32.mrb[0].mxu0
          %v1950 = vadd.f32 %v1765, %v1949
          %v1951 = vpop.f32.mrb[0].mxu0
          %1952 = vmatprep.mubr.f32.mxu0 0.0
          %1953 = vmatmul.mubr.f32.gmra.mrb[0].mxu0 %v1783
          %v1954 = vpop.f32.mrb[0].mxu0
          %v1955 = vadd.f32 %v1765, %v1954
          %v1956 = vpop.f32.mrb[0].mxu0
          %1957 = vmatprep.mubr.f32.mxu0 0.0
          %1958 = vmatmul.mubr.f32.gmra.mrb[0].mxu0 %v1786
          %v1959 = vpop.f32.mrb[0].mxu0
          %v1960 = vadd.f32 %v1765, %v1959
          %v1961 = vpop.f32.mrb[0].mxu0
          %1962 = vmatprep.mubr.f32.mxu0 0.0
          %1963 = vmatmul.mubr.f32.gmra.mrb[0].mxu0 %v1789
          %v1964 = vpop.f32.mrb[0].mxu0
          %v1965 = vadd.f32 %v1765, %v1964
          %v1966 = vpop.f32.mrb[0].mxu0
          %1967 = vmatprep.mubr.f32.mxu0 0.0
          %1968 = vmatmul.mubr.f32.gmra.mrb[0].mxu0 %v1792
          %v1969 = vpop.f32.mrb[0].mxu0
          %v1970 = vadd.f32 %v1765, %v1969
          %v1971 = vpop.f32.mrb[0].mxu0
          %1972 = vmatprep.mubr.f32.mxu0 0.0
          %1973 = vmatmul.mubr.f32.gmra.mrb[0].mxu0 %v1795
          %v1974 = vpop.f32.mrb[0].mxu0
          %v1975 = vadd.f32 %v1765, %v1974
          %v1976 = vpop.f32.mrb[0].mxu0
          %1977 = vmatprep.mubr.f32.mxu0 0.0
          %1978 = vmatmul.mubr.f32.gmra.mrb[0].mxu0 %v1798
          %v1979 = vpop.f32.mrb[0].mxu0
          %v1980 = vadd.f32 %v1765, %v1979
          %v1981 = vpop.f32.mrb[0].mxu0
          %1982 = vmatprep.mubr.f32.mxu0 0.0
          %1983 = vmatmul.mubr.f32.gmra.mrb[0].mxu0 %v1801
          %v1984 = vpop.f32.mrb[0].mxu0
          %v1985 = vadd.f32 %v1765, %v1984
          %v1986 = vpop.f32.mrb[0].mxu0
          %1987 = vmatprep.mubr.f32.mxu0 0.0
          %1988 = vmatmul.mubr.f32.gmra.mrb[0].mxu0 %v1804
          %v1989 = vpop.f32.mrb[0].mxu0
          %v1990 = vadd.f32 %v1765, %v1989
          %v1991 = vpop.f32.mrb[0].mxu0
          %1992 = vmatprep.mubr.f32.mxu0 0.0
          %1993 = vmatmul.mubr.f32.gmra.mrb[0].mxu0 %v1807
          %v1994 = vpop.f32.mrb[0].mxu0
          %v1995 = vadd.f32 %v1765, %v1994
          %v1996 = vpop.f32.mrb[0].mxu0
          %1997 = vmatprep.mubr.f32.mxu0 0.0
          %1998 = vmatmul.mubr.f32.gmra.mrb[0].mxu0 %v1810
          %v1999 = vpop.f32.mrb[0].mxu0
          %v2000 = vadd.f32 %v1765, %v1999
          %v2001 = vpop.f32.mrb[0].mxu0
          %2002 = vmatprep.mubr.f32.mxu0 0.0
          %2003 = vmatmul.mubr.f32.gmra.mrb[0].mxu0 %v1813
          %v2004 = vpop.f32.mrb[0].mxu0
          %v2005 = vadd.f32 %v1765, %v2004
          %v2006 = vpop.f32.mrb[0].mxu0
          %2007 = vmatprep.mubr.f32.mxu0 0.0
          %2008 = vmatmul.mubr.f32.gmra.mrb[0].mxu0 %v1816
          %v2009 = vpop.f32.mrb[0].mxu0
          %v2010 = vadd.f32 %v1765, %v2009
          %v2011 = vpop.f32.mrb[0].mxu0
          %2012 = vmatprep.mubr.f32.mxu0 0.0
          %2013 = vmatmul.mubr.f32.gmra.mrb[0].mxu0 %v1819
          %v2014 = vpop.f32.mrb[0].mxu0
          %v2015 = vadd.f32 %v1765, %v2014
          %v2016 = vpop.f32.mrb[0].mxu0
          %2017 = vmatprep.mubr.f32.mxu0 0.0
          %2018 = vmatmul.mubr.f32.gmra.mrb[0].mxu0 %v1822
          %v2019 = vpop.f32.mrb[0].mxu0
          %v2020 = vadd.f32 %v1765, %v2019
          %v2021 = vpop.f32.mrb[0].mxu0
          %2022 = vmatprep.mubr.f32.mxu0 0.0
          %2023 = vmatmul.mubr.f32.gmra.mrb[0].mxu0 %v1825
          %v2024 = vpop.f32.mrb[0].mxu0
          %v2025 = vadd.f32 %v1765, %v2024
          %v2026 = vpop.f32.mrb[0].mxu0
          %2027 = vmatprep.mubr.f32.mxu0 0.0
          %2028 = vmatmul.mubr.f32.gmra.mrb[0].mxu0 %v1828
          %v2029 = vpop.f32.mrb[0].mxu0
          %v2030 = vadd.f32 %v1765, %v2029
          %v2031 = vpop.f32.mrb[0].mxu0
          %2032 = vmatprep.mubr.f32.mxu0 0.0
          %2033 = vmatmul.mubr.f32.gmra.mrb[0].mxu0 %v1831
          %v2034 = vpop.f32.mrb[0].mxu0
          %v2035 = vadd.f32 %v1765, %v2034
          %v2036 = vpop.f32.mrb[0].mxu0
          %2037 = vmatprep.mubr.f32.mxu0 0.0
          %2038 = vmatmul.mubr.f32.gmra.mrb[0].mxu0 %v1834
          %v2039 = vpop.f32.mrb[0].mxu0
          %v2040 = vadd.f32 %v1765, %v2039
          %v2041 = vpop.f32.mrb[0].mxu0
          %2042 = vmatprep.mubr.f32.mxu0 0.0
          %2043 = vmatmul.mubr.f32.gmra.mrb[0].mxu0 %v1837
          %v2044 = vpop.f32.mrb[0].mxu0
          %v2045 = vadd.f32 %v1765, %v2044
          %v2046 = vpop.f32.mrb[0].mxu0
          %2047 = vmatprep.mubr.f32.mxu0 0.0
          %2048 = vmatmul.mubr.f32.gmra.mrb[0].mxu0 %v1840
          %v2049 = vpop.f32.mrb[0].mxu0
          %v2050 = vadd.f32 %v1765, %v2049
          %v2051 = vpop.f32.mrb[0].mxu0
          %2052 = vmatprep.mubr.f32.mxu0 0.0
          %2053 = vmatmul.mubr.f32.gmra.mrb[0].mxu0 %v1843
          %v2054 = vpop.f32.mrb[0].mxu0
          %v2055 = vadd.f32 %v1765, %v2054
          %v2056 = vpop.f32.mrb[0].mxu0
          %2057 = vmatprep.mubr.f32.mxu0 0.0
          %2058 = vmatmul.mubr.f32.gmra.mrb[0].mxu0 %v1846
          %v2059 = vpop.f32.mrb[0].mxu0
          %v2060 = vadd.f32 %v1765, %v2059
          %v2061 = vpop.f32.mrb[0].mxu0
          %2062 = vmatprep.mubr.f32.mxu0 0.0
          %2063 = vmatmul.mubr.f32.gmra.mrb[0].mxu0 %v1849
          %v2064 = vpop.f32.mrb[0].mxu0
          %v2065 = vadd.f32 %v1765, %v2064
          %v2066 = vpop.f32.mrb[0].mxu0
          %2067 = vmatprep.mubr.f32.mxu0 0.0
          %2068 = vmatmul.mubr.f32.gmra.mrb[0].mxu0 %v1852
          %v2069 = vpop.f32.mrb[0].mxu0
          %v2070 = vadd.f32 %v1765, %v2069
          %v2071 = vpop.f32.mrb[0].mxu0
          %2072 = vmatprep.mubr.f32.mxu0 0.0
          %2073 = vmatmul.mubr.f32.gmra.mrb[0].mxu0 %v1855
          %v2074 = vpop.f32.mrb[0].mxu0
          %v2075 = vadd.f32 %v1765, %v2074
          %v2076 = vpop.f32.mrb[0].mxu0
          %2077 = vmatprep.mubr.f32.mxu0 0.0
          %2078 = vmatmul.mubr.f32.gmra.mrb[0].mxu0 %v1858
          %v2079 = vpop.f32.mrb[0].mxu0
          %v2080 = vadd.f32 %v1765, %v2079
          %v2081 = vpop.f32.mrb[0].mxu0
          %2082 = vmatprep.mubr.f32.mxu0 0.0
          %2083 = vmatmul.mubr.f32.gmra.mrb[0].mxu0 %v1861
          %v2084 = vpop.f32.mrb[0].mxu0
          %v2085 = vadd.f32 %v1765, %v2084
          %v2086 = vpop.f32.mrb[0].mxu0
          %2087 = vdwg.mxu0
          %v2088 = vld [vmem:[%s6] sm:$0xff]
          %v2089 = vld [vmem:[%s6 + $0x8] sm:$0xff]
          %v2090 = vld [vmem:[%s7] sm:$0x1]
          %v2092 = vlaneseq
          %v2093 = vshrl.u32 %v2092, 7
          %v2094 = vsub.s32 0, %v2093
          %v2095 = vrot.slane %v2090, %v2094
          %v2098 = vsel %vm1239, %v1930, 0
          %v2101 = vsel %vm1239, %v1935, 0
          %v2104 = vsel %vm1239, %v1940, 0
          %v2107 = vsel %vm1239, %v1945, 0
          %v2110 = vsel %vm1239, %v1950, 0
          %v2113 = vsel %vm1239, %v1955, 0
          %v2116 = vsel %vm1239, %v1960, 0
          %v2119 = vsel %vm1239, %v1965, 0
          %v2122 = vsel %vm1239, %v1970, 0
          %v2125 = vsel %vm1239, %v1975, 0
          %v2128 = vsel %vm1239, %v1980, 0
          %v2131 = vsel %vm1239, %v1985, 0
          %v2134 = vsel %vm1239, %v1990, 0
          %v2137 = vsel %vm1239, %v1995, 0
          %v2140 = vsel %vm1239, %v2000, 0
          %v2143 = vsel %vm1239, %v2005, 0
          %v2146 = vsel %vm1239, %v2010, 0
          %v2149 = vsel %vm1239, %v2015, 0
          %v2152 = vsel %vm1239, %v2020, 0
          %v2155 = vsel %vm1239, %v2025, 0
          %v2158 = vsel %vm1239, %v2030, 0
          %v2161 = vsel %vm1239, %v2035, 0
          %v2164 = vsel %vm1239, %v2040, 0
          %v2167 = vsel %vm1239, %v2045, 0
          %v2170 = vsel %vm1239, %v2050, 0
          %v2173 = vsel %vm1239, %v2055, 0
          %v2176 = vsel %vm1239, %v2060, 0
          %v2179 = vsel %vm1239, %v2065, 0
          %v2182 = vsel %vm1239, %v2070, 0
          %v2185 = vsel %vm1239, %v2075, 0
          %v2188 = vsel %vm1239, %v2080, 0
          %v2191 = vsel %vm1239, %v2085, 0
          %2193 = vmatprep.subr.mxu0 0.0
          %2194 = vmatpush1.msra.mxu0 %v2088
          %2195 = vmatprep.subr.mxu0 0.0
          %2196 = vmatpush1.msra.mxu0 %v2089
          %2197 = vmatprep.subr.mxu0 0.0
          %2198 = vmatpush1.msra.mxu0 0.0
          %2199 = vmatprep.subr.mxu0 0.0
          %2200 = vmatpush1.msra.mxu0 0.0
          %2201 = vmatprep.subr.mxu0 0.0
          %2202 = vmatpush1.msra.mxu0 0.0
          %2203 = vmatprep.subr.mxu0 0.0
          %2204 = vmatpush1.msra.mxu0 0.0
          %2205 = vmatprep.subr.mxu0 0.0
          %2206 = vmatpush1.msra.mxu0 0.0
          %2207 = vmatprep.subr.mxu0 0.0
          %2208 = vmatpush1.msra.mxu0 0.0
          %2209 = vmatprep.subr.mxu0 0.0
          %2210 = vmatpush1.msra.mxu0 0.0
          %2211 = vmatprep.subr.mxu0 0.0
          %2212 = vmatpush1.msra.mxu0 0.0
          %2213 = vmatprep.subr.mxu0 0.0
          %2214 = vmatpush1.msra.mxu0 0.0
          %2215 = vmatprep.subr.mxu0 0.0
          %2216 = vmatpush1.msra.mxu0 0.0
          %2217 = vmatprep.subr.mxu0 0.0
          %2218 = vmatpush1.msra.mxu0 0.0
          %2219 = vmatprep.subr.mxu0 0.0
          %2220 = vmatpush1.msra.mxu0 0.0
          %2221 = vmatprep.subr.mxu0 0.0
          %2222 = vmatpush1.msra.mxu0 0.0
          %2223 = vmatprep.subr.mxu0 0.0
          %2224 = vmatpush1.msra.mxu0 0.0
          %2225 = vmatprep.subr.mxu0 0.0
          %2226 = vmatpush1.msra.mxu0 0.0
          %2227 = vmatprep.subr.mxu0 0.0
          %2228 = vmatpush1.msra.mxu0 0.0
          %2229 = vmatprep.subr.mxu0 0.0
          %2230 = vmatpush1.msra.mxu0 0.0
          %2231 = vmatprep.subr.mxu0 0.0
          %2232 = vmatpush1.msra.mxu0 0.0
          %2233 = vmatprep.subr.mxu0 0.0
          %2234 = vmatpush1.msra.mxu0 0.0
          %2235 = vmatprep.subr.mxu0 0.0
          %2236 = vmatpush1.msra.mxu0 0.0
          %2237 = vmatprep.subr.mxu0 0.0
          %2238 = vmatpush1.msra.mxu0 0.0
          %2239 = vmatprep.subr.mxu0 0.0
          %2240 = vmatpush1.msra.mxu0 0.0
          %2241 = vmatprep.subr.mxu0 0.0
          %2242 = vmatpush1.msra.mxu0 0.0
          %2243 = vmatprep.subr.mxu0 0.0
          %2244 = vmatpush1.msra.mxu0 0.0
          %2245 = vmatprep.subr.mxu0 0.0
          %2246 = vmatpush1.msra.mxu0 0.0
          %2247 = vmatprep.subr.mxu0 0.0
          %2248 = vmatpush1.msra.mxu0 0.0
          %2249 = vmatprep.subr.mxu0 0.0
          %2250 = vmatpush1.msra.mxu0 0.0
          %2251 = vmatprep.subr.mxu0 0.0
          %2252 = vmatpush1.msra.mxu0 0.0
          %2253 = vmatprep.subr.mxu0 0.0
          %2254 = vmatpush1.msra.mxu0 0.0
          %2255 = vmatprep.subr.mxu0 0.0
          %2256 = vmatpush1.msra.mxu0 0.0
          %2257 = vmatprep.mubr.f32.mxu0 0.0
          %2258 = vmatmul.mubr.f32.gmra.mrb[0].mxu0 %v2098
          %v2259 = vpop.f32.mrb[0].mxu0
          %v2260 = vadd.f32 %v2095, %v2259
          %v2261 = vpop.f32.mrb[0].mxu0
          %2262 = vmatprep.mubr.f32.mxu0 0.0
          %2263 = vmatmul.mubr.f32.gmra.mrb[0].mxu0 %v2101
          %v2264 = vpop.f32.mrb[0].mxu0
          %v2265 = vadd.f32 %v2095, %v2264
          %v2266 = vpop.f32.mrb[0].mxu0
          %2267 = vmatprep.mubr.f32.mxu0 0.0
          %2268 = vmatmul.mubr.f32.gmra.mrb[0].mxu0 %v2104
          %v2269 = vpop.f32.mrb[0].mxu0
          %v2270 = vadd.f32 %v2095, %v2269
          %v2271 = vpop.f32.mrb[0].mxu0
          %2272 = vmatprep.mubr.f32.mxu0 0.0
          %2273 = vmatmul.mubr.f32.gmra.mrb[0].mxu0 %v2107
          %v2274 = vpop.f32.mrb[0].mxu0
          %v2275 = vadd.f32 %v2095, %v2274
          %v2276 = vpop.f32.mrb[0].mxu0
          %2277 = vmatprep.mubr.f32.mxu0 0.0
          %2278 = vmatmul.mubr.f32.gmra.mrb[0].mxu0 %v2110
          %v2279 = vpop.f32.mrb[0].mxu0
          %v2280 = vadd.f32 %v2095, %v2279
          %v2281 = vpop.f32.mrb[0].mxu0
          %2282 = vmatprep.mubr.f32.mxu0 0.0
          %2283 = vmatmul.mubr.f32.gmra.mrb[0].mxu0 %v2113
          %v2284 = vpop.f32.mrb[0].mxu0
          %v2285 = vadd.f32 %v2095, %v2284
          %v2286 = vpop.f32.mrb[0].mxu0
          %2287 = vmatprep.mubr.f32.mxu0 0.0
          %2288 = vmatmul.mubr.f32.gmra.mrb[0].mxu0 %v2116
          %v2289 = vpop.f32.mrb[0].mxu0
          %v2290 = vadd.f32 %v2095, %v2289
          %v2291 = vpop.f32.mrb[0].mxu0
          %2292 = vmatprep.mubr.f32.mxu0 0.0
          %2293 = vmatmul.mubr.f32.gmra.mrb[0].mxu0 %v2119
          %v2294 = vpop.f32.mrb[0].mxu0
          %v2295 = vadd.f32 %v2095, %v2294
          %v2296 = vpop.f32.mrb[0].mxu0
          %2297 = vmatprep.mubr.f32.mxu0 0.0
          %2298 = vmatmul.mubr.f32.gmra.mrb[0].mxu0 %v2122
          %v2299 = vpop.f32.mrb[0].mxu0
          %v2300 = vadd.f32 %v2095, %v2299
          %v2301 = vpop.f32.mrb[0].mxu0
          %2302 = vmatprep.mubr.f32.mxu0 0.0
          %2303 = vmatmul.mubr.f32.gmra.mrb[0].mxu0 %v2125
          %v2304 = vpop.f32.mrb[0].mxu0
          %v2305 = vadd.f32 %v2095, %v2304
          %v2306 = vpop.f32.mrb[0].mxu0
          %2307 = vmatprep.mubr.f32.mxu0 0.0
          %2308 = vmatmul.mubr.f32.gmra.mrb[0].mxu0 %v2128
          %v2309 = vpop.f32.mrb[0].mxu0
          %v2310 = vadd.f32 %v2095, %v2309
          %v2311 = vpop.f32.mrb[0].mxu0
          %2312 = vmatprep.mubr.f32.mxu0 0.0
          %2313 = vmatmul.mubr.f32.gmra.mrb[0].mxu0 %v2131
          %v2314 = vpop.f32.mrb[0].mxu0
          %v2315 = vadd.f32 %v2095, %v2314
          %v2316 = vpop.f32.mrb[0].mxu0
          %2317 = vmatprep.mubr.f32.mxu0 0.0
          %2318 = vmatmul.mubr.f32.gmra.mrb[0].mxu0 %v2134
          %v2319 = vpop.f32.mrb[0].mxu0
          %v2320 = vadd.f32 %v2095, %v2319
          %v2321 = vpop.f32.mrb[0].mxu0
          %2322 = vmatprep.mubr.f32.mxu0 0.0
          %2323 = vmatmul.mubr.f32.gmra.mrb[0].mxu0 %v2137
          %v2324 = vpop.f32.mrb[0].mxu0
          %v2325 = vadd.f32 %v2095, %v2324
          %v2326 = vpop.f32.mrb[0].mxu0
          %2327 = vmatprep.mubr.f32.mxu0 0.0
          %2328 = vmatmul.mubr.f32.gmra.mrb[0].mxu0 %v2140
          %v2329 = vpop.f32.mrb[0].mxu0
          %v2330 = vadd.f32 %v2095, %v2329
          %v2331 = vpop.f32.mrb[0].mxu0
          %2332 = vmatprep.mubr.f32.mxu0 0.0
          %2333 = vmatmul.mubr.f32.gmra.mrb[0].mxu0 %v2143
          %v2334 = vpop.f32.mrb[0].mxu0
          %v2335 = vadd.f32 %v2095, %v2334
          %v2336 = vpop.f32.mrb[0].mxu0
          %2337 = vmatprep.mubr.f32.mxu0 0.0
          %2338 = vmatmul.mubr.f32.gmra.mrb[0].mxu0 %v2146
          %v2339 = vpop.f32.mrb[0].mxu0
          %v2340 = vadd.f32 %v2095, %v2339
          %v2341 = vpop.f32.mrb[0].mxu0
          %2342 = vmatprep.mubr.f32.mxu0 0.0
          %2343 = vmatmul.mubr.f32.gmra.mrb[0].mxu0 %v2149
          %v2344 = vpop.f32.mrb[0].mxu0
          %v2345 = vadd.f32 %v2095, %v2344
          %v2346 = vpop.f32.mrb[0].mxu0
          %2347 = vmatprep.mubr.f32.mxu0 0.0
          %2348 = vmatmul.mubr.f32.gmra.mrb[0].mxu0 %v2152
          %v2349 = vpop.f32.mrb[0].mxu0
          %v2350 = vadd.f32 %v2095, %v2349
          %v2351 = vpop.f32.mrb[0].mxu0
          %2352 = vmatprep.mubr.f32.mxu0 0.0
          %2353 = vmatmul.mubr.f32.gmra.mrb[0].mxu0 %v2155
          %v2354 = vpop.f32.mrb[0].mxu0
          %v2355 = vadd.f32 %v2095, %v2354
          %v2356 = vpop.f32.mrb[0].mxu0
          %2357 = vmatprep.mubr.f32.mxu0 0.0
          %2358 = vmatmul.mubr.f32.gmra.mrb[0].mxu0 %v2158
          %v2359 = vpop.f32.mrb[0].mxu0
          %v2360 = vadd.f32 %v2095, %v2359
          %v2361 = vpop.f32.mrb[0].mxu0
          %2362 = vmatprep.mubr.f32.mxu0 0.0
          %2363 = vmatmul.mubr.f32.gmra.mrb[0].mxu0 %v2161
          %v2364 = vpop.f32.mrb[0].mxu0
          %v2365 = vadd.f32 %v2095, %v2364
          %v2366 = vpop.f32.mrb[0].mxu0
          %2367 = vmatprep.mubr.f32.mxu0 0.0
          %2368 = vmatmul.mubr.f32.gmra.mrb[0].mxu0 %v2164
          %v2369 = vpop.f32.mrb[0].mxu0
          %v2370 = vadd.f32 %v2095, %v2369
          %v2371 = vpop.f32.mrb[0].mxu0
          %2372 = vmatprep.mubr.f32.mxu0 0.0
          %2373 = vmatmul.mubr.f32.gmra.mrb[0].mxu0 %v2167
          %v2374 = vpop.f32.mrb[0].mxu0
          %v2375 = vadd.f32 %v2095, %v2374
          %v2376 = vpop.f32.mrb[0].mxu0
          %2377 = vmatprep.mubr.f32.mxu0 0.0
          %2378 = vmatmul.mubr.f32.gmra.mrb[0].mxu0 %v2170
          %v2379 = vpop.f32.mrb[0].mxu0
          %v2380 = vadd.f32 %v2095, %v2379
          %v2381 = vpop.f32.mrb[0].mxu0
          %2382 = vmatprep.mubr.f32.mxu0 0.0
          %2383 = vmatmul.mubr.f32.gmra.mrb[0].mxu0 %v2173
          %v2384 = vpop.f32.mrb[0].mxu0
          %v2385 = vadd.f32 %v2095, %v2384
          %v2386 = vpop.f32.mrb[0].mxu0
          %2387 = vmatprep.mubr.f32.mxu0 0.0
          %2388 = vmatmul.mubr.f32.gmra.mrb[0].mxu0 %v2176
          %v2389 = vpop.f32.mrb[0].mxu0
          %v2390 = vadd.f32 %v2095, %v2389
          %v2391 = vpop.f32.mrb[0].mxu0
          %2392 = vmatprep.mubr.f32.mxu0 0.0
          %2393 = vmatmul.mubr.f32.gmra.mrb[0].mxu0 %v2179
          %v2394 = vpop.f32.mrb[0].mxu0
          %v2395 = vadd.f32 %v2095, %v2394
          %v2396 = vpop.f32.mrb[0].mxu0
          %2397 = vmatprep.mubr.f32.mxu0 0.0
          %2398 = vmatmul.mubr.f32.gmra.mrb[0].mxu0 %v2182
          %v2399 = vpop.f32.mrb[0].mxu0
          %v2400 = vadd.f32 %v2095, %v2399
          %v2401 = vpop.f32.mrb[0].mxu0
          %2402 = vmatprep.mubr.f32.mxu0 0.0
          %2403 = vmatmul.mubr.f32.gmra.mrb[0].mxu0 %v2185
          %v2404 = vpop.f32.mrb[0].mxu0
          %v2405 = vadd.f32 %v2095, %v2404
          %v2406 = vpop.f32.mrb[0].mxu0
          %2407 = vmatprep.mubr.f32.mxu0 0.0
          %2408 = vmatmul.mubr.f32.gmra.mrb[0].mxu0 %v2188
          %v2409 = vpop.f32.mrb[0].mxu0
          %v2410 = vadd.f32 %v2095, %v2409
          %v2411 = vpop.f32.mrb[0].mxu0
          %2412 = vmatprep.mubr.f32.mxu0 0.0
          %2413 = vmatmul.mubr.f32.gmra.mrb[0].mxu0 %v2191
          %v2414 = vpop.f32.mrb[0].mxu0
          %v2415 = vadd.f32 %v2095, %v2414
          %v2416 = vpop.f32.mrb[0].mxu0
          %2417 = vdwg.mxu0
          %vm2418 = vcmask 261120
          %2419 = vst.msk [vmem:[%s776] sm:$0xff] %vm2418, %v2260
          %2420 = vst.msk [vmem:[%s776 + $0x8] sm:$0xff] %vm2418, %v2265
          %2421 = vst.msk [vmem:[%s776 + $0x10] sm:$0xff] %vm2418, %v2270
          %2422 = vst.msk [vmem:[%s776 + $0x18] sm:$0xff] %vm2418, %v2275
          %2423 = vst.msk [vmem:[%s776 + $0x20] sm:$0xff] %vm2418, %v2280
          %2424 = vst.msk [vmem:[%s776 + $0x28] sm:$0xff] %vm2418, %v2285
          %2425 = vst.msk [vmem:[%s776 + $0x30] sm:$0xff] %vm2418, %v2290
          %2426 = vst.msk [vmem:[%s776 + $0x38] sm:$0xff] %vm2418, %v2295
          %2427 = vst.msk [vmem:[%s776 + $0x40] sm:$0xff] %vm2418, %v2300
          %2428 = vst.msk [vmem:[%s776 + $0x48] sm:$0xff] %vm2418, %v2305
          %2429 = vst.msk [vmem:[%s776 + $0x50] sm:$0xff] %vm2418, %v2310
          %2430 = vst.msk [vmem:[%s776 + $0x58] sm:$0xff] %vm2418, %v2315
          %2431 = vst.msk [vmem:[%s776 + $0x60] sm:$0xff] %vm2418, %v2320
          %2432 = vst.msk [vmem:[%s776 + $0x68] sm:$0xff] %vm2418, %v2325
          %2433 = vst.msk [vmem:[%s776 + $0x70] sm:$0xff] %vm2418, %v2330
          %2434 = vst.msk [vmem:[%s776 + $0x78] sm:$0xff] %vm2418, %v2335
          %2435 = vst.msk [vmem:[%s776 + $0x80] sm:$0xff] %vm2418, %v2340
          %2436 = vst.msk [vmem:[%s776 + $0x88] sm:$0xff] %vm2418, %v2345
          %2437 = vst.msk [vmem:[%s776 + $0x90] sm:$0xff] %vm2418, %v2350
          %2438 = vst.msk [vmem:[%s776 + $0x98] sm:$0xff] %vm2418, %v2355
          %2439 = vst.msk [vmem:[%s776 + $0xa0] sm:$0xff] %vm2418, %v2360
          %2440 = vst.msk [vmem:[%s776 + $0xa8] sm:$0xff] %vm2418, %v2365
          %2441 = vst.msk [vmem:[%s776 + $0xb0] sm:$0xff] %vm2418, %v2370
          %2442 = vst.msk [vmem:[%s776 + $0xb8] sm:$0xff] %vm2418, %v2375
          %2443 = vst.msk [vmem:[%s776 + $0xc0] sm:$0xff] %vm2418, %v2380
          %2444 = vst.msk [vmem:[%s776 + $0xc8] sm:$0xff] %vm2418, %v2385
          %2445 = vst.msk [vmem:[%s776 + $0xd0] sm:$0xff] %vm2418, %v2390
          %2446 = vst.msk [vmem:[%s776 + $0xd8] sm:$0xff] %vm2418, %v2395
          %2447 = vst.msk [vmem:[%s776 + $0xe0] sm:$0xff] %vm2418, %v2400
          %2448 = vst.msk [vmem:[%s776 + $0xe8] sm:$0xff] %vm2418, %v2405
          %2449 = vst.msk [vmem:[%s776 + $0xf0] sm:$0xff] %vm2418, %v2410
          %2450 = vst.msk [vmem:[%s776 + $0xf8] sm:$0xff] %vm2418, %v2415
          %v2451 = vld [vmem:[%s8] sm:$0xff]
          %v2452 = vld [vmem:[%s9] sm:$0x1]
          %v2454 = vlaneseq
          %v2455 = vshrl.u32 %v2454, 7
          %v2456 = vsub.s32 0, %v2455
          %v2457 = vrot.slane %v2452, %v2456
          %v2460 = vsel %vm1657, %v1726, 0
          %v2463 = vsel %vm1657, %v1727, 0
          %v2466 = vsel %vm1657, %v1728, 0
          %v2469 = vsel %vm1657, %v1729, 0
          %v2472 = vsel %vm1657, %v1730, 0
          %v2475 = vsel %vm1657, %v1731, 0
          %v2478 = vsel %vm1657, %v1732, 0
          %v2481 = vsel %vm1657, %v1733, 0
          %v2484 = vsel %vm1657, %v1734, 0
          %v2487 = vsel %vm1657, %v1735, 0
          %v2490 = vsel %vm1657, %v1736, 0
          %v2493 = vsel %vm1657, %v1737, 0
          %v2496 = vsel %vm1657, %v1738, 0
          %v2499 = vsel %vm1657, %v1739, 0
          %v2502 = vsel %vm1657, %v1740, 0
          %v2505 = vsel %vm1657, %v1741, 0
          %v2508 = vsel %vm1657, %v1742, 0
          %v2511 = vsel %vm1657, %v1743, 0
          %v2514 = vsel %vm1657, %v1744, 0
          %v2517 = vsel %vm1657, %v1745, 0
          %v2520 = vsel %vm1657, %v1746, 0
          %v2523 = vsel %vm1657, %v1747, 0
          %v2526 = vsel %vm1657, %v1748, 0
          %v2529 = vsel %vm1657, %v1749, 0
          %v2532 = vsel %vm1657, %v1750, 0
          %v2535 = vsel %vm1657, %v1751, 0
          %v2538 = vsel %vm1657, %v1752, 0
          %v2541 = vsel %vm1657, %v1753, 0
          %v2544 = vsel %vm1657, %v1754, 0
          %v2547 = vsel %vm1657, %v1755, 0
          %v2550 = vsel %vm1657, %v1756, 0
          %v2553 = vsel %vm1657, %v1757, 0
          %2555 = vmatprep.subr.mxu0 0.0
          %2556 = vmatpush1.msra.mxu0 %v2451
          %2557 = vmatprep.subr.mxu0 0.0
          %2558 = vmatpush1.msra.mxu0 0.0
          %2559 = vmatprep.subr.mxu0 0.0
          %2560 = vmatpush1.msra.mxu0 0.0
          %2561 = vmatprep.subr.mxu0 0.0
          %2562 = vmatpush1.msra.mxu0 0.0
          %2563 = vmatprep.subr.mxu0 0.0
          %2564 = vmatpush1.msra.mxu0 0.0
          %2565 = vmatprep.subr.mxu0 0.0
          %2566 = vmatpush1.msra.mxu0 0.0
          %2567 = vmatprep.subr.mxu0 0.0
          %2568 = vmatpush1.msra.mxu0 0.0
          %2569 = vmatprep.subr.mxu0 0.0
          %2570 = vmatpush1.msra.mxu0 0.0
          %2571 = vmatprep.subr.mxu0 0.0
          %2572 = vmatpush1.msra.mxu0 0.0
          %2573 = vmatprep.subr.mxu0 0.0
          %2574 = vmatpush1.msra.mxu0 0.0
          %2575 = vmatprep.subr.mxu0 0.0
          %2576 = vmatpush1.msra.mxu0 0.0
          %2577 = vmatprep.subr.mxu0 0.0
          %2578 = vmatpush1.msra.mxu0 0.0
          %2579 = vmatprep.subr.mxu0 0.0
          %2580 = vmatpush1.msra.mxu0 0.0
          %2581 = vmatprep.subr.mxu0 0.0
          %2582 = vmatpush1.msra.mxu0 0.0
          %2583 = vmatprep.subr.mxu0 0.0
          %2584 = vmatpush1.msra.mxu0 0.0
          %2585 = vmatprep.subr.mxu0 0.0
          %2586 = vmatpush1.msra.mxu0 0.0
          %2587 = vmatprep.subr.mxu0 0.0
          %2588 = vmatpush1.msra.mxu0 0.0
          %2589 = vmatprep.subr.mxu0 0.0
          %2590 = vmatpush1.msra.mxu0 0.0
          %2591 = vmatprep.subr.mxu0 0.0
          %2592 = vmatpush1.msra.mxu0 0.0
          %2593 = vmatprep.subr.mxu0 0.0
          %2594 = vmatpush1.msra.mxu0 0.0
          %2595 = vmatprep.subr.mxu0 0.0
          %2596 = vmatpush1.msra.mxu0 0.0
          %2597 = vmatprep.subr.mxu0 0.0
          %2598 = vmatpush1.msra.mxu0 0.0
          %2599 = vmatprep.subr.mxu0 0.0
          %2600 = vmatpush1.msra.mxu0 0.0
          %2601 = vmatprep.subr.mxu0 0.0
          %2602 = vmatpush1.msra.mxu0 0.0
          %2603 = vmatprep.subr.mxu0 0.0
          %2604 = vmatpush1.msra.mxu0 0.0
          %2605 = vmatprep.subr.mxu0 0.0
          %2606 = vmatpush1.msra.mxu0 0.0
          %2607 = vmatprep.subr.mxu0 0.0
          %2608 = vmatpush1.msra.mxu0 0.0
          %2609 = vmatprep.subr.mxu0 0.0
          %2610 = vmatpush1.msra.mxu0 0.0
          %2611 = vmatprep.subr.mxu0 0.0
          %2612 = vmatpush1.msra.mxu0 0.0
          %2613 = vmatprep.subr.mxu0 0.0
          %2614 = vmatpush1.msra.mxu0 0.0
          %2615 = vmatprep.subr.mxu0 0.0
          %2616 = vmatpush1.msra.mxu0 0.0
          %2617 = vmatprep.subr.mxu0 0.0
          %2618 = vmatpush1.msra.mxu0 0.0
          %2619 = vmatprep.mubr.f32.mxu0 0.0
          %2620 = vmatmul.mubr.f32.gmra.mrb[0].mxu0 %v2460
          %v2621 = vpop.f32.mrb[0].mxu0
          %v2622 = vadd.f32 %v2457, %v2621
          %v2623 = vpop.f32.mrb[0].mxu0
          %2624 = vmatprep.mubr.f32.mxu0 0.0
          %2625 = vmatmul.mubr.f32.gmra.mrb[0].mxu0 %v2463
          %v2626 = vpop.f32.mrb[0].mxu0
          %v2627 = vadd.f32 %v2457, %v2626
          %v2628 = vpop.f32.mrb[0].mxu0
          %2629 = vmatprep.mubr.f32.mxu0 0.0
          %2630 = vmatmul.mubr.f32.gmra.mrb[0].mxu0 %v2466
          %v2631 = vpop.f32.mrb[0].mxu0
          %v2632 = vadd.f32 %v2457, %v2631
          %v2633 = vpop.f32.mrb[0].mxu0
          %2634 = vmatprep.mubr.f32.mxu0 0.0
          %2635 = vmatmul.mubr.f32.gmra.mrb[0].mxu0 %v2469
          %v2636 = vpop.f32.mrb[0].mxu0
          %v2637 = vadd.f32 %v2457, %v2636
          %v2638 = vpop.f32.mrb[0].mxu0
          %2639 = vmatprep.mubr.f32.mxu0 0.0
          %2640 = vmatmul.mubr.f32.gmra.mrb[0].mxu0 %v2472
          %v2641 = vpop.f32.mrb[0].mxu0
          %v2642 = vadd.f32 %v2457, %v2641
          %v2643 = vpop.f32.mrb[0].mxu0
          %2644 = vmatprep.mubr.f32.mxu0 0.0
          %2645 = vmatmul.mubr.f32.gmra.mrb[0].mxu0 %v2475
          %v2646 = vpop.f32.mrb[0].mxu0
          %v2647 = vadd.f32 %v2457, %v2646
          %v2648 = vpop.f32.mrb[0].mxu0
          %2649 = vmatprep.mubr.f32.mxu0 0.0
          %2650 = vmatmul.mubr.f32.gmra.mrb[0].mxu0 %v2478
          %v2651 = vpop.f32.mrb[0].mxu0
          %v2652 = vadd.f32 %v2457, %v2651
          %v2653 = vpop.f32.mrb[0].mxu0
          %2654 = vmatprep.mubr.f32.mxu0 0.0
          %2655 = vmatmul.mubr.f32.gmra.mrb[0].mxu0 %v2481
          %v2656 = vpop.f32.mrb[0].mxu0
          %v2657 = vadd.f32 %v2457, %v2656
          %v2658 = vpop.f32.mrb[0].mxu0
          %2659 = vmatprep.mubr.f32.mxu0 0.0
          %2660 = vmatmul.mubr.f32.gmra.mrb[0].mxu0 %v2484
          %v2661 = vpop.f32.mrb[0].mxu0
          %v2662 = vadd.f32 %v2457, %v2661
          %v2663 = vpop.f32.mrb[0].mxu0
          %2664 = vmatprep.mubr.f32.mxu0 0.0
          %2665 = vmatmul.mubr.f32.gmra.mrb[0].mxu0 %v2487
          %v2666 = vpop.f32.mrb[0].mxu0
          %v2667 = vadd.f32 %v2457, %v2666
          %v2668 = vpop.f32.mrb[0].mxu0
          %2669 = vmatprep.mubr.f32.mxu0 0.0
          %2670 = vmatmul.mubr.f32.gmra.mrb[0].mxu0 %v2490
          %v2671 = vpop.f32.mrb[0].mxu0
          %v2672 = vadd.f32 %v2457, %v2671
          %v2673 = vpop.f32.mrb[0].mxu0
          %2674 = vmatprep.mubr.f32.mxu0 0.0
          %2675 = vmatmul.mubr.f32.gmra.mrb[0].mxu0 %v2493
          %v2676 = vpop.f32.mrb[0].mxu0
          %v2677 = vadd.f32 %v2457, %v2676
          %v2678 = vpop.f32.mrb[0].mxu0
          %2679 = vmatprep.mubr.f32.mxu0 0.0
          %2680 = vmatmul.mubr.f32.gmra.mrb[0].mxu0 %v2496
          %v2681 = vpop.f32.mrb[0].mxu0
          %v2682 = vadd.f32 %v2457, %v2681
          %v2683 = vpop.f32.mrb[0].mxu0
          %2684 = vmatprep.mubr.f32.mxu0 0.0
          %2685 = vmatmul.mubr.f32.gmra.mrb[0].mxu0 %v2499
          %v2686 = vpop.f32.mrb[0].mxu0
          %v2687 = vadd.f32 %v2457, %v2686
          %v2688 = vpop.f32.mrb[0].mxu0
          %2689 = vmatprep.mubr.f32.mxu0 0.0
          %2690 = vmatmul.mubr.f32.gmra.mrb[0].mxu0 %v2502
          %v2691 = vpop.f32.mrb[0].mxu0
          %v2692 = vadd.f32 %v2457, %v2691
          %v2693 = vpop.f32.mrb[0].mxu0
          %2694 = vmatprep.mubr.f32.mxu0 0.0
          %2695 = vmatmul.mubr.f32.gmra.mrb[0].mxu0 %v2505
          %v2696 = vpop.f32.mrb[0].mxu0
          %v2697 = vadd.f32 %v2457, %v2696
          %v2698 = vpop.f32.mrb[0].mxu0
          %2699 = vmatprep.mubr.f32.mxu0 0.0
          %2700 = vmatmul.mubr.f32.gmra.mrb[0].mxu0 %v2508
          %v2701 = vpop.f32.mrb[0].mxu0
          %v2702 = vadd.f32 %v2457, %v2701
          %v2703 = vpop.f32.mrb[0].mxu0
          %2704 = vmatprep.mubr.f32.mxu0 0.0
          %2705 = vmatmul.mubr.f32.gmra.mrb[0].mxu0 %v2511
          %v2706 = vpop.f32.mrb[0].mxu0
          %v2707 = vadd.f32 %v2457, %v2706
          %v2708 = vpop.f32.mrb[0].mxu0
          %2709 = vmatprep.mubr.f32.mxu0 0.0
          %2710 = vmatmul.mubr.f32.gmra.mrb[0].mxu0 %v2514
          %v2711 = vpop.f32.mrb[0].mxu0
          %v2712 = vadd.f32 %v2457, %v2711
          %v2713 = vpop.f32.mrb[0].mxu0
          %2714 = vmatprep.mubr.f32.mxu0 0.0
          %2715 = vmatmul.mubr.f32.gmra.mrb[0].mxu0 %v2517
          %v2716 = vpop.f32.mrb[0].mxu0
          %v2717 = vadd.f32 %v2457, %v2716
          %v2718 = vpop.f32.mrb[0].mxu0
          %2719 = vmatprep.mubr.f32.mxu0 0.0
          %2720 = vmatmul.mubr.f32.gmra.mrb[0].mxu0 %v2520
          %v2721 = vpop.f32.mrb[0].mxu0
          %v2722 = vadd.f32 %v2457, %v2721
          %v2723 = vpop.f32.mrb[0].mxu0
          %2724 = vmatprep.mubr.f32.mxu0 0.0
          %2725 = vmatmul.mubr.f32.gmra.mrb[0].mxu0 %v2523
          %v2726 = vpop.f32.mrb[0].mxu0
          %v2727 = vadd.f32 %v2457, %v2726
          %v2728 = vpop.f32.mrb[0].mxu0
          %2729 = vmatprep.mubr.f32.mxu0 0.0
          %2730 = vmatmul.mubr.f32.gmra.mrb[0].mxu0 %v2526
          %v2731 = vpop.f32.mrb[0].mxu0
          %v2732 = vadd.f32 %v2457, %v2731
          %v2733 = vpop.f32.mrb[0].mxu0
          %2734 = vmatprep.mubr.f32.mxu0 0.0
          %2735 = vmatmul.mubr.f32.gmra.mrb[0].mxu0 %v2529
          %v2736 = vpop.f32.mrb[0].mxu0
          %v2737 = vadd.f32 %v2457, %v2736
          %v2738 = vpop.f32.mrb[0].mxu0
          %2739 = vmatprep.mubr.f32.mxu0 0.0
          %2740 = vmatmul.mubr.f32.gmra.mrb[0].mxu0 %v2532
          %v2741 = vpop.f32.mrb[0].mxu0
          %v2742 = vadd.f32 %v2457, %v2741
          %v2743 = vpop.f32.mrb[0].mxu0
          %2744 = vmatprep.mubr.f32.mxu0 0.0
          %2745 = vmatmul.mubr.f32.gmra.mrb[0].mxu0 %v2535
          %v2746 = vpop.f32.mrb[0].mxu0
          %v2747 = vadd.f32 %v2457, %v2746
          %v2748 = vpop.f32.mrb[0].mxu0
          %2749 = vmatprep.mubr.f32.mxu0 0.0
          %2750 = vmatmul.mubr.f32.gmra.mrb[0].mxu0 %v2538
          %v2751 = vpop.f32.mrb[0].mxu0
          %v2752 = vadd.f32 %v2457, %v2751
          %v2753 = vpop.f32.mrb[0].mxu0
          %2754 = vmatprep.mubr.f32.mxu0 0.0
          %2755 = vmatmul.mubr.f32.gmra.mrb[0].mxu0 %v2541
          %v2756 = vpop.f32.mrb[0].mxu0
          %v2757 = vadd.f32 %v2457, %v2756
          %v2758 = vpop.f32.mrb[0].mxu0
          %2759 = vmatprep.mubr.f32.mxu0 0.0
          %2760 = vmatmul.mubr.f32.gmra.mrb[0].mxu0 %v2544
          %v2761 = vpop.f32.mrb[0].mxu0
          %v2762 = vadd.f32 %v2457, %v2761
          %v2763 = vpop.f32.mrb[0].mxu0
          %2764 = vmatprep.mubr.f32.mxu0 0.0
          %2765 = vmatmul.mubr.f32.gmra.mrb[0].mxu0 %v2547
          %v2766 = vpop.f32.mrb[0].mxu0
          %v2767 = vadd.f32 %v2457, %v2766
          %v2768 = vpop.f32.mrb[0].mxu0
          %2769 = vmatprep.mubr.f32.mxu0 0.0
          %2770 = vmatmul.mubr.f32.gmra.mrb[0].mxu0 %v2550
          %v2771 = vpop.f32.mrb[0].mxu0
          %v2772 = vadd.f32 %v2457, %v2771
          %v2773 = vpop.f32.mrb[0].mxu0
          %2774 = vmatprep.mubr.f32.mxu0 0.0
          %2775 = vmatmul.mubr.f32.gmra.mrb[0].mxu0 %v2553
          %v2776 = vpop.f32.mrb[0].mxu0
          %v2777 = vadd.f32 %v2457, %v2776
          %v2778 = vpop.f32.mrb[0].mxu0
          %2779 = vdwg.mxu0
          %2780 = vst.msk [vmem:[%s782] sm:$0xff] %vm1239, %v2622
          %2781 = vst.msk [vmem:[%s782 + $0x8] sm:$0xff] %vm1239, %v2627
          %2782 = vst.msk [vmem:[%s782 + $0x10] sm:$0xff] %vm1239, %v2632
          %2783 = vst.msk [vmem:[%s782 + $0x18] sm:$0xff] %vm1239, %v2637
          %2784 = vst.msk [vmem:[%s782 + $0x20] sm:$0xff] %vm1239, %v2642
          %2785 = vst.msk [vmem:[%s782 + $0x28] sm:$0xff] %vm1239, %v2647
          %2786 = vst.msk [vmem:[%s782 + $0x30] sm:$0xff] %vm1239, %v2652
          %2787 = vst.msk [vmem:[%s782 + $0x38] sm:$0xff] %vm1239, %v2657
          %2788 = vst.msk [vmem:[%s782 + $0x40] sm:$0xff] %vm1239, %v2662
          %2789 = vst.msk [vmem:[%s782 + $0x48] sm:$0xff] %vm1239, %v2667
          %2790 = vst.msk [vmem:[%s782 + $0x50] sm:$0xff] %vm1239, %v2672
          %2791 = vst.msk [vmem:[%s782 + $0x58] sm:$0xff] %vm1239, %v2677
          %2792 = vst.msk [vmem:[%s782 + $0x60] sm:$0xff] %vm1239, %v2682
          %2793 = vst.msk [vmem:[%s782 + $0x68] sm:$0xff] %vm1239, %v2687
          %2794 = vst.msk [vmem:[%s782 + $0x70] sm:$0xff] %vm1239, %v2692
          %2795 = vst.msk [vmem:[%s782 + $0x78] sm:$0xff] %vm1239, %v2697
          %2796 = vst.msk [vmem:[%s782 + $0x80] sm:$0xff] %vm1239, %v2702
          %2797 = vst.msk [vmem:[%s782 + $0x88] sm:$0xff] %vm1239, %v2707
          %2798 = vst.msk [vmem:[%s782 + $0x90] sm:$0xff] %vm1239, %v2712
          %2799 = vst.msk [vmem:[%s782 + $0x98] sm:$0xff] %vm1239, %v2717
          %2800 = vst.msk [vmem:[%s782 + $0xa0] sm:$0xff] %vm1239, %v2722
          %2801 = vst.msk [vmem:[%s782 + $0xa8] sm:$0xff] %vm1239, %v2727
          %2802 = vst.msk [vmem:[%s782 + $0xb0] sm:$0xff] %vm1239, %v2732
          %2803 = vst.msk [vmem:[%s782 + $0xb8] sm:$0xff] %vm1239, %v2737
          %2804 = vst.msk [vmem:[%s782 + $0xc0] sm:$0xff] %vm1239, %v2742
          %2805 = vst.msk [vmem:[%s782 + $0xc8] sm:$0xff] %vm1239, %v2747
          %2806 = vst.msk [vmem:[%s782 + $0xd0] sm:$0xff] %vm1239, %v2752
          %2807 = vst.msk [vmem:[%s782 + $0xd8] sm:$0xff] %vm1239, %v2757
          %2808 = vst.msk [vmem:[%s782 + $0xe0] sm:$0xff] %vm1239, %v2762
          %2809 = vst.msk [vmem:[%s782 + $0xe8] sm:$0xff] %vm1239, %v2767
          %2810 = vst.msk [vmem:[%s782 + $0xf0] sm:$0xff] %vm1239, %v2772
          %2811 = vst.msk [vmem:[%s782 + $0xf8] sm:$0xff] %vm1239, %v2777
        $region114: #{encoder_omics_forward.5} parent=97 // pred_fallthru
          _
        %s2812 = smul.u32 32, %s27
        %p2813 = scmp.lt.s32.totalorder %s2812, 63
        %s2814 = scalar_select %p2813, %s2812, 63
        %s2815 = smul.addr %s2814, 8
        %s2816 = scalar_lea.vmem %s10, %s2815
        %s2817 = smul.u32 32, %s27
        %p2818 = scmp.lt.s32.totalorder %s2817, 63
        %s2819 = scalar_select %p2818, %s2817, 63
        %s2820 = smul.addr %s2819, 8
        %s2821 = scalar_lea.vmem %s11, %s2820
        // Predicated region
        $region115: #{encoder_omics_forward.5} parent=97 // pred_check
          %p2822 = pneg %p287
        $region116: #{encoder_omics_forward.5} parent=97 // pred_check_branch
          %2824 = sbr.rel (%p2822) target = $region118
        $region117: #{encoder_omics_forward.5} parent=97 // pred_region
          %s2825 = smul.u32 32, %s27
        $region118: #{encoder_omics_forward.5} parent=97 // pred_fallthru
          _
        // Predicated region
        $region119: #{encoder_omics_forward.5} parent=97 // pred_check
          %p2826 = pneg %p313
        $region120: #{encoder_omics_forward.5} parent=97 // pred_check_branch
          %2828 = sbr.rel (%p2826) target = $region122
        $region121: #{encoder_omics_forward.5} parent=97 // pred_region
          %s2829 = smul.u32 32, %s27
        $region122: #{encoder_omics_forward.5} parent=97 // pred_fallthru
          _
      $region98: #{encoder_omics_forward.5} parent=5 // pred_fallthru
        _
      %p2830 = scmp.le.s32.totalorder 2, %s18
      // Predicated region
      $region123: #{encoder_omics_forward.5} parent=5 // pred_check
        %p2831 = pneg %p2830
      $region124: #{encoder_omics_forward.5} parent=5 // pred_check_branch
        %2833 = sbr.rel (%p2831) target = $region126
      $region125: #{encoder_omics_forward.5} parent=5 // pred_region
        %s2834 = ssub.s32 %s18, 2
        // Predicated region
        $region127: #{encoder_omics_forward.5} parent=125 // pred_check
          %p2835 = pneg %p293
        $region128: #{encoder_omics_forward.5} parent=125 // pred_check_branch
          %2837 = sbr.rel (%p2835) target = $region130
        $region129: #{encoder_omics_forward.5} parent=125 // pred_region
          %s2838 = smul.u32 32, %s29
          %p2839 = scmp.lt.s32.totalorder %s2838, 63
          %s2840 = scalar_select %p2839, %s2838, 63
          %s2841 = smul.addr %s2840, 8
          %s2842 = scalar_lea.vmem %s10, %s2841
        $region130: #{encoder_omics_forward.5} parent=125 // pred_fallthru
          _
        // Predicated region
        $region131: #{encoder_omics_forward.5} parent=125 // pred_check
          %p2843 = pneg %p319
        $region132: #{encoder_omics_forward.5} parent=125 // pred_check_branch
          %2845 = sbr.rel (%p2843) target = $region134
        $region133: #{encoder_omics_forward.5} parent=125 // pred_region
          %s2846 = smul.u32 32, %s29
          %p2847 = scmp.lt.s32.totalorder %s2846, 63
          %s2848 = scalar_select %p2847, %s2846, 63
          %s2849 = smul.addr %s2848, 8
          %s2850 = scalar_lea.vmem %s11, %s2849
        $region134: #{encoder_omics_forward.5} parent=125 // pred_fallthru
          _
      $region126: #{encoder_omics_forward.5} parent=5 // pred_fallthru
        _
    $region6: #{encoder_omics_forward.5} parent=1 // loop_footer
      %s22 = sadd.s32 1, %s18
    $region7: #{encoder_omics_forward.5} parent=1 // loop_footer_branch
      %17 = sbr.rel target = $region3
    $region8: #{encoder_omics_forward.5} parent=1 // loop_exit
      _

// kernel: encoder_omics_forward.4
$region0: #{encoder_omics_forward.4}
  #allocation0 [shape = 'u32[]', space=smem, size = 0x4, offset = 0x4, fixed_abs, tag = 'smem constant byte address 0x4 - core index']
  #allocation1 [shape = 'u32[144,128]{1,0:T(1,128)}', space=vmem, size = 0x12000, scoped, tag = 'internal scratch']
  #allocation2 [shape = 'f32[256,16]{1,0:T(8,128)}', space=vmem, size = 0x20000, scoped, tag = 'scratch operand']
  #allocation3 [shape = 'f32[256,16]{1,0:T(8,128)}', space=vmem, size = 0x20000, scoped, tag = 'scratch operand']
  %s0 = inlined_call_operand.vmem [shape: f32[512,512], index: 0, kind: input, shape index: {}]
  %s1 = inlined_call_operand.hbm [shape: f32[512,512], index: 1, kind: input, shape index: {}]
  %s2 = inlined_call_operand.vmem [shape: f32[512,16], index: 2, kind: input, shape index: {}]
  %s3 = inlined_call_operand.vmem [shape: f32[512,16], index: 3, kind: input, shape index: {}]
  %s4 = inlined_call_operand.vmem [shape: f32[16,16], index: 4, kind: input, shape index: {}]
  %s5 = inlined_call_operand.vmem [shape: f32[1,16], index: 5, kind: input, shape index: {}]
  %s6 = inlined_call_operand.vmem [shape: f32[16,16], index: 6, kind: input, shape index: {}]
  %s7 = inlined_call_operand.vmem [shape: f32[16,8], index: 7, kind: input, shape index: {}]
  %s8 = inlined_call_operand.vmem [shape: f32[512,16], index: 8, kind: output, shape index: {0}]
  %s9 = inlined_call_operand.vmem [shape: f32[512,16], index: 9, kind: output, shape index: {1}]
  %s10 = inlined_call_operand.vmem [shape: f32[512,16], index: 10, kind: output, shape index: {2}]
  %s11 = inlined_call_operand.vmem [shape: f32[512,2], index: 11, kind: output, shape index: {3}]
  %s12 = inlined_call_operand.vmem [shape: f32[512,16], index: 12, kind: output, shape index: {4}]
  %s13 = inlined_call_operand.vmem [shape: f32[512,8], index: 13, kind: output, shape index: {5}]
  %14 = xla_tuple %s8, %s9, %s10, %s11, %s12, %s13
  %s15 = sld [smem:[#allocation0]]
  $region140: #{encoder_omics_forward.4} parent=0
    _
  %s17 = ssub.s32 1, %s15
  %s18 = scalar_select 0, %s17, %s15
  $region1: #{encoder_omics_forward.4} parent=0
    #allocation4 [shape = 'u8[524288]{0}', space=vmem, size = 0x80000, scoped, tag = 'input window, operand 0']
    #allocation5 [shape = 'u8[524288]{0}', space=vmem, size = 0x80000, scoped, tag = 'input window, operand 1']
    #allocation6 [shape = 's32[2]{0}', space=sflag, size = 0x8, scoped, tag = 'scoped memory for encoder_omics_forward.4']
    %19 = vsyncpa [#allocation6], 0
    %s20 = scalar_lea.sflag [#allocation6], 1
    %21 = vsyncpa %s20, 0
    loop: start=0, step=1, limit=6
    $region2: #{encoder_omics_forward.4} parent=1 // loop_pre_header
      _
    $region3: #{encoder_omics_forward.4} parent=1 // loop_header
      %s23 = sphi 0, %s27
      %p24 = scmp.ge.s32.totalorder %s23, 6
      %s30 = sphi 0, %s42
      %s31 = sphi 0, %s38
      %s32 = sphi 0, %s30
      %s33 = sphi 0, %s31
      %s34 = sphi 0, %s32
      %s35 = sphi 0, %s33
      %s47 = sphi 0, %s49
      %s50 = sphi 0, %s47
      %s51 = sphi 0, %s50
      %s67 = sphi 0, %s51
      %s75 = sphi 0, %s77
      %s78 = sphi 0, %s75
      %s79 = sphi 0, %s78
      %s95 = sphi 0, %s79
      %s101 = sphi 0, %s103
      %s104 = sphi 0, %s101
      %s105 = sphi 0, %s104
      %s121 = sphi 0, %s105
      %s127 = sphi 0, %s129
      %s130 = sphi 0, %s127
      %s131 = sphi 0, %s130
      %s147 = sphi 0, %s131
      %s151 = sphi 0, %s151
      %s153 = sphi 0, %s151
      %s154 = sphi 0, %s153
      %s168 = sphi 0, %s154
      %s172 = sphi 0, %s172
      %s174 = sphi 0, %s172
      %s175 = sphi 0, %s174
      %s189 = sphi 0, %s175
      %s193 = sphi 0, %s193
      %s195 = sphi 0, %s193
      %s196 = sphi 0, %s195
      %s210 = sphi 0, %s196
      %s214 = sphi 0, %s214
      %s216 = sphi 0, %s214
      %s217 = sphi 0, %s216
      %s231 = sphi 0, %s217
      %s237 = sphi 0, %s239
      %s240 = sphi 0, %s237
      %s241 = sphi 0, %s240
      %s257 = sphi 0, %s241
      %s263 = sphi 0, %s265
      %s266 = sphi 0, %s263
      %s267 = sphi 0, %s266
      %s283 = sphi 0, %s267
      %s289 = sphi 0, %s291
      %s292 = sphi 0, %s289
      %s293 = sphi 0, %s292
      %s309 = sphi 0, %s293
      %s315 = sphi 0, %s317
      %s318 = sphi 0, %s315
      %s319 = sphi 0, %s318
      %s335 = sphi 0, %s319
      %s341 = sphi 0, %s343
      %s344 = sphi 0, %s341
      %s345 = sphi 0, %s344
      %s361 = sphi 0, %s345
      %s367 = sphi 0, %s369
      %s370 = sphi 0, %s367
      %s371 = sphi 0, %s370
      %s387 = sphi 0, %s371
    $region4: #{encoder_omics_forward.4} parent=1 // loop_header_branch
      %26 = sbr.rel (%p24) target = $region8
    $region5: #{encoder_omics_forward.4} parent=1 // loop_body
      %s28 = ssub.s32 %s23, 1
      %s29 = ssub.s32 %s23, 2
      %s36 = sadd.s32 1, %s31
      %p37 = scmp.ge.s32.totalorder %s36, 2
      %s38 = scalar_select %p37, 0, %s36
      %s39 = sadd.s32 1, %s30
      %s40 = scalar_select %p37, %s39, %s30
      %p41 = scmp.ge.s32.totalorder %s40, 2
      %s42 = scalar_select %p41, 0, %s40
      %s43 = ssub.s32 %s30, %s42
      %s44 = ssub.s32 %s31, %s38
      %s45 = sor.u32 %s43, %s44
      %p46 = scmp.eq.s32.totalorder %s45, 0
      %s48 = sadd.s32 %s47, 1
      %s49 = scalar_select %p46, %s47, %s48
      %p52 = pneg %p46
      %p53 = scmp.eq.s32.totalorder %s23, 3
      %p54 = por %p52, %p53
      %p55 = scmp.ne.s32.totalorder %s47, %s50
      %p56 = scmp.eq.s32.totalorder %s23, 0
      %p57 = por %p55, %p56
      %p58 = scmp.ne.s32.totalorder %s47, %s50
      %p59 = scmp.eq.s32.totalorder %s28, 3
      %p60 = por %p58, %p59
      %p61 = scmp.ne.s32.totalorder %s50, %s51
      %p62 = scmp.eq.s32.totalorder %s28, 0
      %p63 = por %p61, %p62
      %p64 = scmp.ne.s32.totalorder %s50, %s51
      %p65 = scmp.eq.s32.totalorder %s29, 3
      %p66 = por %p64, %p65
      %p68 = scmp.ne.s32.totalorder %s51, %s67
      %p69 = scmp.eq.s32.totalorder %s29, 0
      %p70 = por %p68, %p69
      %s71 = ssub.s32 %s30, %s42
      %s72 = ssub.s32 %s31, %s38
      %s73 = sor.u32 %s71, %s72
      %p74 = scmp.eq.s32.totalorder %s73, 0
      %s76 = sadd.s32 %s75, 1
      %s77 = scalar_select %p74, %s75, %s76
      %p80 = pneg %p74
      %p81 = scmp.eq.s32.totalorder %s23, 3
      %p82 = por %p80, %p81
      %p83 = scmp.ne.s32.totalorder %s75, %s78
      %p84 = scmp.eq.s32.totalorder %s23, 0
      %p85 = por %p83, %p84
      %p86 = scmp.ne.s32.totalorder %s75, %s78
      %p87 = scmp.eq.s32.totalorder %s28, 3
      %p88 = por %p86, %p87
      %p89 = scmp.ne.s32.totalorder %s78, %s79
      %p90 = scmp.eq.s32.totalorder %s28, 0
      %p91 = por %p89, %p90
      %p92 = scmp.ne.s32.totalorder %s78, %s79
      %p93 = scmp.eq.s32.totalorder %s29, 3
      %p94 = por %p92, %p93
      %p96 = scmp.ne.s32.totalorder %s79, %s95
      %p97 = scmp.eq.s32.totalorder %s29, 0
      %p98 = por %p96, %p97
      %s99 = ssub.s32 %s31, %s38
      %p100 = scmp.eq.s32.totalorder %s99, 0
      %s102 = sadd.s32 %s101, 1
      %s103 = scalar_select %p100, %s101, %s102
      %p106 = pneg %p100
      %p107 = scmp.eq.s32.totalorder %s23, 3
      %p108 = por %p106, %p107
      %p109 = scmp.ne.s32.totalorder %s101, %s104
      %p110 = scmp.eq.s32.totalorder %s23, 0
      %p111 = por %p109, %p110
      %p112 = scmp.ne.s32.totalorder %s101, %s104
      %p113 = scmp.eq.s32.totalorder %s28, 3
      %p114 = por %p112, %p113
      %p115 = scmp.ne.s32.totalorder %s104, %s105
      %p116 = scmp.eq.s32.totalorder %s28, 0
      %p117 = por %p115, %p116
      %p118 = scmp.ne.s32.totalorder %s104, %s105
      %p119 = scmp.eq.s32.totalorder %s29, 3
      %p120 = por %p118, %p119
      %p122 = scmp.ne.s32.totalorder %s105, %s121
      %p123 = scmp.eq.s32.totalorder %s29, 0
      %p124 = por %p122, %p123
      %s125 = ssub.s32 %s31, %s38
      %p126 = scmp.eq.s32.totalorder %s125, 0
      %s128 = sadd.s32 %s127, 1
      %s129 = scalar_select %p126, %s127, %s128
      %p132 = pneg %p126
      %p133 = scmp.eq.s32.totalorder %s23, 3
      %p134 = por %p132, %p133
      %p135 = scmp.ne.s32.totalorder %s127, %s130
      %p136 = scmp.eq.s32.totalorder %s23, 0
      %p137 = por %p135, %p136
      %p138 = scmp.ne.s32.totalorder %s127, %s130
      %p139 = scmp.eq.s32.totalorder %s28, 3
      %p140 = por %p138, %p139
      %p141 = scmp.ne.s32.totalorder %s130, %s131
      %p142 = scmp.eq.s32.totalorder %s28, 0
      %p143 = por %p141, %p142
      %p144 = scmp.ne.s32.totalorder %s130, %s131
      %p145 = scmp.eq.s32.totalorder %s29, 3
      %p146 = por %p144, %p145
      %p148 = scmp.ne.s32.totalorder %s131, %s147
      %p149 = scmp.eq.s32.totalorder %s29, 0
      %p150 = por %p148, %p149
      %s152 = sadd.s32 %s151, 1
      %p155 = scmp.eq.s32.totalorder %s23, 3
      %p156 = scmp.ne.s32.totalorder %s151, %s153
      %p157 = scmp.eq.s32.totalorder %s23, 0
      %p158 = por %p156, %p157
      %p159 = scmp.ne.s32.totalorder %s151, %s153
      %p160 = scmp.eq.s32.totalorder %s28, 3
      %p161 = por %p159, %p160
      %p162 = scmp.ne.s32.totalorder %s153, %s154
      %p163 = scmp.eq.s32.totalorder %s28, 0
      %p164 = por %p162, %p163
      %p165 = scmp.ne.s32.totalorder %s153, %s154
      %p166 = scmp.eq.s32.totalorder %s29, 3
      %p167 = por %p165, %p166
      %p169 = scmp.ne.s32.totalorder %s154, %s168
      %p170 = scmp.eq.s32.totalorder %s29, 0
      %p171 = por %p169, %p170
      %s173 = sadd.s32 %s172, 1
      %p176 = scmp.eq.s32.totalorder %s23, 3
      %p177 = scmp.ne.s32.totalorder %s172, %s174
      %p178 = scmp.eq.s32.totalorder %s23, 0
      %p179 = por %p177, %p178
      %p180 = scmp.ne.s32.totalorder %s172, %s174
      %p181 = scmp.eq.s32.totalorder %s28, 3
      %p182 = por %p180, %p181
      %p183 = scmp.ne.s32.totalorder %s174, %s175
      %p184 = scmp.eq.s32.totalorder %s28, 0
      %p185 = por %p183, %p184
      %p186 = scmp.ne.s32.totalorder %s174, %s175
      %p187 = scmp.eq.s32.totalorder %s29, 3
      %p188 = por %p186, %p187
      %p190 = scmp.ne.s32.totalorder %s175, %s189
      %p191 = scmp.eq.s32.totalorder %s29, 0
      %p192 = por %p190, %p191
      %s194 = sadd.s32 %s193, 1
      %p197 = scmp.eq.s32.totalorder %s23, 3
      %p198 = scmp.ne.s32.totalorder %s193, %s195
      %p199 = scmp.eq.s32.totalorder %s23, 0
      %p200 = por %p198, %p199
      %p201 = scmp.ne.s32.totalorder %s193, %s195
      %p202 = scmp.eq.s32.totalorder %s28, 3
      %p203 = por %p201, %p202
      %p204 = scmp.ne.s32.totalorder %s195, %s196
      %p205 = scmp.eq.s32.totalorder %s28, 0
      %p206 = por %p204, %p205
      %p207 = scmp.ne.s32.totalorder %s195, %s196
      %p208 = scmp.eq.s32.totalorder %s29, 3
      %p209 = por %p207, %p208
      %p211 = scmp.ne.s32.totalorder %s196, %s210
      %p212 = scmp.eq.s32.totalorder %s29, 0
      %p213 = por %p211, %p212
      %s215 = sadd.s32 %s214, 1
      %p218 = scmp.eq.s32.totalorder %s23, 3
      %p219 = scmp.ne.s32.totalorder %s214, %s216
      %p220 = scmp.eq.s32.totalorder %s23, 0
      %p221 = por %p219, %p220
      %p222 = scmp.ne.s32.totalorder %s214, %s216
      %p223 = scmp.eq.s32.totalorder %s28, 3
      %p224 = por %p222, %p223
      %p225 = scmp.ne.s32.totalorder %s216, %s217
      %p226 = scmp.eq.s32.totalorder %s28, 0
      %p227 = por %p225, %p226
      %p228 = scmp.ne.s32.totalorder %s216, %s217
      %p229 = scmp.eq.s32.totalorder %s29, 3
      %p230 = por %p228, %p229
      %p232 = scmp.ne.s32.totalorder %s217, %s231
      %p233 = scmp.eq.s32.totalorder %s29, 0
      %p234 = por %p232, %p233
      %s235 = ssub.s32 %s30, %s42
      %p236 = scmp.eq.s32.totalorder %s235, 0
      %s238 = sadd.s32 %s237, 1
      %s239 = scalar_select %p236, %s237, %s238
      %p242 = pneg %p236
      %p243 = scmp.eq.s32.totalorder %s23, 3
      %p244 = por %p242, %p243
      %p245 = scmp.ne.s32.totalorder %s237, %s240
      %p246 = scmp.eq.s32.totalorder %s23, 0
      %p247 = por %p245, %p246
      %p248 = scmp.ne.s32.totalorder %s237, %s240
      %p249 = scmp.eq.s32.totalorder %s28, 3
      %p250 = por %p248, %p249
      %p251 = scmp.ne.s32.totalorder %s240, %s241
      %p252 = scmp.eq.s32.totalorder %s28, 0
      %p253 = por %p251, %p252
      %p254 = scmp.ne.s32.totalorder %s240, %s241
      %p255 = scmp.eq.s32.totalorder %s29, 3
      %p256 = por %p254, %p255
      %p258 = scmp.ne.s32.totalorder %s241, %s257
      %p259 = scmp.eq.s32.totalorder %s29, 0
      %p260 = por %p258, %p259
      %s261 = ssub.s32 %s30, %s42
      %p262 = scmp.eq.s32.totalorder %s261, 0
      %s264 = sadd.s32 %s263, 1
      %s265 = scalar_select %p262, %s263, %s264
      %p268 = pneg %p262
      %p269 = scmp.eq.s32.totalorder %s23, 3
      %p270 = por %p268, %p269
      %p271 = scmp.ne.s32.totalorder %s263, %s266
      %p272 = scmp.eq.s32.totalorder %s23, 0
      %p273 = por %p271, %p272
      %p274 = scmp.ne.s32.totalorder %s263, %s266
      %p275 = scmp.eq.s32.totalorder %s28, 3
      %p276 = por %p274, %p275
      %p277 = scmp.ne.s32.totalorder %s266, %s267
      %p278 = scmp.eq.s32.totalorder %s28, 0
      %p279 = por %p277, %p278
      %p280 = scmp.ne.s32.totalorder %s266, %s267
      %p281 = scmp.eq.s32.totalorder %s29, 3
      %p282 = por %p280, %p281
      %p284 = scmp.ne.s32.totalorder %s267, %s283
      %p285 = scmp.eq.s32.totalorder %s29, 0
      %p286 = por %p284, %p285
      %s287 = ssub.s32 %s30, %s42
      %p288 = scmp.eq.s32.totalorder %s287, 0
      %s290 = sadd.s32 %s289, 1
      %s291 = scalar_select %p288, %s289, %s290
      %p294 = pneg %p288
      %p295 = scmp.eq.s32.totalorder %s23, 3
      %p296 = por %p294, %p295
      %p297 = scmp.ne.s32.totalorder %s289, %s292
      %p298 = scmp.eq.s32.totalorder %s23, 0
      %p299 = por %p297, %p298
      %p300 = scmp.ne.s32.totalorder %s289, %s292
      %p301 = scmp.eq.s32.totalorder %s28, 3
      %p302 = por %p300, %p301
      %p303 = scmp.ne.s32.totalorder %s292, %s293
      %p304 = scmp.eq.s32.totalorder %s28, 0
      %p305 = por %p303, %p304
      %p306 = scmp.ne.s32.totalorder %s292, %s293
      %p307 = scmp.eq.s32.totalorder %s29, 3
      %p308 = por %p306, %p307
      %p310 = scmp.ne.s32.totalorder %s293, %s309
      %p311 = scmp.eq.s32.totalorder %s29, 0
      %p312 = por %p310, %p311
      %s313 = ssub.s32 %s30, %s42
      %p314 = scmp.eq.s32.totalorder %s313, 0
      %s316 = sadd.s32 %s315, 1
      %s317 = scalar_select %p314, %s315, %s316
      %p320 = pneg %p314
      %p321 = scmp.eq.s32.totalorder %s23, 3
      %p322 = por %p320, %p321
      %p323 = scmp.ne.s32.totalorder %s315, %s318
      %p324 = scmp.eq.s32.totalorder %s23, 0
      %p325 = por %p323, %p324
      %p326 = scmp.ne.s32.totalorder %s315, %s318
      %p327 = scmp.eq.s32.totalorder %s28, 3
      %p328 = por %p326, %p327
      %p329 = scmp.ne.s32.totalorder %s318, %s319
      %p330 = scmp.eq.s32.totalorder %s28, 0
      %p331 = por %p329, %p330
      %p332 = scmp.ne.s32.totalorder %s318, %s319
      %p333 = scmp.eq.s32.totalorder %s29, 3
      %p334 = por %p332, %p333
      %p336 = scmp.ne.s32.totalorder %s319, %s335
      %p337 = scmp.eq.s32.totalorder %s29, 0
      %p338 = por %p336, %p337
      %s339 = ssub.s32 %s30, %s42
      %p340 = scmp.eq.s32.totalorder %s339, 0
      %s342 = sadd.s32 %s341, 1
      %s343 = scalar_select %p340, %s341, %s342
      %p346 = pneg %p340
      %p347 = scmp.eq.s32.totalorder %s23, 3
      %p348 = por %p346, %p347
      %p349 = scmp.ne.s32.totalorder %s341, %s344
      %p350 = scmp.eq.s32.totalorder %s23, 0
      %p351 = por %p349, %p350
      %p352 = scmp.ne.s32.totalorder %s341, %s344
      %p353 = scmp.eq.s32.totalorder %s28, 3
      %p354 = por %p352, %p353
      %p355 = scmp.ne.s32.totalorder %s344, %s345
      %p356 = scmp.eq.s32.totalorder %s28, 0
      %p357 = por %p355, %p356
      %p358 = scmp.ne.s32.totalorder %s344, %s345
      %p359 = scmp.eq.s32.totalorder %s29, 3
      %p360 = por %p358, %p359
      %p362 = scmp.ne.s32.totalorder %s345, %s361
      %p363 = scmp.eq.s32.totalorder %s29, 0
      %p364 = por %p362, %p363
      %s365 = ssub.s32 %s30, %s42
      %p366 = scmp.eq.s32.totalorder %s365, 0
      %s368 = sadd.s32 %s367, 1
      %s369 = scalar_select %p366, %s367, %s368
      %p372 = pneg %p366
      %p373 = scmp.eq.s32.totalorder %s23, 3
      %p374 = por %p372, %p373
      %p375 = scmp.ne.s32.totalorder %s367, %s370
      %p376 = scmp.eq.s32.totalorder %s23, 0
      %p377 = por %p375, %p376
      %p378 = scmp.ne.s32.totalorder %s367, %s370
      %p379 = scmp.eq.s32.totalorder %s28, 3
      %p380 = por %p378, %p379
      %p381 = scmp.ne.s32.totalorder %s370, %s371
      %p382 = scmp.eq.s32.totalorder %s28, 0
      %p383 = por %p381, %p382
      %p384 = scmp.ne.s32.totalorder %s370, %s371
      %p385 = scmp.eq.s32.totalorder %s29, 3
      %p386 = por %p384, %p385
      %p388 = scmp.ne.s32.totalorder %s371, %s387
      %p389 = scmp.eq.s32.totalorder %s29, 0
      %p390 = por %p388, %p389
      %p391 = scmp.le.s32.totalorder 1, %s23
      %p392 = scmp.lt.s32.totalorder %s23, 5
      %p393 = pnand %p391, %p392
      %p394 = pneg %p393
      // Predicated region
      $region9: #{encoder_omics_forward.4} parent=5 // pred_check
        _
      $region10: #{encoder_omics_forward.4} parent=5 // pred_check_branch
        %396 = sbr.rel (%p393) target = $region12
      $region11: #{encoder_omics_forward.4} parent=5 // pred_region
        %s397 = ssub.s32 %s23, 1
        // Predicated region
        $region13: #{encoder_omics_forward.4} parent=11 // pred_check
          %p398 = pneg %p164
        $region14: #{encoder_omics_forward.4} parent=11 // pred_check_branch
          %400 = sbr.rel (%p398) target = $region16
        $region15: #{encoder_omics_forward.4} parent=11 // pred_region
          _
        $region16: #{encoder_omics_forward.4} parent=11 // pred_fallthru
          _
        // Predicated region
        $region17: #{encoder_omics_forward.4} parent=11 // pred_check
          %p401 = pneg %p185
        $region18: #{encoder_omics_forward.4} parent=11 // pred_check_branch
          %403 = sbr.rel (%p401) target = $region20
        $region19: #{encoder_omics_forward.4} parent=11 // pred_region
          _
        $region20: #{encoder_omics_forward.4} parent=11 // pred_fallthru
          _
        // Predicated region
        $region21: #{encoder_omics_forward.4} parent=11 // pred_check
          %p404 = pneg %p206
        $region22: #{encoder_omics_forward.4} parent=11 // pred_check_branch
          %406 = sbr.rel (%p404) target = $region24
        $region23: #{encoder_omics_forward.4} parent=11 // pred_region
          _
        $region24: #{encoder_omics_forward.4} parent=11 // pred_fallthru
          _
        // Predicated region
        $region25: #{encoder_omics_forward.4} parent=11 // pred_check
          %p407 = pneg %p227
        $region26: #{encoder_omics_forward.4} parent=11 // pred_check_branch
          %409 = sbr.rel (%p407) target = $region28
        $region27: #{encoder_omics_forward.4} parent=11 // pred_region
          _
        $region28: #{encoder_omics_forward.4} parent=11 // pred_fallthru
          _
      $region12: #{encoder_omics_forward.4} parent=5 // pred_fallthru
        _
      %p410 = scmp.lt.s32.totalorder %s23, 4
      // Predicated region
      $region29: #{encoder_omics_forward.4} parent=5 // pred_check
        %p411 = pneg %p410
      $region30: #{encoder_omics_forward.4} parent=5 // pred_check_branch
        %413 = sbr.rel (%p411) target = $region32
      $region31: #{encoder_omics_forward.4} parent=5 // pred_region
        // Predicated region
        $region33: #{encoder_omics_forward.4} parent=31 // pred_check
          %p414 = pneg %p57
        $region34: #{encoder_omics_forward.4} parent=31 // pred_check_branch
          %416 = sbr.rel (%p414) target = $region36
        $region35: #{encoder_omics_forward.4} parent=31 // pred_region
          %s417 = sand.u32 %s47, 1
          %s418 = sand.u32 %s47, 1
          %s419 = smul.addr %s418, 512
          %s420 = scalar_lea.vmem [#allocation4], %s419
          %s421 = smul.u32 32, %s30
          %s422 = smul.u32 2, %s31
          %s423 = smul.addr %s421, 4
          %s424 = sadd.s32 %s422, %s423
          %s425 = smul.addr %s424, 8
          %s426 = scalar_lea.vmem %s0, %s425
          // Predicated region
          $region37: #{encoder_omics_forward.4} parent=35 // pred_check
            _
          $region38: #{encoder_omics_forward.4} parent=35 // pred_check_branch
            %428 = sbr.rel (0) target = $region40
          $region39: #{encoder_omics_forward.4} parent=35 // pred_region
            // Predicated region
            $region41: #{encoder_omics_forward.4} parent=39 // pred_check
              _
            $region42: #{encoder_omics_forward.4} parent=39 // pred_check_branch
              %430 = sbr.rel (0) target = $region44
            $region43: #{encoder_omics_forward.4} parent=39 // pred_region
              loop: start=0, step=1, limit=1
              $region45: #{encoder_omics_forward.4} parent=43 // loop_pre_header
                _
              $region46: #{encoder_omics_forward.4} parent=43 // loop_header
                %s432 = sphi 0, %s436
                %p433 = scmp.ge.s32.totalorder %s432, 1
                %s437 = sphi %s426, %s426
                %s438 = sphi %s420, %s420
              $region47: #{encoder_omics_forward.4} parent=43 // loop_header_branch
                %435 = sbr.rel (%p433) target = $region51
              $region48: #{encoder_omics_forward.4} parent=43 // loop_body
                %v439 = vld [vmem:[%s437] sm:$0xff]
                %440 = vst [vmem:[%s438] sm:$0xff] %v439
                %v441 = vld [vmem:[%s437 + $0x8] sm:$0xff]
                %442 = vst [vmem:[%s438 + $0x8] sm:$0xff] %v441
                %v443 = vld [vmem:[%s437 + $0x20] sm:$0xff]
                %444 = vst [vmem:[%s438 + $0x10] sm:$0xff] %v443
                %v445 = vld [vmem:[%s437 + $0x28] sm:$0xff]
                %446 = vst [vmem:[%s438 + $0x18] sm:$0xff] %v445
                %v447 = vld [vmem:[%s437 + $0x40] sm:$0xff]
                %448 = vst [vmem:[%s438 + $0x20] sm:$0xff] %v447
                %v449 = vld [vmem:[%s437 + $0x48] sm:$0xff]
                %450 = vst [vmem:[%s438 + $0x28] sm:$0xff] %v449
                %v451 = vld [vmem:[%s437 + $0x60] sm:$0xff]
                %452 = vst [vmem:[%s438 + $0x30] sm:$0xff] %v451
                %v453 = vld [vmem:[%s437 + $0x68] sm:$0xff]
                %454 = vst [vmem:[%s438 + $0x38] sm:$0xff] %v453
                %v455 = vld [vmem:[%s437 + $0x80] sm:$0xff]
                %456 = vst [vmem:[%s438 + $0x40] sm:$0xff] %v455
                %v457 = vld [vmem:[%s437 + $0x88] sm:$0xff]
                %458 = vst [vmem:[%s438 + $0x48] sm:$0xff] %v457
                %v459 = vld [vmem:[%s437 + $0xa0] sm:$0xff]
                %460 = vst [vmem:[%s438 + $0x50] sm:$0xff] %v459
                %v461 = vld [vmem:[%s437 + $0xa8] sm:$0xff]
                %462 = vst [vmem:[%s438 + $0x58] sm:$0xff] %v461
                %v463 = vld [vmem:[%s437 + $0xc0] sm:$0xff]
                %464 = vst [vmem:[%s438 + $0x60] sm:$0xff] %v463
                %v465 = vld [vmem:[%s437 + $0xc8] sm:$0xff]
                %466 = vst [vmem:[%s438 + $0x68] sm:$0xff] %v465
                %v467 = vld [vmem:[%s437 + $0xe0] sm:$0xff]
                %468 = vst [vmem:[%s438 + $0x70] sm:$0xff] %v467
                %v469 = vld [vmem:[%s437 + $0xe8] sm:$0xff]
                %470 = vst [vmem:[%s438 + $0x78] sm:$0xff] %v469
                %v471 = vld [vmem:[%s437 + $0x100] sm:$0xff]
                %472 = vst [vmem:[%s438 + $0x80] sm:$0xff] %v471
                %v473 = vld [vmem:[%s437 + $0x108] sm:$0xff]
                %474 = vst [vmem:[%s438 + $0x88] sm:$0xff] %v473
                %v475 = vld [vmem:[%s437 + $0x120] sm:$0xff]
                %476 = vst [vmem:[%s438 + $0x90] sm:$0xff] %v475
                %v477 = vld [vmem:[%s437 + $0x128] sm:$0xff]
                %478 = vst [vmem:[%s438 + $0x98] sm:$0xff] %v477
                %v479 = vld [vmem:[%s437 + $0x140] sm:$0xff]
                %480 = vst [vmem:[%s438 + $0xa0] sm:$0xff] %v479
                %v481 = vld [vmem:[%s437 + $0x148] sm:$0xff]
                %482 = vst [vmem:[%s438 + $0xa8] sm:$0xff] %v481
                %v483 = vld [vmem:[%s437 + $0x160] sm:$0xff]
                %484 = vst [vmem:[%s438 + $0xb0] sm:$0xff] %v483
                %v485 = vld [vmem:[%s437 + $0x168] sm:$0xff]
                %486 = vst [vmem:[%s438 + $0xb8] sm:$0xff] %v485
                %v487 = vld [vmem:[%s437 + $0x180] sm:$0xff]
                %488 = vst [vmem:[%s438 + $0xc0] sm:$0xff] %v487
                %v489 = vld [vmem:[%s437 + $0x188] sm:$0xff]
                %490 = vst [vmem:[%s438 + $0xc8] sm:$0xff] %v489
                %v491 = vld [vmem:[%s437 + $0x1a0] sm:$0xff]
                %492 = vst [vmem:[%s438 + $0xd0] sm:$0xff] %v491
                %v493 = vld [vmem:[%s437 + $0x1a8] sm:$0xff]
                %494 = vst [vmem:[%s438 + $0xd8] sm:$0xff] %v493
                %v495 = vld [vmem:[%s437 + $0x1c0] sm:$0xff]
                %496 = vst [vmem:[%s438 + $0xe0] sm:$0xff] %v495
                %v497 = vld [vmem:[%s437 + $0x1c8] sm:$0xff]
                %498 = vst [vmem:[%s438 + $0xe8] sm:$0xff] %v497
                %v499 = vld [vmem:[%s437 + $0x1e0] sm:$0xff]
                %500 = vst [vmem:[%s438 + $0xf0] sm:$0xff] %v499
                %v501 = vld [vmem:[%s437 + $0x1e8] sm:$0xff]
                %502 = vst [vmem:[%s438 + $0xf8] sm:$0xff] %v501
                %v503 = vld [vmem:[%s437 + $0x200] sm:$0xff]
                %504 = vst [vmem:[%s438 + $0x100] sm:$0xff] %v503
                %v505 = vld [vmem:[%s437 + $0x208] sm:$0xff]
                %506 = vst [vmem:[%s438 + $0x108] sm:$0xff] %v505
                %v507 = vld [vmem:[%s437 + $0x220] sm:$0xff]
                %508 = vst [vmem:[%s438 + $0x110] sm:$0xff] %v507
                %v509 = vld [vmem:[%s437 + $0x228] sm:$0xff]
                %510 = vst [vmem:[%s438 + $0x118] sm:$0xff] %v509
                %v511 = vld [vmem:[%s437 + $0x240] sm:$0xff]
                %512 = vst [vmem:[%s438 + $0x120] sm:$0xff] %v511
                %v513 = vld [vmem:[%s437 + $0x248] sm:$0xff]
                %514 = vst [vmem:[%s438 + $0x128] sm:$0xff] %v513
                %v515 = vld [vmem:[%s437 + $0x260] sm:$0xff]
                %516 = vst [vmem:[%s438 + $0x130] sm:$0xff] %v515
                %v517 = vld [vmem:[%s437 + $0x268] sm:$0xff]
                %518 = vst [vmem:[%s438 + $0x138] sm:$0xff] %v517
                %v519 = vld [vmem:[%s437 + $0x280] sm:$0xff]
                %520 = vst [vmem:[%s438 + $0x140] sm:$0xff] %v519
                %v521 = vld [vmem:[%s437 + $0x288] sm:$0xff]
                %522 = vst [vmem:[%s438 + $0x148] sm:$0xff] %v521
                %v523 = vld [vmem:[%s437 + $0x2a0] sm:$0xff]
                %524 = vst [vmem:[%s438 + $0x150] sm:$0xff] %v523
                %v525 = vld [vmem:[%s437 + $0x2a8] sm:$0xff]
                %526 = vst [vmem:[%s438 + $0x158] sm:$0xff] %v525
                %v527 = vld [vmem:[%s437 + $0x2c0] sm:$0xff]
                %528 = vst [vmem:[%s438 + $0x160] sm:$0xff] %v527
                %v529 = vld [vmem:[%s437 + $0x2c8] sm:$0xff]
                %530 = vst [vmem:[%s438 + $0x168] sm:$0xff] %v529
                %v531 = vld [vmem:[%s437 + $0x2e0] sm:$0xff]
                %532 = vst [vmem:[%s438 + $0x170] sm:$0xff] %v531
                %v533 = vld [vmem:[%s437 + $0x2e8] sm:$0xff]
                %534 = vst [vmem:[%s438 + $0x178] sm:$0xff] %v533
                %v535 = vld [vmem:[%s437 + $0x300] sm:$0xff]
                %536 = vst [vmem:[%s438 + $0x180] sm:$0xff] %v535
                %v537 = vld [vmem:[%s437 + $0x308] sm:$0xff]
                %538 = vst [vmem:[%s438 + $0x188] sm:$0xff] %v537
                %v539 = vld [vmem:[%s437 + $0x320] sm:$0xff]
                %540 = vst [vmem:[%s438 + $0x190] sm:$0xff] %v539
                %v541 = vld [vmem:[%s437 + $0x328] sm:$0xff]
                %542 = vst [vmem:[%s438 + $0x198] sm:$0xff] %v541
                %v543 = vld [vmem:[%s437 + $0x340] sm:$0xff]
                %544 = vst [vmem:[%s438 + $0x1a0] sm:$0xff] %v543
                %v545 = vld [vmem:[%s437 + $0x348] sm:$0xff]
                %546 = vst [vmem:[%s438 + $0x1a8] sm:$0xff] %v545
                %v547 = vld [vmem:[%s437 + $0x360] sm:$0xff]
                %548 = vst [vmem:[%s438 + $0x1b0] sm:$0xff] %v547
                %v549 = vld [vmem:[%s437 + $0x368] sm:$0xff]
                %550 = vst [vmem:[%s438 + $0x1b8] sm:$0xff] %v549
                %v551 = vld [vmem:[%s437 + $0x380] sm:$0xff]
                %552 = vst [vmem:[%s438 + $0x1c0] sm:$0xff] %v551
                %v553 = vld [vmem:[%s437 + $0x388] sm:$0xff]
                %554 = vst [vmem:[%s438 + $0x1c8] sm:$0xff] %v553
                %v555 = vld [vmem:[%s437 + $0x3a0] sm:$0xff]
                %556 = vst [vmem:[%s438 + $0x1d0] sm:$0xff] %v555
                %v557 = vld [vmem:[%s437 + $0x3a8] sm:$0xff]
                %558 = vst [vmem:[%s438 + $0x1d8] sm:$0xff] %v557
                %v559 = vld [vmem:[%s437 + $0x3c0] sm:$0xff]
                %560 = vst [vmem:[%s438 + $0x1e0] sm:$0xff] %v559
                %v561 = vld [vmem:[%s437 + $0x3c8] sm:$0xff]
                %562 = vst [vmem:[%s438 + $0x1e8] sm:$0xff] %v561
                %v563 = vld [vmem:[%s437 + $0x3e0] sm:$0xff]
                %564 = vst [vmem:[%s438 + $0x1f0] sm:$0xff] %v563
                %v565 = vld [vmem:[%s437 + $0x3e8] sm:$0xff]
                %566 = vst [vmem:[%s438 + $0x1f8] sm:$0xff] %v565
              $region49: #{encoder_omics_forward.4} parent=43 // loop_footer
                %s436 = sadd.s32 1, %s432
              $region50: #{encoder_omics_forward.4} parent=43 // loop_footer_branch
                %431 = sbr.rel target = $region46
              $region51: #{encoder_omics_forward.4} parent=43 // loop_exit
                _
            $region44: #{encoder_omics_forward.4} parent=39 // pred_fallthru
              _
            // Predicated region
            $region52: #{encoder_omics_forward.4} parent=39 // pred_check
              _
            $region53: #{encoder_omics_forward.4} parent=39 // pred_check_branch
              %568 = sbr.rel target = $region55
            $region54: #{encoder_omics_forward.4} parent=39 // pred_region
              _
            $region55: #{encoder_omics_forward.4} parent=39 // pred_fallthru
              _
          $region40: #{encoder_omics_forward.4} parent=35 // pred_fallthru
            _
          %569 = vnop
        $region36: #{encoder_omics_forward.4} parent=31 // pred_fallthru
          _
        // Predicated region
        $region56: #{encoder_omics_forward.4} parent=31 // pred_check
          %p570 = pneg %p85
        $region57: #{encoder_omics_forward.4} parent=31 // pred_check_branch
          %572 = sbr.rel (%p570) target = $region59
        $region58: #{encoder_omics_forward.4} parent=31 // pred_region
          %s573 = sand.u32 %s75, 1
          %s574 = scalar_lea.sflag [#allocation6], %s573
          %s575 = sand.u32 %s75, 1
          %s576 = smul.addr %s575, 512
          %s577 = scalar_lea.vmem [#allocation5], %s576
          %s578 = smul.u32 32, %s30
          %s579 = smul.u32 2, %s31
          %s581 = ssub.s32 8192, 8192
          %582 = vsyncadd %s574, %s581
          %s583 = smul.addr %s578, 4
          %s584 = sadd.s32 %s579, %s583
          %s585 = smul.addr %s584, 128
          %s586 = scalar_lea.hbm %s1, %s585
          %s587 = sshll.u32 %s577, 4
          %s588 = int_to_ptr.vmem [resolvable:$true] %s587
          %593 = dma.hbm_to_vmem [thread:$0]  %s586, 8192, %s588, %s574, 512, 256, 16
        $region59: #{encoder_omics_forward.4} parent=31 // pred_fallthru
          _
        // Predicated region
        $region60: #{encoder_omics_forward.4} parent=31 // pred_check
          %p594 = pneg %p111
        $region61: #{encoder_omics_forward.4} parent=31 // pred_check_branch
          %596 = sbr.rel (%p594) target = $region63
        $region62: #{encoder_omics_forward.4} parent=31 // pred_region
          %s597 = smul.u32 32, %s31
          %p598 = scmp.lt.s32.totalorder %s597, 63
          %s599 = scalar_select %p598, %s597, 63
          %s600 = smul.addr %s599, 8
          %s601 = scalar_lea.vmem %s2, %s600
          %s602 = smul.u32 32, %s31
        $region63: #{encoder_omics_forward.4} parent=31 // pred_fallthru
          _
        // Predicated region
        $region64: #{encoder_omics_forward.4} parent=31 // pred_check
          %p603 = pneg %p137
        $region65: #{encoder_omics_forward.4} parent=31 // pred_check_branch
          %605 = sbr.rel (%p603) target = $region67
        $region66: #{encoder_omics_forward.4} parent=31 // pred_region
          %s606 = smul.u32 32, %s31
          %p607 = scmp.lt.s32.totalorder %s606, 63
          %s608 = scalar_select %p607, %s606, 63
          %s609 = smul.addr %s608, 8
          %s610 = scalar_lea.vmem %s3, %s609
          %s611 = smul.u32 32, %s31
        $region67: #{encoder_omics_forward.4} parent=31 // pred_fallthru
          _
      $region32: #{encoder_omics_forward.4} parent=5 // pred_fallthru
        _
      %p612 = scmp.le.s32.totalorder 1, %s23
      %p613 = scmp.lt.s32.totalorder %s23, 5
      %p614 = pnand %p612, %p613
      %p615 = pneg %p614
      // Predicated region
      $region68: #{encoder_omics_forward.4} parent=5 // pred_check
        _
      $region69: #{encoder_omics_forward.4} parent=5 // pred_check_branch
        %617 = sbr.rel (%p614) target = $region71
      $region70: #{encoder_omics_forward.4} parent=5 // pred_region
        %s618 = ssub.s32 %s23, 1
        %s619 = sand.u32 %s50, 1
        %s620 = sand.u32 %s50, 1
        %s621 = smul.addr %s620, 512
        %s622 = scalar_lea.vmem [#allocation4], %s621
        // Predicated region
        $region72: #{encoder_omics_forward.4} parent=70 // pred_check
          %p623 = pneg %p63
        $region73: #{encoder_omics_forward.4} parent=70 // pred_check_branch
          %625 = sbr.rel (%p623) target = $region75
        $region74: #{encoder_omics_forward.4} parent=70 // pred_region
          _
        $region75: #{encoder_omics_forward.4} parent=70 // pred_fallthru
          _
        %s626 = sand.u32 %s78, 1
        %s627 = scalar_lea.sflag [#allocation6], %s626
        %s628 = sand.u32 %s78, 1
        %s629 = smul.addr %s628, 512
        %s630 = scalar_lea.vmem [#allocation5], %s629
        // Predicated region
        $region76: #{encoder_omics_forward.4} parent=70 // pred_check
          %p631 = pneg %p91
        $region77: #{encoder_omics_forward.4} parent=70 // pred_check_branch
          %633 = sbr.rel (%p631) target = $region79
        $region78: #{encoder_omics_forward.4} parent=70 // pred_region
          %634 = dma.done %s627, 8192
        $region79: #{encoder_omics_forward.4} parent=70 // pred_fallthru
          _
        %s635 = sand.u32 %s50, 1
        %s636 = sand.u32 %s50, 1
        %s637 = smul.addr %s636, 512
        %s638 = scalar_lea.vmem [#allocation4], %s637
        %p639 = pneg %p63
        %p640 = pneg %p60
        %s641 = sand.u32 %s78, 1
        %s642 = scalar_lea.sflag [#allocation6], %s641
        %s643 = sand.u32 %s78, 1
        %s644 = smul.addr %s643, 512
        %s645 = scalar_lea.vmem [#allocation5], %s644
        %p646 = pneg %p91
        %p647 = pneg %p88
        %s648 = smul.u32 32, %s33
        %p649 = scmp.lt.s32.totalorder %s648, 63
        %s650 = scalar_select %p649, %s648, 63
        %s651 = smul.addr %s650, 8
        %s652 = scalar_lea.vmem %s2, %s651
        %p653 = pneg %p117
        %p654 = pneg %p114
        %s655 = smul.u32 32, %s33
        %p656 = scmp.lt.s32.totalorder %s655, 63
        %s657 = scalar_select %p656, %s655, 63
        %s658 = smul.addr %s657, 8
        %s659 = scalar_lea.vmem %s3, %s658
        %p660 = pneg %p143
        %p661 = pneg %p140
        %p662 = pneg %p164
        %p663 = pneg %p161
        %p664 = pneg %p185
        %p665 = pneg %p182
        %p666 = pneg %p206
        %p667 = pneg %p203
        %p668 = pneg %p227
        %p669 = pneg %p224
        %p670 = pneg %p253
        %p671 = pneg %p250
        %s672 = smul.u32 32, %s32
        %p673 = scmp.lt.s32.totalorder %s672, 63
        %s674 = scalar_select %p673, %s672, 63
        %s675 = smul.addr %s674, 8
        %s676 = scalar_lea.vmem %s8, %s675
        %p677 = pneg %p279
        %p678 = pneg %p276
        %s679 = smul.u32 32, %s32
        %p680 = scmp.lt.s32.totalorder %s679, 63
        %s681 = scalar_select %p680, %s679, 63
        %s682 = smul.addr %s681, 8
        %s683 = scalar_lea.vmem %s9, %s682
        %p684 = pneg %p305
        %p685 = pneg %p302
        %s686 = smul.u32 32, %s32
        %p687 = scmp.lt.s32.totalorder %s686, 63
        %s688 = scalar_select %p687, %s686, 63
        %s689 = smul.addr %s688, 8
        %s690 = scalar_lea.vmem %s10, %s689
        %p691 = pneg %p331
        %p692 = pneg %p328
        %s693 = smul.u32 32, %s32
        %p694 = scmp.lt.s32.totalorder %s693, 63
        %s695 = scalar_select %p694, %s693, 63
        %s696 = smul.addr %s695, 8
        %s697 = scalar_lea.vmem %s11, %s696
        %p698 = pneg %p357
        %p699 = pneg %p354
        %s700 = smul.u32 32, %s32
        %p701 = scmp.lt.s32.totalorder %s700, 63
        %s702 = scalar_select %p701, %s700, 63
        %s703 = smul.addr %s702, 8
        %s704 = scalar_lea.vmem %s12, %s703
        %p705 = pneg %p383
        %p706 = pneg %p380
        %s707 = smul.u32 32, %s32
        %p708 = scmp.lt.s32.totalorder %s707, 63
        %s709 = scalar_select %p708, %s707, 63
        %s710 = smul.addr %s709, 8
        %s711 = scalar_lea.vmem %s13, %s710
        %s712 = smul.u32 32, %s32
        %s713 = smul.u32 2, %s33
        %s714 = smul.u32 32, %s32
        %s715 = smul.u32 2, %s33
        %s716 = smul.u32 32, %s33
        %p717 = scmp.lt.s32.totalorder %s716, 63
        %s718 = scalar_select %p717, %s716, 63
        %s719 = smul.addr %s718, 8
        %s720 = scalar_lea.vmem %s2, %s719
        %s721 = smul.u32 32, %s33
        %s722 = smul.u32 32, %s33
        %p723 = scmp.lt.s32.totalorder %s722, 63
        %s724 = scalar_select %p723, %s722, 63
        %s725 = smul.addr %s724, 8
        %s726 = scalar_lea.vmem %s3, %s725
        %s727 = smul.u32 32, %s33
        %s728 = smul.u32 32, %s32
        %p729 = scmp.lt.s32.totalorder %s728, 63
        %s730 = scalar_select %p729, %s728, 63
        %s731 = smul.addr %s730, 8
        %s732 = scalar_lea.vmem %s8, %s731
        %s733 = smul.u32 32, %s32
        %s734 = smul.u32 32, %s32
        %p735 = scmp.lt.s32.totalorder %s734, 63
        %s736 = scalar_select %p735, %s734, 63
        %s737 = smul.addr %s736, 8
        %s738 = scalar_lea.vmem %s9, %s737
        %s739 = smul.u32 32, %s32
        %s740 = smul.u32 32, %s32
        %p741 = scmp.lt.s32.totalorder %s740, 63
        %s742 = scalar_select %p741, %s740, 63
        %s743 = smul.addr %s742, 8
        %s744 = scalar_lea.vmem %s10, %s743
        %s745 = smul.u32 32, %s32
        %s746 = smul.u32 32, %s32
        %p747 = scmp.lt.s32.totalorder %s746, 63
        %s748 = scalar_select %p747, %s746, 63
        %s749 = smul.addr %s748, 8
        %s750 = scalar_lea.vmem %s11, %s749
        %s751 = smul.u32 32, %s32
        %s752 = smul.u32 32, %s32
        %p753 = scmp.lt.s32.totalorder %s752, 63
        %s754 = scalar_select %p753, %s752, 63
        %s755 = smul.addr %s754, 8
        %s756 = scalar_lea.vmem %s12, %s755
        %s757 = smul.u32 32, %s32
        %s758 = smul.u32 32, %s32
        %p759 = scmp.lt.s32.totalorder %s758, 63
        %s760 = scalar_select %p759, %s758, 63
        %s761 = smul.addr %s760, 8
        %s762 = scalar_lea.vmem %s13, %s761
        %s763 = smul.u32 32, %s32
        %p764 = scmp.eq.s32.totalorder %s33, 0
        // Predicated region
        $region80: #{encoder_omics_forward.4} parent=70 // pred_check
          %p765 = pneg %p764
        $region81: #{encoder_omics_forward.4} parent=70 // pred_check_branch
          %767 = sbr.rel (%p765) target = $region83
        $region82: #{encoder_omics_forward.4} parent=70 // pred_region
          %vm768 = vcmask 130048
          %769 = vst.msk [vmem:[#allocation2] sm:$0xff] %vm768, 0.0
          %770 = vst.msk [vmem:[#allocation2 + $0x8] sm:$0xff] %vm768, 0.0
          %771 = vst.msk [vmem:[#allocation2 + $0x10] sm:$0xff] %vm768, 0.0
          %772 = vst.msk [vmem:[#allocation2 + $0x18] sm:$0xff] %vm768, 0.0
          %773 = vst.msk [vmem:[#allocation2 + $0x20] sm:$0xff] %vm768, 0.0
          %774 = vst.msk [vmem:[#allocation2 + $0x28] sm:$0xff] %vm768, 0.0
          %775 = vst.msk [vmem:[#allocation2 + $0x30] sm:$0xff] %vm768, 0.0
          %776 = vst.msk [vmem:[#allocation2 + $0x38] sm:$0xff] %vm768, 0.0
          %777 = vst.msk [vmem:[#allocation2 + $0x40] sm:$0xff] %vm768, 0.0
          %778 = vst.msk [vmem:[#allocation2 + $0x48] sm:$0xff] %vm768, 0.0
          %779 = vst.msk [vmem:[#allocation2 + $0x50] sm:$0xff] %vm768, 0.0
          %780 = vst.msk [vmem:[#allocation2 + $0x58] sm:$0xff] %vm768, 0.0
          %781 = vst.msk [vmem:[#allocation2 + $0x60] sm:$0xff] %vm768, 0.0
          %782 = vst.msk [vmem:[#allocation2 + $0x68] sm:$0xff] %vm768, 0.0
          %783 = vst.msk [vmem:[#allocation2 + $0x70] sm:$0xff] %vm768, 0.0
          %784 = vst.msk [vmem:[#allocation2 + $0x78] sm:$0xff] %vm768, 0.0
          %785 = vst.msk [vmem:[#allocation2 + $0x80] sm:$0xff] %vm768, 0.0
          %786 = vst.msk [vmem:[#allocation2 + $0x88] sm:$0xff] %vm768, 0.0
          %787 = vst.msk [vmem:[#allocation2 + $0x90] sm:$0xff] %vm768, 0.0
          %788 = vst.msk [vmem:[#allocation2 + $0x98] sm:$0xff] %vm768, 0.0
          %789 = vst.msk [vmem:[#allocation2 + $0xa0] sm:$0xff] %vm768, 0.0
          %790 = vst.msk [vmem:[#allocation2 + $0xa8] sm:$0xff] %vm768, 0.0
          %791 = vst.msk [vmem:[#allocation2 + $0xb0] sm:$0xff] %vm768, 0.0
          %792 = vst.msk [vmem:[#allocation2 + $0xb8] sm:$0xff] %vm768, 0.0
          %793 = vst.msk [vmem:[#allocation2 + $0xc0] sm:$0xff] %vm768, 0.0
          %794 = vst.msk [vmem:[#allocation2 + $0xc8] sm:$0xff] %vm768, 0.0
          %795 = vst.msk [vmem:[#allocation2 + $0xd0] sm:$0xff] %vm768, 0.0
          %796 = vst.msk [vmem:[#allocation2 + $0xd8] sm:$0xff] %vm768, 0.0
          %797 = vst.msk [vmem:[#allocation2 + $0xe0] sm:$0xff] %vm768, 0.0
          %798 = vst.msk [vmem:[#allocation2 + $0xe8] sm:$0xff] %vm768, 0.0
          %799 = vst.msk [vmem:[#allocation2 + $0xf0] sm:$0xff] %vm768, 0.0
          %800 = vst.msk [vmem:[#allocation2 + $0xf8] sm:$0xff] %vm768, 0.0
          %801 = vst.msk [vmem:[#allocation3] sm:$0xff] %vm768, 0.0
          %802 = vst.msk [vmem:[#allocation3 + $0x8] sm:$0xff] %vm768, 0.0
          %803 = vst.msk [vmem:[#allocation3 + $0x10] sm:$0xff] %vm768, 0.0
          %804 = vst.msk [vmem:[#allocation3 + $0x18] sm:$0xff] %vm768, 0.0
          %805 = vst.msk [vmem:[#allocation3 + $0x20] sm:$0xff] %vm768, 0.0
          %806 = vst.msk [vmem:[#allocation3 + $0x28] sm:$0xff] %vm768, 0.0
          %807 = vst.msk [vmem:[#allocation3 + $0x30] sm:$0xff] %vm768, 0.0
          %808 = vst.msk [vmem:[#allocation3 + $0x38] sm:$0xff] %vm768, 0.0
          %809 = vst.msk [vmem:[#allocation3 + $0x40] sm:$0xff] %vm768, 0.0
          %810 = vst.msk [vmem:[#allocation3 + $0x48] sm:$0xff] %vm768, 0.0
          %811 = vst.msk [vmem:[#allocation3 + $0x50] sm:$0xff] %vm768, 0.0
          %812 = vst.msk [vmem:[#allocation3 + $0x58] sm:$0xff] %vm768, 0.0
          %813 = vst.msk [vmem:[#allocation3 + $0x60] sm:$0xff] %vm768, 0.0
          %814 = vst.msk [vmem:[#allocation3 + $0x68] sm:$0xff] %vm768, 0.0
          %815 = vst.msk [vmem:[#allocation3 + $0x70] sm:$0xff] %vm768, 0.0
          %816 = vst.msk [vmem:[#allocation3 + $0x78] sm:$0xff] %vm768, 0.0
          %817 = vst.msk [vmem:[#allocation3 + $0x80] sm:$0xff] %vm768, 0.0
          %818 = vst.msk [vmem:[#allocation3 + $0x88] sm:$0xff] %vm768, 0.0
          %819 = vst.msk [vmem:[#allocation3 + $0x90] sm:$0xff] %vm768, 0.0
          %820 = vst.msk [vmem:[#allocation3 + $0x98] sm:$0xff] %vm768, 0.0
          %821 = vst.msk [vmem:[#allocation3 + $0xa0] sm:$0xff] %vm768, 0.0
          %822 = vst.msk [vmem:[#allocation3 + $0xa8] sm:$0xff] %vm768, 0.0
          %823 = vst.msk [vmem:[#allocation3 + $0xb0] sm:$0xff] %vm768, 0.0
          %824 = vst.msk [vmem:[#allocation3 + $0xb8] sm:$0xff] %vm768, 0.0
          %825 = vst.msk [vmem:[#allocation3 + $0xc0] sm:$0xff] %vm768, 0.0
          %826 = vst.msk [vmem:[#allocation3 + $0xc8] sm:$0xff] %vm768, 0.0
          %827 = vst.msk [vmem:[#allocation3 + $0xd0] sm:$0xff] %vm768, 0.0
          %828 = vst.msk [vmem:[#allocation3 + $0xd8] sm:$0xff] %vm768, 0.0
          %829 = vst.msk [vmem:[#allocation3 + $0xe0] sm:$0xff] %vm768, 0.0
          %830 = vst.msk [vmem:[#allocation3 + $0xe8] sm:$0xff] %vm768, 0.0
          %831 = vst.msk [vmem:[#allocation3 + $0xf0] sm:$0xff] %vm768, 0.0
          %832 = vst.msk [vmem:[#allocation3 + $0xf8] sm:$0xff] %vm768, 0.0
        $region83: #{encoder_omics_forward.4} parent=70 // pred_fallthru
          _
        %v833 = vld [vmem:[#allocation2] sm:$0xff]
        %v834 = vld [vmem:[#allocation2 + $0x8] sm:$0xff]
        %v835 = vld [vmem:[#allocation2 + $0x10] sm:$0xff]
        %v836 = vld [vmem:[#allocation2 + $0x18] sm:$0xff]
        %v837 = vld [vmem:[#allocation2 + $0x20] sm:$0xff]
        %v838 = vld [vmem:[#allocation2 + $0x28] sm:$0xff]
        %v839 = vld [vmem:[#allocation2 + $0x30] sm:$0xff]
        %v840 = vld [vmem:[#allocation2 + $0x38] sm:$0xff]
        %v841 = vld [vmem:[#allocation2 + $0x40] sm:$0xff]
        %v842 = vld [vmem:[#allocation2 + $0x48] sm:$0xff]
        %v843 = vld [vmem:[#allocation2 + $0x50] sm:$0xff]
        %v844 = vld [vmem:[#allocation2 + $0x58] sm:$0xff]
        %v845 = vld [vmem:[#allocation2 + $0x60] sm:$0xff]
        %v846 = vld [vmem:[#allocation2 + $0x68] sm:$0xff]
        %v847 = vld [vmem:[#allocation2 + $0x70] sm:$0xff]
        %v848 = vld [vmem:[#allocation2 + $0x78] sm:$0xff]
        %v849 = vld [vmem:[#allocation2 + $0x80] sm:$0xff]
        %v850 = vld [vmem:[#allocation2 + $0x88] sm:$0xff]
        %v851 = vld [vmem:[#allocation2 + $0x90] sm:$0xff]
        %v852 = vld [vmem:[#allocation2 + $0x98] sm:$0xff]
        %v853 = vld [vmem:[#allocation2 + $0xa0] sm:$0xff]
        %v854 = vld [vmem:[#allocation2 + $0xa8] sm:$0xff]
        %v855 = vld [vmem:[#allocation2 + $0xb0] sm:$0xff]
        %v856 = vld [vmem:[#allocation2 + $0xb8] sm:$0xff]
        %v857 = vld [vmem:[#allocation2 + $0xc0] sm:$0xff]
        %v858 = vld [vmem:[#allocation2 + $0xc8] sm:$0xff]
        %v859 = vld [vmem:[#allocation2 + $0xd0] sm:$0xff]
        %v860 = vld [vmem:[#allocation2 + $0xd8] sm:$0xff]
        %v861 = vld [vmem:[#allocation2 + $0xe0] sm:$0xff]
        %v862 = vld [vmem:[#allocation2 + $0xe8] sm:$0xff]
        %v863 = vld [vmem:[#allocation2 + $0xf0] sm:$0xff]
        %v864 = vld [vmem:[#allocation2 + $0xf8] sm:$0xff]
        %v865 = vld [vmem:[%s622] sm:$0xff]
        %v866 = vld [vmem:[%s622 + $0x8] sm:$0xff]
        %v867 = vld [vmem:[%s622 + $0x10] sm:$0xff]
        %v868 = vld [vmem:[%s622 + $0x18] sm:$0xff]
        %v869 = vld [vmem:[%s622 + $0x20] sm:$0xff]
        %v870 = vld [vmem:[%s622 + $0x28] sm:$0xff]
        %v871 = vld [vmem:[%s622 + $0x30] sm:$0xff]
        %v872 = vld [vmem:[%s622 + $0x38] sm:$0xff]
        %v873 = vld [vmem:[%s622 + $0x40] sm:$0xff]
        %v874 = vld [vmem:[%s622 + $0x48] sm:$0xff]
        %v875 = vld [vmem:[%s622 + $0x50] sm:$0xff]
        %v876 = vld [vmem:[%s622 + $0x58] sm:$0xff]
        %v877 = vld [vmem:[%s622 + $0x60] sm:$0xff]
        %v878 = vld [vmem:[%s622 + $0x68] sm:$0xff]
        %v879 = vld [vmem:[%s622 + $0x70] sm:$0xff]
        %v880 = vld [vmem:[%s622 + $0x78] sm:$0xff]
        %v881 = vld [vmem:[%s622 + $0x80] sm:$0xff]
        %v882 = vld [vmem:[%s622 + $0x88] sm:$0xff]
        %v883 = vld [vmem:[%s622 + $0x90] sm:$0xff]
        %v884 = vld [vmem:[%s622 + $0x98] sm:$0xff]
        %v885 = vld [vmem:[%s622 + $0xa0] sm:$0xff]
        %v886 = vld [vmem:[%s622 + $0xa8] sm:$0xff]
        %v887 = vld [vmem:[%s622 + $0xb0] sm:$0xff]
        %v888 = vld [vmem:[%s622 + $0xb8] sm:$0xff]
        %v889 = vld [vmem:[%s622 + $0xc0] sm:$0xff]
        %v890 = vld [vmem:[%s622 + $0xc8] sm:$0xff]
        %v891 = vld [vmem:[%s622 + $0xd0] sm:$0xff]
        %v892 = vld [vmem:[%s622 + $0xd8] sm:$0xff]
        %v893 = vld [vmem:[%s622 + $0xe0] sm:$0xff]
        %v894 = vld [vmem:[%s622 + $0xe8] sm:$0xff]
        %v895 = vld [vmem:[%s622 + $0xf0] sm:$0xff]
        %v896 = vld [vmem:[%s622 + $0xf8] sm:$0xff]
        %v897 = vld [vmem:[%s622 + $0x100] sm:$0xff]
        %v898 = vld [vmem:[%s622 + $0x108] sm:$0xff]
        %v899 = vld [vmem:[%s622 + $0x110] sm:$0xff]
        %v900 = vld [vmem:[%s622 + $0x118] sm:$0xff]
        %v901 = vld [vmem:[%s622 + $0x120] sm:$0xff]
        %v902 = vld [vmem:[%s622 + $0x128] sm:$0xff]
        %v903 = vld [vmem:[%s622 + $0x130] sm:$0xff]
        %v904 = vld [vmem:[%s622 + $0x138] sm:$0xff]
        %v905 = vld [vmem:[%s622 + $0x140] sm:$0xff]
        %v906 = vld [vmem:[%s622 + $0x148] sm:$0xff]
        %v907 = vld [vmem:[%s622 + $0x150] sm:$0xff]
        %v908 = vld [vmem:[%s622 + $0x158] sm:$0xff]
        %v909 = vld [vmem:[%s622 + $0x160] sm:$0xff]
        %v910 = vld [vmem:[%s622 + $0x168] sm:$0xff]
        %v911 = vld [vmem:[%s622 + $0x170] sm:$0xff]
        %v912 = vld [vmem:[%s622 + $0x178] sm:$0xff]
        %v913 = vld [vmem:[%s622 + $0x180] sm:$0xff]
        %v914 = vld [vmem:[%s622 + $0x188] sm:$0xff]
        %v915 = vld [vmem:[%s622 + $0x190] sm:$0xff]
        %v916 = vld [vmem:[%s622 + $0x198] sm:$0xff]
        %v917 = vld [vmem:[%s622 + $0x1a0] sm:$0xff]
        %v918 = vld [vmem:[%s622 + $0x1a8] sm:$0xff]
        %v919 = vld [vmem:[%s622 + $0x1b0] sm:$0xff]
        %v920 = vld [vmem:[%s622 + $0x1b8] sm:$0xff]
        %v921 = vld [vmem:[%s622 + $0x1c0] sm:$0xff]
        %v922 = vld [vmem:[%s622 + $0x1c8] sm:$0xff]
        %v923 = vld [vmem:[%s622 + $0x1d0] sm:$0xff]
        %v924 = vld [vmem:[%s622 + $0x1d8] sm:$0xff]
        %v925 = vld [vmem:[%s622 + $0x1e0] sm:$0xff]
        %v926 = vld [vmem:[%s622 + $0x1e8] sm:$0xff]
        %v927 = vld [vmem:[%s622 + $0x1f0] sm:$0xff]
        %v928 = vld [vmem:[%s622 + $0x1f8] sm:$0xff]
        %v929 = vld [vmem:[%s720] sm:$0xff]
        %v930 = vld [vmem:[%s720 + $0x8] sm:$0xff]
        %v931 = vld [vmem:[%s720 + $0x10] sm:$0xff]
        %v932 = vld [vmem:[%s720 + $0x18] sm:$0xff]
        %v933 = vld [vmem:[%s720 + $0x20] sm:$0xff]
        %v934 = vld [vmem:[%s720 + $0x28] sm:$0xff]
        %v935 = vld [vmem:[%s720 + $0x30] sm:$0xff]
        %v936 = vld [vmem:[%s720 + $0x38] sm:$0xff]
        %v937 = vld [vmem:[%s720 + $0x40] sm:$0xff]
        %v938 = vld [vmem:[%s720 + $0x48] sm:$0xff]
        %v939 = vld [vmem:[%s720 + $0x50] sm:$0xff]
        %v940 = vld [vmem:[%s720 + $0x58] sm:$0xff]
        %v941 = vld [vmem:[%s720 + $0x60] sm:$0xff]
        %v942 = vld [vmem:[%s720 + $0x68] sm:$0xff]
        %v943 = vld [vmem:[%s720 + $0x70] sm:$0xff]
        %v944 = vld [vmem:[%s720 + $0x78] sm:$0xff]
        %v945 = vld [vmem:[%s720 + $0x80] sm:$0xff]
        %v946 = vld [vmem:[%s720 + $0x88] sm:$0xff]
        %v947 = vld [vmem:[%s720 + $0x90] sm:$0xff]
        %v948 = vld [vmem:[%s720 + $0x98] sm:$0xff]
        %v949 = vld [vmem:[%s720 + $0xa0] sm:$0xff]
        %v950 = vld [vmem:[%s720 + $0xa8] sm:$0xff]
        %v951 = vld [vmem:[%s720 + $0xb0] sm:$0xff]
        %v952 = vld [vmem:[%s720 + $0xb8] sm:$0xff]
        %v953 = vld [vmem:[%s720 + $0xc0] sm:$0xff]
        %v954 = vld [vmem:[%s720 + $0xc8] sm:$0xff]
        %v955 = vld [vmem:[%s720 + $0xd0] sm:$0xff]
        %v956 = vld [vmem:[%s720 + $0xd8] sm:$0xff]
        %v957 = vld [vmem:[%s720 + $0xe0] sm:$0xff]
        %v958 = vld [vmem:[%s720 + $0xe8] sm:$0xff]
        %v959 = vld [vmem:[%s720 + $0xf0] sm:$0xff]
        %v960 = vld [vmem:[%s720 + $0xf8] sm:$0xff]
        %961 = vmatprep.subr.mxu0 0.0
        %962 = vmatpush1.msra.mxu0 %v929
        %963 = vmatprep.subr.mxu0 0.0
        %964 = vmatpush1.msra.mxu0 %v930
        %965 = vmatprep.subr.mxu0 0.0
        %966 = vmatpush1.msra.mxu0 %v931
        %967 = vmatprep.subr.mxu0 0.0
        %968 = vmatpush1.msra.mxu0 %v932
        %969 = vmatprep.subr.mxu0 0.0
        %970 = vmatpush1.msra.mxu0 %v933
        %971 = vmatprep.subr.mxu0 0.0
        %972 = vmatpush1.msra.mxu0 %v934
        %973 = vmatprep.subr.mxu0 0.0
        %974 = vmatpush1.msra.mxu0 %v935
        %975 = vmatprep.subr.mxu0 0.0
        %976 = vmatpush1.msra.mxu0 %v936
        %977 = vmatprep.subr.mxu0 0.0
        %978 = vmatpush1.msra.mxu0 %v937
        %979 = vmatprep.subr.mxu0 0.0
        %980 = vmatpush1.msra.mxu0 %v938
        %981 = vmatprep.subr.mxu0 0.0
        %982 = vmatpush1.msra.mxu0 %v939
        %983 = vmatprep.subr.mxu0 0.0
        %984 = vmatpush1.msra.mxu0 %v940
        %985 = vmatprep.subr.mxu0 0.0
        %986 = vmatpush1.msra.mxu0 %v941
        %987 = vmatprep.subr.mxu0 0.0
        %988 = vmatpush1.msra.mxu0 %v942
        %989 = vmatprep.subr.mxu0 0.0
        %990 = vmatpush1.msra.mxu0 %v943
        %991 = vmatprep.subr.mxu0 0.0
        %992 = vmatpush1.msra.mxu0 %v944
        %993 = vmatprep.subr.mxu0 0.0
        %994 = vmatpush1.msra.mxu0 %v945
        %995 = vmatprep.subr.mxu0 0.0
        %996 = vmatpush1.msra.mxu0 %v946
        %997 = vmatprep.subr.mxu0 0.0
        %998 = vmatpush1.msra.mxu0 %v947
        %999 = vmatprep.subr.mxu0 0.0
        %1000 = vmatpush1.msra.mxu0 %v948
        %1001 = vmatprep.subr.mxu0 0.0
        %1002 = vmatpush1.msra.mxu0 %v949
        %1003 = vmatprep.subr.mxu0 0.0
        %1004 = vmatpush1.msra.mxu0 %v950
        %1005 = vmatprep.subr.mxu0 0.0
        %1006 = vmatpush1.msra.mxu0 %v951
        %1007 = vmatprep.subr.mxu0 0.0
        %1008 = vmatpush1.msra.mxu0 %v952
        %1009 = vmatprep.subr.mxu0 0.0
        %1010 = vmatpush1.msra.mxu0 %v953
        %1011 = vmatprep.subr.mxu0 0.0
        %1012 = vmatpush1.msra.mxu0 %v954
        %1013 = vmatprep.subr.mxu0 0.0
        %1014 = vmatpush1.msra.mxu0 %v955
        %1015 = vmatprep.subr.mxu0 0.0
        %1016 = vmatpush1.msra.mxu0 %v956
        %1017 = vmatprep.subr.mxu0 0.0
        %1018 = vmatpush1.msra.mxu0 %v957
        %1019 = vmatprep.subr.mxu0 0.0
        %1020 = vmatpush1.msra.mxu0 %v958
        %1021 = vmatprep.subr.mxu0 0.0
        %1022 = vmatpush1.msra.mxu0 %v959
        %1023 = vmatprep.subr.mxu0 0.0
        %1024 = vmatpush1.msra.mxu0 %v960
        %1025 = vmatprep.mubr.f32.mxu0 %v866
        %1026 = vmatmul.mubr.f32.gmra.mrb[0].mxu0 %v865
        %v1027 = vpop.f32.mrb[0].mxu0
        %v1028 = vadd.f32 0.0, %v1027
        %v1029 = vpop.f32.mrb[0].mxu0
        %1030 = vmatprep.mubr.f32.mxu0 %v868
        %1031 = vmatmul.mubr.f32.gmra.mrb[0].mxu0 %v867
        %v1032 = vpop.f32.mrb[0].mxu0
        %v1033 = vadd.f32 0.0, %v1032
        %v1034 = vpop.f32.mrb[0].mxu0
        %1035 = vmatprep.mubr.f32.mxu0 %v870
        %1036 = vmatmul.mubr.f32.gmra.mrb[0].mxu0 %v869
        %v1037 = vpop.f32.mrb[0].mxu0
        %v1038 = vadd.f32 0.0, %v1037
        %v1039 = vpop.f32.mrb[0].mxu0
        %1040 = vmatprep.mubr.f32.mxu0 %v872
        %1041 = vmatmul.mubr.f32.gmra.mrb[0].mxu0 %v871
        %v1042 = vpop.f32.mrb[0].mxu0
        %v1043 = vadd.f32 0.0, %v1042
        %v1044 = vpop.f32.mrb[0].mxu0
        %1045 = vmatprep.mubr.f32.mxu0 %v874
        %1046 = vmatmul.mubr.f32.gmra.mrb[0].mxu0 %v873
        %v1047 = vpop.f32.mrb[0].mxu0
        %v1048 = vadd.f32 0.0, %v1047
        %v1049 = vpop.f32.mrb[0].mxu0
        %1050 = vmatprep.mubr.f32.mxu0 %v876
        %1051 = vmatmul.mubr.f32.gmra.mrb[0].mxu0 %v875
        %v1052 = vpop.f32.mrb[0].mxu0
        %v1053 = vadd.f32 0.0, %v1052
        %v1054 = vpop.f32.mrb[0].mxu0
        %1055 = vmatprep.mubr.f32.mxu0 %v878
        %1056 = vmatmul.mubr.f32.gmra.mrb[0].mxu0 %v877
        %v1057 = vpop.f32.mrb[0].mxu0
        %v1058 = vadd.f32 0.0, %v1057
        %v1059 = vpop.f32.mrb[0].mxu0
        %1060 = vmatprep.mubr.f32.mxu0 %v880
        %1061 = vmatmul.mubr.f32.gmra.mrb[0].mxu0 %v879
        %v1062 = vpop.f32.mrb[0].mxu0
        %v1063 = vadd.f32 0.0, %v1062
        %v1064 = vpop.f32.mrb[0].mxu0
        %1065 = vmatprep.mubr.f32.mxu0 %v882
        %1066 = vmatmul.mubr.f32.gmra.mrb[0].mxu0 %v881
        %v1067 = vpop.f32.mrb[0].mxu0
        %v1068 = vadd.f32 0.0, %v1067
        %v1069 = vpop.f32.mrb[0].mxu0
        %1070 = vmatprep.mubr.f32.mxu0 %v884
        %1071 = vmatmul.mubr.f32.gmra.mrb[0].mxu0 %v883
        %v1072 = vpop.f32.mrb[0].mxu0
        %v1073 = vadd.f32 0.0, %v1072
        %v1074 = vpop.f32.mrb[0].mxu0
        %1075 = vmatprep.mubr.f32.mxu0 %v886
        %1076 = vmatmul.mubr.f32.gmra.mrb[0].mxu0 %v885
        %v1077 = vpop.f32.mrb[0].mxu0
        %v1078 = vadd.f32 0.0, %v1077
        %v1079 = vpop.f32.mrb[0].mxu0
        %1080 = vmatprep.mubr.f32.mxu0 %v888
        %1081 = vmatmul.mubr.f32.gmra.mrb[0].mxu0 %v887
        %v1082 = vpop.f32.mrb[0].mxu0
        %v1083 = vadd.f32 0.0, %v1082
        %v1084 = vpop.f32.mrb[0].mxu0
        %1085 = vmatprep.mubr.f32.mxu0 %v890
        %1086 = vmatmul.mubr.f32.gmra.mrb[0].mxu0 %v889
        %v1087 = vpop.f32.mrb[0].mxu0
        %v1088 = vadd.f32 0.0, %v1087
        %v1089 = vpop.f32.mrb[0].mxu0
        %1090 = vmatprep.mubr.f32.mxu0 %v892
        %1091 = vmatmul.mubr.f32.gmra.mrb[0].mxu0 %v891
        %v1092 = vpop.f32.mrb[0].mxu0
        %v1093 = vadd.f32 0.0, %v1092
        %v1094 = vpop.f32.mrb[0].mxu0
        %1095 = vmatprep.mubr.f32.mxu0 %v894
        %1096 = vmatmul.mubr.f32.gmra.mrb[0].mxu0 %v893
        %v1097 = vpop.f32.mrb[0].mxu0
        %v1098 = vadd.f32 0.0, %v1097
        %v1099 = vpop.f32.mrb[0].mxu0
        %1100 = vmatprep.mubr.f32.mxu0 %v896
        %1101 = vmatmul.mubr.f32.gmra.mrb[0].mxu0 %v895
        %v1102 = vpop.f32.mrb[0].mxu0
        %v1103 = vadd.f32 0.0, %v1102
        %v1104 = vpop.f32.mrb[0].mxu0
        %1105 = vmatprep.mubr.f32.mxu0 %v898
        %1106 = vmatmul.mubr.f32.gmra.mrb[0].mxu0 %v897
        %v1107 = vpop.f32.mrb[0].mxu0
        %v1108 = vadd.f32 0.0, %v1107
        %v1109 = vpop.f32.mrb[0].mxu0
        %1110 = vmatprep.mubr.f32.mxu0 %v900
        %1111 = vmatmul.mubr.f32.gmra.mrb[0].mxu0 %v899
        %v1112 = vpop.f32.mrb[0].mxu0
        %v1113 = vadd.f32 0.0, %v1112
        %v1114 = vpop.f32.mrb[0].mxu0
        %1115 = vmatprep.mubr.f32.mxu0 %v902
        %1116 = vmatmul.mubr.f32.gmra.mrb[0].mxu0 %v901
        %v1117 = vpop.f32.mrb[0].mxu0
        %v1118 = vadd.f32 0.0, %v1117
        %v1119 = vpop.f32.mrb[0].mxu0
        %1120 = vmatprep.mubr.f32.mxu0 %v904
        %1121 = vmatmul.mubr.f32.gmra.mrb[0].mxu0 %v903
        %v1122 = vpop.f32.mrb[0].mxu0
        %v1123 = vadd.f32 0.0, %v1122
        %v1124 = vpop.f32.mrb[0].mxu0
        %1125 = vmatprep.mubr.f32.mxu0 %v906
        %1126 = vmatmul.mubr.f32.gmra.mrb[0].mxu0 %v905
        %v1127 = vpop.f32.mrb[0].mxu0
        %v1128 = vadd.f32 0.0, %v1127
        %v1129 = vpop.f32.mrb[0].mxu0
        %1130 = vmatprep.mubr.f32.mxu0 %v908
        %1131 = vmatmul.mubr.f32.gmra.mrb[0].mxu0 %v907
        %v1132 = vpop.f32.mrb[0].mxu0
        %v1133 = vadd.f32 0.0, %v1132
        %v1134 = vpop.f32.mrb[0].mxu0
        %1135 = vmatprep.mubr.f32.mxu0 %v910
        %1136 = vmatmul.mubr.f32.gmra.mrb[0].mxu0 %v909
        %v1137 = vpop.f32.mrb[0].mxu0
        %v1138 = vadd.f32 0.0, %v1137
        %v1139 = vpop.f32.mrb[0].mxu0
        %1140 = vmatprep.mubr.f32.mxu0 %v912
        %1141 = vmatmul.mubr.f32.gmra.mrb[0].mxu0 %v911
        %v1142 = vpop.f32.mrb[0].mxu0
        %v1143 = vadd.f32 0.0, %v1142
        %v1144 = vpop.f32.mrb[0].mxu0
        %1145 = vmatprep.mubr.f32.mxu0 %v914
        %1146 = vmatmul.mubr.f32.gmra.mrb[0].mxu0 %v913
        %v1147 = vpop.f32.mrb[0].mxu0
        %v1148 = vadd.f32 0.0, %v1147
        %v1149 = vpop.f32.mrb[0].mxu0
        %1150 = vmatprep.mubr.f32.mxu0 %v916
        %1151 = vmatmul.mubr.f32.gmra.mrb[0].mxu0 %v915
        %v1152 = vpop.f32.mrb[0].mxu0
        %v1153 = vadd.f32 0.0, %v1152
        %v1154 = vpop.f32.mrb[0].mxu0
        %1155 = vmatprep.mubr.f32.mxu0 %v918
        %1156 = vmatmul.mubr.f32.gmra.mrb[0].mxu0 %v917
        %v1157 = vpop.f32.mrb[0].mxu0
        %v1158 = vadd.f32 0.0, %v1157
        %v1159 = vpop.f32.mrb[0].mxu0
        %1160 = vmatprep.mubr.f32.mxu0 %v920
        %1161 = vmatmul.mubr.f32.gmra.mrb[0].mxu0 %v919
        %v1162 = vpop.f32.mrb[0].mxu0
        %v1163 = vadd.f32 0.0, %v1162
        %v1164 = vpop.f32.mrb[0].mxu0
        %1165 = vmatprep.mubr.f32.mxu0 %v922
        %1166 = vmatmul.mubr.f32.gmra.mrb[0].mxu0 %v921
        %v1167 = vpop.f32.mrb[0].mxu0
        %v1168 = vadd.f32 0.0, %v1167
        %v1169 = vpop.f32.mrb[0].mxu0
        %1170 = vmatprep.mubr.f32.mxu0 %v924
        %1171 = vmatmul.mubr.f32.gmra.mrb[0].mxu0 %v923
        %v1172 = vpop.f32.mrb[0].mxu0
        %v1173 = vadd.f32 0.0, %v1172
        %v1174 = vpop.f32.mrb[0].mxu0
        %1175 = vmatprep.mubr.f32.mxu0 %v926
        %1176 = vmatmul.mubr.f32.gmra.mrb[0].mxu0 %v925
        %v1177 = vpop.f32.mrb[0].mxu0
        %v1178 = vadd.f32 0.0, %v1177
        %v1179 = vpop.f32.mrb[0].mxu0
        %1180 = vmatprep.mubr.f32.mxu0 %v928
        %1181 = vmatmul.mubr.f32.gmra.mrb[0].mxu0 %v927
        %v1182 = vpop.f32.mrb[0].mxu0
        %v1183 = vadd.f32 0.0, %v1182
        %v1184 = vpop.f32.mrb[0].mxu0
        %1185 = vdwg.mxu0
        %v1186 = vadd.f32 %v833, %v1028
        %v1187 = vadd.f32 %v834, %v1033
        %v1188 = vadd.f32 %v835, %v1038
        %v1189 = vadd.f32 %v836, %v1043
        %v1190 = vadd.f32 %v837, %v1048
        %v1191 = vadd.f32 %v838, %v1053
        %v1192 = vadd.f32 %v839, %v1058
        %v1193 = vadd.f32 %v840, %v1063
        %v1194 = vadd.f32 %v841, %v1068
        %v1195 = vadd.f32 %v842, %v1073
        %v1196 = vadd.f32 %v843, %v1078
        %v1197 = vadd.f32 %v844, %v1083
        %v1198 = vadd.f32 %v845, %v1088
        %v1199 = vadd.f32 %v846, %v1093
        %v1200 = vadd.f32 %v847, %v1098
        %v1201 = vadd.f32 %v848, %v1103
        %v1202 = vadd.f32 %v849, %v1108
        %v1203 = vadd.f32 %v850, %v1113
        %v1204 = vadd.f32 %v851, %v1118
        %v1205 = vadd.f32 %v852, %v1123
        %v1206 = vadd.f32 %v853, %v1128
        %v1207 = vadd.f32 %v854, %v1133
        %v1208 = vadd.f32 %v855, %v1138
        %v1209 = vadd.f32 %v856, %v1143
        %v1210 = vadd.f32 %v857, %v1148
        %v1211 = vadd.f32 %v858, %v1153
        %v1212 = vadd.f32 %v859, %v1158
        %v1213 = vadd.f32 %v860, %v1163
        %v1214 = vadd.f32 %v861, %v1168
        %v1215 = vadd.f32 %v862, %v1173
        %v1216 = vadd.f32 %v863, %v1178
        %v1217 = vadd.f32 %v864, %v1183
        %vm1218 = vcmask 130048
        %1219 = vst.msk [vmem:[#allocation2] sm:$0xff] %vm1218, %v1186
        %1220 = vst.msk [vmem:[#allocation2 + $0x8] sm:$0xff] %vm1218, %v1187
        %1221 = vst.msk [vmem:[#allocation2 + $0x10] sm:$0xff] %vm1218, %v1188
        %1222 = vst.msk [vmem:[#allocation2 + $0x18] sm:$0xff] %vm1218, %v1189
        %1223 = vst.msk [vmem:[#allocation2 + $0x20] sm:$0xff] %vm1218, %v1190
        %1224 = vst.msk [vmem:[#allocation2 + $0x28] sm:$0xff] %vm1218, %v1191
        %1225 = vst.msk [vmem:[#allocation2 + $0x30] sm:$0xff] %vm1218, %v1192
        %1226 = vst.msk [vmem:[#allocation2 + $0x38] sm:$0xff] %vm1218, %v1193
        %1227 = vst.msk [vmem:[#allocation2 + $0x40] sm:$0xff] %vm1218, %v1194
        %1228 = vst.msk [vmem:[#allocation2 + $0x48] sm:$0xff] %vm1218, %v1195
        %1229 = vst.msk [vmem:[#allocation2 + $0x50] sm:$0xff] %vm1218, %v1196
        %1230 = vst.msk [vmem:[#allocation2 + $0x58] sm:$0xff] %vm1218, %v1197
        %1231 = vst.msk [vmem:[#allocation2 + $0x60] sm:$0xff] %vm1218, %v1198
        %1232 = vst.msk [vmem:[#allocation2 + $0x68] sm:$0xff] %vm1218, %v1199
        %1233 = vst.msk [vmem:[#allocation2 + $0x70] sm:$0xff] %vm1218, %v1200
        %1234 = vst.msk [vmem:[#allocation2 + $0x78] sm:$0xff] %vm1218, %v1201
        %1235 = vst.msk [vmem:[#allocation2 + $0x80] sm:$0xff] %vm1218, %v1202
        %1236 = vst.msk [vmem:[#allocation2 + $0x88] sm:$0xff] %vm1218, %v1203
        %1237 = vst.msk [vmem:[#allocation2 + $0x90] sm:$0xff] %vm1218, %v1204
        %1238 = vst.msk [vmem:[#allocation2 + $0x98] sm:$0xff] %vm1218, %v1205
        %1239 = vst.msk [vmem:[#allocation2 + $0xa0] sm:$0xff] %vm1218, %v1206
        %1240 = vst.msk [vmem:[#allocation2 + $0xa8] sm:$0xff] %vm1218, %v1207
        %1241 = vst.msk [vmem:[#allocation2 + $0xb0] sm:$0xff] %vm1218, %v1208
        %1242 = vst.msk [vmem:[#allocation2 + $0xb8] sm:$0xff] %vm1218, %v1209
        %1243 = vst.msk [vmem:[#allocation2 + $0xc0] sm:$0xff] %vm1218, %v1210
        %1244 = vst.msk [vmem:[#allocation2 + $0xc8] sm:$0xff] %vm1218, %v1211
        %1245 = vst.msk [vmem:[#allocation2 + $0xd0] sm:$0xff] %vm1218, %v1212
        %1246 = vst.msk [vmem:[#allocation2 + $0xd8] sm:$0xff] %vm1218, %v1213
        %1247 = vst.msk [vmem:[#allocation2 + $0xe0] sm:$0xff] %vm1218, %v1214
        %1248 = vst.msk [vmem:[#allocation2 + $0xe8] sm:$0xff] %vm1218, %v1215
        %1249 = vst.msk [vmem:[#allocation2 + $0xf0] sm:$0xff] %vm1218, %v1216
        %1250 = vst.msk [vmem:[#allocation2 + $0xf8] sm:$0xff] %vm1218, %v1217
        %v1251 = vld [vmem:[#allocation3] sm:$0xff]
        %v1252 = vld [vmem:[#allocation3 + $0x8] sm:$0xff]
        %v1253 = vld [vmem:[#allocation3 + $0x10] sm:$0xff]
        %v1254 = vld [vmem:[#allocation3 + $0x18] sm:$0xff]
        %v1255 = vld [vmem:[#allocation3 + $0x20] sm:$0xff]
        %v1256 = vld [vmem:[#allocation3 + $0x28] sm:$0xff]
        %v1257 = vld [vmem:[#allocation3 + $0x30] sm:$0xff]
        %v1258 = vld [vmem:[#allocation3 + $0x38] sm:$0xff]
        %v1259 = vld [vmem:[#allocation3 + $0x40] sm:$0xff]
        %v1260 = vld [vmem:[#allocation3 + $0x48] sm:$0xff]
        %v1261 = vld [vmem:[#allocation3 + $0x50] sm:$0xff]
        %v1262 = vld [vmem:[#allocation3 + $0x58] sm:$0xff]
        %v1263 = vld [vmem:[#allocation3 + $0x60] sm:$0xff]
        %v1264 = vld [vmem:[#allocation3 + $0x68] sm:$0xff]
        %v1265 = vld [vmem:[#allocation3 + $0x70] sm:$0xff]
        %v1266 = vld [vmem:[#allocation3 + $0x78] sm:$0xff]
        %v1267 = vld [vmem:[#allocation3 + $0x80] sm:$0xff]
        %v1268 = vld [vmem:[#allocation3 + $0x88] sm:$0xff]
        %v1269 = vld [vmem:[#allocation3 + $0x90] sm:$0xff]
        %v1270 = vld [vmem:[#allocation3 + $0x98] sm:$0xff]
        %v1271 = vld [vmem:[#allocation3 + $0xa0] sm:$0xff]
        %v1272 = vld [vmem:[#allocation3 + $0xa8] sm:$0xff]
        %v1273 = vld [vmem:[#allocation3 + $0xb0] sm:$0xff]
        %v1274 = vld [vmem:[#allocation3 + $0xb8] sm:$0xff]
        %v1275 = vld [vmem:[#allocation3 + $0xc0] sm:$0xff]
        %v1276 = vld [vmem:[#allocation3 + $0xc8] sm:$0xff]
        %v1277 = vld [vmem:[#allocation3 + $0xd0] sm:$0xff]
        %v1278 = vld [vmem:[#allocation3 + $0xd8] sm:$0xff]
        %v1279 = vld [vmem:[#allocation3 + $0xe0] sm:$0xff]
        %v1280 = vld [vmem:[#allocation3 + $0xe8] sm:$0xff]
        %v1281 = vld [vmem:[#allocation3 + $0xf0] sm:$0xff]
        %v1282 = vld [vmem:[#allocation3 + $0xf8] sm:$0xff]
        %v1283 = vld [vmem:[%s630] sm:$0xff]
        %v1284 = vld [vmem:[%s630 + $0x8] sm:$0xff]
        %v1285 = vld [vmem:[%s630 + $0x10] sm:$0xff]
        %v1286 = vld [vmem:[%s630 + $0x18] sm:$0xff]
        %v1287 = vld [vmem:[%s630 + $0x20] sm:$0xff]
        %v1288 = vld [vmem:[%s630 + $0x28] sm:$0xff]
        %v1289 = vld [vmem:[%s630 + $0x30] sm:$0xff]
        %v1290 = vld [vmem:[%s630 + $0x38] sm:$0xff]
        %v1291 = vld [vmem:[%s630 + $0x40] sm:$0xff]
        %v1292 = vld [vmem:[%s630 + $0x48] sm:$0xff]
        %v1293 = vld [vmem:[%s630 + $0x50] sm:$0xff]
        %v1294 = vld [vmem:[%s630 + $0x58] sm:$0xff]
        %v1295 = vld [vmem:[%s630 + $0x60] sm:$0xff]
        %v1296 = vld [vmem:[%s630 + $0x68] sm:$0xff]
        %v1297 = vld [vmem:[%s630 + $0x70] sm:$0xff]
        %v1298 = vld [vmem:[%s630 + $0x78] sm:$0xff]
        %v1299 = vld [vmem:[%s630 + $0x80] sm:$0xff]
        %v1300 = vld [vmem:[%s630 + $0x88] sm:$0xff]
        %v1301 = vld [vmem:[%s630 + $0x90] sm:$0xff]
        %v1302 = vld [vmem:[%s630 + $0x98] sm:$0xff]
        %v1303 = vld [vmem:[%s630 + $0xa0] sm:$0xff]
        %v1304 = vld [vmem:[%s630 + $0xa8] sm:$0xff]
        %v1305 = vld [vmem:[%s630 + $0xb0] sm:$0xff]
        %v1306 = vld [vmem:[%s630 + $0xb8] sm:$0xff]
        %v1307 = vld [vmem:[%s630 + $0xc0] sm:$0xff]
        %v1308 = vld [vmem:[%s630 + $0xc8] sm:$0xff]
        %v1309 = vld [vmem:[%s630 + $0xd0] sm:$0xff]
        %v1310 = vld [vmem:[%s630 + $0xd8] sm:$0xff]
        %v1311 = vld [vmem:[%s630 + $0xe0] sm:$0xff]
        %v1312 = vld [vmem:[%s630 + $0xe8] sm:$0xff]
        %v1313 = vld [vmem:[%s630 + $0xf0] sm:$0xff]
        %v1314 = vld [vmem:[%s630 + $0xf8] sm:$0xff]
        %v1315 = vld [vmem:[%s630 + $0x100] sm:$0xff]
        %v1316 = vld [vmem:[%s630 + $0x108] sm:$0xff]
        %v1317 = vld [vmem:[%s630 + $0x110] sm:$0xff]
        %v1318 = vld [vmem:[%s630 + $0x118] sm:$0xff]
        %v1319 = vld [vmem:[%s630 + $0x120] sm:$0xff]
        %v1320 = vld [vmem:[%s630 + $0x128] sm:$0xff]
        %v1321 = vld [vmem:[%s630 + $0x130] sm:$0xff]
        %v1322 = vld [vmem:[%s630 + $0x138] sm:$0xff]
        %v1323 = vld [vmem:[%s630 + $0x140] sm:$0xff]
        %v1324 = vld [vmem:[%s630 + $0x148] sm:$0xff]
        %v1325 = vld [vmem:[%s630 + $0x150] sm:$0xff]
        %v1326 = vld [vmem:[%s630 + $0x158] sm:$0xff]
        %v1327 = vld [vmem:[%s630 + $0x160] sm:$0xff]
        %v1328 = vld [vmem:[%s630 + $0x168] sm:$0xff]
        %v1329 = vld [vmem:[%s630 + $0x170] sm:$0xff]
        %v1330 = vld [vmem:[%s630 + $0x178] sm:$0xff]
        %v1331 = vld [vmem:[%s630 + $0x180] sm:$0xff]
        %v1332 = vld [vmem:[%s630 + $0x188] sm:$0xff]
        %v1333 = vld [vmem:[%s630 + $0x190] sm:$0xff]
        %v1334 = vld [vmem:[%s630 + $0x198] sm:$0xff]
        %v1335 = vld [vmem:[%s630 + $0x1a0] sm:$0xff]
        %v1336 = vld [vmem:[%s630 + $0x1a8] sm:$0xff]
        %v1337 = vld [vmem:[%s630 + $0x1b0] sm:$0xff]
        %v1338 = vld [vmem:[%s630 + $0x1b8] sm:$0xff]
        %v1339 = vld [vmem:[%s630 + $0x1c0] sm:$0xff]
        %v1340 = vld [vmem:[%s630 + $0x1c8] sm:$0xff]
        %v1341 = vld [vmem:[%s630 + $0x1d0] sm:$0xff]
        %v1342 = vld [vmem:[%s630 + $0x1d8] sm:$0xff]
        %v1343 = vld [vmem:[%s630 + $0x1e0] sm:$0xff]
        %v1344 = vld [vmem:[%s630 + $0x1e8] sm:$0xff]
        %v1345 = vld [vmem:[%s630 + $0x1f0] sm:$0xff]
        %v1346 = vld [vmem:[%s630 + $0x1f8] sm:$0xff]
        %v1347 = vld [vmem:[%s726] sm:$0xff]
        %v1348 = vld [vmem:[%s726 + $0x8] sm:$0xff]
        %v1349 = vld [vmem:[%s726 + $0x10] sm:$0xff]
        %v1350 = vld [vmem:[%s726 + $0x18] sm:$0xff]
        %v1351 = vld [vmem:[%s726 + $0x20] sm:$0xff]
        %v1352 = vld [vmem:[%s726 + $0x28] sm:$0xff]
        %v1353 = vld [vmem:[%s726 + $0x30] sm:$0xff]
        %v1354 = vld [vmem:[%s726 + $0x38] sm:$0xff]
        %v1355 = vld [vmem:[%s726 + $0x40] sm:$0xff]
        %v1356 = vld [vmem:[%s726 + $0x48] sm:$0xff]
        %v1357 = vld [vmem:[%s726 + $0x50] sm:$0xff]
        %v1358 = vld [vmem:[%s726 + $0x58] sm:$0xff]
        %v1359 = vld [vmem:[%s726 + $0x60] sm:$0xff]
        %v1360 = vld [vmem:[%s726 + $0x68] sm:$0xff]
        %v1361 = vld [vmem:[%s726 + $0x70] sm:$0xff]
        %v1362 = vld [vmem:[%s726 + $0x78] sm:$0xff]
        %v1363 = vld [vmem:[%s726 + $0x80] sm:$0xff]
        %v1364 = vld [vmem:[%s726 + $0x88] sm:$0xff]
        %v1365 = vld [vmem:[%s726 + $0x90] sm:$0xff]
        %v1366 = vld [vmem:[%s726 + $0x98] sm:$0xff]
        %v1367 = vld [vmem:[%s726 + $0xa0] sm:$0xff]
        %v1368 = vld [vmem:[%s726 + $0xa8] sm:$0xff]
        %v1369 = vld [vmem:[%s726 + $0xb0] sm:$0xff]
        %v1370 = vld [vmem:[%s726 + $0xb8] sm:$0xff]
        %v1371 = vld [vmem:[%s726 + $0xc0] sm:$0xff]
        %v1372 = vld [vmem:[%s726 + $0xc8] sm:$0xff]
        %v1373 = vld [vmem:[%s726 + $0xd0] sm:$0xff]
        %v1374 = vld [vmem:[%s726 + $0xd8] sm:$0xff]
        %v1375 = vld [vmem:[%s726 + $0xe0] sm:$0xff]
        %v1376 = vld [vmem:[%s726 + $0xe8] sm:$0xff]
        %v1377 = vld [vmem:[%s726 + $0xf0] sm:$0xff]
        %v1378 = vld [vmem:[%s726 + $0xf8] sm:$0xff]
        %1379 = vmatprep.subr.mxu0 0.0
        %1380 = vmatpush1.msra.mxu0 %v1347
        %1381 = vmatprep.subr.mxu0 0.0
        %1382 = vmatpush1.msra.mxu0 %v1348
        %1383 = vmatprep.subr.mxu0 0.0
        %1384 = vmatpush1.msra.mxu0 %v1349
        %1385 = vmatprep.subr.mxu0 0.0
        %1386 = vmatpush1.msra.mxu0 %v1350
        %1387 = vmatprep.subr.mxu0 0.0
        %1388 = vmatpush1.msra.mxu0 %v1351
        %1389 = vmatprep.subr.mxu0 0.0
        %1390 = vmatpush1.msra.mxu0 %v1352
        %1391 = vmatprep.subr.mxu0 0.0
        %1392 = vmatpush1.msra.mxu0 %v1353
        %1393 = vmatprep.subr.mxu0 0.0
        %1394 = vmatpush1.msra.mxu0 %v1354
        %1395 = vmatprep.subr.mxu0 0.0
        %1396 = vmatpush1.msra.mxu0 %v1355
        %1397 = vmatprep.subr.mxu0 0.0
        %1398 = vmatpush1.msra.mxu0 %v1356
        %1399 = vmatprep.subr.mxu0 0.0
        %1400 = vmatpush1.msra.mxu0 %v1357
        %1401 = vmatprep.subr.mxu0 0.0
        %1402 = vmatpush1.msra.mxu0 %v1358
        %1403 = vmatprep.subr.mxu0 0.0
        %1404 = vmatpush1.msra.mxu0 %v1359
        %1405 = vmatprep.subr.mxu0 0.0
        %1406 = vmatpush1.msra.mxu0 %v1360
        %1407 = vmatprep.subr.mxu0 0.0
        %1408 = vmatpush1.msra.mxu0 %v1361
        %1409 = vmatprep.subr.mxu0 0.0
        %1410 = vmatpush1.msra.mxu0 %v1362
        %1411 = vmatprep.subr.mxu0 0.0
        %1412 = vmatpush1.msra.mxu0 %v1363
        %1413 = vmatprep.subr.mxu0 0.0
        %1414 = vmatpush1.msra.mxu0 %v1364
        %1415 = vmatprep.subr.mxu0 0.0
        %1416 = vmatpush1.msra.mxu0 %v1365
        %1417 = vmatprep.subr.mxu0 0.0
        %1418 = vmatpush1.msra.mxu0 %v1366
        %1419 = vmatprep.subr.mxu0 0.0
        %1420 = vmatpush1.msra.mxu0 %v1367
        %1421 = vmatprep.subr.mxu0 0.0
        %1422 = vmatpush1.msra.mxu0 %v1368
        %1423 = vmatprep.subr.mxu0 0.0
        %1424 = vmatpush1.msra.mxu0 %v1369
        %1425 = vmatprep.subr.mxu0 0.0
        %1426 = vmatpush1.msra.mxu0 %v1370
        %1427 = vmatprep.subr.mxu0 0.0
        %1428 = vmatpush1.msra.mxu0 %v1371
        %1429 = vmatprep.subr.mxu0 0.0
        %1430 = vmatpush1.msra.mxu0 %v1372
        %1431 = vmatprep.subr.mxu0 0.0
        %1432 = vmatpush1.msra.mxu0 %v1373
        %1433 = vmatprep.subr.mxu0 0.0
        %1434 = vmatpush1.msra.mxu0 %v1374
        %1435 = vmatprep.subr.mxu0 0.0
        %1436 = vmatpush1.msra.mxu0 %v1375
        %1437 = vmatprep.subr.mxu0 0.0
        %1438 = vmatpush1.msra.mxu0 %v1376
        %1439 = vmatprep.subr.mxu0 0.0
        %1440 = vmatpush1.msra.mxu0 %v1377
        %1441 = vmatprep.subr.mxu0 0.0
        %1442 = vmatpush1.msra.mxu0 %v1378
        %1443 = vmatprep.mubr.f32.mxu0 %v1284
        %1444 = vmatmul.mubr.f32.gmra.mrb[0].mxu0 %v1283
        %v1445 = vpop.f32.mrb[0].mxu0
        %v1446 = vadd.f32 0.0, %v1445
        %v1447 = vpop.f32.mrb[0].mxu0
        %1448 = vmatprep.mubr.f32.mxu0 %v1286
        %1449 = vmatmul.mubr.f32.gmra.mrb[0].mxu0 %v1285
        %v1450 = vpop.f32.mrb[0].mxu0
        %v1451 = vadd.f32 0.0, %v1450
        %v1452 = vpop.f32.mrb[0].mxu0
        %1453 = vmatprep.mubr.f32.mxu0 %v1288
        %1454 = vmatmul.mubr.f32.gmra.mrb[0].mxu0 %v1287
        %v1455 = vpop.f32.mrb[0].mxu0
        %v1456 = vadd.f32 0.0, %v1455
        %v1457 = vpop.f32.mrb[0].mxu0
        %1458 = vmatprep.mubr.f32.mxu0 %v1290
        %1459 = vmatmul.mubr.f32.gmra.mrb[0].mxu0 %v1289
        %v1460 = vpop.f32.mrb[0].mxu0
        %v1461 = vadd.f32 0.0, %v1460
        %v1462 = vpop.f32.mrb[0].mxu0
        %1463 = vmatprep.mubr.f32.mxu0 %v1292
        %1464 = vmatmul.mubr.f32.gmra.mrb[0].mxu0 %v1291
        %v1465 = vpop.f32.mrb[0].mxu0
        %v1466 = vadd.f32 0.0, %v1465
        %v1467 = vpop.f32.mrb[0].mxu0
        %1468 = vmatprep.mubr.f32.mxu0 %v1294
        %1469 = vmatmul.mubr.f32.gmra.mrb[0].mxu0 %v1293
        %v1470 = vpop.f32.mrb[0].mxu0
        %v1471 = vadd.f32 0.0, %v1470
        %v1472 = vpop.f32.mrb[0].mxu0
        %1473 = vmatprep.mubr.f32.mxu0 %v1296
        %1474 = vmatmul.mubr.f32.gmra.mrb[0].mxu0 %v1295
        %v1475 = vpop.f32.mrb[0].mxu0
        %v1476 = vadd.f32 0.0, %v1475
        %v1477 = vpop.f32.mrb[0].mxu0
        %1478 = vmatprep.mubr.f32.mxu0 %v1298
        %1479 = vmatmul.mubr.f32.gmra.mrb[0].mxu0 %v1297
        %v1480 = vpop.f32.mrb[0].mxu0
        %v1481 = vadd.f32 0.0, %v1480
        %v1482 = vpop.f32.mrb[0].mxu0
        %1483 = vmatprep.mubr.f32.mxu0 %v1300
        %1484 = vmatmul.mubr.f32.gmra.mrb[0].mxu0 %v1299
        %v1485 = vpop.f32.mrb[0].mxu0
        %v1486 = vadd.f32 0.0, %v1485
        %v1487 = vpop.f32.mrb[0].mxu0
        %1488 = vmatprep.mubr.f32.mxu0 %v1302
        %1489 = vmatmul.mubr.f32.gmra.mrb[0].mxu0 %v1301
        %v1490 = vpop.f32.mrb[0].mxu0
        %v1491 = vadd.f32 0.0, %v1490
        %v1492 = vpop.f32.mrb[0].mxu0
        %1493 = vmatprep.mubr.f32.mxu0 %v1304
        %1494 = vmatmul.mubr.f32.gmra.mrb[0].mxu0 %v1303
        %v1495 = vpop.f32.mrb[0].mxu0
        %v1496 = vadd.f32 0.0, %v1495
        %v1497 = vpop.f32.mrb[0].mxu0
        %1498 = vmatprep.mubr.f32.mxu0 %v1306
        %1499 = vmatmul.mubr.f32.gmra.mrb[0].mxu0 %v1305
        %v1500 = vpop.f32.mrb[0].mxu0
        %v1501 = vadd.f32 0.0, %v1500
        %v1502 = vpop.f32.mrb[0].mxu0
        %1503 = vmatprep.mubr.f32.mxu0 %v1308
        %1504 = vmatmul.mubr.f32.gmra.mrb[0].mxu0 %v1307
        %v1505 = vpop.f32.mrb[0].mxu0
        %v1506 = vadd.f32 0.0, %v1505
        %v1507 = vpop.f32.mrb[0].mxu0
        %1508 = vmatprep.mubr.f32.mxu0 %v1310
        %1509 = vmatmul.mubr.f32.gmra.mrb[0].mxu0 %v1309
        %v1510 = vpop.f32.mrb[0].mxu0
        %v1511 = vadd.f32 0.0, %v1510
        %v1512 = vpop.f32.mrb[0].mxu0
        %1513 = vmatprep.mubr.f32.mxu0 %v1312
        %1514 = vmatmul.mubr.f32.gmra.mrb[0].mxu0 %v1311
        %v1515 = vpop.f32.mrb[0].mxu0
        %v1516 = vadd.f32 0.0, %v1515
        %v1517 = vpop.f32.mrb[0].mxu0
        %1518 = vmatprep.mubr.f32.mxu0 %v1314
        %1519 = vmatmul.mubr.f32.gmra.mrb[0].mxu0 %v1313
        %v1520 = vpop.f32.mrb[0].mxu0
        %v1521 = vadd.f32 0.0, %v1520
        %v1522 = vpop.f32.mrb[0].mxu0
        %1523 = vmatprep.mubr.f32.mxu0 %v1316
        %1524 = vmatmul.mubr.f32.gmra.mrb[0].mxu0 %v1315
        %v1525 = vpop.f32.mrb[0].mxu0
        %v1526 = vadd.f32 0.0, %v1525
        %v1527 = vpop.f32.mrb[0].mxu0
        %1528 = vmatprep.mubr.f32.mxu0 %v1318
        %1529 = vmatmul.mubr.f32.gmra.mrb[0].mxu0 %v1317
        %v1530 = vpop.f32.mrb[0].mxu0
        %v1531 = vadd.f32 0.0, %v1530
        %v1532 = vpop.f32.mrb[0].mxu0
        %1533 = vmatprep.mubr.f32.mxu0 %v1320
        %1534 = vmatmul.mubr.f32.gmra.mrb[0].mxu0 %v1319
        %v1535 = vpop.f32.mrb[0].mxu0
        %v1536 = vadd.f32 0.0, %v1535
        %v1537 = vpop.f32.mrb[0].mxu0
        %1538 = vmatprep.mubr.f32.mxu0 %v1322
        %1539 = vmatmul.mubr.f32.gmra.mrb[0].mxu0 %v1321
        %v1540 = vpop.f32.mrb[0].mxu0
        %v1541 = vadd.f32 0.0, %v1540
        %v1542 = vpop.f32.mrb[0].mxu0
        %1543 = vmatprep.mubr.f32.mxu0 %v1324
        %1544 = vmatmul.mubr.f32.gmra.mrb[0].mxu0 %v1323
        %v1545 = vpop.f32.mrb[0].mxu0
        %v1546 = vadd.f32 0.0, %v1545
        %v1547 = vpop.f32.mrb[0].mxu0
        %1548 = vmatprep.mubr.f32.mxu0 %v1326
        %1549 = vmatmul.mubr.f32.gmra.mrb[0].mxu0 %v1325
        %v1550 = vpop.f32.mrb[0].mxu0
        %v1551 = vadd.f32 0.0, %v1550
        %v1552 = vpop.f32.mrb[0].mxu0
        %1553 = vmatprep.mubr.f32.mxu0 %v1328
        %1554 = vmatmul.mubr.f32.gmra.mrb[0].mxu0 %v1327
        %v1555 = vpop.f32.mrb[0].mxu0
        %v1556 = vadd.f32 0.0, %v1555
        %v1557 = vpop.f32.mrb[0].mxu0
        %1558 = vmatprep.mubr.f32.mxu0 %v1330
        %1559 = vmatmul.mubr.f32.gmra.mrb[0].mxu0 %v1329
        %v1560 = vpop.f32.mrb[0].mxu0
        %v1561 = vadd.f32 0.0, %v1560
        %v1562 = vpop.f32.mrb[0].mxu0
        %1563 = vmatprep.mubr.f32.mxu0 %v1332
        %1564 = vmatmul.mubr.f32.gmra.mrb[0].mxu0 %v1331
        %v1565 = vpop.f32.mrb[0].mxu0
        %v1566 = vadd.f32 0.0, %v1565
        %v1567 = vpop.f32.mrb[0].mxu0
        %1568 = vmatprep.mubr.f32.mxu0 %v1334
        %1569 = vmatmul.mubr.f32.gmra.mrb[0].mxu0 %v1333
        %v1570 = vpop.f32.mrb[0].mxu0
        %v1571 = vadd.f32 0.0, %v1570
        %v1572 = vpop.f32.mrb[0].mxu0
        %1573 = vmatprep.mubr.f32.mxu0 %v1336
        %1574 = vmatmul.mubr.f32.gmra.mrb[0].mxu0 %v1335
        %v1575 = vpop.f32.mrb[0].mxu0
        %v1576 = vadd.f32 0.0, %v1575
        %v1577 = vpop.f32.mrb[0].mxu0
        %1578 = vmatprep.mubr.f32.mxu0 %v1338
        %1579 = vmatmul.mubr.f32.gmra.mrb[0].mxu0 %v1337
        %v1580 = vpop.f32.mrb[0].mxu0
        %v1581 = vadd.f32 0.0, %v1580
        %v1582 = vpop.f32.mrb[0].mxu0
        %1583 = vmatprep.mubr.f32.mxu0 %v1340
        %1584 = vmatmul.mubr.f32.gmra.mrb[0].mxu0 %v1339
        %v1585 = vpop.f32.mrb[0].mxu0
        %v1586 = vadd.f32 0.0, %v1585
        %v1587 = vpop.f32.mrb[0].mxu0
        %1588 = vmatprep.mubr.f32.mxu0 %v1342
        %1589 = vmatmul.mubr.f32.gmra.mrb[0].mxu0 %v1341
        %v1590 = vpop.f32.mrb[0].mxu0
        %v1591 = vadd.f32 0.0, %v1590
        %v1592 = vpop.f32.mrb[0].mxu0
        %1593 = vmatprep.mubr.f32.mxu0 %v1344
        %1594 = vmatmul.mubr.f32.gmra.mrb[0].mxu0 %v1343
        %v1595 = vpop.f32.mrb[0].mxu0
        %v1596 = vadd.f32 0.0, %v1595
        %v1597 = vpop.f32.mrb[0].mxu0
        %1598 = vmatprep.mubr.f32.mxu0 %v1346
        %1599 = vmatmul.mubr.f32.gmra.mrb[0].mxu0 %v1345
        %v1600 = vpop.f32.mrb[0].mxu0
        %v1601 = vadd.f32 0.0, %v1600
        %v1602 = vpop.f32.mrb[0].mxu0
        %1603 = vdwg.mxu0
        %v1604 = vadd.f32 %v1251, %v1446
        %v1605 = vadd.f32 %v1252, %v1451
        %v1606 = vadd.f32 %v1253, %v1456
        %v1607 = vadd.f32 %v1254, %v1461
        %v1608 = vadd.f32 %v1255, %v1466
        %v1609 = vadd.f32 %v1256, %v1471
        %v1610 = vadd.f32 %v1257, %v1476
        %v1611 = vadd.f32 %v1258, %v1481
        %v1612 = vadd.f32 %v1259, %v1486
        %v1613 = vadd.f32 %v1260, %v1491
        %v1614 = vadd.f32 %v1261, %v1496
        %v1615 = vadd.f32 %v1262, %v1501
        %v1616 = vadd.f32 %v1263, %v1506
        %v1617 = vadd.f32 %v1264, %v1511
        %v1618 = vadd.f32 %v1265, %v1516
        %v1619 = vadd.f32 %v1266, %v1521
        %v1620 = vadd.f32 %v1267, %v1526
        %v1621 = vadd.f32 %v1268, %v1531
        %v1622 = vadd.f32 %v1269, %v1536
        %v1623 = vadd.f32 %v1270, %v1541
        %v1624 = vadd.f32 %v1271, %v1546
        %v1625 = vadd.f32 %v1272, %v1551
        %v1626 = vadd.f32 %v1273, %v1556
        %v1627 = vadd.f32 %v1274, %v1561
        %v1628 = vadd.f32 %v1275, %v1566
        %v1629 = vadd.f32 %v1276, %v1571
        %v1630 = vadd.f32 %v1277, %v1576
        %v1631 = vadd.f32 %v1278, %v1581
        %v1632 = vadd.f32 %v1279, %v1586
        %v1633 = vadd.f32 %v1280, %v1591
        %v1634 = vadd.f32 %v1281, %v1596
        %v1635 = vadd.f32 %v1282, %v1601
        %1636 = vst.msk [vmem:[#allocation3] sm:$0xff] %vm1218, %v1604
        %1637 = vst.msk [vmem:[#allocation3 + $0x8] sm:$0xff] %vm1218, %v1605
        %1638 = vst.msk [vmem:[#allocation3 + $0x10] sm:$0xff] %vm1218, %v1606
        %1639 = vst.msk [vmem:[#allocation3 + $0x18] sm:$0xff] %vm1218, %v1607
        %1640 = vst.msk [vmem:[#allocation3 + $0x20] sm:$0xff] %vm1218, %v1608
        %1641 = vst.msk [vmem:[#allocation3 + $0x28] sm:$0xff] %vm1218, %v1609
        %1642 = vst.msk [vmem:[#allocation3 + $0x30] sm:$0xff] %vm1218, %v1610
        %1643 = vst.msk [vmem:[#allocation3 + $0x38] sm:$0xff] %vm1218, %v1611
        %1644 = vst.msk [vmem:[#allocation3 + $0x40] sm:$0xff] %vm1218, %v1612
        %1645 = vst.msk [vmem:[#allocation3 + $0x48] sm:$0xff] %vm1218, %v1613
        %1646 = vst.msk [vmem:[#allocation3 + $0x50] sm:$0xff] %vm1218, %v1614
        %1647 = vst.msk [vmem:[#allocation3 + $0x58] sm:$0xff] %vm1218, %v1615
        %1648 = vst.msk [vmem:[#allocation3 + $0x60] sm:$0xff] %vm1218, %v1616
        %1649 = vst.msk [vmem:[#allocation3 + $0x68] sm:$0xff] %vm1218, %v1617
        %1650 = vst.msk [vmem:[#allocation3 + $0x70] sm:$0xff] %vm1218, %v1618
        %1651 = vst.msk [vmem:[#allocation3 + $0x78] sm:$0xff] %vm1218, %v1619
        %1652 = vst.msk [vmem:[#allocation3 + $0x80] sm:$0xff] %vm1218, %v1620
        %1653 = vst.msk [vmem:[#allocation3 + $0x88] sm:$0xff] %vm1218, %v1621
        %1654 = vst.msk [vmem:[#allocation3 + $0x90] sm:$0xff] %vm1218, %v1622
        %1655 = vst.msk [vmem:[#allocation3 + $0x98] sm:$0xff] %vm1218, %v1623
        %1656 = vst.msk [vmem:[#allocation3 + $0xa0] sm:$0xff] %vm1218, %v1624
        %1657 = vst.msk [vmem:[#allocation3 + $0xa8] sm:$0xff] %vm1218, %v1625
        %1658 = vst.msk [vmem:[#allocation3 + $0xb0] sm:$0xff] %vm1218, %v1626
        %1659 = vst.msk [vmem:[#allocation3 + $0xb8] sm:$0xff] %vm1218, %v1627
        %1660 = vst.msk [vmem:[#allocation3 + $0xc0] sm:$0xff] %vm1218, %v1628
        %1661 = vst.msk [vmem:[#allocation3 + $0xc8] sm:$0xff] %vm1218, %v1629
        %1662 = vst.msk [vmem:[#allocation3 + $0xd0] sm:$0xff] %vm1218, %v1630
        %1663 = vst.msk [vmem:[#allocation3 + $0xd8] sm:$0xff] %vm1218, %v1631
        %1664 = vst.msk [vmem:[#allocation3 + $0xe0] sm:$0xff] %vm1218, %v1632
        %1665 = vst.msk [vmem:[#allocation3 + $0xe8] sm:$0xff] %vm1218, %v1633
        %1666 = vst.msk [vmem:[#allocation3 + $0xf0] sm:$0xff] %vm1218, %v1634
        %1667 = vst.msk [vmem:[#allocation3 + $0xf8] sm:$0xff] %vm1218, %v1635
        %p1668 = scmp.eq.s32.totalorder %s33, 1
        // Predicated region
        $region84: #{encoder_omics_forward.4} parent=70 // pred_check
          %p1669 = pneg %p1668
        $region85: #{encoder_omics_forward.4} parent=70 // pred_check_branch
          %1671 = sbr.rel (%p1669) target = $region87
        $region86: #{encoder_omics_forward.4} parent=70 // pred_region
          %v1672 = vld [vmem:[#allocation2] sm:$0xff]
          %v1673 = vld [vmem:[#allocation2 + $0x8] sm:$0xff]
          %v1674 = vld [vmem:[#allocation2 + $0x10] sm:$0xff]
          %v1675 = vld [vmem:[#allocation2 + $0x18] sm:$0xff]
          %v1676 = vld [vmem:[#allocation2 + $0x20] sm:$0xff]
          %v1677 = vld [vmem:[#allocation2 + $0x28] sm:$0xff]
          %v1678 = vld [vmem:[#allocation2 + $0x30] sm:$0xff]
          %v1679 = vld [vmem:[#allocation2 + $0x38] sm:$0xff]
          %v1680 = vld [vmem:[#allocation2 + $0x40] sm:$0xff]
          %v1681 = vld [vmem:[#allocation2 + $0x48] sm:$0xff]
          %v1682 = vld [vmem:[#allocation2 + $0x50] sm:$0xff]
          %v1683 = vld [vmem:[#allocation2 + $0x58] sm:$0xff]
          %v1684 = vld [vmem:[#allocation2 + $0x60] sm:$0xff]
          %v1685 = vld [vmem:[#allocation2 + $0x68] sm:$0xff]
          %v1686 = vld [vmem:[#allocation2 + $0x70] sm:$0xff]
          %v1687 = vld [vmem:[#allocation2 + $0x78] sm:$0xff]
          %v1688 = vld [vmem:[#allocation2 + $0x80] sm:$0xff]
          %v1689 = vld [vmem:[#allocation2 + $0x88] sm:$0xff]
          %v1690 = vld [vmem:[#allocation2 + $0x90] sm:$0xff]
          %v1691 = vld [vmem:[#allocation2 + $0x98] sm:$0xff]
          %v1692 = vld [vmem:[#allocation2 + $0xa0] sm:$0xff]
          %v1693 = vld [vmem:[#allocation2 + $0xa8] sm:$0xff]
          %v1694 = vld [vmem:[#allocation2 + $0xb0] sm:$0xff]
          %v1695 = vld [vmem:[#allocation2 + $0xb8] sm:$0xff]
          %v1696 = vld [vmem:[#allocation2 + $0xc0] sm:$0xff]
          %v1697 = vld [vmem:[#allocation2 + $0xc8] sm:$0xff]
          %v1698 = vld [vmem:[#allocation2 + $0xd0] sm:$0xff]
          %v1699 = vld [vmem:[#allocation2 + $0xd8] sm:$0xff]
          %v1700 = vld [vmem:[#allocation2 + $0xe0] sm:$0xff]
          %v1701 = vld [vmem:[#allocation2 + $0xe8] sm:$0xff]
          %v1702 = vld [vmem:[#allocation2 + $0xf0] sm:$0xff]
          %v1703 = vld [vmem:[#allocation2 + $0xf8] sm:$0xff]
          %v1704 = vld [vmem:[#allocation3] sm:$0xff]
          %v1705 = vld [vmem:[#allocation3 + $0x8] sm:$0xff]
          %v1706 = vld [vmem:[#allocation3 + $0x10] sm:$0xff]
          %v1707 = vld [vmem:[#allocation3 + $0x18] sm:$0xff]
          %v1708 = vld [vmem:[#allocation3 + $0x20] sm:$0xff]
          %v1709 = vld [vmem:[#allocation3 + $0x28] sm:$0xff]
          %v1710 = vld [vmem:[#allocation3 + $0x30] sm:$0xff]
          %v1711 = vld [vmem:[#allocation3 + $0x38] sm:$0xff]
          %v1712 = vld [vmem:[#allocation3 + $0x40] sm:$0xff]
          %v1713 = vld [vmem:[#allocation3 + $0x48] sm:$0xff]
          %v1714 = vld [vmem:[#allocation3 + $0x50] sm:$0xff]
          %v1715 = vld [vmem:[#allocation3 + $0x58] sm:$0xff]
          %v1716 = vld [vmem:[#allocation3 + $0x60] sm:$0xff]
          %v1717 = vld [vmem:[#allocation3 + $0x68] sm:$0xff]
          %v1718 = vld [vmem:[#allocation3 + $0x70] sm:$0xff]
          %v1719 = vld [vmem:[#allocation3 + $0x78] sm:$0xff]
          %v1720 = vld [vmem:[#allocation3 + $0x80] sm:$0xff]
          %v1721 = vld [vmem:[#allocation3 + $0x88] sm:$0xff]
          %v1722 = vld [vmem:[#allocation3 + $0x90] sm:$0xff]
          %v1723 = vld [vmem:[#allocation3 + $0x98] sm:$0xff]
          %v1724 = vld [vmem:[#allocation3 + $0xa0] sm:$0xff]
          %v1725 = vld [vmem:[#allocation3 + $0xa8] sm:$0xff]
          %v1726 = vld [vmem:[#allocation3 + $0xb0] sm:$0xff]
          %v1727 = vld [vmem:[#allocation3 + $0xb8] sm:$0xff]
          %v1728 = vld [vmem:[#allocation3 + $0xc0] sm:$0xff]
          %v1729 = vld [vmem:[#allocation3 + $0xc8] sm:$0xff]
          %v1730 = vld [vmem:[#allocation3 + $0xd0] sm:$0xff]
          %v1731 = vld [vmem:[#allocation3 + $0xd8] sm:$0xff]
          %v1732 = vld [vmem:[#allocation3 + $0xe0] sm:$0xff]
          %v1733 = vld [vmem:[#allocation3 + $0xe8] sm:$0xff]
          %v1734 = vld [vmem:[#allocation3 + $0xf0] sm:$0xff]
          %v1735 = vld [vmem:[#allocation3 + $0xf8] sm:$0xff]
          %1736 = vst.msk [vmem:[%s732] sm:$0xff] %vm1218, %v1672
          %1737 = vst.msk [vmem:[%s732 + $0x8] sm:$0xff] %vm1218, %v1673
          %1738 = vst.msk [vmem:[%s732 + $0x10] sm:$0xff] %vm1218, %v1674
          %1739 = vst.msk [vmem:[%s732 + $0x18] sm:$0xff] %vm1218, %v1675
          %1740 = vst.msk [vmem:[%s732 + $0x20] sm:$0xff] %vm1218, %v1676
          %1741 = vst.msk [vmem:[%s732 + $0x28] sm:$0xff] %vm1218, %v1677
          %1742 = vst.msk [vmem:[%s732 + $0x30] sm:$0xff] %vm1218, %v1678
          %1743 = vst.msk [vmem:[%s732 + $0x38] sm:$0xff] %vm1218, %v1679
          %1744 = vst.msk [vmem:[%s732 + $0x40] sm:$0xff] %vm1218, %v1680
          %1745 = vst.msk [vmem:[%s732 + $0x48] sm:$0xff] %vm1218, %v1681
          %1746 = vst.msk [vmem:[%s732 + $0x50] sm:$0xff] %vm1218, %v1682
          %1747 = vst.msk [vmem:[%s732 + $0x58] sm:$0xff] %vm1218, %v1683
          %1748 = vst.msk [vmem:[%s732 + $0x60] sm:$0xff] %vm1218, %v1684
          %1749 = vst.msk [vmem:[%s732 + $0x68] sm:$0xff] %vm1218, %v1685
          %1750 = vst.msk [vmem:[%s732 + $0x70] sm:$0xff] %vm1218, %v1686
          %1751 = vst.msk [vmem:[%s732 + $0x78] sm:$0xff] %vm1218, %v1687
          %1752 = vst.msk [vmem:[%s732 + $0x80] sm:$0xff] %vm1218, %v1688
          %1753 = vst.msk [vmem:[%s732 + $0x88] sm:$0xff] %vm1218, %v1689
          %1754 = vst.msk [vmem:[%s732 + $0x90] sm:$0xff] %vm1218, %v1690
          %1755 = vst.msk [vmem:[%s732 + $0x98] sm:$0xff] %vm1218, %v1691
          %1756 = vst.msk [vmem:[%s732 + $0xa0] sm:$0xff] %vm1218, %v1692
          %1757 = vst.msk [vmem:[%s732 + $0xa8] sm:$0xff] %vm1218, %v1693
          %1758 = vst.msk [vmem:[%s732 + $0xb0] sm:$0xff] %vm1218, %v1694
          %1759 = vst.msk [vmem:[%s732 + $0xb8] sm:$0xff] %vm1218, %v1695
          %1760 = vst.msk [vmem:[%s732 + $0xc0] sm:$0xff] %vm1218, %v1696
          %1761 = vst.msk [vmem:[%s732 + $0xc8] sm:$0xff] %vm1218, %v1697
          %1762 = vst.msk [vmem:[%s732 + $0xd0] sm:$0xff] %vm1218, %v1698
          %1763 = vst.msk [vmem:[%s732 + $0xd8] sm:$0xff] %vm1218, %v1699
          %1764 = vst.msk [vmem:[%s732 + $0xe0] sm:$0xff] %vm1218, %v1700
          %1765 = vst.msk [vmem:[%s732 + $0xe8] sm:$0xff] %vm1218, %v1701
          %1766 = vst.msk [vmem:[%s732 + $0xf0] sm:$0xff] %vm1218, %v1702
          %1767 = vst.msk [vmem:[%s732 + $0xf8] sm:$0xff] %vm1218, %v1703
          %1768 = vst.msk [vmem:[%s738] sm:$0xff] %vm1218, %v1704
          %1769 = vst.msk [vmem:[%s738 + $0x8] sm:$0xff] %vm1218, %v1705
          %1770 = vst.msk [vmem:[%s738 + $0x10] sm:$0xff] %vm1218, %v1706
          %1771 = vst.msk [vmem:[%s738 + $0x18] sm:$0xff] %vm1218, %v1707
          %1772 = vst.msk [vmem:[%s738 + $0x20] sm:$0xff] %vm1218, %v1708
          %1773 = vst.msk [vmem:[%s738 + $0x28] sm:$0xff] %vm1218, %v1709
          %1774 = vst.msk [vmem:[%s738 + $0x30] sm:$0xff] %vm1218, %v1710
          %1775 = vst.msk [vmem:[%s738 + $0x38] sm:$0xff] %vm1218, %v1711
          %1776 = vst.msk [vmem:[%s738 + $0x40] sm:$0xff] %vm1218, %v1712
          %1777 = vst.msk [vmem:[%s738 + $0x48] sm:$0xff] %vm1218, %v1713
          %1778 = vst.msk [vmem:[%s738 + $0x50] sm:$0xff] %vm1218, %v1714
          %1779 = vst.msk [vmem:[%s738 + $0x58] sm:$0xff] %vm1218, %v1715
          %1780 = vst.msk [vmem:[%s738 + $0x60] sm:$0xff] %vm1218, %v1716
          %1781 = vst.msk [vmem:[%s738 + $0x68] sm:$0xff] %vm1218, %v1717
          %1782 = vst.msk [vmem:[%s738 + $0x70] sm:$0xff] %vm1218, %v1718
          %1783 = vst.msk [vmem:[%s738 + $0x78] sm:$0xff] %vm1218, %v1719
          %1784 = vst.msk [vmem:[%s738 + $0x80] sm:$0xff] %vm1218, %v1720
          %1785 = vst.msk [vmem:[%s738 + $0x88] sm:$0xff] %vm1218, %v1721
          %1786 = vst.msk [vmem:[%s738 + $0x90] sm:$0xff] %vm1218, %v1722
          %1787 = vst.msk [vmem:[%s738 + $0x98] sm:$0xff] %vm1218, %v1723
          %1788 = vst.msk [vmem:[%s738 + $0xa0] sm:$0xff] %vm1218, %v1724
          %1789 = vst.msk [vmem:[%s738 + $0xa8] sm:$0xff] %vm1218, %v1725
          %1790 = vst.msk [vmem:[%s738 + $0xb0] sm:$0xff] %vm1218, %v1726
          %1791 = vst.msk [vmem:[%s738 + $0xb8] sm:$0xff] %vm1218, %v1727
          %1792 = vst.msk [vmem:[%s738 + $0xc0] sm:$0xff] %vm1218, %v1728
          %1793 = vst.msk [vmem:[%s738 + $0xc8] sm:$0xff] %vm1218, %v1729
          %1794 = vst.msk [vmem:[%s738 + $0xd0] sm:$0xff] %vm1218, %v1730
          %1795 = vst.msk [vmem:[%s738 + $0xd8] sm:$0xff] %vm1218, %v1731
          %1796 = vst.msk [vmem:[%s738 + $0xe0] sm:$0xff] %vm1218, %v1732
          %1797 = vst.msk [vmem:[%s738 + $0xe8] sm:$0xff] %vm1218, %v1733
          %1798 = vst.msk [vmem:[%s738 + $0xf0] sm:$0xff] %vm1218, %v1734
          %1799 = vst.msk [vmem:[%s738 + $0xf8] sm:$0xff] %vm1218, %v1735
          %v1800 = vld [vmem:[%s4] sm:$0xff]
          %v1801 = vld [vmem:[%s4 + $0x8] sm:$0xff]
          %v1802 = vld [vmem:[%s5] sm:$0x1]
          %v1804 = vsel %vm1218, %v1672, 0
          %v1807 = vsel %vm1218, %v1673, 0
          %v1810 = vsel %vm1218, %v1674, 0
          %v1813 = vsel %vm1218, %v1675, 0
          %v1816 = vsel %vm1218, %v1676, 0
          %v1819 = vsel %vm1218, %v1677, 0
          %v1822 = vsel %vm1218, %v1678, 0
          %v1825 = vsel %vm1218, %v1679, 0
          %v1828 = vsel %vm1218, %v1680, 0
          %v1831 = vsel %vm1218, %v1681, 0
          %v1834 = vsel %vm1218, %v1682, 0
          %v1837 = vsel %vm1218, %v1683, 0
          %v1840 = vsel %vm1218, %v1684, 0
          %v1843 = vsel %vm1218, %v1685, 0
          %v1846 = vsel %vm1218, %v1686, 0
          %v1849 = vsel %vm1218, %v1687, 0
          %v1852 = vsel %vm1218, %v1688, 0
          %v1855 = vsel %vm1218, %v1689, 0
          %v1858 = vsel %vm1218, %v1690, 0
          %v1861 = vsel %vm1218, %v1691, 0
          %v1864 = vsel %vm1218, %v1692, 0
          %v1867 = vsel %vm1218, %v1693, 0
          %v1870 = vsel %vm1218, %v1694, 0
          %v1873 = vsel %vm1218, %v1695, 0
          %v1876 = vsel %vm1218, %v1696, 0
          %v1879 = vsel %vm1218, %v1697, 0
          %v1882 = vsel %vm1218, %v1698, 0
          %v1885 = vsel %vm1218, %v1699, 0
          %v1888 = vsel %vm1218, %v1700, 0
          %v1891 = vsel %vm1218, %v1701, 0
          %v1894 = vsel %vm1218, %v1702, 0
          %v1897 = vsel %vm1218, %v1703, 0
          %1899 = vmatprep.subr.mxu0 0.0
          %1900 = vmatpush1.msra.mxu0 %v1800
          %1901 = vmatprep.subr.mxu0 0.0
          %1902 = vmatpush1.msra.mxu0 %v1801
          %1903 = vmatprep.subr.mxu0 0.0
          %1904 = vmatpush1.msra.mxu0 0.0
          %1905 = vmatprep.subr.mxu0 0.0
          %1906 = vmatpush1.msra.mxu0 0.0
          %1907 = vmatprep.subr.mxu0 0.0
          %1908 = vmatpush1.msra.mxu0 0.0
          %1909 = vmatprep.subr.mxu0 0.0
          %1910 = vmatpush1.msra.mxu0 0.0
          %1911 = vmatprep.subr.mxu0 0.0
          %1912 = vmatpush1.msra.mxu0 0.0
          %1913 = vmatprep.subr.mxu0 0.0
          %1914 = vmatpush1.msra.mxu0 0.0
          %1915 = vmatprep.subr.mxu0 0.0
          %1916 = vmatpush1.msra.mxu0 0.0
          %1917 = vmatprep.subr.mxu0 0.0
          %1918 = vmatpush1.msra.mxu0 0.0
          %1919 = vmatprep.subr.mxu0 0.0
          %1920 = vmatpush1.msra.mxu0 0.0
          %1921 = vmatprep.subr.mxu0 0.0
          %1922 = vmatpush1.msra.mxu0 0.0
          %1923 = vmatprep.subr.mxu0 0.0
          %1924 = vmatpush1.msra.mxu0 0.0
          %1925 = vmatprep.subr.mxu0 0.0
          %1926 = vmatpush1.msra.mxu0 0.0
          %1927 = vmatprep.subr.mxu0 0.0
          %1928 = vmatpush1.msra.mxu0 0.0
          %1929 = vmatprep.subr.mxu0 0.0
          %1930 = vmatpush1.msra.mxu0 0.0
          %1931 = vmatprep.subr.mxu0 0.0
          %1932 = vmatpush1.msra.mxu0 0.0
          %1933 = vmatprep.subr.mxu0 0.0
          %1934 = vmatpush1.msra.mxu0 0.0
          %1935 = vmatprep.subr.mxu0 0.0
          %1936 = vmatpush1.msra.mxu0 0.0
          %1937 = vmatprep.subr.mxu0 0.0
          %1938 = vmatpush1.msra.mxu0 0.0
          %1939 = vmatprep.subr.mxu0 0.0
          %1940 = vmatpush1.msra.mxu0 0.0
          %1941 = vmatprep.subr.mxu0 0.0
          %1942 = vmatpush1.msra.mxu0 0.0
          %1943 = vmatprep.subr.mxu0 0.0
          %1944 = vmatpush1.msra.mxu0 0.0
          %1945 = vmatprep.subr.mxu0 0.0
          %1946 = vmatpush1.msra.mxu0 0.0
          %1947 = vmatprep.subr.mxu0 0.0
          %1948 = vmatpush1.msra.mxu0 0.0
          %1949 = vmatprep.subr.mxu0 0.0
          %1950 = vmatpush1.msra.mxu0 0.0
          %1951 = vmatprep.subr.mxu0 0.0
          %1952 = vmatpush1.msra.mxu0 0.0
          %1953 = vmatprep.subr.mxu0 0.0
          %1954 = vmatpush1.msra.mxu0 0.0
          %1955 = vmatprep.subr.mxu0 0.0
          %1956 = vmatpush1.msra.mxu0 0.0
          %1957 = vmatprep.subr.mxu0 0.0
          %1958 = vmatpush1.msra.mxu0 0.0
          %1959 = vmatprep.subr.mxu0 0.0
          %1960 = vmatpush1.msra.mxu0 0.0
          %1961 = vmatprep.subr.mxu0 0.0
          %1962 = vmatpush1.msra.mxu0 0.0
          %1963 = vmatprep.mubr.f32.mxu0 0.0
          %1964 = vmatmul.mubr.f32.gmra.mrb[0].mxu0 %v1804
          %v1965 = vpop.f32.mrb[0].mxu0
          %v1966 = vadd.f32 0.0, %v1965
          %v1967 = vpop.f32.mrb[0].mxu0
          %1968 = vmatprep.mubr.f32.mxu0 0.0
          %1969 = vmatmul.mubr.f32.gmra.mrb[0].mxu0 %v1807
          %v1970 = vpop.f32.mrb[0].mxu0
          %v1971 = vadd.f32 0.0, %v1970
          %v1972 = vpop.f32.mrb[0].mxu0
          %1973 = vmatprep.mubr.f32.mxu0 0.0
          %1974 = vmatmul.mubr.f32.gmra.mrb[0].mxu0 %v1810
          %v1975 = vpop.f32.mrb[0].mxu0
          %v1976 = vadd.f32 0.0, %v1975
          %v1977 = vpop.f32.mrb[0].mxu0
          %1978 = vmatprep.mubr.f32.mxu0 0.0
          %1979 = vmatmul.mubr.f32.gmra.mrb[0].mxu0 %v1813
          %v1980 = vpop.f32.mrb[0].mxu0
          %v1981 = vadd.f32 0.0, %v1980
          %v1982 = vpop.f32.mrb[0].mxu0
          %1983 = vmatprep.mubr.f32.mxu0 0.0
          %1984 = vmatmul.mubr.f32.gmra.mrb[0].mxu0 %v1816
          %v1985 = vpop.f32.mrb[0].mxu0
          %v1986 = vadd.f32 0.0, %v1985
          %v1987 = vpop.f32.mrb[0].mxu0
          %1988 = vmatprep.mubr.f32.mxu0 0.0
          %1989 = vmatmul.mubr.f32.gmra.mrb[0].mxu0 %v1819
          %v1990 = vpop.f32.mrb[0].mxu0
          %v1991 = vadd.f32 0.0, %v1990
          %v1992 = vpop.f32.mrb[0].mxu0
          %1993 = vmatprep.mubr.f32.mxu0 0.0
          %1994 = vmatmul.mubr.f32.gmra.mrb[0].mxu0 %v1822
          %v1995 = vpop.f32.mrb[0].mxu0
          %v1996 = vadd.f32 0.0, %v1995
          %v1997 = vpop.f32.mrb[0].mxu0
          %1998 = vmatprep.mubr.f32.mxu0 0.0
          %1999 = vmatmul.mubr.f32.gmra.mrb[0].mxu0 %v1825
          %v2000 = vpop.f32.mrb[0].mxu0
          %v2001 = vadd.f32 0.0, %v2000
          %v2002 = vpop.f32.mrb[0].mxu0
          %2003 = vmatprep.mubr.f32.mxu0 0.0
          %2004 = vmatmul.mubr.f32.gmra.mrb[0].mxu0 %v1828
          %v2005 = vpop.f32.mrb[0].mxu0
          %v2006 = vadd.f32 0.0, %v2005
          %v2007 = vpop.f32.mrb[0].mxu0
          %2008 = vmatprep.mubr.f32.mxu0 0.0
          %2009 = vmatmul.mubr.f32.gmra.mrb[0].mxu0 %v1831
          %v2010 = vpop.f32.mrb[0].mxu0
          %v2011 = vadd.f32 0.0, %v2010
          %v2012 = vpop.f32.mrb[0].mxu0
          %2013 = vmatprep.mubr.f32.mxu0 0.0
          %2014 = vmatmul.mubr.f32.gmra.mrb[0].mxu0 %v1834
          %v2015 = vpop.f32.mrb[0].mxu0
          %v2016 = vadd.f32 0.0, %v2015
          %v2017 = vpop.f32.mrb[0].mxu0
          %2018 = vmatprep.mubr.f32.mxu0 0.0
          %2019 = vmatmul.mubr.f32.gmra.mrb[0].mxu0 %v1837
          %v2020 = vpop.f32.mrb[0].mxu0
          %v2021 = vadd.f32 0.0, %v2020
          %v2022 = vpop.f32.mrb[0].mxu0
          %2023 = vmatprep.mubr.f32.mxu0 0.0
          %2024 = vmatmul.mubr.f32.gmra.mrb[0].mxu0 %v1840
          %v2025 = vpop.f32.mrb[0].mxu0
          %v2026 = vadd.f32 0.0, %v2025
          %v2027 = vpop.f32.mrb[0].mxu0
          %2028 = vmatprep.mubr.f32.mxu0 0.0
          %2029 = vmatmul.mubr.f32.gmra.mrb[0].mxu0 %v1843
          %v2030 = vpop.f32.mrb[0].mxu0
          %v2031 = vadd.f32 0.0, %v2030
          %v2032 = vpop.f32.mrb[0].mxu0
          %2033 = vmatprep.mubr.f32.mxu0 0.0
          %2034 = vmatmul.mubr.f32.gmra.mrb[0].mxu0 %v1846
          %v2035 = vpop.f32.mrb[0].mxu0
          %v2036 = vadd.f32 0.0, %v2035
          %v2037 = vpop.f32.mrb[0].mxu0
          %2038 = vmatprep.mubr.f32.mxu0 0.0
          %2039 = vmatmul.mubr.f32.gmra.mrb[0].mxu0 %v1849
          %v2040 = vpop.f32.mrb[0].mxu0
          %v2041 = vadd.f32 0.0, %v2040
          %v2042 = vpop.f32.mrb[0].mxu0
          %2043 = vmatprep.mubr.f32.mxu0 0.0
          %2044 = vmatmul.mubr.f32.gmra.mrb[0].mxu0 %v1852
          %v2045 = vpop.f32.mrb[0].mxu0
          %v2046 = vadd.f32 0.0, %v2045
          %v2047 = vpop.f32.mrb[0].mxu0
          %2048 = vmatprep.mubr.f32.mxu0 0.0
          %2049 = vmatmul.mubr.f32.gmra.mrb[0].mxu0 %v1855
          %v2050 = vpop.f32.mrb[0].mxu0
          %v2051 = vadd.f32 0.0, %v2050
          %v2052 = vpop.f32.mrb[0].mxu0
          %2053 = vmatprep.mubr.f32.mxu0 0.0
          %2054 = vmatmul.mubr.f32.gmra.mrb[0].mxu0 %v1858
          %v2055 = vpop.f32.mrb[0].mxu0
          %v2056 = vadd.f32 0.0, %v2055
          %v2057 = vpop.f32.mrb[0].mxu0
          %2058 = vmatprep.mubr.f32.mxu0 0.0
          %2059 = vmatmul.mubr.f32.gmra.mrb[0].mxu0 %v1861
          %v2060 = vpop.f32.mrb[0].mxu0
          %v2061 = vadd.f32 0.0, %v2060
          %v2062 = vpop.f32.mrb[0].mxu0
          %2063 = vmatprep.mubr.f32.mxu0 0.0
          %2064 = vmatmul.mubr.f32.gmra.mrb[0].mxu0 %v1864
          %v2065 = vpop.f32.mrb[0].mxu0
          %v2066 = vadd.f32 0.0, %v2065
          %v2067 = vpop.f32.mrb[0].mxu0
          %2068 = vmatprep.mubr.f32.mxu0 0.0
          %2069 = vmatmul.mubr.f32.gmra.mrb[0].mxu0 %v1867
          %v2070 = vpop.f32.mrb[0].mxu0
          %v2071 = vadd.f32 0.0, %v2070
          %v2072 = vpop.f32.mrb[0].mxu0
          %2073 = vmatprep.mubr.f32.mxu0 0.0
          %2074 = vmatmul.mubr.f32.gmra.mrb[0].mxu0 %v1870
          %v2075 = vpop.f32.mrb[0].mxu0
          %v2076 = vadd.f32 0.0, %v2075
          %v2077 = vpop.f32.mrb[0].mxu0
          %2078 = vmatprep.mubr.f32.mxu0 0.0
          %2079 = vmatmul.mubr.f32.gmra.mrb[0].mxu0 %v1873
          %v2080 = vpop.f32.mrb[0].mxu0
          %v2081 = vadd.f32 0.0, %v2080
          %v2082 = vpop.f32.mrb[0].mxu0
          %2083 = vmatprep.mubr.f32.mxu0 0.0
          %2084 = vmatmul.mubr.f32.gmra.mrb[0].mxu0 %v1876
          %v2085 = vpop.f32.mrb[0].mxu0
          %v2086 = vadd.f32 0.0, %v2085
          %v2087 = vpop.f32.mrb[0].mxu0
          %2088 = vmatprep.mubr.f32.mxu0 0.0
          %2089 = vmatmul.mubr.f32.gmra.mrb[0].mxu0 %v1879
          %v2090 = vpop.f32.mrb[0].mxu0
          %v2091 = vadd.f32 0.0, %v2090
          %v2092 = vpop.f32.mrb[0].mxu0
          %2093 = vmatprep.mubr.f32.mxu0 0.0
          %2094 = vmatmul.mubr.f32.gmra.mrb[0].mxu0 %v1882
          %v2095 = vpop.f32.mrb[0].mxu0
          %v2096 = vadd.f32 0.0, %v2095
          %v2097 = vpop.f32.mrb[0].mxu0
          %2098 = vmatprep.mubr.f32.mxu0 0.0
          %2099 = vmatmul.mubr.f32.gmra.mrb[0].mxu0 %v1885
          %v2100 = vpop.f32.mrb[0].mxu0
          %v2101 = vadd.f32 0.0, %v2100
          %v2102 = vpop.f32.mrb[0].mxu0
          %2103 = vmatprep.mubr.f32.mxu0 0.0
          %2104 = vmatmul.mubr.f32.gmra.mrb[0].mxu0 %v1888
          %v2105 = vpop.f32.mrb[0].mxu0
          %v2106 = vadd.f32 0.0, %v2105
          %v2107 = vpop.f32.mrb[0].mxu0
          %2108 = vmatprep.mubr.f32.mxu0 0.0
          %2109 = vmatmul.mubr.f32.gmra.mrb[0].mxu0 %v1891
          %v2110 = vpop.f32.mrb[0].mxu0
          %v2111 = vadd.f32 0.0, %v2110
          %v2112 = vpop.f32.mrb[0].mxu0
          %2113 = vmatprep.mubr.f32.mxu0 0.0
          %2114 = vmatmul.mubr.f32.gmra.mrb[0].mxu0 %v1894
          %v2115 = vpop.f32.mrb[0].mxu0
          %v2116 = vadd.f32 0.0, %v2115
          %v2117 = vpop.f32.mrb[0].mxu0
          %2118 = vmatprep.mubr.f32.mxu0 0.0
          %2119 = vmatmul.mubr.f32.gmra.mrb[0].mxu0 %v1897
          %v2120 = vpop.f32.mrb[0].mxu0
          %v2121 = vadd.f32 0.0, %v2120
          %v2122 = vpop.f32.mrb[0].mxu0
          %2123 = vdwg.mxu0
          %v2124 = vtanh.pop %v1966
          %v2125 = vtanh.pop %v1971
          %v2126 = vtanh.pop %v1976
          %v2127 = vtanh.pop %v1981
          %v2128 = vtanh.pop %v1986
          %v2129 = vtanh.pop %v1991
          %v2130 = vtanh.pop %v1996
          %v2131 = vtanh.pop %v2001
          %v2132 = vtanh.pop %v2006
          %v2133 = vtanh.pop %v2011
          %v2134 = vtanh.pop %v2016
          %v2135 = vtanh.pop %v2021
          %v2136 = vtanh.pop %v2026
          %v2137 = vtanh.pop %v2031
          %v2138 = vtanh.pop %v2036
          %v2139 = vtanh.pop %v2041
          %v2140 = vtanh.pop %v2046
          %v2141 = vtanh.pop %v2051
          %v2142 = vtanh.pop %v2056
          %v2143 = vtanh.pop %v2061
          %v2144 = vtanh.pop %v2066
          %v2145 = vtanh.pop %v2071
          %v2146 = vtanh.pop %v2076
          %v2147 = vtanh.pop %v2081
          %v2148 = vtanh.pop %v2086
          %v2149 = vtanh.pop %v2091
          %v2150 = vtanh.pop %v2096
          %v2151 = vtanh.pop %v2101
          %v2152 = vtanh.pop %v2106
          %v2153 = vtanh.pop %v2111
          %v2154 = vtanh.pop %v2116
          %v2155 = vtanh.pop %v2121
          %v2157 = vsel %vm1218, %v1704, 0
          %v2160 = vsel %vm1218, %v1705, 0
          %v2163 = vsel %vm1218, %v1706, 0
          %v2166 = vsel %vm1218, %v1707, 0
          %v2169 = vsel %vm1218, %v1708, 0
          %v2172 = vsel %vm1218, %v1709, 0
          %v2175 = vsel %vm1218, %v1710, 0
          %v2178 = vsel %vm1218, %v1711, 0
          %v2181 = vsel %vm1218, %v1712, 0
          %v2184 = vsel %vm1218, %v1713, 0
          %v2187 = vsel %vm1218, %v1714, 0
          %v2190 = vsel %vm1218, %v1715, 0
          %v2193 = vsel %vm1218, %v1716, 0
          %v2196 = vsel %vm1218, %v1717, 0
          %v2199 = vsel %vm1218, %v1718, 0
          %v2202 = vsel %vm1218, %v1719, 0
          %v2205 = vsel %vm1218, %v1720, 0
          %v2208 = vsel %vm1218, %v1721, 0
          %v2211 = vsel %vm1218, %v1722, 0
          %v2214 = vsel %vm1218, %v1723, 0
          %v2217 = vsel %vm1218, %v1724, 0
          %v2220 = vsel %vm1218, %v1725, 0
          %v2223 = vsel %vm1218, %v1726, 0
          %v2226 = vsel %vm1218, %v1727, 0
          %v2229 = vsel %vm1218, %v1728, 0
          %v2232 = vsel %vm1218, %v1729, 0
          %v2235 = vsel %vm1218, %v1730, 0
          %v2238 = vsel %vm1218, %v1731, 0
          %v2241 = vsel %vm1218, %v1732, 0
          %v2244 = vsel %vm1218, %v1733, 0
          %v2247 = vsel %vm1218, %v1734, 0
          %v2250 = vsel %vm1218, %v1735, 0
          %2252 = vmatprep.subr.mxu0 0.0
          %2253 = vmatpush1.msra.mxu0 %v1800
          %2254 = vmatprep.subr.mxu0 0.0
          %2255 = vmatpush1.msra.mxu0 %v1801
          %2256 = vmatprep.subr.mxu0 0.0
          %2257 = vmatpush1.msra.mxu0 0.0
          %2258 = vmatprep.subr.mxu0 0.0
          %2259 = vmatpush1.msra.mxu0 0.0
          %2260 = vmatprep.subr.mxu0 0.0
          %2261 = vmatpush1.msra.mxu0 0.0
          %2262 = vmatprep.subr.mxu0 0.0
          %2263 = vmatpush1.msra.mxu0 0.0
          %2264 = vmatprep.subr.mxu0 0.0
          %2265 = vmatpush1.msra.mxu0 0.0
          %2266 = vmatprep.subr.mxu0 0.0
          %2267 = vmatpush1.msra.mxu0 0.0
          %2268 = vmatprep.subr.mxu0 0.0
          %2269 = vmatpush1.msra.mxu0 0.0
          %2270 = vmatprep.subr.mxu0 0.0
          %2271 = vmatpush1.msra.mxu0 0.0
          %2272 = vmatprep.subr.mxu0 0.0
          %2273 = vmatpush1.msra.mxu0 0.0
          %2274 = vmatprep.subr.mxu0 0.0
          %2275 = vmatpush1.msra.mxu0 0.0
          %2276 = vmatprep.subr.mxu0 0.0
          %2277 = vmatpush1.msra.mxu0 0.0
          %2278 = vmatprep.subr.mxu0 0.0
          %2279 = vmatpush1.msra.mxu0 0.0
          %2280 = vmatprep.subr.mxu0 0.0
          %2281 = vmatpush1.msra.mxu0 0.0
          %2282 = vmatprep.subr.mxu0 0.0
          %2283 = vmatpush1.msra.mxu0 0.0
          %2284 = vmatprep.subr.mxu0 0.0
          %2285 = vmatpush1.msra.mxu0 0.0
          %2286 = vmatprep.subr.mxu0 0.0
          %2287 = vmatpush1.msra.mxu0 0.0
          %2288 = vmatprep.subr.mxu0 0.0
          %2289 = vmatpush1.msra.mxu0 0.0
          %2290 = vmatprep.subr.mxu0 0.0
          %2291 = vmatpush1.msra.mxu0 0.0
          %2292 = vmatprep.subr.mxu0 0.0
          %2293 = vmatpush1.msra.mxu0 0.0
          %2294 = vmatprep.subr.mxu0 0.0
          %2295 = vmatpush1.msra.mxu0 0.0
          %2296 = vmatprep.subr.mxu0 0.0
          %2297 = vmatpush1.msra.mxu0 0.0
          %2298 = vmatprep.subr.mxu0 0.0
          %2299 = vmatpush1.msra.mxu0 0.0
          %2300 = vmatprep.subr.mxu0 0.0
          %2301 = vmatpush1.msra.mxu0 0.0
          %2302 = vmatprep.subr.mxu0 0.0
          %2303 = vmatpush1.msra.mxu0 0.0
          %2304 = vmatprep.subr.mxu0 0.0
          %2305 = vmatpush1.msra.mxu0 0.0
          %2306 = vmatprep.subr.mxu0 0.0
          %2307 = vmatpush1.msra.mxu0 0.0
          %2308 = vmatprep.subr.mxu0 0.0
          %2309 = vmatpush1.msra.mxu0 0.0
          %2310 = vmatprep.subr.mxu0 0.0
          %2311 = vmatpush1.msra.mxu0 0.0
          %2312 = vmatprep.subr.mxu0 0.0
          %2313 = vmatpush1.msra.mxu0 0.0
          %2314 = vmatprep.subr.mxu0 0.0
          %2315 = vmatpush1.msra.mxu0 0.0
          %2316 = vmatprep.mubr.f32.mxu0 0.0
          %2317 = vmatmul.mubr.f32.gmra.mrb[0].mxu0 %v2157
          %v2318 = vpop.f32.mrb[0].mxu0
          %v2319 = vadd.f32 0.0, %v2318
          %v2320 = vpop.f32.mrb[0].mxu0
          %2321 = vmatprep.mubr.f32.mxu0 0.0
          %2322 = vmatmul.mubr.f32.gmra.mrb[0].mxu0 %v2160
          %v2323 = vpop.f32.mrb[0].mxu0
          %v2324 = vadd.f32 0.0, %v2323
          %v2325 = vpop.f32.mrb[0].mxu0
          %2326 = vmatprep.mubr.f32.mxu0 0.0
          %2327 = vmatmul.mubr.f32.gmra.mrb[0].mxu0 %v2163
          %v2328 = vpop.f32.mrb[0].mxu0
          %v2329 = vadd.f32 0.0, %v2328
          %v2330 = vpop.f32.mrb[0].mxu0
          %2331 = vmatprep.mubr.f32.mxu0 0.0
          %2332 = vmatmul.mubr.f32.gmra.mrb[0].mxu0 %v2166
          %v2333 = vpop.f32.mrb[0].mxu0
          %v2334 = vadd.f32 0.0, %v2333
          %v2335 = vpop.f32.mrb[0].mxu0
          %2336 = vmatprep.mubr.f32.mxu0 0.0
          %2337 = vmatmul.mubr.f32.gmra.mrb[0].mxu0 %v2169
          %v2338 = vpop.f32.mrb[0].mxu0
          %v2339 = vadd.f32 0.0, %v2338
          %v2340 = vpop.f32.mrb[0].mxu0
          %2341 = vmatprep.mubr.f32.mxu0 0.0
          %2342 = vmatmul.mubr.f32.gmra.mrb[0].mxu0 %v2172
          %v2343 = vpop.f32.mrb[0].mxu0
          %v2344 = vadd.f32 0.0, %v2343
          %v2345 = vpop.f32.mrb[0].mxu0
          %2346 = vmatprep.mubr.f32.mxu0 0.0
          %2347 = vmatmul.mubr.f32.gmra.mrb[0].mxu0 %v2175
          %v2348 = vpop.f32.mrb[0].mxu0
          %v2349 = vadd.f32 0.0, %v2348
          %v2350 = vpop.f32.mrb[0].mxu0
          %2351 = vmatprep.mubr.f32.mxu0 0.0
          %2352 = vmatmul.mubr.f32.gmra.mrb[0].mxu0 %v2178
          %v2353 = vpop.f32.mrb[0].mxu0
          %v2354 = vadd.f32 0.0, %v2353
          %v2355 = vpop.f32.mrb[0].mxu0
          %2356 = vmatprep.mubr.f32.mxu0 0.0
          %2357 = vmatmul.mubr.f32.gmra.mrb[0].mxu0 %v2181
          %v2358 = vpop.f32.mrb[0].mxu0
          %v2359 = vadd.f32 0.0, %v2358
          %v2360 = vpop.f32.mrb[0].mxu0
          %2361 = vmatprep.mubr.f32.mxu0 0.0
          %2362 = vmatmul.mubr.f32.gmra.mrb[0].mxu0 %v2184
          %v2363 = vpop.f32.mrb[0].mxu0
          %v2364 = vadd.f32 0.0, %v2363
          %v2365 = vpop.f32.mrb[0].mxu0
          %2366 = vmatprep.mubr.f32.mxu0 0.0
          %2367 = vmatmul.mubr.f32.gmra.mrb[0].mxu0 %v2187
          %v2368 = vpop.f32.mrb[0].mxu0
          %v2369 = vadd.f32 0.0, %v2368
          %v2370 = vpop.f32.mrb[0].mxu0
          %2371 = vmatprep.mubr.f32.mxu0 0.0
          %2372 = vmatmul.mubr.f32.gmra.mrb[0].mxu0 %v2190
          %v2373 = vpop.f32.mrb[0].mxu0
          %v2374 = vadd.f32 0.0, %v2373
          %v2375 = vpop.f32.mrb[0].mxu0
          %2376 = vmatprep.mubr.f32.mxu0 0.0
          %2377 = vmatmul.mubr.f32.gmra.mrb[0].mxu0 %v2193
          %v2378 = vpop.f32.mrb[0].mxu0
          %v2379 = vadd.f32 0.0, %v2378
          %v2380 = vpop.f32.mrb[0].mxu0
          %2381 = vmatprep.mubr.f32.mxu0 0.0
          %2382 = vmatmul.mubr.f32.gmra.mrb[0].mxu0 %v2196
          %v2383 = vpop.f32.mrb[0].mxu0
          %v2384 = vadd.f32 0.0, %v2383
          %v2385 = vpop.f32.mrb[0].mxu0
          %2386 = vmatprep.mubr.f32.mxu0 0.0
          %2387 = vmatmul.mubr.f32.gmra.mrb[0].mxu0 %v2199
          %v2388 = vpop.f32.mrb[0].mxu0
          %v2389 = vadd.f32 0.0, %v2388
          %v2390 = vpop.f32.mrb[0].mxu0
          %2391 = vmatprep.mubr.f32.mxu0 0.0
          %2392 = vmatmul.mubr.f32.gmra.mrb[0].mxu0 %v2202
          %v2393 = vpop.f32.mrb[0].mxu0
          %v2394 = vadd.f32 0.0, %v2393
          %v2395 = vpop.f32.mrb[0].mxu0
          %2396 = vmatprep.mubr.f32.mxu0 0.0
          %2397 = vmatmul.mubr.f32.gmra.mrb[0].mxu0 %v2205
          %v2398 = vpop.f32.mrb[0].mxu0
          %v2399 = vadd.f32 0.0, %v2398
          %v2400 = vpop.f32.mrb[0].mxu0
          %2401 = vmatprep.mubr.f32.mxu0 0.0
          %2402 = vmatmul.mubr.f32.gmra.mrb[0].mxu0 %v2208
          %v2403 = vpop.f32.mrb[0].mxu0
          %v2404 = vadd.f32 0.0, %v2403
          %v2405 = vpop.f32.mrb[0].mxu0
          %2406 = vmatprep.mubr.f32.mxu0 0.0
          %2407 = vmatmul.mubr.f32.gmra.mrb[0].mxu0 %v2211
          %v2408 = vpop.f32.mrb[0].mxu0
          %v2409 = vadd.f32 0.0, %v2408
          %v2410 = vpop.f32.mrb[0].mxu0
          %2411 = vmatprep.mubr.f32.mxu0 0.0
          %2412 = vmatmul.mubr.f32.gmra.mrb[0].mxu0 %v2214
          %v2413 = vpop.f32.mrb[0].mxu0
          %v2414 = vadd.f32 0.0, %v2413
          %v2415 = vpop.f32.mrb[0].mxu0
          %2416 = vmatprep.mubr.f32.mxu0 0.0
          %2417 = vmatmul.mubr.f32.gmra.mrb[0].mxu0 %v2217
          %v2418 = vpop.f32.mrb[0].mxu0
          %v2419 = vadd.f32 0.0, %v2418
          %v2420 = vpop.f32.mrb[0].mxu0
          %2421 = vmatprep.mubr.f32.mxu0 0.0
          %2422 = vmatmul.mubr.f32.gmra.mrb[0].mxu0 %v2220
          %v2423 = vpop.f32.mrb[0].mxu0
          %v2424 = vadd.f32 0.0, %v2423
          %v2425 = vpop.f32.mrb[0].mxu0
          %2426 = vmatprep.mubr.f32.mxu0 0.0
          %2427 = vmatmul.mubr.f32.gmra.mrb[0].mxu0 %v2223
          %v2428 = vpop.f32.mrb[0].mxu0
          %v2429 = vadd.f32 0.0, %v2428
          %v2430 = vpop.f32.mrb[0].mxu0
          %2431 = vmatprep.mubr.f32.mxu0 0.0
          %2432 = vmatmul.mubr.f32.gmra.mrb[0].mxu0 %v2226
          %v2433 = vpop.f32.mrb[0].mxu0
          %v2434 = vadd.f32 0.0, %v2433
          %v2435 = vpop.f32.mrb[0].mxu0
          %2436 = vmatprep.mubr.f32.mxu0 0.0
          %2437 = vmatmul.mubr.f32.gmra.mrb[0].mxu0 %v2229
          %v2438 = vpop.f32.mrb[0].mxu0
          %v2439 = vadd.f32 0.0, %v2438
          %v2440 = vpop.f32.mrb[0].mxu0
          %2441 = vmatprep.mubr.f32.mxu0 0.0
          %2442 = vmatmul.mubr.f32.gmra.mrb[0].mxu0 %v2232
          %v2443 = vpop.f32.mrb[0].mxu0
          %v2444 = vadd.f32 0.0, %v2443
          %v2445 = vpop.f32.mrb[0].mxu0
          %2446 = vmatprep.mubr.f32.mxu0 0.0
          %2447 = vmatmul.mubr.f32.gmra.mrb[0].mxu0 %v2235
          %v2448 = vpop.f32.mrb[0].mxu0
          %v2449 = vadd.f32 0.0, %v2448
          %v2450 = vpop.f32.mrb[0].mxu0
          %2451 = vmatprep.mubr.f32.mxu0 0.0
          %2452 = vmatmul.mubr.f32.gmra.mrb[0].mxu0 %v2238
          %v2453 = vpop.f32.mrb[0].mxu0
          %v2454 = vadd.f32 0.0, %v2453
          %v2455 = vpop.f32.mrb[0].mxu0
          %2456 = vmatprep.mubr.f32.mxu0 0.0
          %2457 = vmatmul.mubr.f32.gmra.mrb[0].mxu0 %v2241
          %v2458 = vpop.f32.mrb[0].mxu0
          %v2459 = vadd.f32 0.0, %v2458
          %v2460 = vpop.f32.mrb[0].mxu0
          %2461 = vmatprep.mubr.f32.mxu0 0.0
          %2462 = vmatmul.mubr.f32.gmra.mrb[0].mxu0 %v2244
          %v2463 = vpop.f32.mrb[0].mxu0
          %v2464 = vadd.f32 0.0, %v2463
          %v2465 = vpop.f32.mrb[0].mxu0
          %2466 = vmatprep.mubr.f32.mxu0 0.0
          %2467 = vmatmul.mubr.f32.gmra.mrb[0].mxu0 %v2247
          %v2468 = vpop.f32.mrb[0].mxu0
          %v2469 = vadd.f32 0.0, %v2468
          %v2470 = vpop.f32.mrb[0].mxu0
          %2471 = vmatprep.mubr.f32.mxu0 0.0
          %2472 = vmatmul.mubr.f32.gmra.mrb[0].mxu0 %v2250
          %v2473 = vpop.f32.mrb[0].mxu0
          %v2474 = vadd.f32 0.0, %v2473
          %v2475 = vpop.f32.mrb[0].mxu0
          %2476 = vdwg.mxu0
          %v2477 = vtanh.pop %v2319
          %v2478 = vtanh.pop %v2324
          %v2479 = vtanh.pop %v2329
          %v2480 = vtanh.pop %v2334
          %v2481 = vtanh.pop %v2339
          %v2482 = vtanh.pop %v2344
          %v2483 = vtanh.pop %v2349
          %v2484 = vtanh.pop %v2354
          %v2485 = vtanh.pop %v2359
          %v2486 = vtanh.pop %v2364
          %v2487 = vtanh.pop %v2369
          %v2488 = vtanh.pop %v2374
          %v2489 = vtanh.pop %v2379
          %v2490 = vtanh.pop %v2384
          %v2491 = vtanh.pop %v2389
          %v2492 = vtanh.pop %v2394
          %v2493 = vtanh.pop %v2399
          %v2494 = vtanh.pop %v2404
          %v2495 = vtanh.pop %v2409
          %v2496 = vtanh.pop %v2414
          %v2497 = vtanh.pop %v2419
          %v2498 = vtanh.pop %v2424
          %v2499 = vtanh.pop %v2429
          %v2500 = vtanh.pop %v2434
          %v2501 = vtanh.pop %v2439
          %v2502 = vtanh.pop %v2444
          %v2503 = vtanh.pop %v2449
          %v2504 = vtanh.pop %v2454
          %v2505 = vtanh.pop %v2459
          %v2506 = vtanh.pop %v2464
          %v2507 = vtanh.pop %v2469
          %v2508 = vtanh.pop %v2474
          %v2510 = vlaneseq
          %v2511 = vshrl.u32 %v2510, 7
          %v2512 = vsub.s32 0, %v2511
          %v2513 = vrot.slane %v1802, %v2512
          %v2515 = vmul.f32 %v2124, %v2513
          %v2516 = vmul.f32 %v2125, %v2513
          %v2517 = vmul.f32 %v2126, %v2513
          %v2518 = vmul.f32 %v2127, %v2513
          %v2519 = vmul.f32 %v2128, %v2513
          %v2520 = vmul.f32 %v2129, %v2513
          %v2521 = vmul.f32 %v2130, %v2513
          %v2522 = vmul.f32 %v2131, %v2513
          %v2523 = vmul.f32 %v2132, %v2513
          %v2524 = vmul.f32 %v2133, %v2513
          %v2525 = vmul.f32 %v2134, %v2513
          %v2526 = vmul.f32 %v2135, %v2513
          %v2527 = vmul.f32 %v2136, %v2513
          %v2528 = vmul.f32 %v2137, %v2513
          %v2529 = vmul.f32 %v2138, %v2513
          %v2530 = vmul.f32 %v2139, %v2513
          %v2531 = vmul.f32 %v2140, %v2513
          %v2532 = vmul.f32 %v2141, %v2513
          %v2533 = vmul.f32 %v2142, %v2513
          %v2534 = vmul.f32 %v2143, %v2513
          %v2535 = vmul.f32 %v2144, %v2513
          %v2536 = vmul.f32 %v2145, %v2513
          %v2537 = vmul.f32 %v2146, %v2513
          %v2538 = vmul.f32 %v2147, %v2513
          %v2539 = vmul.f32 %v2148, %v2513
          %v2540 = vmul.f32 %v2149, %v2513
          %v2541 = vmul.f32 %v2150, %v2513
          %v2542 = vmul.f32 %v2151, %v2513
          %v2543 = vmul.f32 %v2152, %v2513
          %v2544 = vmul.f32 %v2153, %v2513
          %v2545 = vmul.f32 %v2154, %v2513
          %v2546 = vmul.f32 %v2155, %v2513
          %v2547 = vsel %vm1218, %v2515, 0.0
          %2548 = vadd.xlane.f32.xlu0 %v2547
          %v2549 = vpop.xlane.xlu0 %2548
          %v2550 = vsel %vm1218, %v2516, 0.0
          %2551 = vadd.xlane.f32.xlu0 %v2550
          %v2552 = vpop.xlane.xlu0 %2551
          %v2553 = vsel %vm1218, %v2517, 0.0
          %2554 = vadd.xlane.f32.xlu0 %v2553
          %v2555 = vpop.xlane.xlu0 %2554
          %v2556 = vsel %vm1218, %v2518, 0.0
          %2557 = vadd.xlane.f32.xlu0 %v2556
          %v2558 = vpop.xlane.xlu0 %2557
          %v2559 = vsel %vm1218, %v2519, 0.0
          %2560 = vadd.xlane.f32.xlu0 %v2559
          %v2561 = vpop.xlane.xlu0 %2560
          %v2562 = vsel %vm1218, %v2520, 0.0
          %2563 = vadd.xlane.f32.xlu0 %v2562
          %v2564 = vpop.xlane.xlu0 %2563
          %v2565 = vsel %vm1218, %v2521, 0.0
          %2566 = vadd.xlane.f32.xlu0 %v2565
          %v2567 = vpop.xlane.xlu0 %2566
          %v2568 = vsel %vm1218, %v2522, 0.0
          %2569 = vadd.xlane.f32.xlu0 %v2568
          %v2570 = vpop.xlane.xlu0 %2569
          %v2571 = vsel %vm1218, %v2523, 0.0
          %2572 = vadd.xlane.f32.xlu0 %v2571
          %v2573 = vpop.xlane.xlu0 %2572
          %v2574 = vsel %vm1218, %v2524, 0.0
          %2575 = vadd.xlane.f32.xlu0 %v2574
          %v2576 = vpop.xlane.xlu0 %2575
          %v2577 = vsel %vm1218, %v2525, 0.0
          %2578 = vadd.xlane.f32.xlu0 %v2577
          %v2579 = vpop.xlane.xlu0 %2578
          %v2580 = vsel %vm1218, %v2526, 0.0
          %2581 = vadd.xlane.f32.xlu0 %v2580
          %v2582 = vpop.xlane.xlu0 %2581
          %v2583 = vsel %vm1218, %v2527, 0.0
          %2584 = vadd.xlane.f32.xlu0 %v2583
          %v2585 = vpop.xlane.xlu0 %2584
          %v2586 = vsel %vm1218, %v2528, 0.0
          %2587 = vadd.xlane.f32.xlu0 %v2586
          %v2588 = vpop.xlane.xlu0 %2587
          %v2589 = vsel %vm1218, %v2529, 0.0
          %2590 = vadd.xlane.f32.xlu0 %v2589
          %v2591 = vpop.xlane.xlu0 %2590
          %v2592 = vsel %vm1218, %v2530, 0.0
          %2593 = vadd.xlane.f32.xlu0 %v2592
          %v2594 = vpop.xlane.xlu0 %2593
          %v2595 = vsel %vm1218, %v2531, 0.0
          %2596 = vadd.xlane.f32.xlu0 %v2595
          %v2597 = vpop.xlane.xlu0 %2596
          %v2598 = vsel %vm1218, %v2532, 0.0
          %2599 = vadd.xlane.f32.xlu0 %v2598
          %v2600 = vpop.xlane.xlu0 %2599
          %v2601 = vsel %vm1218, %v2533, 0.0
          %2602 = vadd.xlane.f32.xlu0 %v2601
          %v2603 = vpop.xlane.xlu0 %2602
          %v2604 = vsel %vm1218, %v2534, 0.0
          %2605 = vadd.xlane.f32.xlu0 %v2604
          %v2606 = vpop.xlane.xlu0 %2605
          %v2607 = vsel %vm1218, %v2535, 0.0
          %2608 = vadd.xlane.f32.xlu0 %v2607
          %v2609 = vpop.xlane.xlu0 %2608
          %v2610 = vsel %vm1218, %v2536, 0.0
          %2611 = vadd.xlane.f32.xlu0 %v2610
          %v2612 = vpop.xlane.xlu0 %2611
          %v2613 = vsel %vm1218, %v2537, 0.0
          %2614 = vadd.xlane.f32.xlu0 %v2613
          %v2615 = vpop.xlane.xlu0 %2614
          %v2616 = vsel %vm1218, %v2538, 0.0
          %2617 = vadd.xlane.f32.xlu0 %v2616
          %v2618 = vpop.xlane.xlu0 %2617
          %v2619 = vsel %vm1218, %v2539, 0.0
          %2620 = vadd.xlane.f32.xlu0 %v2619
          %v2621 = vpop.xlane.xlu0 %2620
          %v2622 = vsel %vm1218, %v2540, 0.0
          %2623 = vadd.xlane.f32.xlu0 %v2622
          %v2624 = vpop.xlane.xlu0 %2623
          %v2625 = vsel %vm1218, %v2541, 0.0
          %2626 = vadd.xlane.f32.xlu0 %v2625
          %v2627 = vpop.xlane.xlu0 %2626
          %v2628 = vsel %vm1218, %v2542, 0.0
          %2629 = vadd.xlane.f32.xlu0 %v2628
          %v2630 = vpop.xlane.xlu0 %2629
          %v2631 = vsel %vm1218, %v2543, 0.0
          %2632 = vadd.xlane.f32.xlu0 %v2631
          %v2633 = vpop.xlane.xlu0 %2632
          %v2634 = vsel %vm1218, %v2544, 0.0
          %2635 = vadd.xlane.f32.xlu0 %v2634
          %v2636 = vpop.xlane.xlu0 %2635
          %v2637 = vsel %vm1218, %v2545, 0.0
          %2638 = vadd.xlane.f32.xlu0 %v2637
          %v2639 = vpop.xlane.xlu0 %2638
          %v2640 = vsel %vm1218, %v2546, 0.0
          %2641 = vadd.xlane.f32.xlu0 %v2640
          %v2642 = vpop.xlane.xlu0 %2641
          %v2643 = vadd.f32 %v2549, 1e-06
          %v2644 = vadd.f32 %v2552, 1e-06
          %v2645 = vadd.f32 %v2555, 1e-06
          %v2646 = vadd.f32 %v2558, 1e-06
          %v2647 = vadd.f32 %v2561, 1e-06
          %v2648 = vadd.f32 %v2564, 1e-06
          %v2649 = vadd.f32 %v2567, 1e-06
          %v2650 = vadd.f32 %v2570, 1e-06
          %v2651 = vadd.f32 %v2573, 1e-06
          %v2652 = vadd.f32 %v2576, 1e-06
          %v2653 = vadd.f32 %v2579, 1e-06
          %v2654 = vadd.f32 %v2582, 1e-06
          %v2655 = vadd.f32 %v2585, 1e-06
          %v2656 = vadd.f32 %v2588, 1e-06
          %v2657 = vadd.f32 %v2591, 1e-06
          %v2658 = vadd.f32 %v2594, 1e-06
          %v2659 = vadd.f32 %v2597, 1e-06
          %v2660 = vadd.f32 %v2600, 1e-06
          %v2661 = vadd.f32 %v2603, 1e-06
          %v2662 = vadd.f32 %v2606, 1e-06
          %v2663 = vadd.f32 %v2609, 1e-06
          %v2664 = vadd.f32 %v2612, 1e-06
          %v2665 = vadd.f32 %v2615, 1e-06
          %v2666 = vadd.f32 %v2618, 1e-06
          %v2667 = vadd.f32 %v2621, 1e-06
          %v2668 = vadd.f32 %v2624, 1e-06
          %v2669 = vadd.f32 %v2627, 1e-06
          %v2670 = vadd.f32 %v2630, 1e-06
          %v2671 = vadd.f32 %v2633, 1e-06
          %v2672 = vadd.f32 %v2636, 1e-06
          %v2673 = vadd.f32 %v2639, 1e-06
          %v2674 = vadd.f32 %v2642, 1e-06
          %v2675 = vmul.f32 %v2477, %v2513
          %v2676 = vmul.f32 %v2478, %v2513
          %v2677 = vmul.f32 %v2479, %v2513
          %v2678 = vmul.f32 %v2480, %v2513
          %v2679 = vmul.f32 %v2481, %v2513
          %v2680 = vmul.f32 %v2482, %v2513
          %v2681 = vmul.f32 %v2483, %v2513
          %v2682 = vmul.f32 %v2484, %v2513
          %v2683 = vmul.f32 %v2485, %v2513
          %v2684 = vmul.f32 %v2486, %v2513
          %v2685 = vmul.f32 %v2487, %v2513
          %v2686 = vmul.f32 %v2488, %v2513
          %v2687 = vmul.f32 %v2489, %v2513
          %v2688 = vmul.f32 %v2490, %v2513
          %v2689 = vmul.f32 %v2491, %v2513
          %v2690 = vmul.f32 %v2492, %v2513
          %v2691 = vmul.f32 %v2493, %v2513
          %v2692 = vmul.f32 %v2494, %v2513
          %v2693 = vmul.f32 %v2495, %v2513
          %v2694 = vmul.f32 %v2496, %v2513
          %v2695 = vmul.f32 %v2497, %v2513
          %v2696 = vmul.f32 %v2498, %v2513
          %v2697 = vmul.f32 %v2499, %v2513
          %v2698 = vmul.f32 %v2500, %v2513
          %v2699 = vmul.f32 %v2501, %v2513
          %v2700 = vmul.f32 %v2502, %v2513
          %v2701 = vmul.f32 %v2503, %v2513
          %v2702 = vmul.f32 %v2504, %v2513
          %v2703 = vmul.f32 %v2505, %v2513
          %v2704 = vmul.f32 %v2506, %v2513
          %v2705 = vmul.f32 %v2507, %v2513
          %v2706 = vmul.f32 %v2508, %v2513
          %v2707 = vsel %vm1218, %v2675, 0.0
          %2708 = vadd.xlane.f32.xlu0 %v2707
          %v2709 = vpop.xlane.xlu0 %2708
          %v2710 = vsel %vm1218, %v2676, 0.0
          %2711 = vadd.xlane.f32.xlu0 %v2710
          %v2712 = vpop.xlane.xlu0 %2711
          %v2713 = vsel %vm1218, %v2677, 0.0
          %2714 = vadd.xlane.f32.xlu0 %v2713
          %v2715 = vpop.xlane.xlu0 %2714
          %v2716 = vsel %vm1218, %v2678, 0.0
          %2717 = vadd.xlane.f32.xlu0 %v2716
          %v2718 = vpop.xlane.xlu0 %2717
          %v2719 = vsel %vm1218, %v2679, 0.0
          %2720 = vadd.xlane.f32.xlu0 %v2719
          %v2721 = vpop.xlane.xlu0 %2720
          %v2722 = vsel %vm1218, %v2680, 0.0
          %2723 = vadd.xlane.f32.xlu0 %v2722
          %v2724 = vpop.xlane.xlu0 %2723
          %v2725 = vsel %vm1218, %v2681, 0.0
          %2726 = vadd.xlane.f32.xlu0 %v2725
          %v2727 = vpop.xlane.xlu0 %2726
          %v2728 = vsel %vm1218, %v2682, 0.0
          %2729 = vadd.xlane.f32.xlu0 %v2728
          %v2730 = vpop.xlane.xlu0 %2729
          %v2731 = vsel %vm1218, %v2683, 0.0
          %2732 = vadd.xlane.f32.xlu0 %v2731
          %v2733 = vpop.xlane.xlu0 %2732
          %v2734 = vsel %vm1218, %v2684, 0.0
          %2735 = vadd.xlane.f32.xlu0 %v2734
          %v2736 = vpop.xlane.xlu0 %2735
          %v2737 = vsel %vm1218, %v2685, 0.0
          %2738 = vadd.xlane.f32.xlu0 %v2737
          %v2739 = vpop.xlane.xlu0 %2738
          %v2740 = vsel %vm1218, %v2686, 0.0
          %2741 = vadd.xlane.f32.xlu0 %v2740
          %v2742 = vpop.xlane.xlu0 %2741
          %v2743 = vsel %vm1218, %v2687, 0.0
          %2744 = vadd.xlane.f32.xlu0 %v2743
          %v2745 = vpop.xlane.xlu0 %2744
          %v2746 = vsel %vm1218, %v2688, 0.0
          %2747 = vadd.xlane.f32.xlu0 %v2746
          %v2748 = vpop.xlane.xlu0 %2747
          %v2749 = vsel %vm1218, %v2689, 0.0
          %2750 = vadd.xlane.f32.xlu0 %v2749
          %v2751 = vpop.xlane.xlu0 %2750
          %v2752 = vsel %vm1218, %v2690, 0.0
          %2753 = vadd.xlane.f32.xlu0 %v2752
          %v2754 = vpop.xlane.xlu0 %2753
          %v2755 = vsel %vm1218, %v2691, 0.0
          %2756 = vadd.xlane.f32.xlu0 %v2755
          %v2757 = vpop.xlane.xlu0 %2756
          %v2758 = vsel %vm1218, %v2692, 0.0
          %2759 = vadd.xlane.f32.xlu0 %v2758
          %v2760 = vpop.xlane.xlu0 %2759
          %v2761 = vsel %vm1218, %v2693, 0.0
          %2762 = vadd.xlane.f32.xlu0 %v2761
          %v2763 = vpop.xlane.xlu0 %2762
          %v2764 = vsel %vm1218, %v2694, 0.0
          %2765 = vadd.xlane.f32.xlu0 %v2764
          %v2766 = vpop.xlane.xlu0 %2765
          %v2767 = vsel %vm1218, %v2695, 0.0
          %2768 = vadd.xlane.f32.xlu0 %v2767
          %v2769 = vpop.xlane.xlu0 %2768
          %v2770 = vsel %vm1218, %v2696, 0.0
          %2771 = vadd.xlane.f32.xlu0 %v2770
          %v2772 = vpop.xlane.xlu0 %2771
          %v2773 = vsel %vm1218, %v2697, 0.0
          %2774 = vadd.xlane.f32.xlu0 %v2773
          %v2775 = vpop.xlane.xlu0 %2774
          %v2776 = vsel %vm1218, %v2698, 0.0
          %2777 = vadd.xlane.f32.xlu0 %v2776
          %v2778 = vpop.xlane.xlu0 %2777
          %v2779 = vsel %vm1218, %v2699, 0.0
          %2780 = vadd.xlane.f32.xlu0 %v2779
          %v2781 = vpop.xlane.xlu0 %2780
          %v2782 = vsel %vm1218, %v2700, 0.0
          %2783 = vadd.xlane.f32.xlu0 %v2782
          %v2784 = vpop.xlane.xlu0 %2783
          %v2785 = vsel %vm1218, %v2701, 0.0
          %2786 = vadd.xlane.f32.xlu0 %v2785
          %v2787 = vpop.xlane.xlu0 %2786
          %v2788 = vsel %vm1218, %v2702, 0.0
          %2789 = vadd.xlane.f32.xlu0 %v2788
          %v2790 = vpop.xlane.xlu0 %2789
          %v2791 = vsel %vm1218, %v2703, 0.0
          %2792 = vadd.xlane.f32.xlu0 %v2791
          %v2793 = vpop.xlane.xlu0 %2792
          %v2794 = vsel %vm1218, %v2704, 0.0
          %2795 = vadd.xlane.f32.xlu0 %v2794
          %v2796 = vpop.xlane.xlu0 %2795
          %v2797 = vsel %vm1218, %v2705, 0.0
          %2798 = vadd.xlane.f32.xlu0 %v2797
          %v2799 = vpop.xlane.xlu0 %2798
          %v2800 = vsel %vm1218, %v2706, 0.0
          %2801 = vadd.xlane.f32.xlu0 %v2800
          %v2802 = vpop.xlane.xlu0 %2801
          %v2803 = vadd.f32 %v2709, 1e-06
          %v2804 = vadd.f32 %v2712, 1e-06
          %v2805 = vadd.f32 %v2715, 1e-06
          %v2806 = vadd.f32 %v2718, 1e-06
          %v2807 = vadd.f32 %v2721, 1e-06
          %v2808 = vadd.f32 %v2724, 1e-06
          %v2809 = vadd.f32 %v2727, 1e-06
          %v2810 = vadd.f32 %v2730, 1e-06
          %v2811 = vadd.f32 %v2733, 1e-06
          %v2812 = vadd.f32 %v2736, 1e-06
          %v2813 = vadd.f32 %v2739, 1e-06
          %v2814 = vadd.f32 %v2742, 1e-06
          %v2815 = vadd.f32 %v2745, 1e-06
          %v2816 = vadd.f32 %v2748, 1e-06
          %v2817 = vadd.f32 %v2751, 1e-06
          %v2818 = vadd.f32 %v2754, 1e-06
          %v2819 = vadd.f32 %v2757, 1e-06
          %v2820 = vadd.f32 %v2760, 1e-06
          %v2821 = vadd.f32 %v2763, 1e-06
          %v2822 = vadd.f32 %v2766, 1e-06
          %v2823 = vadd.f32 %v2769, 1e-06
          %v2824 = vadd.f32 %v2772, 1e-06
          %v2825 = vadd.f32 %v2775, 1e-06
          %v2826 = vadd.f32 %v2778, 1e-06
          %v2827 = vadd.f32 %v2781, 1e-06
          %v2828 = vadd.f32 %v2784, 1e-06
          %v2829 = vadd.f32 %v2787, 1e-06
          %v2830 = vadd.f32 %v2790, 1e-06
          %v2831 = vadd.f32 %v2793, 1e-06
          %v2832 = vadd.f32 %v2796, 1e-06
          %v2833 = vadd.f32 %v2799, 1e-06
          %v2834 = vadd.f32 %v2802, 1e-06
          %v2835 = vmax.f32 %v2643, %v2803
          %v2836 = vmax.f32 %v2644, %v2804
          %v2837 = vmax.f32 %v2645, %v2805
          %v2838 = vmax.f32 %v2646, %v2806
          %v2839 = vmax.f32 %v2647, %v2807
          %v2840 = vmax.f32 %v2648, %v2808
          %v2841 = vmax.f32 %v2649, %v2809
          %v2842 = vmax.f32 %v2650, %v2810
          %v2843 = vmax.f32 %v2651, %v2811
          %v2844 = vmax.f32 %v2652, %v2812
          %v2845 = vmax.f32 %v2653, %v2813
          %v2846 = vmax.f32 %v2654, %v2814
          %v2847 = vmax.f32 %v2655, %v2815
          %v2848 = vmax.f32 %v2656, %v2816
          %v2849 = vmax.f32 %v2657, %v2817
          %v2850 = vmax.f32 %v2658, %v2818
          %v2851 = vmax.f32 %v2659, %v2819
          %v2852 = vmax.f32 %v2660, %v2820
          %v2853 = vmax.f32 %v2661, %v2821
          %v2854 = vmax.f32 %v2662, %v2822
          %v2855 = vmax.f32 %v2663, %v2823
          %v2856 = vmax.f32 %v2664, %v2824
          %v2857 = vmax.f32 %v2665, %v2825
          %v2858 = vmax.f32 %v2666, %v2826
          %v2859 = vmax.f32 %v2667, %v2827
          %v2860 = vmax.f32 %v2668, %v2828
          %v2861 = vmax.f32 %v2669, %v2829
          %v2862 = vmax.f32 %v2670, %v2830
          %v2863 = vmax.f32 %v2671, %v2831
          %v2864 = vmax.f32 %v2672, %v2832
          %v2865 = vmax.f32 %v2673, %v2833
          %v2866 = vmax.f32 %v2674, %v2834
          %v2867 = vsub.f32 %v2643, %v2835
          %v2868 = vsub.f32 %v2644, %v2836
          %v2869 = vsub.f32 %v2645, %v2837
          %v2870 = vsub.f32 %v2646, %v2838
          %v2871 = vsub.f32 %v2647, %v2839
          %v2872 = vsub.f32 %v2648, %v2840
          %v2873 = vsub.f32 %v2649, %v2841
          %v2874 = vsub.f32 %v2650, %v2842
          %v2875 = vsub.f32 %v2651, %v2843
          %v2876 = vsub.f32 %v2652, %v2844
          %v2877 = vsub.f32 %v2653, %v2845
          %v2878 = vsub.f32 %v2654, %v2846
          %v2879 = vsub.f32 %v2655, %v2847
          %v2880 = vsub.f32 %v2656, %v2848
          %v2881 = vsub.f32 %v2657, %v2849
          %v2882 = vsub.f32 %v2658, %v2850
          %v2883 = vsub.f32 %v2659, %v2851
          %v2884 = vsub.f32 %v2660, %v2852
          %v2885 = vsub.f32 %v2661, %v2853
          %v2886 = vsub.f32 %v2662, %v2854
          %v2887 = vsub.f32 %v2663, %v2855
          %v2888 = vsub.f32 %v2664, %v2856
          %v2889 = vsub.f32 %v2665, %v2857
          %v2890 = vsub.f32 %v2666, %v2858
          %v2891 = vsub.f32 %v2667, %v2859
          %v2892 = vsub.f32 %v2668, %v2860
          %v2893 = vsub.f32 %v2669, %v2861
          %v2894 = vsub.f32 %v2670, %v2862
          %v2895 = vsub.f32 %v2671, %v2863
          %v2896 = vsub.f32 %v2672, %v2864
          %v2897 = vsub.f32 %v2673, %v2865
          %v2898 = vsub.f32 %v2674, %v2866
          %v2899 = vmul.f32 %v2867, 1.442695
          %v2900 = vpow.pop %v2899
          %v2901 = vmul.f32 %v2868, 1.442695
          %v2902 = vpow.pop %v2901
          %v2903 = vmul.f32 %v2869, 1.442695
          %v2904 = vpow.pop %v2903
          %v2905 = vmul.f32 %v2870, 1.442695
          %v2906 = vpow.pop %v2905
          %v2907 = vmul.f32 %v2871, 1.442695
          %v2908 = vpow.pop %v2907
          %v2909 = vmul.f32 %v2872, 1.442695
          %v2910 = vpow.pop %v2909
          %v2911 = vmul.f32 %v2873, 1.442695
          %v2912 = vpow.pop %v2911
          %v2913 = vmul.f32 %v2874, 1.442695
          %v2914 = vpow.pop %v2913
          %v2915 = vmul.f32 %v2875, 1.442695
          %v2916 = vpow.pop %v2915
          %v2917 = vmul.f32 %v2876, 1.442695
          %v2918 = vpow.pop %v2917
          %v2919 = vmul.f32 %v2877, 1.442695
          %v2920 = vpow.pop %v2919
          %v2921 = vmul.f32 %v2878, 1.442695
          %v2922 = vpow.pop %v2921
          %v2923 = vmul.f32 %v2879, 1.442695
          %v2924 = vpow.pop %v2923
          %v2925 = vmul.f32 %v2880, 1.442695
          %v2926 = vpow.pop %v2925
          %v2927 = vmul.f32 %v2881, 1.442695
          %v2928 = vpow.pop %v2927
          %v2929 = vmul.f32 %v2882, 1.442695
          %v2930 = vpow.pop %v2929
          %v2931 = vmul.f32 %v2883, 1.442695
          %v2932 = vpow.pop %v2931
          %v2933 = vmul.f32 %v2884, 1.442695
          %v2934 = vpow.pop %v2933
          %v2935 = vmul.f32 %v2885, 1.442695
          %v2936 = vpow.pop %v2935
          %v2937 = vmul.f32 %v2886, 1.442695
          %v2938 = vpow.pop %v2937
          %v2939 = vmul.f32 %v2887, 1.442695
          %v2940 = vpow.pop %v2939
          %v2941 = vmul.f32 %v2888, 1.442695
          %v2942 = vpow.pop %v2941
          %v2943 = vmul.f32 %v2889, 1.442695
          %v2944 = vpow.pop %v2943
          %v2945 = vmul.f32 %v2890, 1.442695
          %v2946 = vpow.pop %v2945
          %v2947 = vmul.f32 %v2891, 1.442695
          %v2948 = vpow.pop %v2947
          %v2949 = vmul.f32 %v2892, 1.442695
          %v2950 = vpow.pop %v2949
          %v2951 = vmul.f32 %v2893, 1.442695
          %v2952 = vpow.pop %v2951
          %v2953 = vmul.f32 %v2894, 1.442695
          %v2954 = vpow.pop %v2953
          %v2955 = vmul.f32 %v2895, 1.442695
          %v2956 = vpow.pop %v2955
          %v2957 = vmul.f32 %v2896, 1.442695
          %v2958 = vpow.pop %v2957
          %v2959 = vmul.f32 %v2897, 1.442695
          %v2960 = vpow.pop %v2959
          %v2961 = vmul.f32 %v2898, 1.442695
          %v2962 = vpow.pop %v2961
          %v2963 = vsub.f32 %v2803, %v2835
          %v2964 = vsub.f32 %v2804, %v2836
          %v2965 = vsub.f32 %v2805, %v2837
          %v2966 = vsub.f32 %v2806, %v2838
          %v2967 = vsub.f32 %v2807, %v2839
          %v2968 = vsub.f32 %v2808, %v2840
          %v2969 = vsub.f32 %v2809, %v2841
          %v2970 = vsub.f32 %v2810, %v2842
          %v2971 = vsub.f32 %v2811, %v2843
          %v2972 = vsub.f32 %v2812, %v2844
          %v2973 = vsub.f32 %v2813, %v2845
          %v2974 = vsub.f32 %v2814, %v2846
          %v2975 = vsub.f32 %v2815, %v2847
          %v2976 = vsub.f32 %v2816, %v2848
          %v2977 = vsub.f32 %v2817, %v2849
          %v2978 = vsub.f32 %v2818, %v2850
          %v2979 = vsub.f32 %v2819, %v2851
          %v2980 = vsub.f32 %v2820, %v2852
          %v2981 = vsub.f32 %v2821, %v2853
          %v2982 = vsub.f32 %v2822, %v2854
          %v2983 = vsub.f32 %v2823, %v2855
          %v2984 = vsub.f32 %v2824, %v2856
          %v2985 = vsub.f32 %v2825, %v2857
          %v2986 = vsub.f32 %v2826, %v2858
          %v2987 = vsub.f32 %v2827, %v2859
          %v2988 = vsub.f32 %v2828, %v2860
          %v2989 = vsub.f32 %v2829, %v2861
          %v2990 = vsub.f32 %v2830, %v2862
          %v2991 = vsub.f32 %v2831, %v2863
          %v2992 = vsub.f32 %v2832, %v2864
          %v2993 = vsub.f32 %v2833, %v2865
          %v2994 = vsub.f32 %v2834, %v2866
          %v2995 = vmul.f32 %v2963, 1.442695
          %v2996 = vpow.pop %v2995
          %v2997 = vmul.f32 %v2964, 1.442695
          %v2998 = vpow.pop %v2997
          %v2999 = vmul.f32 %v2965, 1.442695
          %v3000 = vpow.pop %v2999
          %v3001 = vmul.f32 %v2966, 1.442695
          %v3002 = vpow.pop %v3001
          %v3003 = vmul.f32 %v2967, 1.442695
          %v3004 = vpow.pop %v3003
          %v3005 = vmul.f32 %v2968, 1.442695
          %v3006 = vpow.pop %v3005
          %v3007 = vmul.f32 %v2969, 1.442695
          %v3008 = vpow.pop %v3007
          %v3009 = vmul.f32 %v2970, 1.442695
          %v3010 = vpow.pop %v3009
          %v3011 = vmul.f32 %v2971, 1.442695
          %v3012 = vpow.pop %v3011
          %v3013 = vmul.f32 %v2972, 1.442695
          %v3014 = vpow.pop %v3013
          %v3015 = vmul.f32 %v2973, 1.442695
          %v3016 = vpow.pop %v3015
          %v3017 = vmul.f32 %v2974, 1.442695
          %v3018 = vpow.pop %v3017
          %v3019 = vmul.f32 %v2975, 1.442695
          %v3020 = vpow.pop %v3019
          %v3021 = vmul.f32 %v2976, 1.442695
          %v3022 = vpow.pop %v3021
          %v3023 = vmul.f32 %v2977, 1.442695
          %v3024 = vpow.pop %v3023
          %v3025 = vmul.f32 %v2978, 1.442695
          %v3026 = vpow.pop %v3025
          %v3027 = vmul.f32 %v2979, 1.442695
          %v3028 = vpow.pop %v3027
          %v3029 = vmul.f32 %v2980, 1.442695
          %v3030 = vpow.pop %v3029
          %v3031 = vmul.f32 %v2981, 1.442695
          %v3032 = vpow.pop %v3031
          %v3033 = vmul.f32 %v2982, 1.442695
          %v3034 = vpow.pop %v3033
          %v3035 = vmul.f32 %v2983, 1.442695
          %v3036 = vpow.pop %v3035
          %v3037 = vmul.f32 %v2984, 1.442695
          %v3038 = vpow.pop %v3037
          %v3039 = vmul.f32 %v2985, 1.442695
          %v3040 = vpow.pop %v3039
          %v3041 = vmul.f32 %v2986, 1.442695
          %v3042 = vpow.pop %v3041
          %v3043 = vmul.f32 %v2987, 1.442695
          %v3044 = vpow.pop %v3043
          %v3045 = vmul.f32 %v2988, 1.442695
          %v3046 = vpow.pop %v3045
          %v3047 = vmul.f32 %v2989, 1.442695
          %v3048 = vpow.pop %v3047
          %v3049 = vmul.f32 %v2990, 1.442695
          %v3050 = vpow.pop %v3049
          %v3051 = vmul.f32 %v2991, 1.442695
          %v3052 = vpow.pop %v3051
          %v3053 = vmul.f32 %v2992, 1.442695
          %v3054 = vpow.pop %v3053
          %v3055 = vmul.f32 %v2993, 1.442695
          %v3056 = vpow.pop %v3055
          %v3057 = vmul.f32 %v2994, 1.442695
          %v3058 = vpow.pop %v3057
          %v3059 = vadd.f32 %v2900, %v2996
          %v3060 = vadd.f32 %v2902, %v2998
          %v3061 = vadd.f32 %v2904, %v3000
          %v3062 = vadd.f32 %v2906, %v3002
          %v3063 = vadd.f32 %v2908, %v3004
          %v3064 = vadd.f32 %v2910, %v3006
          %v3065 = vadd.f32 %v2912, %v3008
          %v3066 = vadd.f32 %v2914, %v3010
          %v3067 = vadd.f32 %v2916, %v3012
          %v3068 = vadd.f32 %v2918, %v3014
          %v3069 = vadd.f32 %v2920, %v3016
          %v3070 = vadd.f32 %v2922, %v3018
          %v3071 = vadd.f32 %v2924, %v3020
          %v3072 = vadd.f32 %v2926, %v3022
          %v3073 = vadd.f32 %v2928, %v3024
          %v3074 = vadd.f32 %v2930, %v3026
          %v3075 = vadd.f32 %v2932, %v3028
          %v3076 = vadd.f32 %v2934, %v3030
          %v3077 = vadd.f32 %v2936, %v3032
          %v3078 = vadd.f32 %v2938, %v3034
          %v3079 = vadd.f32 %v2940, %v3036
          %v3080 = vadd.f32 %v2942, %v3038
          %v3081 = vadd.f32 %v2944, %v3040
          %v3082 = vadd.f32 %v2946, %v3042
          %v3083 = vadd.f32 %v2948, %v3044
          %v3084 = vadd.f32 %v2950, %v3046
          %v3085 = vadd.f32 %v2952, %v3048
          %v3086 = vadd.f32 %v2954, %v3050
          %v3087 = vadd.f32 %v2956, %v3052
          %v3088 = vadd.f32 %v2958, %v3054
          %v3089 = vadd.f32 %v2960, %v3056
          %v3090 = vadd.f32 %v2962, %v3058
          %v3091 = vrcp.pop %v3059
          %v3092 = vrcp.pop %v3060
          %v3093 = vrcp.pop %v3061
          %v3094 = vrcp.pop %v3062
          %v3095 = vrcp.pop %v3063
          %v3096 = vrcp.pop %v3064
          %v3097 = vrcp.pop %v3065
          %v3098 = vrcp.pop %v3066
          %v3099 = vrcp.pop %v3067
          %v3100 = vrcp.pop %v3068
          %v3101 = vrcp.pop %v3069
          %v3102 = vrcp.pop %v3070
          %v3103 = vrcp.pop %v3071
          %v3104 = vrcp.pop %v3072
          %v3105 = vrcp.pop %v3073
          %v3106 = vrcp.pop %v3074
          %v3107 = vrcp.pop %v3075
          %v3108 = vrcp.pop %v3076
          %v3109 = vrcp.pop %v3077
          %v3110 = vrcp.pop %v3078
          %v3111 = vrcp.pop %v3079
          %v3112 = vrcp.pop %v3080
          %v3113 = vrcp.pop %v3081
          %v3114 = vrcp.pop %v3082
          %v3115 = vrcp.pop %v3083
          %v3116 = vrcp.pop %v3084
          %v3117 = vrcp.pop %v3085
          %v3118 = vrcp.pop %v3086
          %v3119 = vrcp.pop %v3087
          %v3120 = vrcp.pop %v3088
          %v3121 = vrcp.pop %v3089
          %v3122 = vrcp.pop %v3090
          %v3123 = vmul.f32 %v2900, %v3091
          %v3124 = vmul.f32 %v2902, %v3092
          %v3125 = vmul.f32 %v2904, %v3093
          %v3126 = vmul.f32 %v2906, %v3094
          %v3127 = vmul.f32 %v2908, %v3095
          %v3128 = vmul.f32 %v2910, %v3096
          %v3129 = vmul.f32 %v2912, %v3097
          %v3130 = vmul.f32 %v2914, %v3098
          %v3131 = vmul.f32 %v2916, %v3099
          %v3132 = vmul.f32 %v2918, %v3100
          %v3133 = vmul.f32 %v2920, %v3101
          %v3134 = vmul.f32 %v2922, %v3102
          %v3135 = vmul.f32 %v2924, %v3103
          %v3136 = vmul.f32 %v2926, %v3104
          %v3137 = vmul.f32 %v2928, %v3105
          %v3138 = vmul.f32 %v2930, %v3106
          %v3139 = vmul.f32 %v2932, %v3107
          %v3140 = vmul.f32 %v2934, %v3108
          %v3141 = vmul.f32 %v2936, %v3109
          %v3142 = vmul.f32 %v2938, %v3110
          %v3143 = vmul.f32 %v2940, %v3111
          %v3144 = vmul.f32 %v2942, %v3112
          %v3145 = vmul.f32 %v2944, %v3113
          %v3146 = vmul.f32 %v2946, %v3114
          %v3147 = vmul.f32 %v2948, %v3115
          %v3148 = vmul.f32 %v2950, %v3116
          %v3149 = vmul.f32 %v2952, %v3117
          %v3150 = vmul.f32 %v2954, %v3118
          %v3151 = vmul.f32 %v2956, %v3119
          %v3152 = vmul.f32 %v2958, %v3120
          %v3153 = vmul.f32 %v2960, %v3121
          %v3154 = vmul.f32 %v2962, %v3122
          %v3155 = vmul.f32 %v2996, %v3091
          %v3156 = vmul.f32 %v2998, %v3092
          %v3157 = vmul.f32 %v3000, %v3093
          %v3158 = vmul.f32 %v3002, %v3094
          %v3159 = vmul.f32 %v3004, %v3095
          %v3160 = vmul.f32 %v3006, %v3096
          %v3161 = vmul.f32 %v3008, %v3097
          %v3162 = vmul.f32 %v3010, %v3098
          %v3163 = vmul.f32 %v3012, %v3099
          %v3164 = vmul.f32 %v3014, %v3100
          %v3165 = vmul.f32 %v3016, %v3101
          %v3166 = vmul.f32 %v3018, %v3102
          %v3167 = vmul.f32 %v3020, %v3103
          %v3168 = vmul.f32 %v3022, %v3104
          %v3169 = vmul.f32 %v3024, %v3105
          %v3170 = vmul.f32 %v3026, %v3106
          %v3171 = vmul.f32 %v3028, %v3107
          %v3172 = vmul.f32 %v3030, %v3108
          %v3173 = vmul.f32 %v3032, %v3109
          %v3174 = vmul.f32 %v3034, %v3110
          %v3175 = vmul.f32 %v3036, %v3111
          %v3176 = vmul.f32 %v3038, %v3112
          %v3177 = vmul.f32 %v3040, %v3113
          %v3178 = vmul.f32 %v3042, %v3114
          %v3179 = vmul.f32 %v3044, %v3115
          %v3180 = vmul.f32 %v3046, %v3116
          %v3181 = vmul.f32 %v3048, %v3117
          %v3182 = vmul.f32 %v3050, %v3118
          %v3183 = vmul.f32 %v3052, %v3119
          %v3184 = vmul.f32 %v3054, %v3120
          %v3185 = vmul.f32 %v3056, %v3121
          %v3186 = vmul.f32 %v3058, %v3122
          %v3187 = vmul.f32 %v3123, %v1672
          %v3188 = vmul.f32 %v3124, %v1673
          %v3189 = vmul.f32 %v3125, %v1674
          %v3190 = vmul.f32 %v3126, %v1675
          %v3191 = vmul.f32 %v3127, %v1676
          %v3192 = vmul.f32 %v3128, %v1677
          %v3193 = vmul.f32 %v3129, %v1678
          %v3194 = vmul.f32 %v3130, %v1679
          %v3195 = vmul.f32 %v3131, %v1680
          %v3196 = vmul.f32 %v3132, %v1681
          %v3197 = vmul.f32 %v3133, %v1682
          %v3198 = vmul.f32 %v3134, %v1683
          %v3199 = vmul.f32 %v3135, %v1684
          %v3200 = vmul.f32 %v3136, %v1685
          %v3201 = vmul.f32 %v3137, %v1686
          %v3202 = vmul.f32 %v3138, %v1687
          %v3203 = vmul.f32 %v3139, %v1688
          %v3204 = vmul.f32 %v3140, %v1689
          %v3205 = vmul.f32 %v3141, %v1690
          %v3206 = vmul.f32 %v3142, %v1691
          %v3207 = vmul.f32 %v3143, %v1692
          %v3208 = vmul.f32 %v3144, %v1693
          %v3209 = vmul.f32 %v3145, %v1694
          %v3210 = vmul.f32 %v3146, %v1695
          %v3211 = vmul.f32 %v3147, %v1696
          %v3212 = vmul.f32 %v3148, %v1697
          %v3213 = vmul.f32 %v3149, %v1698
          %v3214 = vmul.f32 %v3150, %v1699
          %v3215 = vmul.f32 %v3151, %v1700
          %v3216 = vmul.f32 %v3152, %v1701
          %v3217 = vmul.f32 %v3153, %v1702
          %v3218 = vmul.f32 %v3154, %v1703
          %v3219 = vmul.f32 %v3155, %v1704
          %v3220 = vmul.f32 %v3156, %v1705
          %v3221 = vmul.f32 %v3157, %v1706
          %v3222 = vmul.f32 %v3158, %v1707
          %v3223 = vmul.f32 %v3159, %v1708
          %v3224 = vmul.f32 %v3160, %v1709
          %v3225 = vmul.f32 %v3161, %v1710
          %v3226 = vmul.f32 %v3162, %v1711
          %v3227 = vmul.f32 %v3163, %v1712
          %v3228 = vmul.f32 %v3164, %v1713
          %v3229 = vmul.f32 %v3165, %v1714
          %v3230 = vmul.f32 %v3166, %v1715
          %v3231 = vmul.f32 %v3167, %v1716
          %v3232 = vmul.f32 %v3168, %v1717
          %v3233 = vmul.f32 %v3169, %v1718
          %v3234 = vmul.f32 %v3170, %v1719
          %v3235 = vmul.f32 %v3171, %v1720
          %v3236 = vmul.f32 %v3172, %v1721
          %v3237 = vmul.f32 %v3173, %v1722
          %v3238 = vmul.f32 %v3174, %v1723
          %v3239 = vmul.f32 %v3175, %v1724
          %v3240 = vmul.f32 %v3176, %v1725
          %v3241 = vmul.f32 %v3177, %v1726
          %v3242 = vmul.f32 %v3178, %v1727
          %v3243 = vmul.f32 %v3179, %v1728
          %v3244 = vmul.f32 %v3180, %v1729
          %v3245 = vmul.f32 %v3181, %v1730
          %v3246 = vmul.f32 %v3182, %v1731
          %v3247 = vmul.f32 %v3183, %v1732
          %v3248 = vmul.f32 %v3184, %v1733
          %v3249 = vmul.f32 %v3185, %v1734
          %v3250 = vmul.f32 %v3186, %v1735
          %v3251 = vadd.f32 %v3187, %v3219
          %v3252 = vadd.f32 %v3188, %v3220
          %v3253 = vadd.f32 %v3189, %v3221
          %v3254 = vadd.f32 %v3190, %v3222
          %v3255 = vadd.f32 %v3191, %v3223
          %v3256 = vadd.f32 %v3192, %v3224
          %v3257 = vadd.f32 %v3193, %v3225
          %v3258 = vadd.f32 %v3194, %v3226
          %v3259 = vadd.f32 %v3195, %v3227
          %v3260 = vadd.f32 %v3196, %v3228
          %v3261 = vadd.f32 %v3197, %v3229
          %v3262 = vadd.f32 %v3198, %v3230
          %v3263 = vadd.f32 %v3199, %v3231
          %v3264 = vadd.f32 %v3200, %v3232
          %v3265 = vadd.f32 %v3201, %v3233
          %v3266 = vadd.f32 %v3202, %v3234
          %v3267 = vadd.f32 %v3203, %v3235
          %v3268 = vadd.f32 %v3204, %v3236
          %v3269 = vadd.f32 %v3205, %v3237
          %v3270 = vadd.f32 %v3206, %v3238
          %v3271 = vadd.f32 %v3207, %v3239
          %v3272 = vadd.f32 %v3208, %v3240
          %v3273 = vadd.f32 %v3209, %v3241
          %v3274 = vadd.f32 %v3210, %v3242
          %v3275 = vadd.f32 %v3211, %v3243
          %v3276 = vadd.f32 %v3212, %v3244
          %v3277 = vadd.f32 %v3213, %v3245
          %v3278 = vadd.f32 %v3214, %v3246
          %v3279 = vadd.f32 %v3215, %v3247
          %v3280 = vadd.f32 %v3216, %v3248
          %v3281 = vadd.f32 %v3217, %v3249
          %v3282 = vadd.f32 %v3218, %v3250
          %3283 = vst.msk [vmem:[%s744] sm:$0xff] %vm1218, %v3251
          %3284 = vst.msk [vmem:[%s744 + $0x8] sm:$0xff] %vm1218, %v3252
          %3285 = vst.msk [vmem:[%s744 + $0x10] sm:$0xff] %vm1218, %v3253
          %3286 = vst.msk [vmem:[%s744 + $0x18] sm:$0xff] %vm1218, %v3254
          %3287 = vst.msk [vmem:[%s744 + $0x20] sm:$0xff] %vm1218, %v3255
          %3288 = vst.msk [vmem:[%s744 + $0x28] sm:$0xff] %vm1218, %v3256
          %3289 = vst.msk [vmem:[%s744 + $0x30] sm:$0xff] %vm1218, %v3257
          %3290 = vst.msk [vmem:[%s744 + $0x38] sm:$0xff] %vm1218, %v3258
          %3291 = vst.msk [vmem:[%s744 + $0x40] sm:$0xff] %vm1218, %v3259
          %3292 = vst.msk [vmem:[%s744 + $0x48] sm:$0xff] %vm1218, %v3260
          %3293 = vst.msk [vmem:[%s744 + $0x50] sm:$0xff] %vm1218, %v3261
          %3294 = vst.msk [vmem:[%s744 + $0x58] sm:$0xff] %vm1218, %v3262
          %3295 = vst.msk [vmem:[%s744 + $0x60] sm:$0xff] %vm1218, %v3263
          %3296 = vst.msk [vmem:[%s744 + $0x68] sm:$0xff] %vm1218, %v3264
          %3297 = vst.msk [vmem:[%s744 + $0x70] sm:$0xff] %vm1218, %v3265
          %3298 = vst.msk [vmem:[%s744 + $0x78] sm:$0xff] %vm1218, %v3266
          %3299 = vst.msk [vmem:[%s744 + $0x80] sm:$0xff] %vm1218, %v3267
          %3300 = vst.msk [vmem:[%s744 + $0x88] sm:$0xff] %vm1218, %v3268
          %3301 = vst.msk [vmem:[%s744 + $0x90] sm:$0xff] %vm1218, %v3269
          %3302 = vst.msk [vmem:[%s744 + $0x98] sm:$0xff] %vm1218, %v3270
          %3303 = vst.msk [vmem:[%s744 + $0xa0] sm:$0xff] %vm1218, %v3271
          %3304 = vst.msk [vmem:[%s744 + $0xa8] sm:$0xff] %vm1218, %v3272
          %3305 = vst.msk [vmem:[%s744 + $0xb0] sm:$0xff] %vm1218, %v3273
          %3306 = vst.msk [vmem:[%s744 + $0xb8] sm:$0xff] %vm1218, %v3274
          %3307 = vst.msk [vmem:[%s744 + $0xc0] sm:$0xff] %vm1218, %v3275
          %3308 = vst.msk [vmem:[%s744 + $0xc8] sm:$0xff] %vm1218, %v3276
          %3309 = vst.msk [vmem:[%s744 + $0xd0] sm:$0xff] %vm1218, %v3277
          %3310 = vst.msk [vmem:[%s744 + $0xd8] sm:$0xff] %vm1218, %v3278
          %3311 = vst.msk [vmem:[%s744 + $0xe0] sm:$0xff] %vm1218, %v3279
          %3312 = vst.msk [vmem:[%s744 + $0xe8] sm:$0xff] %vm1218, %v3280
          %3313 = vst.msk [vmem:[%s744 + $0xf0] sm:$0xff] %vm1218, %v3281
          %3314 = vst.msk [vmem:[%s744 + $0xf8] sm:$0xff] %vm1218, %v3282
          %v3315 = vlaneseq
          %v3316 = vand.u32 %v3315, 127
          %vm3317 = vcmp.eq.s32.totalorder %v3316, 0
          %v3318 = vsel %vm3317, %v3123, %v3155
          %v3319 = vsel %vm3317, %v3124, %v3156
          %v3320 = vsel %vm3317, %v3125, %v3157
          %v3321 = vsel %vm3317, %v3126, %v3158
          %v3322 = vsel %vm3317, %v3127, %v3159
          %v3323 = vsel %vm3317, %v3128, %v3160
          %v3324 = vsel %vm3317, %v3129, %v3161
          %v3325 = vsel %vm3317, %v3130, %v3162
          %v3326 = vsel %vm3317, %v3131, %v3163
          %v3327 = vsel %vm3317, %v3132, %v3164
          %v3328 = vsel %vm3317, %v3133, %v3165
          %v3329 = vsel %vm3317, %v3134, %v3166
          %v3330 = vsel %vm3317, %v3135, %v3167
          %v3331 = vsel %vm3317, %v3136, %v3168
          %v3332 = vsel %vm3317, %v3137, %v3169
          %v3333 = vsel %vm3317, %v3138, %v3170
          %v3334 = vsel %vm3317, %v3139, %v3171
          %v3335 = vsel %vm3317, %v3140, %v3172
          %v3336 = vsel %vm3317, %v3141, %v3173
          %v3337 = vsel %vm3317, %v3142, %v3174
          %v3338 = vsel %vm3317, %v3143, %v3175
          %v3339 = vsel %vm3317, %v3144, %v3176
          %v3340 = vsel %vm3317, %v3145, %v3177
          %v3341 = vsel %vm3317, %v3146, %v3178
          %v3342 = vsel %vm3317, %v3147, %v3179
          %v3343 = vsel %vm3317, %v3148, %v3180
          %v3344 = vsel %vm3317, %v3149, %v3181
          %v3345 = vsel %vm3317, %v3150, %v3182
          %v3346 = vsel %vm3317, %v3151, %v3183
          %v3347 = vsel %vm3317, %v3152, %v3184
          %v3348 = vsel %vm3317, %v3153, %v3185
          %v3349 = vsel %vm3317, %v3154, %v3186
          %vm3350 = vcmask 15360
          %3351 = vst.msk [vmem:[%s750] sm:$0xff] %vm3350, %v3318
          %3352 = vst.msk [vmem:[%s750 + $0x8] sm:$0xff] %vm3350, %v3319
          %3353 = vst.msk [vmem:[%s750 + $0x10] sm:$0xff] %vm3350, %v3320
          %3354 = vst.msk [vmem:[%s750 + $0x18] sm:$0xff] %vm3350, %v3321
          %3355 = vst.msk [vmem:[%s750 + $0x20] sm:$0xff] %vm3350, %v3322
          %3356 = vst.msk [vmem:[%s750 + $0x28] sm:$0xff] %vm3350, %v3323
          %3357 = vst.msk [vmem:[%s750 + $0x30] sm:$0xff] %vm3350, %v3324
          %3358 = vst.msk [vmem:[%s750 + $0x38] sm:$0xff] %vm3350, %v3325
          %3359 = vst.msk [vmem:[%s750 + $0x40] sm:$0xff] %vm3350, %v3326
          %3360 = vst.msk [vmem:[%s750 + $0x48] sm:$0xff] %vm3350, %v3327
          %3361 = vst.msk [vmem:[%s750 + $0x50] sm:$0xff] %vm3350, %v3328
          %3362 = vst.msk [vmem:[%s750 + $0x58] sm:$0xff] %vm3350, %v3329
          %3363 = vst.msk [vmem:[%s750 + $0x60] sm:$0xff] %vm3350, %v3330
          %3364 = vst.msk [vmem:[%s750 + $0x68] sm:$0xff] %vm3350, %v3331
          %3365 = vst.msk [vmem:[%s750 + $0x70] sm:$0xff] %vm3350, %v3332
          %3366 = vst.msk [vmem:[%s750 + $0x78] sm:$0xff] %vm3350, %v3333
          %3367 = vst.msk [vmem:[%s750 + $0x80] sm:$0xff] %vm3350, %v3334
          %3368 = vst.msk [vmem:[%s750 + $0x88] sm:$0xff] %vm3350, %v3335
          %3369 = vst.msk [vmem:[%s750 + $0x90] sm:$0xff] %vm3350, %v3336
          %3370 = vst.msk [vmem:[%s750 + $0x98] sm:$0xff] %vm3350, %v3337
          %3371 = vst.msk [vmem:[%s750 + $0xa0] sm:$0xff] %vm3350, %v3338
          %3372 = vst.msk [vmem:[%s750 + $0xa8] sm:$0xff] %vm3350, %v3339
          %3373 = vst.msk [vmem:[%s750 + $0xb0] sm:$0xff] %vm3350, %v3340
          %3374 = vst.msk [vmem:[%s750 + $0xb8] sm:$0xff] %vm3350, %v3341
          %3375 = vst.msk [vmem:[%s750 + $0xc0] sm:$0xff] %vm3350, %v3342
          %3376 = vst.msk [vmem:[%s750 + $0xc8] sm:$0xff] %vm3350, %v3343
          %3377 = vst.msk [vmem:[%s750 + $0xd0] sm:$0xff] %vm3350, %v3344
          %3378 = vst.msk [vmem:[%s750 + $0xd8] sm:$0xff] %vm3350, %v3345
          %3379 = vst.msk [vmem:[%s750 + $0xe0] sm:$0xff] %vm3350, %v3346
          %3380 = vst.msk [vmem:[%s750 + $0xe8] sm:$0xff] %vm3350, %v3347
          %3381 = vst.msk [vmem:[%s750 + $0xf0] sm:$0xff] %vm3350, %v3348
          %3382 = vst.msk [vmem:[%s750 + $0xf8] sm:$0xff] %vm3350, %v3349
          %v3383 = vld [vmem:[%s6] sm:$0xff]
          %v3384 = vld [vmem:[%s6 + $0x8] sm:$0xff]
          %v3386 = vsel %vm1218, %v3251, 0
          %v3389 = vsel %vm1218, %v3252, 0
          %v3392 = vsel %vm1218, %v3253, 0
          %v3395 = vsel %vm1218, %v3254, 0
          %v3398 = vsel %vm1218, %v3255, 0
          %v3401 = vsel %vm1218, %v3256, 0
          %v3404 = vsel %vm1218, %v3257, 0
          %v3407 = vsel %vm1218, %v3258, 0
          %v3410 = vsel %vm1218, %v3259, 0
          %v3413 = vsel %vm1218, %v3260, 0
          %v3416 = vsel %vm1218, %v3261, 0
          %v3419 = vsel %vm1218, %v3262, 0
          %v3422 = vsel %vm1218, %v3263, 0
          %v3425 = vsel %vm1218, %v3264, 0
          %v3428 = vsel %vm1218, %v3265, 0
          %v3431 = vsel %vm1218, %v3266, 0
          %v3434 = vsel %vm1218, %v3267, 0
          %v3437 = vsel %vm1218, %v3268, 0
          %v3440 = vsel %vm1218, %v3269, 0
          %v3443 = vsel %vm1218, %v3270, 0
          %v3446 = vsel %vm1218, %v3271, 0
          %v3449 = vsel %vm1218, %v3272, 0
          %v3452 = vsel %vm1218, %v3273, 0
          %v3455 = vsel %vm1218, %v3274, 0
          %v3458 = vsel %vm1218, %v3275, 0
          %v3461 = vsel %vm1218, %v3276, 0
          %v3464 = vsel %vm1218, %v3277, 0
          %v3467 = vsel %vm1218, %v3278, 0
          %v3470 = vsel %vm1218, %v3279, 0
          %v3473 = vsel %vm1218, %v3280, 0
          %v3476 = vsel %vm1218, %v3281, 0
          %v3479 = vsel %vm1218, %v3282, 0
          %3481 = vmatprep.subr.mxu0 0.0
          %3482 = vmatpush1.msra.mxu0 %v3383
          %3483 = vmatprep.subr.mxu0 0.0
          %3484 = vmatpush1.msra.mxu0 %v3384
          %3485 = vmatprep.subr.mxu0 0.0
          %3486 = vmatpush1.msra.mxu0 0.0
          %3487 = vmatprep.subr.mxu0 0.0
          %3488 = vmatpush1.msra.mxu0 0.0
          %3489 = vmatprep.subr.mxu0 0.0
          %3490 = vmatpush1.msra.mxu0 0.0
          %3491 = vmatprep.subr.mxu0 0.0
          %3492 = vmatpush1.msra.mxu0 0.0
          %3493 = vmatprep.subr.mxu0 0.0
          %3494 = vmatpush1.msra.mxu0 0.0
          %3495 = vmatprep.subr.mxu0 0.0
          %3496 = vmatpush1.msra.mxu0 0.0
          %3497 = vmatprep.subr.mxu0 0.0
          %3498 = vmatpush1.msra.mxu0 0.0
          %3499 = vmatprep.subr.mxu0 0.0
          %3500 = vmatpush1.msra.mxu0 0.0
          %3501 = vmatprep.subr.mxu0 0.0
          %3502 = vmatpush1.msra.mxu0 0.0
          %3503 = vmatprep.subr.mxu0 0.0
          %3504 = vmatpush1.msra.mxu0 0.0
          %3505 = vmatprep.subr.mxu0 0.0
          %3506 = vmatpush1.msra.mxu0 0.0
          %3507 = vmatprep.subr.mxu0 0.0
          %3508 = vmatpush1.msra.mxu0 0.0
          %3509 = vmatprep.subr.mxu0 0.0
          %3510 = vmatpush1.msra.mxu0 0.0
          %3511 = vmatprep.subr.mxu0 0.0
          %3512 = vmatpush1.msra.mxu0 0.0
          %3513 = vmatprep.subr.mxu0 0.0
          %3514 = vmatpush1.msra.mxu0 0.0
          %3515 = vmatprep.subr.mxu0 0.0
          %3516 = vmatpush1.msra.mxu0 0.0
          %3517 = vmatprep.subr.mxu0 0.0
          %3518 = vmatpush1.msra.mxu0 0.0
          %3519 = vmatprep.subr.mxu0 0.0
          %3520 = vmatpush1.msra.mxu0 0.0
          %3521 = vmatprep.subr.mxu0 0.0
          %3522 = vmatpush1.msra.mxu0 0.0
          %3523 = vmatprep.subr.mxu0 0.0
          %3524 = vmatpush1.msra.mxu0 0.0
          %3525 = vmatprep.subr.mxu0 0.0
          %3526 = vmatpush1.msra.mxu0 0.0
          %3527 = vmatprep.subr.mxu0 0.0
          %3528 = vmatpush1.msra.mxu0 0.0
          %3529 = vmatprep.subr.mxu0 0.0
          %3530 = vmatpush1.msra.mxu0 0.0
          %3531 = vmatprep.subr.mxu0 0.0
          %3532 = vmatpush1.msra.mxu0 0.0
          %3533 = vmatprep.subr.mxu0 0.0
          %3534 = vmatpush1.msra.mxu0 0.0
          %3535 = vmatprep.subr.mxu0 0.0
          %3536 = vmatpush1.msra.mxu0 0.0
          %3537 = vmatprep.subr.mxu0 0.0
          %3538 = vmatpush1.msra.mxu0 0.0
          %3539 = vmatprep.subr.mxu0 0.0
          %3540 = vmatpush1.msra.mxu0 0.0
          %3541 = vmatprep.subr.mxu0 0.0
          %3542 = vmatpush1.msra.mxu0 0.0
          %3543 = vmatprep.subr.mxu0 0.0
          %3544 = vmatpush1.msra.mxu0 0.0
          %3545 = vmatprep.mubr.f32.mxu0 0.0
          %3546 = vmatmul.mubr.f32.gmra.mrb[0].mxu0 %v3386
          %v3547 = vpop.f32.mrb[0].mxu0
          %v3548 = vadd.f32 0.0, %v3547
          %v3549 = vpop.f32.mrb[0].mxu0
          %3550 = vmatprep.mubr.f32.mxu0 0.0
          %3551 = vmatmul.mubr.f32.gmra.mrb[0].mxu0 %v3389
          %v3552 = vpop.f32.mrb[0].mxu0
          %v3553 = vadd.f32 0.0, %v3552
          %v3554 = vpop.f32.mrb[0].mxu0
          %3555 = vmatprep.mubr.f32.mxu0 0.0
          %3556 = vmatmul.mubr.f32.gmra.mrb[0].mxu0 %v3392
          %v3557 = vpop.f32.mrb[0].mxu0
          %v3558 = vadd.f32 0.0, %v3557
          %v3559 = vpop.f32.mrb[0].mxu0
          %3560 = vmatprep.mubr.f32.mxu0 0.0
          %3561 = vmatmul.mubr.f32.gmra.mrb[0].mxu0 %v3395
          %v3562 = vpop.f32.mrb[0].mxu0
          %v3563 = vadd.f32 0.0, %v3562
          %v3564 = vpop.f32.mrb[0].mxu0
          %3565 = vmatprep.mubr.f32.mxu0 0.0
          %3566 = vmatmul.mubr.f32.gmra.mrb[0].mxu0 %v3398
          %v3567 = vpop.f32.mrb[0].mxu0
          %v3568 = vadd.f32 0.0, %v3567
          %v3569 = vpop.f32.mrb[0].mxu0
          %3570 = vmatprep.mubr.f32.mxu0 0.0
          %3571 = vmatmul.mubr.f32.gmra.mrb[0].mxu0 %v3401
          %v3572 = vpop.f32.mrb[0].mxu0
          %v3573 = vadd.f32 0.0, %v3572
          %v3574 = vpop.f32.mrb[0].mxu0
          %3575 = vmatprep.mubr.f32.mxu0 0.0
          %3576 = vmatmul.mubr.f32.gmra.mrb[0].mxu0 %v3404
          %v3577 = vpop.f32.mrb[0].mxu0
          %v3578 = vadd.f32 0.0, %v3577
          %v3579 = vpop.f32.mrb[0].mxu0
          %3580 = vmatprep.mubr.f32.mxu0 0.0
          %3581 = vmatmul.mubr.f32.gmra.mrb[0].mxu0 %v3407
          %v3582 = vpop.f32.mrb[0].mxu0
          %v3583 = vadd.f32 0.0, %v3582
          %v3584 = vpop.f32.mrb[0].mxu0
          %3585 = vmatprep.mubr.f32.mxu0 0.0
          %3586 = vmatmul.mubr.f32.gmra.mrb[0].mxu0 %v3410
          %v3587 = vpop.f32.mrb[0].mxu0
          %v3588 = vadd.f32 0.0, %v3587
          %v3589 = vpop.f32.mrb[0].mxu0
          %3590 = vmatprep.mubr.f32.mxu0 0.0
          %3591 = vmatmul.mubr.f32.gmra.mrb[0].mxu0 %v3413
          %v3592 = vpop.f32.mrb[0].mxu0
          %v3593 = vadd.f32 0.0, %v3592
          %v3594 = vpop.f32.mrb[0].mxu0
          %3595 = vmatprep.mubr.f32.mxu0 0.0
          %3596 = vmatmul.mubr.f32.gmra.mrb[0].mxu0 %v3416
          %v3597 = vpop.f32.mrb[0].mxu0
          %v3598 = vadd.f32 0.0, %v3597
          %v3599 = vpop.f32.mrb[0].mxu0
          %3600 = vmatprep.mubr.f32.mxu0 0.0
          %3601 = vmatmul.mubr.f32.gmra.mrb[0].mxu0 %v3419
          %v3602 = vpop.f32.mrb[0].mxu0
          %v3603 = vadd.f32 0.0, %v3602
          %v3604 = vpop.f32.mrb[0].mxu0
          %3605 = vmatprep.mubr.f32.mxu0 0.0
          %3606 = vmatmul.mubr.f32.gmra.mrb[0].mxu0 %v3422
          %v3607 = vpop.f32.mrb[0].mxu0
          %v3608 = vadd.f32 0.0, %v3607
          %v3609 = vpop.f32.mrb[0].mxu0
          %3610 = vmatprep.mubr.f32.mxu0 0.0
          %3611 = vmatmul.mubr.f32.gmra.mrb[0].mxu0 %v3425
          %v3612 = vpop.f32.mrb[0].mxu0
          %v3613 = vadd.f32 0.0, %v3612
          %v3614 = vpop.f32.mrb[0].mxu0
          %3615 = vmatprep.mubr.f32.mxu0 0.0
          %3616 = vmatmul.mubr.f32.gmra.mrb[0].mxu0 %v3428
          %v3617 = vpop.f32.mrb[0].mxu0
          %v3618 = vadd.f32 0.0, %v3617
          %v3619 = vpop.f32.mrb[0].mxu0
          %3620 = vmatprep.mubr.f32.mxu0 0.0
          %3621 = vmatmul.mubr.f32.gmra.mrb[0].mxu0 %v3431
          %v3622 = vpop.f32.mrb[0].mxu0
          %v3623 = vadd.f32 0.0, %v3622
          %v3624 = vpop.f32.mrb[0].mxu0
          %3625 = vmatprep.mubr.f32.mxu0 0.0
          %3626 = vmatmul.mubr.f32.gmra.mrb[0].mxu0 %v3434
          %v3627 = vpop.f32.mrb[0].mxu0
          %v3628 = vadd.f32 0.0, %v3627
          %v3629 = vpop.f32.mrb[0].mxu0
          %3630 = vmatprep.mubr.f32.mxu0 0.0
          %3631 = vmatmul.mubr.f32.gmra.mrb[0].mxu0 %v3437
          %v3632 = vpop.f32.mrb[0].mxu0
          %v3633 = vadd.f32 0.0, %v3632
          %v3634 = vpop.f32.mrb[0].mxu0
          %3635 = vmatprep.mubr.f32.mxu0 0.0
          %3636 = vmatmul.mubr.f32.gmra.mrb[0].mxu0 %v3440
          %v3637 = vpop.f32.mrb[0].mxu0
          %v3638 = vadd.f32 0.0, %v3637
          %v3639 = vpop.f32.mrb[0].mxu0
          %3640 = vmatprep.mubr.f32.mxu0 0.0
          %3641 = vmatmul.mubr.f32.gmra.mrb[0].mxu0 %v3443
          %v3642 = vpop.f32.mrb[0].mxu0
          %v3643 = vadd.f32 0.0, %v3642
          %v3644 = vpop.f32.mrb[0].mxu0
          %3645 = vmatprep.mubr.f32.mxu0 0.0
          %3646 = vmatmul.mubr.f32.gmra.mrb[0].mxu0 %v3446
          %v3647 = vpop.f32.mrb[0].mxu0
          %v3648 = vadd.f32 0.0, %v3647
          %v3649 = vpop.f32.mrb[0].mxu0
          %3650 = vmatprep.mubr.f32.mxu0 0.0
          %3651 = vmatmul.mubr.f32.gmra.mrb[0].mxu0 %v3449
          %v3652 = vpop.f32.mrb[0].mxu0
          %v3653 = vadd.f32 0.0, %v3652
          %v3654 = vpop.f32.mrb[0].mxu0
          %3655 = vmatprep.mubr.f32.mxu0 0.0
          %3656 = vmatmul.mubr.f32.gmra.mrb[0].mxu0 %v3452
          %v3657 = vpop.f32.mrb[0].mxu0
          %v3658 = vadd.f32 0.0, %v3657
          %v3659 = vpop.f32.mrb[0].mxu0
          %3660 = vmatprep.mubr.f32.mxu0 0.0
          %3661 = vmatmul.mubr.f32.gmra.mrb[0].mxu0 %v3455
          %v3662 = vpop.f32.mrb[0].mxu0
          %v3663 = vadd.f32 0.0, %v3662
          %v3664 = vpop.f32.mrb[0].mxu0
          %3665 = vmatprep.mubr.f32.mxu0 0.0
          %3666 = vmatmul.mubr.f32.gmra.mrb[0].mxu0 %v3458
          %v3667 = vpop.f32.mrb[0].mxu0
          %v3668 = vadd.f32 0.0, %v3667
          %v3669 = vpop.f32.mrb[0].mxu0
          %3670 = vmatprep.mubr.f32.mxu0 0.0
          %3671 = vmatmul.mubr.f32.gmra.mrb[0].mxu0 %v3461
          %v3672 = vpop.f32.mrb[0].mxu0
          %v3673 = vadd.f32 0.0, %v3672
          %v3674 = vpop.f32.mrb[0].mxu0
          %3675 = vmatprep.mubr.f32.mxu0 0.0
          %3676 = vmatmul.mubr.f32.gmra.mrb[0].mxu0 %v3464
          %v3677 = vpop.f32.mrb[0].mxu0
          %v3678 = vadd.f32 0.0, %v3677
          %v3679 = vpop.f32.mrb[0].mxu0
          %3680 = vmatprep.mubr.f32.mxu0 0.0
          %3681 = vmatmul.mubr.f32.gmra.mrb[0].mxu0 %v3467
          %v3682 = vpop.f32.mrb[0].mxu0
          %v3683 = vadd.f32 0.0, %v3682
          %v3684 = vpop.f32.mrb[0].mxu0
          %3685 = vmatprep.mubr.f32.mxu0 0.0
          %3686 = vmatmul.mubr.f32.gmra.mrb[0].mxu0 %v3470
          %v3687 = vpop.f32.mrb[0].mxu0
          %v3688 = vadd.f32 0.0, %v3687
          %v3689 = vpop.f32.mrb[0].mxu0
          %3690 = vmatprep.mubr.f32.mxu0 0.0
          %3691 = vmatmul.mubr.f32.gmra.mrb[0].mxu0 %v3473
          %v3692 = vpop.f32.mrb[0].mxu0
          %v3693 = vadd.f32 0.0, %v3692
          %v3694 = vpop.f32.mrb[0].mxu0
          %3695 = vmatprep.mubr.f32.mxu0 0.0
          %3696 = vmatmul.mubr.f32.gmra.mrb[0].mxu0 %v3476
          %v3697 = vpop.f32.mrb[0].mxu0
          %v3698 = vadd.f32 0.0, %v3697
          %v3699 = vpop.f32.mrb[0].mxu0
          %3700 = vmatprep.mubr.f32.mxu0 0.0
          %3701 = vmatmul.mubr.f32.gmra.mrb[0].mxu0 %v3479
          %v3702 = vpop.f32.mrb[0].mxu0
          %v3703 = vadd.f32 0.0, %v3702
          %v3704 = vpop.f32.mrb[0].mxu0
          %3705 = vdwg.mxu0
          %3706 = vst.msk [vmem:[%s756] sm:$0xff] %vm1218, %v3548
          %3707 = vst.msk [vmem:[%s756 + $0x8] sm:$0xff] %vm1218, %v3553
          %3708 = vst.msk [vmem:[%s756 + $0x10] sm:$0xff] %vm1218, %v3558
          %3709 = vst.msk [vmem:[%s756 + $0x18] sm:$0xff] %vm1218, %v3563
          %3710 = vst.msk [vmem:[%s756 + $0x20] sm:$0xff] %vm1218, %v3568
          %3711 = vst.msk [vmem:[%s756 + $0x28] sm:$0xff] %vm1218, %v3573
          %3712 = vst.msk [vmem:[%s756 + $0x30] sm:$0xff] %vm1218, %v3578
          %3713 = vst.msk [vmem:[%s756 + $0x38] sm:$0xff] %vm1218, %v3583
          %3714 = vst.msk [vmem:[%s756 + $0x40] sm:$0xff] %vm1218, %v3588
          %3715 = vst.msk [vmem:[%s756 + $0x48] sm:$0xff] %vm1218, %v3593
          %3716 = vst.msk [vmem:[%s756 + $0x50] sm:$0xff] %vm1218, %v3598
          %3717 = vst.msk [vmem:[%s756 + $0x58] sm:$0xff] %vm1218, %v3603
          %3718 = vst.msk [vmem:[%s756 + $0x60] sm:$0xff] %vm1218, %v3608
          %3719 = vst.msk [vmem:[%s756 + $0x68] sm:$0xff] %vm1218, %v3613
          %3720 = vst.msk [vmem:[%s756 + $0x70] sm:$0xff] %vm1218, %v3618
          %3721 = vst.msk [vmem:[%s756 + $0x78] sm:$0xff] %vm1218, %v3623
          %3722 = vst.msk [vmem:[%s756 + $0x80] sm:$0xff] %vm1218, %v3628
          %3723 = vst.msk [vmem:[%s756 + $0x88] sm:$0xff] %vm1218, %v3633
          %3724 = vst.msk [vmem:[%s756 + $0x90] sm:$0xff] %vm1218, %v3638
          %3725 = vst.msk [vmem:[%s756 + $0x98] sm:$0xff] %vm1218, %v3643
          %3726 = vst.msk [vmem:[%s756 + $0xa0] sm:$0xff] %vm1218, %v3648
          %3727 = vst.msk [vmem:[%s756 + $0xa8] sm:$0xff] %vm1218, %v3653
          %3728 = vst.msk [vmem:[%s756 + $0xb0] sm:$0xff] %vm1218, %v3658
          %3729 = vst.msk [vmem:[%s756 + $0xb8] sm:$0xff] %vm1218, %v3663
          %3730 = vst.msk [vmem:[%s756 + $0xc0] sm:$0xff] %vm1218, %v3668
          %3731 = vst.msk [vmem:[%s756 + $0xc8] sm:$0xff] %vm1218, %v3673
          %3732 = vst.msk [vmem:[%s756 + $0xd0] sm:$0xff] %vm1218, %v3678
          %3733 = vst.msk [vmem:[%s756 + $0xd8] sm:$0xff] %vm1218, %v3683
          %3734 = vst.msk [vmem:[%s756 + $0xe0] sm:$0xff] %vm1218, %v3688
          %3735 = vst.msk [vmem:[%s756 + $0xe8] sm:$0xff] %vm1218, %v3693
          %3736 = vst.msk [vmem:[%s756 + $0xf0] sm:$0xff] %vm1218, %v3698
          %3737 = vst.msk [vmem:[%s756 + $0xf8] sm:$0xff] %vm1218, %v3703
          %v3738 = vld [vmem:[%s7] sm:$0xff]
          %v3739 = vld [vmem:[%s7 + $0x8] sm:$0xff]
          %3740 = vmatprep.subr.mxu0 0.0
          %3741 = vmatpush1.msra.mxu0 %v3738
          %3742 = vmatprep.subr.mxu0 0.0
          %3743 = vmatpush1.msra.mxu0 %v3739
          %3744 = vmatprep.subr.mxu0 0.0
          %3745 = vmatpush1.msra.mxu0 0.0
          %3746 = vmatprep.subr.mxu0 0.0
          %3747 = vmatpush1.msra.mxu0 0.0
          %3748 = vmatprep.subr.mxu0 0.0
          %3749 = vmatpush1.msra.mxu0 0.0
          %3750 = vmatprep.subr.mxu0 0.0
          %3751 = vmatpush1.msra.mxu0 0.0
          %3752 = vmatprep.subr.mxu0 0.0
          %3753 = vmatpush1.msra.mxu0 0.0
          %3754 = vmatprep.subr.mxu0 0.0
          %3755 = vmatpush1.msra.mxu0 0.0
          %3756 = vmatprep.subr.mxu0 0.0
          %3757 = vmatpush1.msra.mxu0 0.0
          %3758 = vmatprep.subr.mxu0 0.0
          %3759 = vmatpush1.msra.mxu0 0.0
          %3760 = vmatprep.subr.mxu0 0.0
          %3761 = vmatpush1.msra.mxu0 0.0
          %3762 = vmatprep.subr.mxu0 0.0
          %3763 = vmatpush1.msra.mxu0 0.0
          %3764 = vmatprep.subr.mxu0 0.0
          %3765 = vmatpush1.msra.mxu0 0.0
          %3766 = vmatprep.subr.mxu0 0.0
          %3767 = vmatpush1.msra.mxu0 0.0
          %3768 = vmatprep.subr.mxu0 0.0
          %3769 = vmatpush1.msra.mxu0 0.0
          %3770 = vmatprep.subr.mxu0 0.0
          %3771 = vmatpush1.msra.mxu0 0.0
          %3772 = vmatprep.subr.mxu0 0.0
          %3773 = vmatpush1.msra.mxu0 0.0
          %3774 = vmatprep.subr.mxu0 0.0
          %3775 = vmatpush1.msra.mxu0 0.0
          %3776 = vmatprep.subr.mxu0 0.0
          %3777 = vmatpush1.msra.mxu0 0.0
          %3778 = vmatprep.subr.mxu0 0.0
          %3779 = vmatpush1.msra.mxu0 0.0
          %3780 = vmatprep.subr.mxu0 0.0
          %3781 = vmatpush1.msra.mxu0 0.0
          %3782 = vmatprep.subr.mxu0 0.0
          %3783 = vmatpush1.msra.mxu0 0.0
          %3784 = vmatprep.subr.mxu0 0.0
          %3785 = vmatpush1.msra.mxu0 0.0
          %3786 = vmatprep.subr.mxu0 0.0
          %3787 = vmatpush1.msra.mxu0 0.0
          %3788 = vmatprep.subr.mxu0 0.0
          %3789 = vmatpush1.msra.mxu0 0.0
          %3790 = vmatprep.subr.mxu0 0.0
          %3791 = vmatpush1.msra.mxu0 0.0
          %3792 = vmatprep.subr.mxu0 0.0
          %3793 = vmatpush1.msra.mxu0 0.0
          %3794 = vmatprep.subr.mxu0 0.0
          %3795 = vmatpush1.msra.mxu0 0.0
          %3796 = vmatprep.subr.mxu0 0.0
          %3797 = vmatpush1.msra.mxu0 0.0
          %3798 = vmatprep.subr.mxu0 0.0
          %3799 = vmatpush1.msra.mxu0 0.0
          %3800 = vmatprep.subr.mxu0 0.0
          %3801 = vmatpush1.msra.mxu0 0.0
          %3802 = vmatprep.subr.mxu0 0.0
          %3803 = vmatpush1.msra.mxu0 0.0
          %3804 = vmatprep.mubr.f32.mxu0 0.0
          %3805 = vmatmul.mubr.f32.gmra.mrb[0].mxu0 %v3386
          %v3806 = vpop.f32.mrb[0].mxu0
          %v3807 = vadd.f32 0.0, %v3806
          %v3808 = vpop.f32.mrb[0].mxu0
          %3809 = vmatprep.mubr.f32.mxu0 0.0
          %3810 = vmatmul.mubr.f32.gmra.mrb[0].mxu0 %v3389
          %v3811 = vpop.f32.mrb[0].mxu0
          %v3812 = vadd.f32 0.0, %v3811
          %v3813 = vpop.f32.mrb[0].mxu0
          %3814 = vmatprep.mubr.f32.mxu0 0.0
          %3815 = vmatmul.mubr.f32.gmra.mrb[0].mxu0 %v3392
          %v3816 = vpop.f32.mrb[0].mxu0
          %v3817 = vadd.f32 0.0, %v3816
          %v3818 = vpop.f32.mrb[0].mxu0
          %3819 = vmatprep.mubr.f32.mxu0 0.0
          %3820 = vmatmul.mubr.f32.gmra.mrb[0].mxu0 %v3395
          %v3821 = vpop.f32.mrb[0].mxu0
          %v3822 = vadd.f32 0.0, %v3821
          %v3823 = vpop.f32.mrb[0].mxu0
          %3824 = vmatprep.mubr.f32.mxu0 0.0
          %3825 = vmatmul.mubr.f32.gmra.mrb[0].mxu0 %v3398
          %v3826 = vpop.f32.mrb[0].mxu0
          %v3827 = vadd.f32 0.0, %v3826
          %v3828 = vpop.f32.mrb[0].mxu0
          %3829 = vmatprep.mubr.f32.mxu0 0.0
          %3830 = vmatmul.mubr.f32.gmra.mrb[0].mxu0 %v3401
          %v3831 = vpop.f32.mrb[0].mxu0
          %v3832 = vadd.f32 0.0, %v3831
          %v3833 = vpop.f32.mrb[0].mxu0
          %3834 = vmatprep.mubr.f32.mxu0 0.0
          %3835 = vmatmul.mubr.f32.gmra.mrb[0].mxu0 %v3404
          %v3836 = vpop.f32.mrb[0].mxu0
          %v3837 = vadd.f32 0.0, %v3836
          %v3838 = vpop.f32.mrb[0].mxu0
          %3839 = vmatprep.mubr.f32.mxu0 0.0
          %3840 = vmatmul.mubr.f32.gmra.mrb[0].mxu0 %v3407
          %v3841 = vpop.f32.mrb[0].mxu0
          %v3842 = vadd.f32 0.0, %v3841
          %v3843 = vpop.f32.mrb[0].mxu0
          %3844 = vmatprep.mubr.f32.mxu0 0.0
          %3845 = vmatmul.mubr.f32.gmra.mrb[0].mxu0 %v3410
          %v3846 = vpop.f32.mrb[0].mxu0
          %v3847 = vadd.f32 0.0, %v3846
          %v3848 = vpop.f32.mrb[0].mxu0
          %3849 = vmatprep.mubr.f32.mxu0 0.0
          %3850 = vmatmul.mubr.f32.gmra.mrb[0].mxu0 %v3413
          %v3851 = vpop.f32.mrb[0].mxu0
          %v3852 = vadd.f32 0.0, %v3851
          %v3853 = vpop.f32.mrb[0].mxu0
          %3854 = vmatprep.mubr.f32.mxu0 0.0
          %3855 = vmatmul.mubr.f32.gmra.mrb[0].mxu0 %v3416
          %v3856 = vpop.f32.mrb[0].mxu0
          %v3857 = vadd.f32 0.0, %v3856
          %v3858 = vpop.f32.mrb[0].mxu0
          %3859 = vmatprep.mubr.f32.mxu0 0.0
          %3860 = vmatmul.mubr.f32.gmra.mrb[0].mxu0 %v3419
          %v3861 = vpop.f32.mrb[0].mxu0
          %v3862 = vadd.f32 0.0, %v3861
          %v3863 = vpop.f32.mrb[0].mxu0
          %3864 = vmatprep.mubr.f32.mxu0 0.0
          %3865 = vmatmul.mubr.f32.gmra.mrb[0].mxu0 %v3422
          %v3866 = vpop.f32.mrb[0].mxu0
          %v3867 = vadd.f32 0.0, %v3866
          %v3868 = vpop.f32.mrb[0].mxu0
          %3869 = vmatprep.mubr.f32.mxu0 0.0
          %3870 = vmatmul.mubr.f32.gmra.mrb[0].mxu0 %v3425
          %v3871 = vpop.f32.mrb[0].mxu0
          %v3872 = vadd.f32 0.0, %v3871
          %v3873 = vpop.f32.mrb[0].mxu0
          %3874 = vmatprep.mubr.f32.mxu0 0.0
          %3875 = vmatmul.mubr.f32.gmra.mrb[0].mxu0 %v3428
          %v3876 = vpop.f32.mrb[0].mxu0
          %v3877 = vadd.f32 0.0, %v3876
          %v3878 = vpop.f32.mrb[0].mxu0
          %3879 = vmatprep.mubr.f32.mxu0 0.0
          %3880 = vmatmul.mubr.f32.gmra.mrb[0].mxu0 %v3431
          %v3881 = vpop.f32.mrb[0].mxu0
          %v3882 = vadd.f32 0.0, %v3881
          %v3883 = vpop.f32.mrb[0].mxu0
          %3884 = vmatprep.mubr.f32.mxu0 0.0
          %3885 = vmatmul.mubr.f32.gmra.mrb[0].mxu0 %v3434
          %v3886 = vpop.f32.mrb[0].mxu0
          %v3887 = vadd.f32 0.0, %v3886
          %v3888 = vpop.f32.mrb[0].mxu0
          %3889 = vmatprep.mubr.f32.mxu0 0.0
          %3890 = vmatmul.mubr.f32.gmra.mrb[0].mxu0 %v3437
          %v3891 = vpop.f32.mrb[0].mxu0
          %v3892 = vadd.f32 0.0, %v3891
          %v3893 = vpop.f32.mrb[0].mxu0
          %3894 = vmatprep.mubr.f32.mxu0 0.0
          %3895 = vmatmul.mubr.f32.gmra.mrb[0].mxu0 %v3440
          %v3896 = vpop.f32.mrb[0].mxu0
          %v3897 = vadd.f32 0.0, %v3896
          %v3898 = vpop.f32.mrb[0].mxu0
          %3899 = vmatprep.mubr.f32.mxu0 0.0
          %3900 = vmatmul.mubr.f32.gmra.mrb[0].mxu0 %v3443
          %v3901 = vpop.f32.mrb[0].mxu0
          %v3902 = vadd.f32 0.0, %v3901
          %v3903 = vpop.f32.mrb[0].mxu0
          %3904 = vmatprep.mubr.f32.mxu0 0.0
          %3905 = vmatmul.mubr.f32.gmra.mrb[0].mxu0 %v3446
          %v3906 = vpop.f32.mrb[0].mxu0
          %v3907 = vadd.f32 0.0, %v3906
          %v3908 = vpop.f32.mrb[0].mxu0
          %3909 = vmatprep.mubr.f32.mxu0 0.0
          %3910 = vmatmul.mubr.f32.gmra.mrb[0].mxu0 %v3449
          %v3911 = vpop.f32.mrb[0].mxu0
          %v3912 = vadd.f32 0.0, %v3911
          %v3913 = vpop.f32.mrb[0].mxu0
          %3914 = vmatprep.mubr.f32.mxu0 0.0
          %3915 = vmatmul.mubr.f32.gmra.mrb[0].mxu0 %v3452
          %v3916 = vpop.f32.mrb[0].mxu0
          %v3917 = vadd.f32 0.0, %v3916
          %v3918 = vpop.f32.mrb[0].mxu0
          %3919 = vmatprep.mubr.f32.mxu0 0.0
          %3920 = vmatmul.mubr.f32.gmra.mrb[0].mxu0 %v3455
          %v3921 = vpop.f32.mrb[0].mxu0
          %v3922 = vadd.f32 0.0, %v3921
          %v3923 = vpop.f32.mrb[0].mxu0
          %3924 = vmatprep.mubr.f32.mxu0 0.0
          %3925 = vmatmul.mubr.f32.gmra.mrb[0].mxu0 %v3458
          %v3926 = vpop.f32.mrb[0].mxu0
          %v3927 = vadd.f32 0.0, %v3926
          %v3928 = vpop.f32.mrb[0].mxu0
          %3929 = vmatprep.mubr.f32.mxu0 0.0
          %3930 = vmatmul.mubr.f32.gmra.mrb[0].mxu0 %v3461
          %v3931 = vpop.f32.mrb[0].mxu0
          %v3932 = vadd.f32 0.0, %v3931
          %v3933 = vpop.f32.mrb[0].mxu0
          %3934 = vmatprep.mubr.f32.mxu0 0.0
          %3935 = vmatmul.mubr.f32.gmra.mrb[0].mxu0 %v3464
          %v3936 = vpop.f32.mrb[0].mxu0
          %v3937 = vadd.f32 0.0, %v3936
          %v3938 = vpop.f32.mrb[0].mxu0
          %3939 = vmatprep.mubr.f32.mxu0 0.0
          %3940 = vmatmul.mubr.f32.gmra.mrb[0].mxu0 %v3467
          %v3941 = vpop.f32.mrb[0].mxu0
          %v3942 = vadd.f32 0.0, %v3941
          %v3943 = vpop.f32.mrb[0].mxu0
          %3944 = vmatprep.mubr.f32.mxu0 0.0
          %3945 = vmatmul.mubr.f32.gmra.mrb[0].mxu0 %v3470
          %v3946 = vpop.f32.mrb[0].mxu0
          %v3947 = vadd.f32 0.0, %v3946
          %v3948 = vpop.f32.mrb[0].mxu0
          %3949 = vmatprep.mubr.f32.mxu0 0.0
          %3950 = vmatmul.mubr.f32.gmra.mrb[0].mxu0 %v3473
          %v3951 = vpop.f32.mrb[0].mxu0
          %v3952 = vadd.f32 0.0, %v3951
          %v3953 = vpop.f32.mrb[0].mxu0
          %3954 = vmatprep.mubr.f32.mxu0 0.0
          %3955 = vmatmul.mubr.f32.gmra.mrb[0].mxu0 %v3476
          %v3956 = vpop.f32.mrb[0].mxu0
          %v3957 = vadd.f32 0.0, %v3956
          %v3958 = vpop.f32.mrb[0].mxu0
          %3959 = vmatprep.mubr.f32.mxu0 0.0
          %3960 = vmatmul.mubr.f32.gmra.mrb[0].mxu0 %v3479
          %v3961 = vpop.f32.mrb[0].mxu0
          %v3962 = vadd.f32 0.0, %v3961
          %v3963 = vpop.f32.mrb[0].mxu0
          %3964 = vdwg.mxu0
          %vm3965 = vcmask 64512
          %3966 = vst.msk [vmem:[%s762] sm:$0xff] %vm3965, %v3807
          %3967 = vst.msk [vmem:[%s762 + $0x8] sm:$0xff] %vm3965, %v3812
          %3968 = vst.msk [vmem:[%s762 + $0x10] sm:$0xff] %vm3965, %v3817
          %3969 = vst.msk [vmem:[%s762 + $0x18] sm:$0xff] %vm3965, %v3822
          %3970 = vst.msk [vmem:[%s762 + $0x20] sm:$0xff] %vm3965, %v3827
          %3971 = vst.msk [vmem:[%s762 + $0x28] sm:$0xff] %vm3965, %v3832
          %3972 = vst.msk [vmem:[%s762 + $0x30] sm:$0xff] %vm3965, %v3837
          %3973 = vst.msk [vmem:[%s762 + $0x38] sm:$0xff] %vm3965, %v3842
          %3974 = vst.msk [vmem:[%s762 + $0x40] sm:$0xff] %vm3965, %v3847
          %3975 = vst.msk [vmem:[%s762 + $0x48] sm:$0xff] %vm3965, %v3852
          %3976 = vst.msk [vmem:[%s762 + $0x50] sm:$0xff] %vm3965, %v3857
          %3977 = vst.msk [vmem:[%s762 + $0x58] sm:$0xff] %vm3965, %v3862
          %3978 = vst.msk [vmem:[%s762 + $0x60] sm:$0xff] %vm3965, %v3867
          %3979 = vst.msk [vmem:[%s762 + $0x68] sm:$0xff] %vm3965, %v3872
          %3980 = vst.msk [vmem:[%s762 + $0x70] sm:$0xff] %vm3965, %v3877
          %3981 = vst.msk [vmem:[%s762 + $0x78] sm:$0xff] %vm3965, %v3882
          %3982 = vst.msk [vmem:[%s762 + $0x80] sm:$0xff] %vm3965, %v3887
          %3983 = vst.msk [vmem:[%s762 + $0x88] sm:$0xff] %vm3965, %v3892
          %3984 = vst.msk [vmem:[%s762 + $0x90] sm:$0xff] %vm3965, %v3897
          %3985 = vst.msk [vmem:[%s762 + $0x98] sm:$0xff] %vm3965, %v3902
          %3986 = vst.msk [vmem:[%s762 + $0xa0] sm:$0xff] %vm3965, %v3907
          %3987 = vst.msk [vmem:[%s762 + $0xa8] sm:$0xff] %vm3965, %v3912
          %3988 = vst.msk [vmem:[%s762 + $0xb0] sm:$0xff] %vm3965, %v3917
          %3989 = vst.msk [vmem:[%s762 + $0xb8] sm:$0xff] %vm3965, %v3922
          %3990 = vst.msk [vmem:[%s762 + $0xc0] sm:$0xff] %vm3965, %v3927
          %3991 = vst.msk [vmem:[%s762 + $0xc8] sm:$0xff] %vm3965, %v3932
          %3992 = vst.msk [vmem:[%s762 + $0xd0] sm:$0xff] %vm3965, %v3937
          %3993 = vst.msk [vmem:[%s762 + $0xd8] sm:$0xff] %vm3965, %v3942
          %3994 = vst.msk [vmem:[%s762 + $0xe0] sm:$0xff] %vm3965, %v3947
          %3995 = vst.msk [vmem:[%s762 + $0xe8] sm:$0xff] %vm3965, %v3952
          %3996 = vst.msk [vmem:[%s762 + $0xf0] sm:$0xff] %vm3965, %v3957
          %3997 = vst.msk [vmem:[%s762 + $0xf8] sm:$0xff] %vm3965, %v3962
        $region87: #{encoder_omics_forward.4} parent=70 // pred_fallthru
          _
        %s3998 = smul.u32 32, %s32
        %p3999 = scmp.lt.s32.totalorder %s3998, 63
        %s4000 = scalar_select %p3999, %s3998, 63
        %s4001 = smul.addr %s4000, 8
        %s4002 = scalar_lea.vmem %s8, %s4001
        %s4003 = smul.u32 32, %s32
        %p4004 = scmp.lt.s32.totalorder %s4003, 63
        %s4005 = scalar_select %p4004, %s4003, 63
        %s4006 = smul.addr %s4005, 8
        %s4007 = scalar_lea.vmem %s9, %s4006
        %s4008 = smul.u32 32, %s32
        %p4009 = scmp.lt.s32.totalorder %s4008, 63
        %s4010 = scalar_select %p4009, %s4008, 63
        %s4011 = smul.addr %s4010, 8
        %s4012 = scalar_lea.vmem %s10, %s4011
        %s4013 = smul.u32 32, %s32
        %p4014 = scmp.lt.s32.totalorder %s4013, 63
        %s4015 = scalar_select %p4014, %s4013, 63
        %s4016 = smul.addr %s4015, 8
        %s4017 = scalar_lea.vmem %s11, %s4016
        %s4018 = smul.u32 32, %s32
        %p4019 = scmp.lt.s32.totalorder %s4018, 63
        %s4020 = scalar_select %p4019, %s4018, 63
        %s4021 = smul.addr %s4020, 8
        %s4022 = scalar_lea.vmem %s12, %s4021
        %s4023 = smul.u32 32, %s32
        %p4024 = scmp.lt.s32.totalorder %s4023, 63
        %s4025 = scalar_select %p4024, %s4023, 63
        %s4026 = smul.addr %s4025, 8
        %s4027 = scalar_lea.vmem %s13, %s4026
        // Predicated region
        $region88: #{encoder_omics_forward.4} parent=70 // pred_check
          %p4028 = pneg %p250
        $region89: #{encoder_omics_forward.4} parent=70 // pred_check_branch
          %4030 = sbr.rel (%p4028) target = $region91
        $region90: #{encoder_omics_forward.4} parent=70 // pred_region
          %s4031 = smul.u32 32, %s32
        $region91: #{encoder_omics_forward.4} parent=70 // pred_fallthru
          _
        // Predicated region
        $region92: #{encoder_omics_forward.4} parent=70 // pred_check
          %p4032 = pneg %p276
        $region93: #{encoder_omics_forward.4} parent=70 // pred_check_branch
          %4034 = sbr.rel (%p4032) target = $region95
        $region94: #{encoder_omics_forward.4} parent=70 // pred_region
          %s4035 = smul.u32 32, %s32
        $region95: #{encoder_omics_forward.4} parent=70 // pred_fallthru
          _
        // Predicated region
        $region96: #{encoder_omics_forward.4} parent=70 // pred_check
          %p4036 = pneg %p302
        $region97: #{encoder_omics_forward.4} parent=70 // pred_check_branch
          %4038 = sbr.rel (%p4036) target = $region99
        $region98: #{encoder_omics_forward.4} parent=70 // pred_region
          %s4039 = smul.u32 32, %s32
        $region99: #{encoder_omics_forward.4} parent=70 // pred_fallthru
          _
        // Predicated region
        $region100: #{encoder_omics_forward.4} parent=70 // pred_check
          %p4040 = pneg %p328
        $region101: #{encoder_omics_forward.4} parent=70 // pred_check_branch
          %4042 = sbr.rel (%p4040) target = $region103
        $region102: #{encoder_omics_forward.4} parent=70 // pred_region
          %s4043 = smul.u32 32, %s32
        $region103: #{encoder_omics_forward.4} parent=70 // pred_fallthru
          _
        // Predicated region
        $region104: #{encoder_omics_forward.4} parent=70 // pred_check
          %p4044 = pneg %p354
        $region105: #{encoder_omics_forward.4} parent=70 // pred_check_branch
          %4046 = sbr.rel (%p4044) target = $region107
        $region106: #{encoder_omics_forward.4} parent=70 // pred_region
          %s4047 = smul.u32 32, %s32
        $region107: #{encoder_omics_forward.4} parent=70 // pred_fallthru
          _
        // Predicated region
        $region108: #{encoder_omics_forward.4} parent=70 // pred_check
          %p4048 = pneg %p380
        $region109: #{encoder_omics_forward.4} parent=70 // pred_check_branch
          %4050 = sbr.rel (%p4048) target = $region111
        $region110: #{encoder_omics_forward.4} parent=70 // pred_region
          %s4051 = smul.u32 32, %s32
        $region111: #{encoder_omics_forward.4} parent=70 // pred_fallthru
          _
      $region71: #{encoder_omics_forward.4} parent=5 // pred_fallthru
        _
      %p4052 = scmp.le.s32.totalorder 2, %s23
      // Predicated region
      $region112: #{encoder_omics_forward.4} parent=5 // pred_check
        %p4053 = pneg %p4052
      $region113: #{encoder_omics_forward.4} parent=5 // pred_check_branch
        %4055 = sbr.rel (%p4053) target = $region115
      $region114: #{encoder_omics_forward.4} parent=5 // pred_region
        %s4056 = ssub.s32 %s23, 2
        // Predicated region
        $region116: #{encoder_omics_forward.4} parent=114 // pred_check
          %p4057 = pneg %p256
        $region117: #{encoder_omics_forward.4} parent=114 // pred_check_branch
          %4059 = sbr.rel (%p4057) target = $region119
        $region118: #{encoder_omics_forward.4} parent=114 // pred_region
          %s4060 = smul.u32 32, %s34
          %p4061 = scmp.lt.s32.totalorder %s4060, 63
          %s4062 = scalar_select %p4061, %s4060, 63
          %s4063 = smul.addr %s4062, 8
          %s4064 = scalar_lea.vmem %s8, %s4063
        $region119: #{encoder_omics_forward.4} parent=114 // pred_fallthru
          _
        // Predicated region
        $region120: #{encoder_omics_forward.4} parent=114 // pred_check
          %p4065 = pneg %p282
        $region121: #{encoder_omics_forward.4} parent=114 // pred_check_branch
          %4067 = sbr.rel (%p4065) target = $region123
        $region122: #{encoder_omics_forward.4} parent=114 // pred_region
          %s4068 = smul.u32 32, %s34
          %p4069 = scmp.lt.s32.totalorder %s4068, 63
          %s4070 = scalar_select %p4069, %s4068, 63
          %s4071 = smul.addr %s4070, 8
          %s4072 = scalar_lea.vmem %s9, %s4071
        $region123: #{encoder_omics_forward.4} parent=114 // pred_fallthru
          _
        // Predicated region
        $region124: #{encoder_omics_forward.4} parent=114 // pred_check
          %p4073 = pneg %p308
        $region125: #{encoder_omics_forward.4} parent=114 // pred_check_branch
          %4075 = sbr.rel (%p4073) target = $region127
        $region126: #{encoder_omics_forward.4} parent=114 // pred_region
          %s4076 = smul.u32 32, %s34
          %p4077 = scmp.lt.s32.totalorder %s4076, 63
          %s4078 = scalar_select %p4077, %s4076, 63
          %s4079 = smul.addr %s4078, 8
          %s4080 = scalar_lea.vmem %s10, %s4079
        $region127: #{encoder_omics_forward.4} parent=114 // pred_fallthru
          _
        // Predicated region
        $region128: #{encoder_omics_forward.4} parent=114 // pred_check
          %p4081 = pneg %p334
        $region129: #{encoder_omics_forward.4} parent=114 // pred_check_branch
          %4083 = sbr.rel (%p4081) target = $region131
        $region130: #{encoder_omics_forward.4} parent=114 // pred_region
          %s4084 = smul.u32 32, %s34
          %p4085 = scmp.lt.s32.totalorder %s4084, 63
          %s4086 = scalar_select %p4085, %s4084, 63
          %s4087 = smul.addr %s4086, 8
          %s4088 = scalar_lea.vmem %s11, %s4087
        $region131: #{encoder_omics_forward.4} parent=114 // pred_fallthru
          _
        // Predicated region
        $region132: #{encoder_omics_forward.4} parent=114 // pred_check
          %p4089 = pneg %p360
        $region133: #{encoder_omics_forward.4} parent=114 // pred_check_branch
          %4091 = sbr.rel (%p4089) target = $region135
        $region134: #{encoder_omics_forward.4} parent=114 // pred_region
          %s4092 = smul.u32 32, %s34
          %p4093 = scmp.lt.s32.totalorder %s4092, 63
          %s4094 = scalar_select %p4093, %s4092, 63
          %s4095 = smul.addr %s4094, 8
          %s4096 = scalar_lea.vmem %s12, %s4095
        $region135: #{encoder_omics_forward.4} parent=114 // pred_fallthru
          _
        // Predicated region
        $region136: #{encoder_omics_forward.4} parent=114 // pred_check
          %p4097 = pneg %p386
        $region137: #{encoder_omics_forward.4} parent=114 // pred_check_branch
          %4099 = sbr.rel (%p4097) target = $region139
        $region138: #{encoder_omics_forward.4} parent=114 // pred_region
          %s4100 = smul.u32 32, %s34
          %p4101 = scmp.lt.s32.totalorder %s4100, 63
          %s4102 = scalar_select %p4101, %s4100, 63
          %s4103 = smul.addr %s4102, 8
          %s4104 = scalar_lea.vmem %s13, %s4103
        $region139: #{encoder_omics_forward.4} parent=114 // pred_fallthru
          _
      $region115: #{encoder_omics_forward.4} parent=5 // pred_fallthru
        _
    $region6: #{encoder_omics_forward.4} parent=1 // loop_footer
      %s27 = sadd.s32 1, %s23
    $region7: #{encoder_omics_forward.4} parent=1 // loop_footer_branch
      %22 = sbr.rel target = $region3
    $region8: #{encoder_omics_forward.4} parent=1 // loop_exit
      _
    %4105 = vsyncpa [#allocation6], 1
    %s4106 = scalar_lea.sflag [#allocation6], 1
    %4107 = vsyncpa %s4106, 1

</llo_original>
